<compile_context>
chip_gen: v7x
topology: tpu7x:2x2x1
jax: 0.10.0
libtpu: 0.0.40
codegen_flags: <defaults>
</compile_context>

<pallas_src>
import math

import jax
import jax.numpy as jnp
from jax.experimental import pallas as pl
from jax.experimental.pallas import tpu as pltpu


# ---------------------------------------------------------------------------
# Fused Pallas kernel: all AGCRN cells of the decoder, one batch element per
# grid step ("parallel" axis -> megacore sharding on v7x).
# ---------------------------------------------------------------------------
def _make_decoder_kernel(num_layers, n_nodes, hidden, k2):
    """Ref layout (per grid step, blocks already in VMEM):

      refs[0]                 x    [N, Cp0]        bf16   (layer-0 input)
      refs[1]                 h0   [L, N, H]       f32
      refs[2]                 s    [K2*N, N]       bf16   (Chebyshev stack)
      refs[3 + 9*l + (0..8)]  per-layer Wz_x, Wz_h, Wr_x, Wr_h, Wu_x, Wu_h
                              ([K2, C_l, H] bf16)  and bz, br, bu ([1, H] f32)
      refs[-1]                out  [L, N, H]       f32
    """

    def kernel(x_ref, h0_ref, s_ref, *rest):
        w_refs = rest[:-1]
        o_ref = rest[-1]

        s = s_ref[...]                                     # [K2*N, N]  bf16
        cur = x_ref[...]                                   # [N, C_l]   bf16

        for l in range(num_layers):                        # unrolled at trace
            (wzx, wzh, wrx, wrh, wux, wuh, bz, br, bu) = w_refs[9 * l:9 * l + 9]
            h = h0_ref[l]                                  # [N, H] f32
            h_bf = h.astype(jnp.bfloat16)

            # Graph convolutions (shared supports, this batch element only):
            #   gx[k*N + n, c] = (S_k @ x)[n, c];  gh likewise for the state.
            gx = jnp.dot(s, cur,
                         preferred_element_type=jnp.float32).astype(jnp.bfloat16)
            gh = jnp.dot(s, h_bf,
                         preferred_element_type=jnp.float32).astype(jnp.bfloat16)

            # Gate AGCN: unrolled per-k MXU accumulation against pre-split
            # weights (no lane concat of k-blocks, no z/r lane split).
            z_pre = jnp.zeros((n_nodes, hidden), jnp.float32)
            r_pre = jnp.zeros((n_nodes, hidden), jnp.float32)
            for k in range(k2):
                gx_k = gx[k * n_nodes:(k + 1) * n_nodes, :]   # sublane-aligned
                gh_k = gh[k * n_nodes:(k + 1) * n_nodes, :]
                z_pre = (z_pre
                         + jnp.dot(gx_k, wzx[k], preferred_element_type=jnp.float32)
                         + jnp.dot(gh_k, wzh[k], preferred_element_type=jnp.float32))
                r_pre = (r_pre
                         + jnp.dot(gx_k, wrx[k], preferred_element_type=jnp.float32)
                         + jnp.dot(gh_k, wrh[k], preferred_element_type=jnp.float32))
            z = jax.nn.sigmoid(z_pre + bz[...])
            r = jax.nn.sigmoid(r_pre + br[...])

            # Update (candidate) AGCN: reuse S@x, recompute only S@(z*h).
            gzh = jnp.dot(s, (z * h).astype(jnp.bfloat16),
                          preferred_element_type=jnp.float32).astype(jnp.bfloat16)
            u_pre = jnp.zeros((n_nodes, hidden), jnp.float32)
            for k in range(k2):
                gx_k = gx[k * n_nodes:(k + 1) * n_nodes, :]
                gzh_k = gzh[k * n_nodes:(k + 1) * n_nodes, :]
                u_pre = (u_pre
                         + jnp.dot(gx_k, wux[k], preferred_element_type=jnp.float32)
                         + jnp.dot(gzh_k, wuh[k], preferred_element_type=jnp.float32))
            hc = jnp.tanh(u_pre + bu[...])

            # GRU blend (MegaCRN formulation), f32 element-wise.
            h_new = r * h + (1.0 - r) * hc
            o_ref[l] = h_new
            cur = h_new.astype(jnp.bfloat16)

    return kernel


# ---------------------------------------------------------------------------
# Host-side glue: Chebyshev supports, parameter splitting, padding, specs.
# ---------------------------------------------------------------------------
def build_support_set(supports, cheb_k):
    """AGCN's support_set construction, stacked to [K2, N, N] (tiny NxN
    recursion, done on the host)."""
    mats = []
    for s in supports:
        n = s.shape[0]
        ks = [jnp.eye(n, dtype=s.dtype), s]
        for _ in range(2, cheb_k):
            ks.append(2.0 * s @ ks[-1] - ks[-2])
        mats.extend(ks)
    return jnp.stack(mats, axis=0)


def xavier_normal(key, shape):
    fan_in, fan_out = shape
    std = math.sqrt(2.0 / (fan_in + fan_out))
    return std * jax.random.normal(key, shape, dtype=jnp.float32)


def init_cell_raw(key, dim_in, dim_out, K2):
    """Raw parameters matching the PyTorch AGCRNCell (gate AGCN + update AGCN)."""
    kg, ku = jax.random.split(key)
    wg = xavier_normal(kg, (K2 * (dim_in + dim_out), 2 * dim_out))
    bg = jnp.zeros((2 * dim_out,), jnp.float32)
    wu = xavier_normal(ku, (K2 * (dim_in + dim_out), dim_out))
    bu = jnp.zeros((dim_out,), jnp.float32)
    return dict(wg=wg, bg=bg, wu=wu, bu=bu, dim_in=dim_in, dim_out=dim_out, K2=K2)


def _round8(n):
    return max(8, -(-n // 8) * 8)


def _split_cell_params(raw, cin_pad):
    """Split gate/update weights into MXU-friendly [K2, C, H] blocks in their
    NATIVE PyTorch row order (k-major, x rows then state rows); zero-pad the
    input-channel rows to `cin_pad`; biases as f32 [1, H]."""
    cin, H, K2 = raw["dim_in"], raw["dim_out"], raw["K2"]
    wg = raw["wg"].reshape(K2, cin + H, 2 * H)
    wu = raw["wu"].reshape(K2, cin + H, H)
    wzx, wrx = wg[:, :cin, :H], wg[:, :cin, H:]
    wzh, wrh = wg[:, cin:, :H], wg[:, cin:, H:]
    wux, wuh = wu[:, :cin, :], wu[:, cin:, :]
    pad = cin_pad - cin
    if pad:
        padw = ((0, 0), (0, pad), (0, 0))
        wzx, wrx, wux = (jnp.pad(w, padw) for w in (wzx, wrx, wux))
    bf = jnp.bfloat16
    bz = raw["bg"][None, :H].astype(jnp.float32)
    br = raw["bg"][None, H:].astype(jnp.float32)
    bu = raw["bu"][None, :].astype(jnp.float32)
    return [wzx.astype(bf), wzh.astype(bf), wrx.astype(bf), wrh.astype(bf),
            wux.astype(bf), wuh.astype(bf), bz, br, bu]


def adcrnn_decoder_forward(xt, init_state, supports, raw_params, cheb_k):
    """JAX/Pallas equivalent of ADCRNN_Decoder.forward (one fused kernel)."""
    B, N, Cin = xt.shape
    L = len(raw_params)
    H = raw_params[0]["dim_out"]
    K2 = raw_params[0]["K2"]
    assert N % 8 == 0, "node count must be a multiple of 8 (sublane alignment)"

    # Chebyshev support stack, shared across the batch (no block-diag).
    S = build_support_set(supports, cheb_k)                      # [K2, N, N]
    s_flat = S.reshape(K2 * N, N).astype(jnp.bfloat16)

    # Layer-0 input, channels zero-padded to a multiple of 8, bf16 for the MXU.
    cp0 = _round8(Cin)
    x_rows = jnp.pad(xt.reshape(B * N, Cin), ((0, 0), (0, cp0 - Cin)))
    x_rows = x_rows.astype(jnp.bfloat16)

    h0 = init_state.reshape(L, B * N, H).astype(jnp.float32)

    weights, weight_specs = [], []
    for raw in raw_params:
        parts = _split_cell_params(raw, _round8(raw["dim_in"]))
        weights += parts
        for p in parts:                                          # resident in VMEM
            idx = (lambda b: (0, 0, 0)) if p.ndim == 3 else (lambda b: (0, 0))
            weight_specs.append(pl.BlockSpec(p.shape, idx))

    kernel = _make_decoder_kernel(L, N, H, K2)

    # TODO(synk): the caller's per-timestep rollout (outside this module) could
    # be folded in as an extra "arbitrary" grid axis with the hidden state
    # aliased in place; out of scope for a single ADCRNN_Decoder.forward.
    out = pl.pallas_call(
        kernel,
        grid=(B,),
        in_specs=[pl.BlockSpec((N, cp0), lambda b: (b, 0)),        # x_t
                  pl.BlockSpec((L, N, H), lambda b: (0, b, 0)),    # init_state
                  pl.BlockSpec((K2 * N, N), lambda b: (0, 0)),     # supports
                  ] + weight_specs,
        out_specs=pl.BlockSpec((L, N, H), lambda b: (0, b, 0)),
        out_shape=jax.ShapeDtypeStruct((L, B * N, H), jnp.float32),
        compiler_params=pltpu.CompilerParams(
            dimension_semantics=("parallel",)),
    )(x_rows, h0, s_flat, *weights)

    out = out.reshape(L, B, N, H)
    output_hidden = [out[i] for i in range(L)]
    return output_hidden[-1], output_hidden


# ---------------------------------------------------------------------------
# Pure-JAX reference (mirrors the PyTorch code 1:1, f32 throughout).
# ---------------------------------------------------------------------------
def _agcn_ref(x, S, w, b):
    xg = jnp.einsum('knm,bmc->bnkc', S, x)
    xg = xg.reshape(x.shape[0], x.shape[1], -1)
    return jnp.einsum('bni,io->bno', xg, w) + b


def _cell_ref(x, state, S, raw):
    H = raw["dim_out"]
    xs = jnp.concatenate([x, state], axis=-1)
    zr = jax.nn.sigmoid(_agcn_ref(xs, S, raw["wg"], raw["bg"]))
    z, r = zr[..., :H], zr[..., H:]
    cand = jnp.concatenate([x, z * state], axis=-1)
    hc = jnp.tanh(_agcn_ref(cand, S, raw["wu"], raw["bu"]))
    return r * state + (1.0 - r) * hc


def decoder_ref(xt, init_state, supports, raw_params, cheb_k):
    S = build_support_set(supports, cheb_k)
    cur = xt
    hidden = []
    for i, raw in enumerate(raw_params):
        cur = _cell_ref(cur, init_state[i], S, raw)
        hidden.append(cur)
    return cur, hidden


# ---------------------------------------------------------------------------
if __name__ == "__main__":
    B, N, Cin, H = 2, 16, 4, 32
    cheb_k, num_layers = 3, 2
    K2 = 2 * cheb_k                      # 2 supports * cheb_k terms

    key = jax.random.PRNGKey(0)
    keys = jax.random.split(key, 4 + num_layers)

    xt = jax.random.normal(keys[0], (B, N, Cin), jnp.float32)
    init_state = jax.random.normal(keys[1], (num_layers, B, N, H), jnp.float32)
    supports = [
        jax.nn.softmax(jax.random.normal(keys[2], (N, N), jnp.float32), axis=-1),
        jax.nn.softmax(jax.random.normal(keys[3], (N, N), jnp.float32), axis=-1),
    ]

    dims_in = [Cin] + [H] * (num_layers - 1)
    raw_params = [init_cell_raw(keys[4 + i], dims_in[i], H, K2)
                  for i in range(num_layers)]

    out, hiddens = adcrnn_decoder_forward(xt, init_state, supports, raw_params, cheb_k)
    out = jax.block_until_ready(out)
    hiddens = [jax.block_until_ready(h) for h in hiddens]

    out_ref, hiddens_ref = decoder_ref(xt, init_state, supports, raw_params, cheb_k)

    assert out.shape == (B, N, H)
    assert len(hiddens) == num_layers
    # bf16 MXU operands inside the kernel -> loosened tolerance vs. the f32 ref.
    assert jnp.allclose(out, out_ref, atol=5e-2, rtol=5e-2)
    for hk, hr in zip(hiddens, hiddens_ref):
        assert hk.shape == (B, N, H)
        assert jnp.allclose(hk, hr, atol=5e-2, rtol=5e-2)

    print("KERNEL_OK")
</pallas_src>

<mosaic_0001>
module attributes {stable_mosaic.version = 11 : i64} {
  func.func @kernel(%arg0: i32, %arg1: memref<16x8xbf16, #tpu.memory_space<vmem>>, %arg2: memref<2x16x32xf32, #tpu.memory_space<vmem>>, %arg3: memref<96x16xbf16, #tpu.memory_space<vmem>>, %arg4: memref<6x8x32xbf16, #tpu.memory_space<vmem>>, %arg5: memref<6x32x32xbf16, #tpu.memory_space<vmem>>, %arg6: memref<6x8x32xbf16, #tpu.memory_space<vmem>>, %arg7: memref<6x32x32xbf16, #tpu.memory_space<vmem>>, %arg8: memref<6x8x32xbf16, #tpu.memory_space<vmem>>, %arg9: memref<6x32x32xbf16, #tpu.memory_space<vmem>>, %arg10: memref<1x32xf32, #tpu.memory_space<vmem>>, %arg11: memref<1x32xf32, #tpu.memory_space<vmem>>, %arg12: memref<1x32xf32, #tpu.memory_space<vmem>>, %arg13: memref<6x32x32xbf16, #tpu.memory_space<vmem>>, %arg14: memref<6x32x32xbf16, #tpu.memory_space<vmem>>, %arg15: memref<6x32x32xbf16, #tpu.memory_space<vmem>>, %arg16: memref<6x32x32xbf16, #tpu.memory_space<vmem>>, %arg17: memref<6x32x32xbf16, #tpu.memory_space<vmem>>, %arg18: memref<6x32x32xbf16, #tpu.memory_space<vmem>>, %arg19: memref<1x32xf32, #tpu.memory_space<vmem>>, %arg20: memref<1x32xf32, #tpu.memory_space<vmem>>, %arg21: memref<1x32xf32, #tpu.memory_space<vmem>>, %arg22: memref<2x16x32xf32, #tpu.memory_space<vmem>>) attributes {dimension_semantics = [#tpu.dimension_semantics<parallel>], iteration_bounds = array<i64: 2>, scalar_prefetch = 0 : i64, scratch_operands = 0 : i64, tpu.core_type = #tpu.core_type<tc>, window_params = [{transform_indices = @transform_0, window_bounds = array<i64: 16, 8>}, {transform_indices = @transform_1, window_bounds = array<i64: 2, 16, 32>}, {pipeline_mode = #tpu.pipeline_mode<synchronous>, transform_indices = @transform_2, window_bounds = array<i64: 96, 16>}, {pipeline_mode = #tpu.pipeline_mode<synchronous>, transform_indices = @transform_3, window_bounds = array<i64: 6, 8, 32>}, {pipeline_mode = #tpu.pipeline_mode<synchronous>, transform_indices = @transform_4, window_bounds = array<i64: 6, 32, 32>}, {pipeline_mode = #tpu.pipeline_mode<synchronous>, transform_indices = @transform_5, window_bounds = array<i64: 6, 8, 32>}, {pipeline_mode = #tpu.pipeline_mode<synchronous>, transform_indices = @transform_6, window_bounds = array<i64: 6, 32, 32>}, {pipeline_mode = #tpu.pipeline_mode<synchronous>, transform_indices = @transform_7, window_bounds = array<i64: 6, 8, 32>}, {pipeline_mode = #tpu.pipeline_mode<synchronous>, transform_indices = @transform_8, window_bounds = array<i64: 6, 32, 32>}, {pipeline_mode = #tpu.pipeline_mode<synchronous>, transform_indices = @transform_9, window_bounds = array<i64: 1, 32>}, {pipeline_mode = #tpu.pipeline_mode<synchronous>, transform_indices = @transform_10, window_bounds = array<i64: 1, 32>}, {pipeline_mode = #tpu.pipeline_mode<synchronous>, transform_indices = @transform_11, window_bounds = array<i64: 1, 32>}, {pipeline_mode = #tpu.pipeline_mode<synchronous>, transform_indices = @transform_12, window_bounds = array<i64: 6, 32, 32>}, {pipeline_mode = #tpu.pipeline_mode<synchronous>, transform_indices = @transform_13, window_bounds = array<i64: 6, 32, 32>}, {pipeline_mode = #tpu.pipeline_mode<synchronous>, transform_indices = @transform_14, window_bounds = array<i64: 6, 32, 32>}, {pipeline_mode = #tpu.pipeline_mode<synchronous>, transform_indices = @transform_15, window_bounds = array<i64: 6, 32, 32>}, {pipeline_mode = #tpu.pipeline_mode<synchronous>, transform_indices = @transform_16, window_bounds = array<i64: 6, 32, 32>}, {pipeline_mode = #tpu.pipeline_mode<synchronous>, transform_indices = @transform_17, window_bounds = array<i64: 6, 32, 32>}, {pipeline_mode = #tpu.pipeline_mode<synchronous>, transform_indices = @transform_18, window_bounds = array<i64: 1, 32>}, {pipeline_mode = #tpu.pipeline_mode<synchronous>, transform_indices = @transform_19, window_bounds = array<i64: 1, 32>}, {pipeline_mode = #tpu.pipeline_mode<synchronous>, transform_indices = @transform_20, window_bounds = array<i64: 1, 32>}, {transform_indices = @transform_21, window_bounds = array<i64: 2, 16, 32>}]} {
    %c0 = arith.constant 0 : index
    %c0_0 = arith.constant 0 : index
    %0 = vector.load %arg3[%c0, %c0_0] : memref<96x16xbf16, #tpu.memory_space<vmem>>, vector<96x16xbf16>
    %c0_1 = arith.constant 0 : index
    %c0_2 = arith.constant 0 : index
    %1 = vector.load %arg1[%c0_1, %c0_2] : memref<16x8xbf16, #tpu.memory_space<vmem>>, vector<16x8xbf16>
    %c0_3 = arith.constant 0 : index
    %c0_4 = arith.constant 0 : index
    %c0_5 = arith.constant 0 : index
    %2 = vector.load %arg2[%c0_3, %c0_4, %c0_5] : memref<2x16x32xf32, #tpu.memory_space<vmem>>, vector<1x16x32xf32>
    %3 = vector.shape_cast %2 : vector<1x16x32xf32> to vector<16x32xf32>
    %4 = arith.truncf %3 : vector<16x32xf32> to vector<16x32xbf16>
    %cst = arith.constant dense<0.000000e+00> : vector<96x8xf32>
    %5 = tpu.matmul %0, %1, %cst {dimension_numbers = #tpu.dot_dimension_numbers<[1], [0], [0], [1], [0, 0, 1, 1], [], []>} : vector<96x16xbf16>, vector<16x8xbf16>, vector<96x8xf32> -> vector<96x8xf32>
    %6 = arith.truncf %5 : vector<96x8xf32> to vector<96x8xbf16>
    %cst_6 = arith.constant dense<0.000000e+00> : vector<96x32xf32>
    %7 = tpu.matmul %0, %4, %cst_6 {dimension_numbers = #tpu.dot_dimension_numbers<[1], [0], [0], [1], [0, 0, 1, 1], [], []>} : vector<96x16xbf16>, vector<16x32xbf16>, vector<96x32xf32> -> vector<96x32xf32>
    %8 = arith.truncf %7 : vector<96x32xf32> to vector<96x32xbf16>
    %cst_7 = arith.constant 0.000000e+00 : f32
    %9 = vector.broadcast %cst_7 : f32 to vector<16x32xf32>
    %cst_8 = arith.constant 0.000000e+00 : f32
    %10 = vector.broadcast %cst_8 : f32 to vector<16x32xf32>
    %11 = vector.extract_strided_slice %6 {offsets = [0, 0], sizes = [16, 8], strides = [1, 1]} : vector<96x8xbf16> to vector<16x8xbf16>
    %12 = vector.extract_strided_slice %8 {offsets = [0, 0], sizes = [16, 32], strides = [1, 1]} : vector<96x32xbf16> to vector<16x32xbf16>
    %c0_9 = arith.constant 0 : index
    %c0_10 = arith.constant 0 : index
    %c0_11 = arith.constant 0 : index
    %13 = vector.load %arg4[%c0_9, %c0_10, %c0_11] : memref<6x8x32xbf16, #tpu.memory_space<vmem>>, vector<1x8x32xbf16>
    %14 = vector.shape_cast %13 : vector<1x8x32xbf16> to vector<8x32xbf16>
    %cst_12 = arith.constant dense<0.000000e+00> : vector<16x32xf32>
    %15 = tpu.matmul %11, %14, %cst_12 {dimension_numbers = #tpu.dot_dimension_numbers<[1], [0], [0], [1], [0, 0, 1, 1], [], []>} : vector<16x8xbf16>, vector<8x32xbf16>, vector<16x32xf32> -> vector<16x32xf32>
    %16 = arith.addf %9, %15 : vector<16x32xf32>
    %c0_13 = arith.constant 0 : index
    %c0_14 = arith.constant 0 : index
    %c0_15 = arith.constant 0 : index
    %17 = vector.load %arg5[%c0_13, %c0_14, %c0_15] : memref<6x32x32xbf16, #tpu.memory_space<vmem>>, vector<1x32x32xbf16>
    %18 = vector.shape_cast %17 : vector<1x32x32xbf16> to vector<32x32xbf16>
    %cst_16 = arith.constant dense<0.000000e+00> : vector<16x32xf32>
    %19 = tpu.matmul %12, %18, %cst_16 {dimension_numbers = #tpu.dot_dimension_numbers<[1], [0], [0], [1], [0, 0, 1, 1], [], []>} : vector<16x32xbf16>, vector<32x32xbf16>, vector<16x32xf32> -> vector<16x32xf32>
    %20 = arith.addf %16, %19 : vector<16x32xf32>
    %c0_17 = arith.constant 0 : index
    %c0_18 = arith.constant 0 : index
    %c0_19 = arith.constant 0 : index
    %21 = vector.load %arg6[%c0_17, %c0_18, %c0_19] : memref<6x8x32xbf16, #tpu.memory_space<vmem>>, vector<1x8x32xbf16>
    %22 = vector.shape_cast %21 : vector<1x8x32xbf16> to vector<8x32xbf16>
    %cst_20 = arith.constant dense<0.000000e+00> : vector<16x32xf32>
    %23 = tpu.matmul %11, %22, %cst_20 {dimension_numbers = #tpu.dot_dimension_numbers<[1], [0], [0], [1], [0, 0, 1, 1], [], []>} : vector<16x8xbf16>, vector<8x32xbf16>, vector<16x32xf32> -> vector<16x32xf32>
    %24 = arith.addf %10, %23 : vector<16x32xf32>
    %c0_21 = arith.constant 0 : index
    %c0_22 = arith.constant 0 : index
    %c0_23 = arith.constant 0 : index
    %25 = vector.load %arg7[%c0_21, %c0_22, %c0_23] : memref<6x32x32xbf16, #tpu.memory_space<vmem>>, vector<1x32x32xbf16>
    %26 = vector.shape_cast %25 : vector<1x32x32xbf16> to vector<32x32xbf16>
    %cst_24 = arith.constant dense<0.000000e+00> : vector<16x32xf32>
    %27 = tpu.matmul %12, %26, %cst_24 {dimension_numbers = #tpu.dot_dimension_numbers<[1], [0], [0], [1], [0, 0, 1, 1], [], []>} : vector<16x32xbf16>, vector<32x32xbf16>, vector<16x32xf32> -> vector<16x32xf32>
    %28 = arith.addf %24, %27 : vector<16x32xf32>
    %29 = vector.extract_strided_slice %6 {offsets = [16, 0], sizes = [16, 8], strides = [1, 1]} : vector<96x8xbf16> to vector<16x8xbf16>
    %30 = vector.extract_strided_slice %8 {offsets = [16, 0], sizes = [16, 32], strides = [1, 1]} : vector<96x32xbf16> to vector<16x32xbf16>
    %c1 = arith.constant 1 : index
    %c0_25 = arith.constant 0 : index
    %c0_26 = arith.constant 0 : index
    %31 = vector.load %arg4[%c1, %c0_25, %c0_26] : memref<6x8x32xbf16, #tpu.memory_space<vmem>>, vector<1x8x32xbf16>
    %32 = vector.shape_cast %31 : vector<1x8x32xbf16> to vector<8x32xbf16>
    %cst_27 = arith.constant dense<0.000000e+00> : vector<16x32xf32>
    %33 = tpu.matmul %29, %32, %cst_27 {dimension_numbers = #tpu.dot_dimension_numbers<[1], [0], [0], [1], [0, 0, 1, 1], [], []>} : vector<16x8xbf16>, vector<8x32xbf16>, vector<16x32xf32> -> vector<16x32xf32>
    %34 = arith.addf %20, %33 : vector<16x32xf32>
    %c1_28 = arith.constant 1 : index
    %c0_29 = arith.constant 0 : index
    %c0_30 = arith.constant 0 : index
    %35 = vector.load %arg5[%c1_28, %c0_29, %c0_30] : memref<6x32x32xbf16, #tpu.memory_space<vmem>>, vector<1x32x32xbf16>
    %36 = vector.shape_cast %35 : vector<1x32x32xbf16> to vector<32x32xbf16>
    %cst_31 = arith.constant dense<0.000000e+00> : vector<16x32xf32>
    %37 = tpu.matmul %30, %36, %cst_31 {dimension_numbers = #tpu.dot_dimension_numbers<[1], [0], [0], [1], [0, 0, 1, 1], [], []>} : vector<16x32xbf16>, vector<32x32xbf16>, vector<16x32xf32> -> vector<16x32xf32>
    %38 = arith.addf %34, %37 : vector<16x32xf32>
    %c1_32 = arith.constant 1 : index
    %c0_33 = arith.constant 0 : index
    %c0_34 = arith.constant 0 : index
    %39 = vector.load %arg6[%c1_32, %c0_33, %c0_34] : memref<6x8x32xbf16, #tpu.memory_space<vmem>>, vector<1x8x32xbf16>
    %40 = vector.shape_cast %39 : vector<1x8x32xbf16> to vector<8x32xbf16>
    %cst_35 = arith.constant dense<0.000000e+00> : vector<16x32xf32>
    %41 = tpu.matmul %29, %40, %cst_35 {dimension_numbers = #tpu.dot_dimension_numbers<[1], [0], [0], [1], [0, 0, 1, 1], [], []>} : vector<16x8xbf16>, vector<8x32xbf16>, vector<16x32xf32> -> vector<16x32xf32>
    %42 = arith.addf %28, %41 : vector<16x32xf32>
    %c1_36 = arith.constant 1 : index
    %c0_37 = arith.constant 0 : index
    %c0_38 = arith.constant 0 : index
    %43 = vector.load %arg7[%c1_36, %c0_37, %c0_38] : memref<6x32x32xbf16, #tpu.memory_space<vmem>>, vector<1x32x32xbf16>
    %44 = vector.shape_cast %43 : vector<1x32x32xbf16> to vector<32x32xbf16>
    %cst_39 = arith.constant dense<0.000000e+00> : vector<16x32xf32>
    %45 = tpu.matmul %30, %44, %cst_39 {dimension_numbers = #tpu.dot_dimension_numbers<[1], [0], [0], [1], [0, 0, 1, 1], [], []>} : vector<16x32xbf16>, vector<32x32xbf16>, vector<16x32xf32> -> vector<16x32xf32>
    %46 = arith.addf %42, %45 : vector<16x32xf32>
    %47 = vector.extract_strided_slice %6 {offsets = [32, 0], sizes = [16, 8], strides = [1, 1]} : vector<96x8xbf16> to vector<16x8xbf16>
    %48 = vector.extract_strided_slice %8 {offsets = [32, 0], sizes = [16, 32], strides = [1, 1]} : vector<96x32xbf16> to vector<16x32xbf16>
    %c2 = arith.constant 2 : index
    %c0_40 = arith.constant 0 : index
    %c0_41 = arith.constant 0 : index
    %49 = vector.load %arg4[%c2, %c0_40, %c0_41] : memref<6x8x32xbf16, #tpu.memory_space<vmem>>, vector<1x8x32xbf16>
    %50 = vector.shape_cast %49 : vector<1x8x32xbf16> to vector<8x32xbf16>
    %cst_42 = arith.constant dense<0.000000e+00> : vector<16x32xf32>
    %51 = tpu.matmul %47, %50, %cst_42 {dimension_numbers = #tpu.dot_dimension_numbers<[1], [0], [0], [1], [0, 0, 1, 1], [], []>} : vector<16x8xbf16>, vector<8x32xbf16>, vector<16x32xf32> -> vector<16x32xf32>
    %52 = arith.addf %38, %51 : vector<16x32xf32>
    %c2_43 = arith.constant 2 : index
    %c0_44 = arith.constant 0 : index
    %c0_45 = arith.constant 0 : index
    %53 = vector.load %arg5[%c2_43, %c0_44, %c0_45] : memref<6x32x32xbf16, #tpu.memory_space<vmem>>, vector<1x32x32xbf16>
    %54 = vector.shape_cast %53 : vector<1x32x32xbf16> to vector<32x32xbf16>
    %cst_46 = arith.constant dense<0.000000e+00> : vector<16x32xf32>
    %55 = tpu.matmul %48, %54, %cst_46 {dimension_numbers = #tpu.dot_dimension_numbers<[1], [0], [0], [1], [0, 0, 1, 1], [], []>} : vector<16x32xbf16>, vector<32x32xbf16>, vector<16x32xf32> -> vector<16x32xf32>
    %56 = arith.addf %52, %55 : vector<16x32xf32>
    %c2_47 = arith.constant 2 : index
    %c0_48 = arith.constant 0 : index
    %c0_49 = arith.constant 0 : index
    %57 = vector.load %arg6[%c2_47, %c0_48, %c0_49] : memref<6x8x32xbf16, #tpu.memory_space<vmem>>, vector<1x8x32xbf16>
    %58 = vector.shape_cast %57 : vector<1x8x32xbf16> to vector<8x32xbf16>
    %cst_50 = arith.constant dense<0.000000e+00> : vector<16x32xf32>
    %59 = tpu.matmul %47, %58, %cst_50 {dimension_numbers = #tpu.dot_dimension_numbers<[1], [0], [0], [1], [0, 0, 1, 1], [], []>} : vector<16x8xbf16>, vector<8x32xbf16>, vector<16x32xf32> -> vector<16x32xf32>
    %60 = arith.addf %46, %59 : vector<16x32xf32>
    %c2_51 = arith.constant 2 : index
    %c0_52 = arith.constant 0 : index
    %c0_53 = arith.constant 0 : index
    %61 = vector.load %arg7[%c2_51, %c0_52, %c0_53] : memref<6x32x32xbf16, #tpu.memory_space<vmem>>, vector<1x32x32xbf16>
    %62 = vector.shape_cast %61 : vector<1x32x32xbf16> to vector<32x32xbf16>
    %cst_54 = arith.constant dense<0.000000e+00> : vector<16x32xf32>
    %63 = tpu.matmul %48, %62, %cst_54 {dimension_numbers = #tpu.dot_dimension_numbers<[1], [0], [0], [1], [0, 0, 1, 1], [], []>} : vector<16x32xbf16>, vector<32x32xbf16>, vector<16x32xf32> -> vector<16x32xf32>
    %64 = arith.addf %60, %63 : vector<16x32xf32>
    %65 = vector.extract_strided_slice %6 {offsets = [48, 0], sizes = [16, 8], strides = [1, 1]} : vector<96x8xbf16> to vector<16x8xbf16>
    %66 = vector.extract_strided_slice %8 {offsets = [48, 0], sizes = [16, 32], strides = [1, 1]} : vector<96x32xbf16> to vector<16x32xbf16>
    %c3 = arith.constant 3 : index
    %c0_55 = arith.constant 0 : index
    %c0_56 = arith.constant 0 : index
    %67 = vector.load %arg4[%c3, %c0_55, %c0_56] : memref<6x8x32xbf16, #tpu.memory_space<vmem>>, vector<1x8x32xbf16>
    %68 = vector.shape_cast %67 : vector<1x8x32xbf16> to vector<8x32xbf16>
    %cst_57 = arith.constant dense<0.000000e+00> : vector<16x32xf32>
    %69 = tpu.matmul %65, %68, %cst_57 {dimension_numbers = #tpu.dot_dimension_numbers<[1], [0], [0], [1], [0, 0, 1, 1], [], []>} : vector<16x8xbf16>, vector<8x32xbf16>, vector<16x32xf32> -> vector<16x32xf32>
    %70 = arith.addf %56, %69 : vector<16x32xf32>
    %c3_58 = arith.constant 3 : index
    %c0_59 = arith.constant 0 : index
    %c0_60 = arith.constant 0 : index
    %71 = vector.load %arg5[%c3_58, %c0_59, %c0_60] : memref<6x32x32xbf16, #tpu.memory_space<vmem>>, vector<1x32x32xbf16>
    %72 = vector.shape_cast %71 : vector<1x32x32xbf16> to vector<32x32xbf16>
    %cst_61 = arith.constant dense<0.000000e+00> : vector<16x32xf32>
    %73 = tpu.matmul %66, %72, %cst_61 {dimension_numbers = #tpu.dot_dimension_numbers<[1], [0], [0], [1], [0, 0, 1, 1], [], []>} : vector<16x32xbf16>, vector<32x32xbf16>, vector<16x32xf32> -> vector<16x32xf32>
    %74 = arith.addf %70, %73 : vector<16x32xf32>
    %c3_62 = arith.constant 3 : index
    %c0_63 = arith.constant 0 : index
    %c0_64 = arith.constant 0 : index
    %75 = vector.load %arg6[%c3_62, %c0_63, %c0_64] : memref<6x8x32xbf16, #tpu.memory_space<vmem>>, vector<1x8x32xbf16>
    %76 = vector.shape_cast %75 : vector<1x8x32xbf16> to vector<8x32xbf16>
    %cst_65 = arith.constant dense<0.000000e+00> : vector<16x32xf32>
    %77 = tpu.matmul %65, %76, %cst_65 {dimension_numbers = #tpu.dot_dimension_numbers<[1], [0], [0], [1], [0, 0, 1, 1], [], []>} : vector<16x8xbf16>, vector<8x32xbf16>, vector<16x32xf32> -> vector<16x32xf32>
    %78 = arith.addf %64, %77 : vector<16x32xf32>
    %c3_66 = arith.constant 3 : index
    %c0_67 = arith.constant 0 : index
    %c0_68 = arith.constant 0 : index
    %79 = vector.load %arg7[%c3_66, %c0_67, %c0_68] : memref<6x32x32xbf16, #tpu.memory_space<vmem>>, vector<1x32x32xbf16>
    %80 = vector.shape_cast %79 : vector<1x32x32xbf16> to vector<32x32xbf16>
    %cst_69 = arith.constant dense<0.000000e+00> : vector<16x32xf32>
    %81 = tpu.matmul %66, %80, %cst_69 {dimension_numbers = #tpu.dot_dimension_numbers<[1], [0], [0], [1], [0, 0, 1, 1], [], []>} : vector<16x32xbf16>, vector<32x32xbf16>, vector<16x32xf32> -> vector<16x32xf32>
    %82 = arith.addf %78, %81 : vector<16x32xf32>
    %83 = vector.extract_strided_slice %6 {offsets = [64, 0], sizes = [16, 8], strides = [1, 1]} : vector<96x8xbf16> to vector<16x8xbf16>
    %84 = vector.extract_strided_slice %8 {offsets = [64, 0], sizes = [16, 32], strides = [1, 1]} : vector<96x32xbf16> to vector<16x32xbf16>
    %c4 = arith.constant 4 : index
    %c0_70 = arith.constant 0 : index
    %c0_71 = arith.constant 0 : index
    %85 = vector.load %arg4[%c4, %c0_70, %c0_71] : memref<6x8x32xbf16, #tpu.memory_space<vmem>>, vector<1x8x32xbf16>
    %86 = vector.shape_cast %85 : vector<1x8x32xbf16> to vector<8x32xbf16>
    %cst_72 = arith.constant dense<0.000000e+00> : vector<16x32xf32>
    %87 = tpu.matmul %83, %86, %cst_72 {dimension_numbers = #tpu.dot_dimension_numbers<[1], [0], [0], [1], [0, 0, 1, 1], [], []>} : vector<16x8xbf16>, vector<8x32xbf16>, vector<16x32xf32> -> vector<16x32xf32>
    %88 = arith.addf %74, %87 : vector<16x32xf32>
    %c4_73 = arith.constant 4 : index
    %c0_74 = arith.constant 0 : index
    %c0_75 = arith.constant 0 : index
    %89 = vector.load %arg5[%c4_73, %c0_74, %c0_75] : memref<6x32x32xbf16, #tpu.memory_space<vmem>>, vector<1x32x32xbf16>
    %90 = vector.shape_cast %89 : vector<1x32x32xbf16> to vector<32x32xbf16>
    %cst_76 = arith.constant dense<0.000000e+00> : vector<16x32xf32>
    %91 = tpu.matmul %84, %90, %cst_76 {dimension_numbers = #tpu.dot_dimension_numbers<[1], [0], [0], [1], [0, 0, 1, 1], [], []>} : vector<16x32xbf16>, vector<32x32xbf16>, vector<16x32xf32> -> vector<16x32xf32>
    %92 = arith.addf %88, %91 : vector<16x32xf32>
    %c4_77 = arith.constant 4 : index
    %c0_78 = arith.constant 0 : index
    %c0_79 = arith.constant 0 : index
    %93 = vector.load %arg6[%c4_77, %c0_78, %c0_79] : memref<6x8x32xbf16, #tpu.memory_space<vmem>>, vector<1x8x32xbf16>
    %94 = vector.shape_cast %93 : vector<1x8x32xbf16> to vector<8x32xbf16>
    %cst_80 = arith.constant dense<0.000000e+00> : vector<16x32xf32>
    %95 = tpu.matmul %83, %94, %cst_80 {dimension_numbers = #tpu.dot_dimension_numbers<[1], [0], [0], [1], [0, 0, 1, 1], [], []>} : vector<16x8xbf16>, vector<8x32xbf16>, vector<16x32xf32> -> vector<16x32xf32>
    %96 = arith.addf %82, %95 : vector<16x32xf32>
    %c4_81 = arith.constant 4 : index
    %c0_82 = arith.constant 0 : index
    %c0_83 = arith.constant 0 : index
    %97 = vector.load %arg7[%c4_81, %c0_82, %c0_83] : memref<6x32x32xbf16, #tpu.memory_space<vmem>>, vector<1x32x32xbf16>
    %98 = vector.shape_cast %97 : vector<1x32x32xbf16> to vector<32x32xbf16>
    %cst_84 = arith.constant dense<0.000000e+00> : vector<16x32xf32>
    %99 = tpu.matmul %84, %98, %cst_84 {dimension_numbers = #tpu.dot_dimension_numbers<[1], [0], [0], [1], [0, 0, 1, 1], [], []>} : vector<16x32xbf16>, vector<32x32xbf16>, vector<16x32xf32> -> vector<16x32xf32>
    %100 = arith.addf %96, %99 : vector<16x32xf32>
    %101 = vector.extract_strided_slice %6 {offsets = [80, 0], sizes = [16, 8], strides = [1, 1]} : vector<96x8xbf16> to vector<16x8xbf16>
    %102 = vector.extract_strided_slice %8 {offsets = [80, 0], sizes = [16, 32], strides = [1, 1]} : vector<96x32xbf16> to vector<16x32xbf16>
    %c5 = arith.constant 5 : index
    %c0_85 = arith.constant 0 : index
    %c0_86 = arith.constant 0 : index
    %103 = vector.load %arg4[%c5, %c0_85, %c0_86] : memref<6x8x32xbf16, #tpu.memory_space<vmem>>, vector<1x8x32xbf16>
    %104 = vector.shape_cast %103 : vector<1x8x32xbf16> to vector<8x32xbf16>
    %cst_87 = arith.constant dense<0.000000e+00> : vector<16x32xf32>
    %105 = tpu.matmul %101, %104, %cst_87 {dimension_numbers = #tpu.dot_dimension_numbers<[1], [0], [0], [1], [0, 0, 1, 1], [], []>} : vector<16x8xbf16>, vector<8x32xbf16>, vector<16x32xf32> -> vector<16x32xf32>
    %106 = arith.addf %92, %105 : vector<16x32xf32>
    %c5_88 = arith.constant 5 : index
    %c0_89 = arith.constant 0 : index
    %c0_90 = arith.constant 0 : index
    %107 = vector.load %arg5[%c5_88, %c0_89, %c0_90] : memref<6x32x32xbf16, #tpu.memory_space<vmem>>, vector<1x32x32xbf16>
    %108 = vector.shape_cast %107 : vector<1x32x32xbf16> to vector<32x32xbf16>
    %cst_91 = arith.constant dense<0.000000e+00> : vector<16x32xf32>
    %109 = tpu.matmul %102, %108, %cst_91 {dimension_numbers = #tpu.dot_dimension_numbers<[1], [0], [0], [1], [0, 0, 1, 1], [], []>} : vector<16x32xbf16>, vector<32x32xbf16>, vector<16x32xf32> -> vector<16x32xf32>
    %110 = arith.addf %106, %109 : vector<16x32xf32>
    %c5_92 = arith.constant 5 : index
    %c0_93 = arith.constant 0 : index
    %c0_94 = arith.constant 0 : index
    %111 = vector.load %arg6[%c5_92, %c0_93, %c0_94] : memref<6x8x32xbf16, #tpu.memory_space<vmem>>, vector<1x8x32xbf16>
    %112 = vector.shape_cast %111 : vector<1x8x32xbf16> to vector<8x32xbf16>
    %cst_95 = arith.constant dense<0.000000e+00> : vector<16x32xf32>
    %113 = tpu.matmul %101, %112, %cst_95 {dimension_numbers = #tpu.dot_dimension_numbers<[1], [0], [0], [1], [0, 0, 1, 1], [], []>} : vector<16x8xbf16>, vector<8x32xbf16>, vector<16x32xf32> -> vector<16x32xf32>
    %114 = arith.addf %100, %113 : vector<16x32xf32>
    %c5_96 = arith.constant 5 : index
    %c0_97 = arith.constant 0 : index
    %c0_98 = arith.constant 0 : index
    %115 = vector.load %arg7[%c5_96, %c0_97, %c0_98] : memref<6x32x32xbf16, #tpu.memory_space<vmem>>, vector<1x32x32xbf16>
    %116 = vector.shape_cast %115 : vector<1x32x32xbf16> to vector<32x32xbf16>
    %cst_99 = arith.constant dense<0.000000e+00> : vector<16x32xf32>
    %117 = tpu.matmul %102, %116, %cst_99 {dimension_numbers = #tpu.dot_dimension_numbers<[1], [0], [0], [1], [0, 0, 1, 1], [], []>} : vector<16x32xbf16>, vector<32x32xbf16>, vector<16x32xf32> -> vector<16x32xf32>
    %118 = arith.addf %114, %117 : vector<16x32xf32>
    %c0_100 = arith.constant 0 : index
    %c0_101 = arith.constant 0 : index
    %119 = vector.load %arg10[%c0_100, %c0_101] : memref<1x32xf32, #tpu.memory_space<vmem>>, vector<1x32xf32>
    %120 = vector.broadcast %119 : vector<1x32xf32> to vector<16x32xf32>
    %121 = arith.addf %110, %120 : vector<16x32xf32>
    %122 = arith.negf %121 : vector<16x32xf32>
    %123 = math.exp %122 : vector<16x32xf32>
    %cst_102 = arith.constant 1.000000e+00 : f32
    %124 = vector.broadcast %cst_102 : f32 to vector<16x32xf32>
    %125 = arith.addf %124, %123 : vector<16x32xf32>
    %126 = arith.divf %124, %125 : vector<16x32xf32>
    %c0_103 = arith.constant 0 : index
    %c0_104 = arith.constant 0 : index
    %127 = vector.load %arg11[%c0_103, %c0_104] : memref<1x32xf32, #tpu.memory_space<vmem>>, vector<1x32xf32>
    %128 = vector.broadcast %127 : vector<1x32xf32> to vector<16x32xf32>
    %129 = arith.addf %118, %128 : vector<16x32xf32>
    %130 = arith.negf %129 : vector<16x32xf32>
    %131 = math.exp %130 : vector<16x32xf32>
    %cst_105 = arith.constant 1.000000e+00 : f32
    %132 = vector.broadcast %cst_105 : f32 to vector<16x32xf32>
    %133 = arith.addf %132, %131 : vector<16x32xf32>
    %134 = arith.divf %132, %133 : vector<16x32xf32>
    %135 = arith.mulf %126, %3 : vector<16x32xf32>
    %136 = arith.truncf %135 : vector<16x32xf32> to vector<16x32xbf16>
    %cst_106 = arith.constant dense<0.000000e+00> : vector<96x32xf32>
    %137 = tpu.matmul %0, %136, %cst_106 {dimension_numbers = #tpu.dot_dimension_numbers<[1], [0], [0], [1], [0, 0, 1, 1], [], []>} : vector<96x16xbf16>, vector<16x32xbf16>, vector<96x32xf32> -> vector<96x32xf32>
    %138 = arith.truncf %137 : vector<96x32xf32> to vector<96x32xbf16>
    %cst_107 = arith.constant 0.000000e+00 : f32
    %139 = vector.broadcast %cst_107 : f32 to vector<16x32xf32>
    %140 = vector.extract_strided_slice %6 {offsets = [0, 0], sizes = [16, 8], strides = [1, 1]} : vector<96x8xbf16> to vector<16x8xbf16>
    %141 = vector.extract_strided_slice %138 {offsets = [0, 0], sizes = [16, 32], strides = [1, 1]} : vector<96x32xbf16> to vector<16x32xbf16>
    %c0_108 = arith.constant 0 : index
    %c0_109 = arith.constant 0 : index
    %c0_110 = arith.constant 0 : index
    %142 = vector.load %arg8[%c0_108, %c0_109, %c0_110] : memref<6x8x32xbf16, #tpu.memory_space<vmem>>, vector<1x8x32xbf16>
    %143 = vector.shape_cast %142 : vector<1x8x32xbf16> to vector<8x32xbf16>
    %cst_111 = arith.constant dense<0.000000e+00> : vector<16x32xf32>
    %144 = tpu.matmul %140, %143, %cst_111 {dimension_numbers = #tpu.dot_dimension_numbers<[1], [0], [0], [1], [0, 0, 1, 1], [], []>} : vector<16x8xbf16>, vector<8x32xbf16>, vector<16x32xf32> -> vector<16x32xf32>
    %145 = arith.addf %139, %144 : vector<16x32xf32>
    %c0_112 = arith.constant 0 : index
    %c0_113 = arith.constant 0 : index
    %c0_114 = arith.constant 0 : index
    %146 = vector.load %arg9[%c0_112, %c0_113, %c0_114] : memref<6x32x32xbf16, #tpu.memory_space<vmem>>, vector<1x32x32xbf16>
    %147 = vector.shape_cast %146 : vector<1x32x32xbf16> to vector<32x32xbf16>
    %cst_115 = arith.constant dense<0.000000e+00> : vector<16x32xf32>
    %148 = tpu.matmul %141, %147, %cst_115 {dimension_numbers = #tpu.dot_dimension_numbers<[1], [0], [0], [1], [0, 0, 1, 1], [], []>} : vector<16x32xbf16>, vector<32x32xbf16>, vector<16x32xf32> -> vector<16x32xf32>
    %149 = arith.addf %145, %148 : vector<16x32xf32>
    %150 = vector.extract_strided_slice %6 {offsets = [16, 0], sizes = [16, 8], strides = [1, 1]} : vector<96x8xbf16> to vector<16x8xbf16>
    %151 = vector.extract_strided_slice %138 {offsets = [16, 0], sizes = [16, 32], strides = [1, 1]} : vector<96x32xbf16> to vector<16x32xbf16>
    %c1_116 = arith.constant 1 : index
    %c0_117 = arith.constant 0 : index
    %c0_118 = arith.constant 0 : index
    %152 = vector.load %arg8[%c1_116, %c0_117, %c0_118] : memref<6x8x32xbf16, #tpu.memory_space<vmem>>, vector<1x8x32xbf16>
    %153 = vector.shape_cast %152 : vector<1x8x32xbf16> to vector<8x32xbf16>
    %cst_119 = arith.constant dense<0.000000e+00> : vector<16x32xf32>
    %154 = tpu.matmul %150, %153, %cst_119 {dimension_numbers = #tpu.dot_dimension_numbers<[1], [0], [0], [1], [0, 0, 1, 1], [], []>} : vector<16x8xbf16>, vector<8x32xbf16>, vector<16x32xf32> -> vector<16x32xf32>
    %155 = arith.addf %149, %154 : vector<16x32xf32>
    %c1_120 = arith.constant 1 : index
    %c0_121 = arith.constant 0 : index
    %c0_122 = arith.constant 0 : index
    %156 = vector.load %arg9[%c1_120, %c0_121, %c0_122] : memref<6x32x32xbf16, #tpu.memory_space<vmem>>, vector<1x32x32xbf16>
    %157 = vector.shape_cast %156 : vector<1x32x32xbf16> to vector<32x32xbf16>
    %cst_123 = arith.constant dense<0.000000e+00> : vector<16x32xf32>
    %158 = tpu.matmul %151, %157, %cst_123 {dimension_numbers = #tpu.dot_dimension_numbers<[1], [0], [0], [1], [0, 0, 1, 1], [], []>} : vector<16x32xbf16>, vector<32x32xbf16>, vector<16x32xf32> -> vector<16x32xf32>
    %159 = arith.addf %155, %158 : vector<16x32xf32>
    %160 = vector.extract_strided_slice %6 {offsets = [32, 0], sizes = [16, 8], strides = [1, 1]} : vector<96x8xbf16> to vector<16x8xbf16>
    %161 = vector.extract_strided_slice %138 {offsets = [32, 0], sizes = [16, 32], strides = [1, 1]} : vector<96x32xbf16> to vector<16x32xbf16>
    %c2_124 = arith.constant 2 : index
    %c0_125 = arith.constant 0 : index
    %c0_126 = arith.constant 0 : index
    %162 = vector.load %arg8[%c2_124, %c0_125, %c0_126] : memref<6x8x32xbf16, #tpu.memory_space<vmem>>, vector<1x8x32xbf16>
    %163 = vector.shape_cast %162 : vector<1x8x32xbf16> to vector<8x32xbf16>
    %cst_127 = arith.constant dense<0.000000e+00> : vector<16x32xf32>
    %164 = tpu.matmul %160, %163, %cst_127 {dimension_numbers = #tpu.dot_dimension_numbers<[1], [0], [0], [1], [0, 0, 1, 1], [], []>} : vector<16x8xbf16>, vector<8x32xbf16>, vector<16x32xf32> -> vector<16x32xf32>
    %165 = arith.addf %159, %164 : vector<16x32xf32>
    %c2_128 = arith.constant 2 : index
    %c0_129 = arith.constant 0 : index
    %c0_130 = arith.constant 0 : index
    %166 = vector.load %arg9[%c2_128, %c0_129, %c0_130] : memref<6x32x32xbf16, #tpu.memory_space<vmem>>, vector<1x32x32xbf16>
    %167 = vector.shape_cast %166 : vector<1x32x32xbf16> to vector<32x32xbf16>
    %cst_131 = arith.constant dense<0.000000e+00> : vector<16x32xf32>
    %168 = tpu.matmul %161, %167, %cst_131 {dimension_numbers = #tpu.dot_dimension_numbers<[1], [0], [0], [1], [0, 0, 1, 1], [], []>} : vector<16x32xbf16>, vector<32x32xbf16>, vector<16x32xf32> -> vector<16x32xf32>
    %169 = arith.addf %165, %168 : vector<16x32xf32>
    %170 = vector.extract_strided_slice %6 {offsets = [48, 0], sizes = [16, 8], strides = [1, 1]} : vector<96x8xbf16> to vector<16x8xbf16>
    %171 = vector.extract_strided_slice %138 {offsets = [48, 0], sizes = [16, 32], strides = [1, 1]} : vector<96x32xbf16> to vector<16x32xbf16>
    %c3_132 = arith.constant 3 : index
    %c0_133 = arith.constant 0 : index
    %c0_134 = arith.constant 0 : index
    %172 = vector.load %arg8[%c3_132, %c0_133, %c0_134] : memref<6x8x32xbf16, #tpu.memory_space<vmem>>, vector<1x8x32xbf16>
    %173 = vector.shape_cast %172 : vector<1x8x32xbf16> to vector<8x32xbf16>
    %cst_135 = arith.constant dense<0.000000e+00> : vector<16x32xf32>
    %174 = tpu.matmul %170, %173, %cst_135 {dimension_numbers = #tpu.dot_dimension_numbers<[1], [0], [0], [1], [0, 0, 1, 1], [], []>} : vector<16x8xbf16>, vector<8x32xbf16>, vector<16x32xf32> -> vector<16x32xf32>
    %175 = arith.addf %169, %174 : vector<16x32xf32>
    %c3_136 = arith.constant 3 : index
    %c0_137 = arith.constant 0 : index
    %c0_138 = arith.constant 0 : index
    %176 = vector.load %arg9[%c3_136, %c0_137, %c0_138] : memref<6x32x32xbf16, #tpu.memory_space<vmem>>, vector<1x32x32xbf16>
    %177 = vector.shape_cast %176 : vector<1x32x32xbf16> to vector<32x32xbf16>
    %cst_139 = arith.constant dense<0.000000e+00> : vector<16x32xf32>
    %178 = tpu.matmul %171, %177, %cst_139 {dimension_numbers = #tpu.dot_dimension_numbers<[1], [0], [0], [1], [0, 0, 1, 1], [], []>} : vector<16x32xbf16>, vector<32x32xbf16>, vector<16x32xf32> -> vector<16x32xf32>
    %179 = arith.addf %175, %178 : vector<16x32xf32>
    %180 = vector.extract_strided_slice %6 {offsets = [64, 0], sizes = [16, 8], strides = [1, 1]} : vector<96x8xbf16> to vector<16x8xbf16>
    %181 = vector.extract_strided_slice %138 {offsets = [64, 0], sizes = [16, 32], strides = [1, 1]} : vector<96x32xbf16> to vector<16x32xbf16>
    %c4_140 = arith.constant 4 : index
    %c0_141 = arith.constant 0 : index
    %c0_142 = arith.constant 0 : index
    %182 = vector.load %arg8[%c4_140, %c0_141, %c0_142] : memref<6x8x32xbf16, #tpu.memory_space<vmem>>, vector<1x8x32xbf16>
    %183 = vector.shape_cast %182 : vector<1x8x32xbf16> to vector<8x32xbf16>
    %cst_143 = arith.constant dense<0.000000e+00> : vector<16x32xf32>
    %184 = tpu.matmul %180, %183, %cst_143 {dimension_numbers = #tpu.dot_dimension_numbers<[1], [0], [0], [1], [0, 0, 1, 1], [], []>} : vector<16x8xbf16>, vector<8x32xbf16>, vector<16x32xf32> -> vector<16x32xf32>
    %185 = arith.addf %179, %184 : vector<16x32xf32>
    %c4_144 = arith.constant 4 : index
    %c0_145 = arith.constant 0 : index
    %c0_146 = arith.constant 0 : index
    %186 = vector.load %arg9[%c4_144, %c0_145, %c0_146] : memref<6x32x32xbf16, #tpu.memory_space<vmem>>, vector<1x32x32xbf16>
    %187 = vector.shape_cast %186 : vector<1x32x32xbf16> to vector<32x32xbf16>
    %cst_147 = arith.constant dense<0.000000e+00> : vector<16x32xf32>
    %188 = tpu.matmul %181, %187, %cst_147 {dimension_numbers = #tpu.dot_dimension_numbers<[1], [0], [0], [1], [0, 0, 1, 1], [], []>} : vector<16x32xbf16>, vector<32x32xbf16>, vector<16x32xf32> -> vector<16x32xf32>
    %189 = arith.addf %185, %188 : vector<16x32xf32>
    %190 = vector.extract_strided_slice %6 {offsets = [80, 0], sizes = [16, 8], strides = [1, 1]} : vector<96x8xbf16> to vector<16x8xbf16>
    %191 = vector.extract_strided_slice %138 {offsets = [80, 0], sizes = [16, 32], strides = [1, 1]} : vector<96x32xbf16> to vector<16x32xbf16>
    %c5_148 = arith.constant 5 : index
    %c0_149 = arith.constant 0 : index
    %c0_150 = arith.constant 0 : index
    %192 = vector.load %arg8[%c5_148, %c0_149, %c0_150] : memref<6x8x32xbf16, #tpu.memory_space<vmem>>, vector<1x8x32xbf16>
    %193 = vector.shape_cast %192 : vector<1x8x32xbf16> to vector<8x32xbf16>
    %cst_151 = arith.constant dense<0.000000e+00> : vector<16x32xf32>
    %194 = tpu.matmul %190, %193, %cst_151 {dimension_numbers = #tpu.dot_dimension_numbers<[1], [0], [0], [1], [0, 0, 1, 1], [], []>} : vector<16x8xbf16>, vector<8x32xbf16>, vector<16x32xf32> -> vector<16x32xf32>
    %195 = arith.addf %189, %194 : vector<16x32xf32>
    %c5_152 = arith.constant 5 : index
    %c0_153 = arith.constant 0 : index
    %c0_154 = arith.constant 0 : index
    %196 = vector.load %arg9[%c5_152, %c0_153, %c0_154] : memref<6x32x32xbf16, #tpu.memory_space<vmem>>, vector<1x32x32xbf16>
    %197 = vector.shape_cast %196 : vector<1x32x32xbf16> to vector<32x32xbf16>
    %cst_155 = arith.constant dense<0.000000e+00> : vector<16x32xf32>
    %198 = tpu.matmul %191, %197, %cst_155 {dimension_numbers = #tpu.dot_dimension_numbers<[1], [0], [0], [1], [0, 0, 1, 1], [], []>} : vector<16x32xbf16>, vector<32x32xbf16>, vector<16x32xf32> -> vector<16x32xf32>
    %199 = arith.addf %195, %198 : vector<16x32xf32>
    %c0_156 = arith.constant 0 : index
    %c0_157 = arith.constant 0 : index
    %200 = vector.load %arg12[%c0_156, %c0_157] : memref<1x32xf32, #tpu.memory_space<vmem>>, vector<1x32xf32>
    %201 = vector.broadcast %200 : vector<1x32xf32> to vector<16x32xf32>
    %202 = arith.addf %199, %201 : vector<16x32xf32>
    %203 = math.tanh %202 : vector<16x32xf32>
    %204 = arith.mulf %134, %3 : vector<16x32xf32>
    %cst_158 = arith.constant 1.000000e+00 : f32
    %205 = vector.broadcast %cst_158 : f32 to vector<16x32xf32>
    %206 = arith.subf %205, %134 : vector<16x32xf32>
    %207 = arith.mulf %206, %203 : vector<16x32xf32>
    %208 = arith.addf %204, %207 : vector<16x32xf32>
    %c0_159 = arith.constant 0 : index
    %c0_160 = arith.constant 0 : index
    %c0_161 = arith.constant 0 : index
    %209 = vector.load %arg22[%c0_159, %c0_160, %c0_161] : memref<2x16x32xf32, #tpu.memory_space<vmem>>, vector<1x16x32xf32>
    %210 = vector.shape_cast %209 : vector<1x16x32xf32> to vector<16x32xf32>
    %211 = vector.shape_cast %208 : vector<16x32xf32> to vector<1x16x32xf32>
    tpu.vector_store %arg22[%c0_159, %c0_160, %c0_161], %211 {strides = array<i32>} : memref<2x16x32xf32, #tpu.memory_space<vmem>>, vector<1x16x32xf32>,
    %212 = arith.truncf %208 : vector<16x32xf32> to vector<16x32xbf16>
    %c1_162 = arith.constant 1 : index
    %c0_163 = arith.constant 0 : index
    %c0_164 = arith.constant 0 : index
    %213 = vector.load %arg2[%c1_162, %c0_163, %c0_164] : memref<2x16x32xf32, #tpu.memory_space<vmem>>, vector<1x16x32xf32>
    %214 = vector.shape_cast %213 : vector<1x16x32xf32> to vector<16x32xf32>
    %215 = arith.truncf %214 : vector<16x32xf32> to vector<16x32xbf16>
    %cst_165 = arith.constant dense<0.000000e+00> : vector<96x32xf32>
    %216 = tpu.matmul %0, %212, %cst_165 {dimension_numbers = #tpu.dot_dimension_numbers<[1], [0], [0], [1], [0, 0, 1, 1], [], []>} : vector<96x16xbf16>, vector<16x32xbf16>, vector<96x32xf32> -> vector<96x32xf32>
    %217 = arith.truncf %216 : vector<96x32xf32> to vector<96x32xbf16>
    %cst_166 = arith.constant dense<0.000000e+00> : vector<96x32xf32>
    %218 = tpu.matmul %0, %215, %cst_166 {dimension_numbers = #tpu.dot_dimension_numbers<[1], [0], [0], [1], [0, 0, 1, 1], [], []>} : vector<96x16xbf16>, vector<16x32xbf16>, vector<96x32xf32> -> vector<96x32xf32>
    %219 = arith.truncf %218 : vector<96x32xf32> to vector<96x32xbf16>
    %cst_167 = arith.constant 0.000000e+00 : f32
    %220 = vector.broadcast %cst_167 : f32 to vector<16x32xf32>
    %cst_168 = arith.constant 0.000000e+00 : f32
    %221 = vector.broadcast %cst_168 : f32 to vector<16x32xf32>
    %222 = vector.extract_strided_slice %217 {offsets = [0, 0], sizes = [16, 32], strides = [1, 1]} : vector<96x32xbf16> to vector<16x32xbf16>
    %223 = vector.extract_strided_slice %219 {offsets = [0, 0], sizes = [16, 32], strides = [1, 1]} : vector<96x32xbf16> to vector<16x32xbf16>
    %c0_169 = arith.constant 0 : index
    %c0_170 = arith.constant 0 : index
    %c0_171 = arith.constant 0 : index
    %224 = vector.load %arg13[%c0_169, %c0_170, %c0_171] : memref<6x32x32xbf16, #tpu.memory_space<vmem>>, vector<1x32x32xbf16>
    %225 = vector.shape_cast %224 : vector<1x32x32xbf16> to vector<32x32xbf16>
    %cst_172 = arith.constant dense<0.000000e+00> : vector<16x32xf32>
    %226 = tpu.matmul %222, %225, %cst_172 {dimension_numbers = #tpu.dot_dimension_numbers<[1], [0], [0], [1], [0, 0, 1, 1], [], []>} : vector<16x32xbf16>, vector<32x32xbf16>, vector<16x32xf32> -> vector<16x32xf32>
    %227 = arith.addf %220, %226 : vector<16x32xf32>
    %c0_173 = arith.constant 0 : index
    %c0_174 = arith.constant 0 : index
    %c0_175 = arith.constant 0 : index
    %228 = vector.load %arg14[%c0_173, %c0_174, %c0_175] : memref<6x32x32xbf16, #tpu.memory_space<vmem>>, vector<1x32x32xbf16>
    %229 = vector.shape_cast %228 : vector<1x32x32xbf16> to vector<32x32xbf16>
    %cst_176 = arith.constant dense<0.000000e+00> : vector<16x32xf32>
    %230 = tpu.matmul %223, %229, %cst_176 {dimension_numbers = #tpu.dot_dimension_numbers<[1], [0], [0], [1], [0, 0, 1, 1], [], []>} : vector<16x32xbf16>, vector<32x32xbf16>, vector<16x32xf32> -> vector<16x32xf32>
    %231 = arith.addf %227, %230 : vector<16x32xf32>
    %c0_177 = arith.constant 0 : index
    %c0_178 = arith.constant 0 : index
    %c0_179 = arith.constant 0 : index
    %232 = vector.load %arg15[%c0_177, %c0_178, %c0_179] : memref<6x32x32xbf16, #tpu.memory_space<vmem>>, vector<1x32x32xbf16>
    %233 = vector.shape_cast %232 : vector<1x32x32xbf16> to vector<32x32xbf16>
    %cst_180 = arith.constant dense<0.000000e+00> : vector<16x32xf32>
    %234 = tpu.matmul %222, %233, %cst_180 {dimension_numbers = #tpu.dot_dimension_numbers<[1], [0], [0], [1], [0, 0, 1, 1], [], []>} : vector<16x32xbf16>, vector<32x32xbf16>, vector<16x32xf32> -> vector<16x32xf32>
    %235 = arith.addf %221, %234 : vector<16x32xf32>
    %c0_181 = arith.constant 0 : index
    %c0_182 = arith.constant 0 : index
    %c0_183 = arith.constant 0 : index
    %236 = vector.load %arg16[%c0_181, %c0_182, %c0_183] : memref<6x32x32xbf16, #tpu.memory_space<vmem>>, vector<1x32x32xbf16>
    %237 = vector.shape_cast %236 : vector<1x32x32xbf16> to vector<32x32xbf16>
    %cst_184 = arith.constant dense<0.000000e+00> : vector<16x32xf32>
    %238 = tpu.matmul %223, %237, %cst_184 {dimension_numbers = #tpu.dot_dimension_numbers<[1], [0], [0], [1], [0, 0, 1, 1], [], []>} : vector<16x32xbf16>, vector<32x32xbf16>, vector<16x32xf32> -> vector<16x32xf32>
    %239 = arith.addf %235, %238 : vector<16x32xf32>
    %240 = vector.extract_strided_slice %217 {offsets = [16, 0], sizes = [16, 32], strides = [1, 1]} : vector<96x32xbf16> to vector<16x32xbf16>
    %241 = vector.extract_strided_slice %219 {offsets = [16, 0], sizes = [16, 32], strides = [1, 1]} : vector<96x32xbf16> to vector<16x32xbf16>
    %c1_185 = arith.constant 1 : index
    %c0_186 = arith.constant 0 : index
    %c0_187 = arith.constant 0 : index
    %242 = vector.load %arg13[%c1_185, %c0_186, %c0_187] : memref<6x32x32xbf16, #tpu.memory_space<vmem>>, vector<1x32x32xbf16>
    %243 = vector.shape_cast %242 : vector<1x32x32xbf16> to vector<32x32xbf16>
    %cst_188 = arith.constant dense<0.000000e+00> : vector<16x32xf32>
    %244 = tpu.matmul %240, %243, %cst_188 {dimension_numbers = #tpu.dot_dimension_numbers<[1], [0], [0], [1], [0, 0, 1, 1], [], []>} : vector<16x32xbf16>, vector<32x32xbf16>, vector<16x32xf32> -> vector<16x32xf32>
    %245 = arith.addf %231, %244 : vector<16x32xf32>
    %c1_189 = arith.constant 1 : index
    %c0_190 = arith.constant 0 : index
    %c0_191 = arith.constant 0 : index
    %246 = vector.load %arg14[%c1_189, %c0_190, %c0_191] : memref<6x32x32xbf16, #tpu.memory_space<vmem>>, vector<1x32x32xbf16>
    %247 = vector.shape_cast %246 : vector<1x32x32xbf16> to vector<32x32xbf16>
    %cst_192 = arith.constant dense<0.000000e+00> : vector<16x32xf32>
    %248 = tpu.matmul %241, %247, %cst_192 {dimension_numbers = #tpu.dot_dimension_numbers<[1], [0], [0], [1], [0, 0, 1, 1], [], []>} : vector<16x32xbf16>, vector<32x32xbf16>, vector<16x32xf32> -> vector<16x32xf32>
    %249 = arith.addf %245, %248 : vector<16x32xf32>
    %c1_193 = arith.constant 1 : index
    %c0_194 = arith.constant 0 : index
    %c0_195 = arith.constant 0 : index
    %250 = vector.load %arg15[%c1_193, %c0_194, %c0_195] : memref<6x32x32xbf16, #tpu.memory_space<vmem>>, vector<1x32x32xbf16>
    %251 = vector.shape_cast %250 : vector<1x32x32xbf16> to vector<32x32xbf16>
    %cst_196 = arith.constant dense<0.000000e+00> : vector<16x32xf32>
    %252 = tpu.matmul %240, %251, %cst_196 {dimension_numbers = #tpu.dot_dimension_numbers<[1], [0], [0], [1], [0, 0, 1, 1], [], []>} : vector<16x32xbf16>, vector<32x32xbf16>, vector<16x32xf32> -> vector<16x32xf32>
    %253 = arith.addf %239, %252 : vector<16x32xf32>
    %c1_197 = arith.constant 1 : index
    %c0_198 = arith.constant 0 : index
    %c0_199 = arith.constant 0 : index
    %254 = vector.load %arg16[%c1_197, %c0_198, %c0_199] : memref<6x32x32xbf16, #tpu.memory_space<vmem>>, vector<1x32x32xbf16>
    %255 = vector.shape_cast %254 : vector<1x32x32xbf16> to vector<32x32xbf16>
    %cst_200 = arith.constant dense<0.000000e+00> : vector<16x32xf32>
    %256 = tpu.matmul %241, %255, %cst_200 {dimension_numbers = #tpu.dot_dimension_numbers<[1], [0], [0], [1], [0, 0, 1, 1], [], []>} : vector<16x32xbf16>, vector<32x32xbf16>, vector<16x32xf32> -> vector<16x32xf32>
    %257 = arith.addf %253, %256 : vector<16x32xf32>
    %258 = vector.extract_strided_slice %217 {offsets = [32, 0], sizes = [16, 32], strides = [1, 1]} : vector<96x32xbf16> to vector<16x32xbf16>
    %259 = vector.extract_strided_slice %219 {offsets = [32, 0], sizes = [16, 32], strides = [1, 1]} : vector<96x32xbf16> to vector<16x32xbf16>
    %c2_201 = arith.constant 2 : index
    %c0_202 = arith.constant 0 : index
    %c0_203 = arith.constant 0 : index
    %260 = vector.load %arg13[%c2_201, %c0_202, %c0_203] : memref<6x32x32xbf16, #tpu.memory_space<vmem>>, vector<1x32x32xbf16>
    %261 = vector.shape_cast %260 : vector<1x32x32xbf16> to vector<32x32xbf16>
    %cst_204 = arith.constant dense<0.000000e+00> : vector<16x32xf32>
    %262 = tpu.matmul %258, %261, %cst_204 {dimension_numbers = #tpu.dot_dimension_numbers<[1], [0], [0], [1], [0, 0, 1, 1], [], []>} : vector<16x32xbf16>, vector<32x32xbf16>, vector<16x32xf32> -> vector<16x32xf32>
    %263 = arith.addf %249, %262 : vector<16x32xf32>
    %c2_205 = arith.constant 2 : index
    %c0_206 = arith.constant 0 : index
    %c0_207 = arith.constant 0 : index
    %264 = vector.load %arg14[%c2_205, %c0_206, %c0_207] : memref<6x32x32xbf16, #tpu.memory_space<vmem>>, vector<1x32x32xbf16>
    %265 = vector.shape_cast %264 : vector<1x32x32xbf16> to vector<32x32xbf16>
    %cst_208 = arith.constant dense<0.000000e+00> : vector<16x32xf32>
    %266 = tpu.matmul %259, %265, %cst_208 {dimension_numbers = #tpu.dot_dimension_numbers<[1], [0], [0], [1], [0, 0, 1, 1], [], []>} : vector<16x32xbf16>, vector<32x32xbf16>, vector<16x32xf32> -> vector<16x32xf32>
    %267 = arith.addf %263, %266 : vector<16x32xf32>
    %c2_209 = arith.constant 2 : index
    %c0_210 = arith.constant 0 : index
    %c0_211 = arith.constant 0 : index
    %268 = vector.load %arg15[%c2_209, %c0_210, %c0_211] : memref<6x32x32xbf16, #tpu.memory_space<vmem>>, vector<1x32x32xbf16>
    %269 = vector.shape_cast %268 : vector<1x32x32xbf16> to vector<32x32xbf16>
    %cst_212 = arith.constant dense<0.000000e+00> : vector<16x32xf32>
    %270 = tpu.matmul %258, %269, %cst_212 {dimension_numbers = #tpu.dot_dimension_numbers<[1], [0], [0], [1], [0, 0, 1, 1], [], []>} : vector<16x32xbf16>, vector<32x32xbf16>, vector<16x32xf32> -> vector<16x32xf32>
    %271 = arith.addf %257, %270 : vector<16x32xf32>
    %c2_213 = arith.constant 2 : index
    %c0_214 = arith.constant 0 : index
    %c0_215 = arith.constant 0 : index
    %272 = vector.load %arg16[%c2_213, %c0_214, %c0_215] : memref<6x32x32xbf16, #tpu.memory_space<vmem>>, vector<1x32x32xbf16>
    %273 = vector.shape_cast %272 : vector<1x32x32xbf16> to vector<32x32xbf16>
    %cst_216 = arith.constant dense<0.000000e+00> : vector<16x32xf32>
    %274 = tpu.matmul %259, %273, %cst_216 {dimension_numbers = #tpu.dot_dimension_numbers<[1], [0], [0], [1], [0, 0, 1, 1], [], []>} : vector<16x32xbf16>, vector<32x32xbf16>, vector<16x32xf32> -> vector<16x32xf32>
    %275 = arith.addf %271, %274 : vector<16x32xf32>
    %276 = vector.extract_strided_slice %217 {offsets = [48, 0], sizes = [16, 32], strides = [1, 1]} : vector<96x32xbf16> to vector<16x32xbf16>
    %277 = vector.extract_strided_slice %219 {offsets = [48, 0], sizes = [16, 32], strides = [1, 1]} : vector<96x32xbf16> to vector<16x32xbf16>
    %c3_217 = arith.constant 3 : index
    %c0_218 = arith.constant 0 : index
    %c0_219 = arith.constant 0 : index
    %278 = vector.load %arg13[%c3_217, %c0_218, %c0_219] : memref<6x32x32xbf16, #tpu.memory_space<vmem>>, vector<1x32x32xbf16>
    %279 = vector.shape_cast %278 : vector<1x32x32xbf16> to vector<32x32xbf16>
    %cst_220 = arith.constant dense<0.000000e+00> : vector<16x32xf32>
    %280 = tpu.matmul %276, %279, %cst_220 {dimension_numbers = #tpu.dot_dimension_numbers<[1], [0], [0], [1], [0, 0, 1, 1], [], []>} : vector<16x32xbf16>, vector<32x32xbf16>, vector<16x32xf32> -> vector<16x32xf32>
    %281 = arith.addf %267, %280 : vector<16x32xf32>
    %c3_221 = arith.constant 3 : index
    %c0_222 = arith.constant 0 : index
    %c0_223 = arith.constant 0 : index
    %282 = vector.load %arg14[%c3_221, %c0_222, %c0_223] : memref<6x32x32xbf16, #tpu.memory_space<vmem>>, vector<1x32x32xbf16>
    %283 = vector.shape_cast %282 : vector<1x32x32xbf16> to vector<32x32xbf16>
    %cst_224 = arith.constant dense<0.000000e+00> : vector<16x32xf32>
    %284 = tpu.matmul %277, %283, %cst_224 {dimension_numbers = #tpu.dot_dimension_numbers<[1], [0], [0], [1], [0, 0, 1, 1], [], []>} : vector<16x32xbf16>, vector<32x32xbf16>, vector<16x32xf32> -> vector<16x32xf32>
    %285 = arith.addf %281, %284 : vector<16x32xf32>
    %c3_225 = arith.constant 3 : index
    %c0_226 = arith.constant 0 : index
    %c0_227 = arith.constant 0 : index
    %286 = vector.load %arg15[%c3_225, %c0_226, %c0_227] : memref<6x32x32xbf16, #tpu.memory_space<vmem>>, vector<1x32x32xbf16>
    %287 = vector.shape_cast %286 : vector<1x32x32xbf16> to vector<32x32xbf16>
    %cst_228 = arith.constant dense<0.000000e+00> : vector<16x32xf32>
    %288 = tpu.matmul %276, %287, %cst_228 {dimension_numbers = #tpu.dot_dimension_numbers<[1], [0], [0], [1], [0, 0, 1, 1], [], []>} : vector<16x32xbf16>, vector<32x32xbf16>, vector<16x32xf32> -> vector<16x32xf32>
    %289 = arith.addf %275, %288 : vector<16x32xf32>
    %c3_229 = arith.constant 3 : index
    %c0_230 = arith.constant 0 : index
    %c0_231 = arith.constant 0 : index
    %290 = vector.load %arg16[%c3_229, %c0_230, %c0_231] : memref<6x32x32xbf16, #tpu.memory_space<vmem>>, vector<1x32x32xbf16>
    %291 = vector.shape_cast %290 : vector<1x32x32xbf16> to vector<32x32xbf16>
    %cst_232 = arith.constant dense<0.000000e+00> : vector<16x32xf32>
    %292 = tpu.matmul %277, %291, %cst_232 {dimension_numbers = #tpu.dot_dimension_numbers<[1], [0], [0], [1], [0, 0, 1, 1], [], []>} : vector<16x32xbf16>, vector<32x32xbf16>, vector<16x32xf32> -> vector<16x32xf32>
    %293 = arith.addf %289, %292 : vector<16x32xf32>
    %294 = vector.extract_strided_slice %217 {offsets = [64, 0], sizes = [16, 32], strides = [1, 1]} : vector<96x32xbf16> to vector<16x32xbf16>
    %295 = vector.extract_strided_slice %219 {offsets = [64, 0], sizes = [16, 32], strides = [1, 1]} : vector<96x32xbf16> to vector<16x32xbf16>
    %c4_233 = arith.constant 4 : index
    %c0_234 = arith.constant 0 : index
    %c0_235 = arith.constant 0 : index
    %296 = vector.load %arg13[%c4_233, %c0_234, %c0_235] : memref<6x32x32xbf16, #tpu.memory_space<vmem>>, vector<1x32x32xbf16>
    %297 = vector.shape_cast %296 : vector<1x32x32xbf16> to vector<32x32xbf16>
    %cst_236 = arith.constant dense<0.000000e+00> : vector<16x32xf32>
    %298 = tpu.matmul %294, %297, %cst_236 {dimension_numbers = #tpu.dot_dimension_numbers<[1], [0], [0], [1], [0, 0, 1, 1], [], []>} : vector<16x32xbf16>, vector<32x32xbf16>, vector<16x32xf32> -> vector<16x32xf32>
    %299 = arith.addf %285, %298 : vector<16x32xf32>
    %c4_237 = arith.constant 4 : index
    %c0_238 = arith.constant 0 : index
    %c0_239 = arith.constant 0 : index
    %300 = vector.load %arg14[%c4_237, %c0_238, %c0_239] : memref<6x32x32xbf16, #tpu.memory_space<vmem>>, vector<1x32x32xbf16>
    %301 = vector.shape_cast %300 : vector<1x32x32xbf16> to vector<32x32xbf16>
    %cst_240 = arith.constant dense<0.000000e+00> : vector<16x32xf32>
    %302 = tpu.matmul %295, %301, %cst_240 {dimension_numbers = #tpu.dot_dimension_numbers<[1], [0], [0], [1], [0, 0, 1, 1], [], []>} : vector<16x32xbf16>, vector<32x32xbf16>, vector<16x32xf32> -> vector<16x32xf32>
    %303 = arith.addf %299, %302 : vector<16x32xf32>
    %c4_241 = arith.constant 4 : index
    %c0_242 = arith.constant 0 : index
    %c0_243 = arith.constant 0 : index
    %304 = vector.load %arg15[%c4_241, %c0_242, %c0_243] : memref<6x32x32xbf16, #tpu.memory_space<vmem>>, vector<1x32x32xbf16>
    %305 = vector.shape_cast %304 : vector<1x32x32xbf16> to vector<32x32xbf16>
    %cst_244 = arith.constant dense<0.000000e+00> : vector<16x32xf32>
    %306 = tpu.matmul %294, %305, %cst_244 {dimension_numbers = #tpu.dot_dimension_numbers<[1], [0], [0], [1], [0, 0, 1, 1], [], []>} : vector<16x32xbf16>, vector<32x32xbf16>, vector<16x32xf32> -> vector<16x32xf32>
    %307 = arith.addf %293, %306 : vector<16x32xf32>
    %c4_245 = arith.constant 4 : index
    %c0_246 = arith.constant 0 : index
    %c0_247 = arith.constant 0 : index
    %308 = vector.load %arg16[%c4_245, %c0_246, %c0_247] : memref<6x32x32xbf16, #tpu.memory_space<vmem>>, vector<1x32x32xbf16>
    %309 = vector.shape_cast %308 : vector<1x32x32xbf16> to vector<32x32xbf16>
    %cst_248 = arith.constant dense<0.000000e+00> : vector<16x32xf32>
    %310 = tpu.matmul %295, %309, %cst_248 {dimension_numbers = #tpu.dot_dimension_numbers<[1], [0], [0], [1], [0, 0, 1, 1], [], []>} : vector<16x32xbf16>, vector<32x32xbf16>, vector<16x32xf32> -> vector<16x32xf32>
    %311 = arith.addf %307, %310 : vector<16x32xf32>
    %312 = vector.extract_strided_slice %217 {offsets = [80, 0], sizes = [16, 32], strides = [1, 1]} : vector<96x32xbf16> to vector<16x32xbf16>
    %313 = vector.extract_strided_slice %219 {offsets = [80, 0], sizes = [16, 32], strides = [1, 1]} : vector<96x32xbf16> to vector<16x32xbf16>
    %c5_249 = arith.constant 5 : index
    %c0_250 = arith.constant 0 : index
    %c0_251 = arith.constant 0 : index
    %314 = vector.load %arg13[%c5_249, %c0_250, %c0_251] : memref<6x32x32xbf16, #tpu.memory_space<vmem>>, vector<1x32x32xbf16>
    %315 = vector.shape_cast %314 : vector<1x32x32xbf16> to vector<32x32xbf16>
    %cst_252 = arith.constant dense<0.000000e+00> : vector<16x32xf32>
    %316 = tpu.matmul %312, %315, %cst_252 {dimension_numbers = #tpu.dot_dimension_numbers<[1], [0], [0], [1], [0, 0, 1, 1], [], []>} : vector<16x32xbf16>, vector<32x32xbf16>, vector<16x32xf32> -> vector<16x32xf32>
    %317 = arith.addf %303, %316 : vector<16x32xf32>
    %c5_253 = arith.constant 5 : index
    %c0_254 = arith.constant 0 : index
    %c0_255 = arith.constant 0 : index
    %318 = vector.load %arg14[%c5_253, %c0_254, %c0_255] : memref<6x32x32xbf16, #tpu.memory_space<vmem>>, vector<1x32x32xbf16>
    %319 = vector.shape_cast %318 : vector<1x32x32xbf16> to vector<32x32xbf16>
    %cst_256 = arith.constant dense<0.000000e+00> : vector<16x32xf32>
    %320 = tpu.matmul %313, %319, %cst_256 {dimension_numbers = #tpu.dot_dimension_numbers<[1], [0], [0], [1], [0, 0, 1, 1], [], []>} : vector<16x32xbf16>, vector<32x32xbf16>, vector<16x32xf32> -> vector<16x32xf32>
    %321 = arith.addf %317, %320 : vector<16x32xf32>
    %c5_257 = arith.constant 5 : index
    %c0_258 = arith.constant 0 : index
    %c0_259 = arith.constant 0 : index
    %322 = vector.load %arg15[%c5_257, %c0_258, %c0_259] : memref<6x32x32xbf16, #tpu.memory_space<vmem>>, vector<1x32x32xbf16>
    %323 = vector.shape_cast %322 : vector<1x32x32xbf16> to vector<32x32xbf16>
    %cst_260 = arith.constant dense<0.000000e+00> : vector<16x32xf32>
    %324 = tpu.matmul %312, %323, %cst_260 {dimension_numbers = #tpu.dot_dimension_numbers<[1], [0], [0], [1], [0, 0, 1, 1], [], []>} : vector<16x32xbf16>, vector<32x32xbf16>, vector<16x32xf32> -> vector<16x32xf32>
    %325 = arith.addf %311, %324 : vector<16x32xf32>
    %c5_261 = arith.constant 5 : index
    %c0_262 = arith.constant 0 : index
    %c0_263 = arith.constant 0 : index
    %326 = vector.load %arg16[%c5_261, %c0_262, %c0_263] : memref<6x32x32xbf16, #tpu.memory_space<vmem>>, vector<1x32x32xbf16>
    %327 = vector.shape_cast %326 : vector<1x32x32xbf16> to vector<32x32xbf16>
    %cst_264 = arith.constant dense<0.000000e+00> : vector<16x32xf32>
    %328 = tpu.matmul %313, %327, %cst_264 {dimension_numbers = #tpu.dot_dimension_numbers<[1], [0], [0], [1], [0, 0, 1, 1], [], []>} : vector<16x32xbf16>, vector<32x32xbf16>, vector<16x32xf32> -> vector<16x32xf32>
    %329 = arith.addf %325, %328 : vector<16x32xf32>
    %c0_265 = arith.constant 0 : index
    %c0_266 = arith.constant 0 : index
    %330 = vector.load %arg19[%c0_265, %c0_266] : memref<1x32xf32, #tpu.memory_space<vmem>>, vector<1x32xf32>
    %331 = vector.broadcast %330 : vector<1x32xf32> to vector<16x32xf32>
    %332 = arith.addf %321, %331 : vector<16x32xf32>
    %333 = arith.negf %332 : vector<16x32xf32>
    %334 = math.exp %333 : vector<16x32xf32>
    %cst_267 = arith.constant 1.000000e+00 : f32
    %335 = vector.broadcast %cst_267 : f32 to vector<16x32xf32>
    %336 = arith.addf %335, %334 : vector<16x32xf32>
    %337 = arith.divf %335, %336 : vector<16x32xf32>
    %c0_268 = arith.constant 0 : index
    %c0_269 = arith.constant 0 : index
    %338 = vector.load %arg20[%c0_268, %c0_269] : memref<1x32xf32, #tpu.memory_space<vmem>>, vector<1x32xf32>
    %339 = vector.broadcast %338 : vector<1x32xf32> to vector<16x32xf32>
    %340 = arith.addf %329, %339 : vector<16x32xf32>
    %341 = arith.negf %340 : vector<16x32xf32>
    %342 = math.exp %341 : vector<16x32xf32>
    %cst_270 = arith.constant 1.000000e+00 : f32
    %343 = vector.broadcast %cst_270 : f32 to vector<16x32xf32>
    %344 = arith.addf %343, %342 : vector<16x32xf32>
    %345 = arith.divf %343, %344 : vector<16x32xf32>
    %346 = arith.mulf %337, %214 : vector<16x32xf32>
    %347 = arith.truncf %346 : vector<16x32xf32> to vector<16x32xbf16>
    %cst_271 = arith.constant dense<0.000000e+00> : vector<96x32xf32>
    %348 = tpu.matmul %0, %347, %cst_271 {dimension_numbers = #tpu.dot_dimension_numbers<[1], [0], [0], [1], [0, 0, 1, 1], [], []>} : vector<96x16xbf16>, vector<16x32xbf16>, vector<96x32xf32> -> vector<96x32xf32>
    %349 = arith.truncf %348 : vector<96x32xf32> to vector<96x32xbf16>
    %cst_272 = arith.constant 0.000000e+00 : f32
    %350 = vector.broadcast %cst_272 : f32 to vector<16x32xf32>
    %351 = vector.extract_strided_slice %217 {offsets = [0, 0], sizes = [16, 32], strides = [1, 1]} : vector<96x32xbf16> to vector<16x32xbf16>
    %352 = vector.extract_strided_slice %349 {offsets = [0, 0], sizes = [16, 32], strides = [1, 1]} : vector<96x32xbf16> to vector<16x32xbf16>
    %c0_273 = arith.constant 0 : index
    %c0_274 = arith.constant 0 : index
    %c0_275 = arith.constant 0 : index
    %353 = vector.load %arg17[%c0_273, %c0_274, %c0_275] : memref<6x32x32xbf16, #tpu.memory_space<vmem>>, vector<1x32x32xbf16>
    %354 = vector.shape_cast %353 : vector<1x32x32xbf16> to vector<32x32xbf16>
    %cst_276 = arith.constant dense<0.000000e+00> : vector<16x32xf32>
    %355 = tpu.matmul %351, %354, %cst_276 {dimension_numbers = #tpu.dot_dimension_numbers<[1], [0], [0], [1], [0, 0, 1, 1], [], []>} : vector<16x32xbf16>, vector<32x32xbf16>, vector<16x32xf32> -> vector<16x32xf32>
    %356 = arith.addf %350, %355 : vector<16x32xf32>
    %c0_277 = arith.constant 0 : index
    %c0_278 = arith.constant 0 : index
    %c0_279 = arith.constant 0 : index
    %357 = vector.load %arg18[%c0_277, %c0_278, %c0_279] : memref<6x32x32xbf16, #tpu.memory_space<vmem>>, vector<1x32x32xbf16>
    %358 = vector.shape_cast %357 : vector<1x32x32xbf16> to vector<32x32xbf16>
    %cst_280 = arith.constant dense<0.000000e+00> : vector<16x32xf32>
    %359 = tpu.matmul %352, %358, %cst_280 {dimension_numbers = #tpu.dot_dimension_numbers<[1], [0], [0], [1], [0, 0, 1, 1], [], []>} : vector<16x32xbf16>, vector<32x32xbf16>, vector<16x32xf32> -> vector<16x32xf32>
    %360 = arith.addf %356, %359 : vector<16x32xf32>
    %361 = vector.extract_strided_slice %217 {offsets = [16, 0], sizes = [16, 32], strides = [1, 1]} : vector<96x32xbf16> to vector<16x32xbf16>
    %362 = vector.extract_strided_slice %349 {offsets = [16, 0], sizes = [16, 32], strides = [1, 1]} : vector<96x32xbf16> to vector<16x32xbf16>
    %c1_281 = arith.constant 1 : index
    %c0_282 = arith.constant 0 : index
    %c0_283 = arith.constant 0 : index
    %363 = vector.load %arg17[%c1_281, %c0_282, %c0_283] : memref<6x32x32xbf16, #tpu.memory_space<vmem>>, vector<1x32x32xbf16>
    %364 = vector.shape_cast %363 : vector<1x32x32xbf16> to vector<32x32xbf16>
    %cst_284 = arith.constant dense<0.000000e+00> : vector<16x32xf32>
    %365 = tpu.matmul %361, %364, %cst_284 {dimension_numbers = #tpu.dot_dimension_numbers<[1], [0], [0], [1], [0, 0, 1, 1], [], []>} : vector<16x32xbf16>, vector<32x32xbf16>, vector<16x32xf32> -> vector<16x32xf32>
    %366 = arith.addf %360, %365 : vector<16x32xf32>
    %c1_285 = arith.constant 1 : index
    %c0_286 = arith.constant 0 : index
    %c0_287 = arith.constant 0 : index
    %367 = vector.load %arg18[%c1_285, %c0_286, %c0_287] : memref<6x32x32xbf16, #tpu.memory_space<vmem>>, vector<1x32x32xbf16>
    %368 = vector.shape_cast %367 : vector<1x32x32xbf16> to vector<32x32xbf16>
    %cst_288 = arith.constant dense<0.000000e+00> : vector<16x32xf32>
    %369 = tpu.matmul %362, %368, %cst_288 {dimension_numbers = #tpu.dot_dimension_numbers<[1], [0], [0], [1], [0, 0, 1, 1], [], []>} : vector<16x32xbf16>, vector<32x32xbf16>, vector<16x32xf32> -> vector<16x32xf32>
    %370 = arith.addf %366, %369 : vector<16x32xf32>
    %371 = vector.extract_strided_slice %217 {offsets = [32, 0], sizes = [16, 32], strides = [1, 1]} : vector<96x32xbf16> to vector<16x32xbf16>
    %372 = vector.extract_strided_slice %349 {offsets = [32, 0], sizes = [16, 32], strides = [1, 1]} : vector<96x32xbf16> to vector<16x32xbf16>
    %c2_289 = arith.constant 2 : index
    %c0_290 = arith.constant 0 : index
    %c0_291 = arith.constant 0 : index
    %373 = vector.load %arg17[%c2_289, %c0_290, %c0_291] : memref<6x32x32xbf16, #tpu.memory_space<vmem>>, vector<1x32x32xbf16>
    %374 = vector.shape_cast %373 : vector<1x32x32xbf16> to vector<32x32xbf16>
    %cst_292 = arith.constant dense<0.000000e+00> : vector<16x32xf32>
    %375 = tpu.matmul %371, %374, %cst_292 {dimension_numbers = #tpu.dot_dimension_numbers<[1], [0], [0], [1], [0, 0, 1, 1], [], []>} : vector<16x32xbf16>, vector<32x32xbf16>, vector<16x32xf32> -> vector<16x32xf32>
    %376 = arith.addf %370, %375 : vector<16x32xf32>
    %c2_293 = arith.constant 2 : index
    %c0_294 = arith.constant 0 : index
    %c0_295 = arith.constant 0 : index
    %377 = vector.load %arg18[%c2_293, %c0_294, %c0_295] : memref<6x32x32xbf16, #tpu.memory_space<vmem>>, vector<1x32x32xbf16>
    %378 = vector.shape_cast %377 : vector<1x32x32xbf16> to vector<32x32xbf16>
    %cst_296 = arith.constant dense<0.000000e+00> : vector<16x32xf32>
    %379 = tpu.matmul %372, %378, %cst_296 {dimension_numbers = #tpu.dot_dimension_numbers<[1], [0], [0], [1], [0, 0, 1, 1], [], []>} : vector<16x32xbf16>, vector<32x32xbf16>, vector<16x32xf32> -> vector<16x32xf32>
    %380 = arith.addf %376, %379 : vector<16x32xf32>
    %381 = vector.extract_strided_slice %217 {offsets = [48, 0], sizes = [16, 32], strides = [1, 1]} : vector<96x32xbf16> to vector<16x32xbf16>
    %382 = vector.extract_strided_slice %349 {offsets = [48, 0], sizes = [16, 32], strides = [1, 1]} : vector<96x32xbf16> to vector<16x32xbf16>
    %c3_297 = arith.constant 3 : index
    %c0_298 = arith.constant 0 : index
    %c0_299 = arith.constant 0 : index
    %383 = vector.load %arg17[%c3_297, %c0_298, %c0_299] : memref<6x32x32xbf16, #tpu.memory_space<vmem>>, vector<1x32x32xbf16>
    %384 = vector.shape_cast %383 : vector<1x32x32xbf16> to vector<32x32xbf16>
    %cst_300 = arith.constant dense<0.000000e+00> : vector<16x32xf32>
    %385 = tpu.matmul %381, %384, %cst_300 {dimension_numbers = #tpu.dot_dimension_numbers<[1], [0], [0], [1], [0, 0, 1, 1], [], []>} : vector<16x32xbf16>, vector<32x32xbf16>, vector<16x32xf32> -> vector<16x32xf32>
    %386 = arith.addf %380, %385 : vector<16x32xf32>
    %c3_301 = arith.constant 3 : index
    %c0_302 = arith.constant 0 : index
    %c0_303 = arith.constant 0 : index
    %387 = vector.load %arg18[%c3_301, %c0_302, %c0_303] : memref<6x32x32xbf16, #tpu.memory_space<vmem>>, vector<1x32x32xbf16>
    %388 = vector.shape_cast %387 : vector<1x32x32xbf16> to vector<32x32xbf16>
    %cst_304 = arith.constant dense<0.000000e+00> : vector<16x32xf32>
    %389 = tpu.matmul %382, %388, %cst_304 {dimension_numbers = #tpu.dot_dimension_numbers<[1], [0], [0], [1], [0, 0, 1, 1], [], []>} : vector<16x32xbf16>, vector<32x32xbf16>, vector<16x32xf32> -> vector<16x32xf32>
    %390 = arith.addf %386, %389 : vector<16x32xf32>
    %391 = vector.extract_strided_slice %217 {offsets = [64, 0], sizes = [16, 32], strides = [1, 1]} : vector<96x32xbf16> to vector<16x32xbf16>
    %392 = vector.extract_strided_slice %349 {offsets = [64, 0], sizes = [16, 32], strides = [1, 1]} : vector<96x32xbf16> to vector<16x32xbf16>
    %c4_305 = arith.constant 4 : index
    %c0_306 = arith.constant 0 : index
    %c0_307 = arith.constant 0 : index
    %393 = vector.load %arg17[%c4_305, %c0_306, %c0_307] : memref<6x32x32xbf16, #tpu.memory_space<vmem>>, vector<1x32x32xbf16>
    %394 = vector.shape_cast %393 : vector<1x32x32xbf16> to vector<32x32xbf16>
    %cst_308 = arith.constant dense<0.000000e+00> : vector<16x32xf32>
    %395 = tpu.matmul %391, %394, %cst_308 {dimension_numbers = #tpu.dot_dimension_numbers<[1], [0], [0], [1], [0, 0, 1, 1], [], []>} : vector<16x32xbf16>, vector<32x32xbf16>, vector<16x32xf32> -> vector<16x32xf32>
    %396 = arith.addf %390, %395 : vector<16x32xf32>
    %c4_309 = arith.constant 4 : index
    %c0_310 = arith.constant 0 : index
    %c0_311 = arith.constant 0 : index
    %397 = vector.load %arg18[%c4_309, %c0_310, %c0_311] : memref<6x32x32xbf16, #tpu.memory_space<vmem>>, vector<1x32x32xbf16>
    %398 = vector.shape_cast %397 : vector<1x32x32xbf16> to vector<32x32xbf16>
    %cst_312 = arith.constant dense<0.000000e+00> : vector<16x32xf32>
    %399 = tpu.matmul %392, %398, %cst_312 {dimension_numbers = #tpu.dot_dimension_numbers<[1], [0], [0], [1], [0, 0, 1, 1], [], []>} : vector<16x32xbf16>, vector<32x32xbf16>, vector<16x32xf32> -> vector<16x32xf32>
    %400 = arith.addf %396, %399 : vector<16x32xf32>
    %401 = vector.extract_strided_slice %217 {offsets = [80, 0], sizes = [16, 32], strides = [1, 1]} : vector<96x32xbf16> to vector<16x32xbf16>
    %402 = vector.extract_strided_slice %349 {offsets = [80, 0], sizes = [16, 32], strides = [1, 1]} : vector<96x32xbf16> to vector<16x32xbf16>
    %c5_313 = arith.constant 5 : index
    %c0_314 = arith.constant 0 : index
    %c0_315 = arith.constant 0 : index
    %403 = vector.load %arg17[%c5_313, %c0_314, %c0_315] : memref<6x32x32xbf16, #tpu.memory_space<vmem>>, vector<1x32x32xbf16>
    %404 = vector.shape_cast %403 : vector<1x32x32xbf16> to vector<32x32xbf16>
    %cst_316 = arith.constant dense<0.000000e+00> : vector<16x32xf32>
    %405 = tpu.matmul %401, %404, %cst_316 {dimension_numbers = #tpu.dot_dimension_numbers<[1], [0], [0], [1], [0, 0, 1, 1], [], []>} : vector<16x32xbf16>, vector<32x32xbf16>, vector<16x32xf32> -> vector<16x32xf32>
    %406 = arith.addf %400, %405 : vector<16x32xf32>
    %c5_317 = arith.constant 5 : index
    %c0_318 = arith.constant 0 : index
    %c0_319 = arith.constant 0 : index
    %407 = vector.load %arg18[%c5_317, %c0_318, %c0_319] : memref<6x32x32xbf16, #tpu.memory_space<vmem>>, vector<1x32x32xbf16>
    %408 = vector.shape_cast %407 : vector<1x32x32xbf16> to vector<32x32xbf16>
    %cst_320 = arith.constant dense<0.000000e+00> : vector<16x32xf32>
    %409 = tpu.matmul %402, %408, %cst_320 {dimension_numbers = #tpu.dot_dimension_numbers<[1], [0], [0], [1], [0, 0, 1, 1], [], []>} : vector<16x32xbf16>, vector<32x32xbf16>, vector<16x32xf32> -> vector<16x32xf32>
    %410 = arith.addf %406, %409 : vector<16x32xf32>
    %c0_321 = arith.constant 0 : index
    %c0_322 = arith.constant 0 : index
    %411 = vector.load %arg21[%c0_321, %c0_322] : memref<1x32xf32, #tpu.memory_space<vmem>>, vector<1x32xf32>
    %412 = vector.broadcast %411 : vector<1x32xf32> to vector<16x32xf32>
    %413 = arith.addf %410, %412 : vector<16x32xf32>
    %414 = math.tanh %413 : vector<16x32xf32>
    %415 = arith.mulf %345, %214 : vector<16x32xf32>
    %cst_323 = arith.constant 1.000000e+00 : f32
    %416 = vector.broadcast %cst_323 : f32 to vector<16x32xf32>
    %417 = arith.subf %416, %345 : vector<16x32xf32>
    %418 = arith.mulf %417, %414 : vector<16x32xf32>
    %419 = arith.addf %415, %418 : vector<16x32xf32>
    %c1_324 = arith.constant 1 : index
    %c0_325 = arith.constant 0 : index
    %c0_326 = arith.constant 0 : index
    %420 = vector.load %arg22[%c1_324, %c0_325, %c0_326] : memref<2x16x32xf32, #tpu.memory_space<vmem>>, vector<1x16x32xf32>
    %421 = vector.shape_cast %420 : vector<1x16x32xf32> to vector<16x32xf32>
    %422 = vector.shape_cast %419 : vector<16x32xf32> to vector<1x16x32xf32>
    tpu.vector_store %arg22[%c1_324, %c0_325, %c0_326], %422 {strides = array<i32>} : memref<2x16x32xf32, #tpu.memory_space<vmem>>, vector<1x16x32xf32>,
    return
  }
  func.func @transform_0(%arg0: i32) -> (i32, i32) {
    %c0_i32 = arith.constant 0 : i32
    %c0_i32_0 = arith.constant 0 : i32
    return %arg0, %c0_i32 : i32, i32
  }
  func.func @transform_1(%arg0: i32) -> (i32, i32, i32) {
    %c0_i32 = arith.constant 0 : i32
    %c0_i32_0 = arith.constant 0 : i32
    %c0_i32_1 = arith.constant 0 : i32
    return %c0_i32, %arg0, %c0_i32_0 : i32, i32, i32
  }
  func.func @transform_2(%arg0: i32) -> (i32, i32) {
    %c0_i32 = arith.constant 0 : i32
    %c0_i32_0 = arith.constant 0 : i32
    %c0_i32_1 = arith.constant 0 : i32
    return %c0_i32, %c0_i32_0 : i32, i32
  }
  func.func @transform_3(%arg0: i32) -> (i32, i32, i32) {
    %c0_i32 = arith.constant 0 : i32
    %c0_i32_0 = arith.constant 0 : i32
    %c0_i32_1 = arith.constant 0 : i32
    %c0_i32_2 = arith.constant 0 : i32
    return %c0_i32, %c0_i32_0, %c0_i32_1 : i32, i32, i32
  }
  func.func @transform_4(%arg0: i32) -> (i32, i32, i32) {
    %c0_i32 = arith.constant 0 : i32
    %c0_i32_0 = arith.constant 0 : i32
    %c0_i32_1 = arith.constant 0 : i32
    %c0_i32_2 = arith.constant 0 : i32
    return %c0_i32, %c0_i32_0, %c0_i32_1 : i32, i32, i32
  }
  func.func @transform_5(%arg0: i32) -> (i32, i32, i32) {
    %c0_i32 = arith.constant 0 : i32
    %c0_i32_0 = arith.constant 0 : i32
    %c0_i32_1 = arith.constant 0 : i32
    %c0_i32_2 = arith.constant 0 : i32
    return %c0_i32, %c0_i32_0, %c0_i32_1 : i32, i32, i32
  }
  func.func @transform_6(%arg0: i32) -> (i32, i32, i32) {
    %c0_i32 = arith.constant 0 : i32
    %c0_i32_0 = arith.constant 0 : i32
    %c0_i32_1 = arith.constant 0 : i32
    %c0_i32_2 = arith.constant 0 : i32
    return %c0_i32, %c0_i32_0, %c0_i32_1 : i32, i32, i32
  }
  func.func @transform_7(%arg0: i32) -> (i32, i32, i32) {
    %c0_i32 = arith.constant 0 : i32
    %c0_i32_0 = arith.constant 0 : i32
    %c0_i32_1 = arith.constant 0 : i32
    %c0_i32_2 = arith.constant 0 : i32
    return %c0_i32, %c0_i32_0, %c0_i32_1 : i32, i32, i32
  }
  func.func @transform_8(%arg0: i32) -> (i32, i32, i32) {
    %c0_i32 = arith.constant 0 : i32
    %c0_i32_0 = arith.constant 0 : i32
    %c0_i32_1 = arith.constant 0 : i32
    %c0_i32_2 = arith.constant 0 : i32
    return %c0_i32, %c0_i32_0, %c0_i32_1 : i32, i32, i32
  }
  func.func @transform_9(%arg0: i32) -> (i32, i32) {
    %c0_i32 = arith.constant 0 : i32
    %c0_i32_0 = arith.constant 0 : i32
    %c0_i32_1 = arith.constant 0 : i32
    return %c0_i32, %c0_i32_0 : i32, i32
  }
  func.func @transform_10(%arg0: i32) -> (i32, i32) {
    %c0_i32 = arith.constant 0 : i32
    %c0_i32_0 = arith.constant 0 : i32
    %c0_i32_1 = arith.constant 0 : i32
    return %c0_i32, %c0_i32_0 : i32, i32
  }
  func.func @transform_11(%arg0: i32) -> (i32, i32) {
    %c0_i32 = arith.constant 0 : i32
    %c0_i32_0 = arith.constant 0 : i32
    %c0_i32_1 = arith.constant 0 : i32
    return %c0_i32, %c0_i32_0 : i32, i32
  }
  func.func @transform_12(%arg0: i32) -> (i32, i32, i32) {
    %c0_i32 = arith.constant 0 : i32
    %c0_i32_0 = arith.constant 0 : i32
    %c0_i32_1 = arith.constant 0 : i32
    %c0_i32_2 = arith.constant 0 : i32
    return %c0_i32, %c0_i32_0, %c0_i32_1 : i32, i32, i32
  }
  func.func @transform_13(%arg0: i32) -> (i32, i32, i32) {
    %c0_i32 = arith.constant 0 : i32
    %c0_i32_0 = arith.constant 0 : i32
    %c0_i32_1 = arith.constant 0 : i32
    %c0_i32_2 = arith.constant 0 : i32
    return %c0_i32, %c0_i32_0, %c0_i32_1 : i32, i32, i32
  }
  func.func @transform_14(%arg0: i32) -> (i32, i32, i32) {
    %c0_i32 = arith.constant 0 : i32
    %c0_i32_0 = arith.constant 0 : i32
    %c0_i32_1 = arith.constant 0 : i32
    %c0_i32_2 = arith.constant 0 : i32
    return %c0_i32, %c0_i32_0, %c0_i32_1 : i32, i32, i32
  }
  func.func @transform_15(%arg0: i32) -> (i32, i32, i32) {
    %c0_i32 = arith.constant 0 : i32
    %c0_i32_0 = arith.constant 0 : i32
    %c0_i32_1 = arith.constant 0 : i32
    %c0_i32_2 = arith.constant 0 : i32
    return %c0_i32, %c0_i32_0, %c0_i32_1 : i32, i32, i32
  }
  func.func @transform_16(%arg0: i32) -> (i32, i32, i32) {
    %c0_i32 = arith.constant 0 : i32
    %c0_i32_0 = arith.constant 0 : i32
    %c0_i32_1 = arith.constant 0 : i32
    %c0_i32_2 = arith.constant 0 : i32
    return %c0_i32, %c0_i32_0, %c0_i32_1 : i32, i32, i32
  }
  func.func @transform_17(%arg0: i32) -> (i32, i32, i32) {
    %c0_i32 = arith.constant 0 : i32
    %c0_i32_0 = arith.constant 0 : i32
    %c0_i32_1 = arith.constant 0 : i32
    %c0_i32_2 = arith.constant 0 : i32
    return %c0_i32, %c0_i32_0, %c0_i32_1 : i32, i32, i32
  }
  func.func @transform_18(%arg0: i32) -> (i32, i32) {
    %c0_i32 = arith.constant 0 : i32
    %c0_i32_0 = arith.constant 0 : i32
    %c0_i32_1 = arith.constant 0 : i32
    return %c0_i32, %c0_i32_0 : i32, i32
  }
  func.func @transform_19(%arg0: i32) -> (i32, i32) {
    %c0_i32 = arith.constant 0 : i32
    %c0_i32_0 = arith.constant 0 : i32
    %c0_i32_1 = arith.constant 0 : i32
    return %c0_i32, %c0_i32_0 : i32, i32
  }
  func.func @transform_20(%arg0: i32) -> (i32, i32) {
    %c0_i32 = arith.constant 0 : i32
    %c0_i32_0 = arith.constant 0 : i32
    %c0_i32_1 = arith.constant 0 : i32
    return %c0_i32, %c0_i32_0 : i32, i32
  }
  func.func @transform_21(%arg0: i32) -> (i32, i32, i32) {
    %c0_i32 = arith.constant 0 : i32
    %c0_i32_0 = arith.constant 0 : i32
    %c0_i32_1 = arith.constant 0 : i32
    return %c0_i32, %arg0, %c0_i32_0 : i32, i32, i32
  }
}

</mosaic_0001>

<llo_original>
// kernel: tpu_custom_call.1
$region0: #{tpu_custom_call.1}
  #allocation0 [shape = 'u32[]', space=smem, size = 0x4, offset = 0x4, fixed_abs, tag = 'smem constant byte address 0x4 - core index']
  #allocation1 [shape = 'u32[144,128]{1,0:T(1,128)}', space=vmem, size = 0x12000, scoped, tag = 'internal scratch']
  #allocation23 [shape = 's32[]', space=sflag, size = 0x4, offset = 0, fixed_abs, tag = 'sflag constant byte address 0x0 - dummy sync flag']
  #allocation25 [shape = 's32[]', space=sflag, size = 0x4, offset = 0, fixed_abs, tag = 'sflag constant byte address 0x0 - dummy sync flag']
  %s0 = inlined_call_operand.vmem [shape: bf16[32,8], index: 0, kind: input, shape index: {}]
  %s1 = inlined_call_operand.hbm [shape: f32[2,32,32], index: 1, kind: input, shape index: {}]
  %s2 = inlined_call_operand.vmem [shape: bf16[96,16], index: 2, kind: input, shape index: {}]
  %s3 = inlined_call_operand.hbm [shape: bf16[6,8,32], index: 3, kind: input, shape index: {}]
  %s4 = inlined_call_operand.hbm [shape: bf16[6,32,32], index: 4, kind: input, shape index: {}]
  %s5 = inlined_call_operand.hbm [shape: bf16[6,8,32], index: 5, kind: input, shape index: {}]
  %s6 = inlined_call_operand.vmem [shape: bf16[6,32,32], index: 6, kind: input, shape index: {}]
  %s7 = inlined_call_operand.hbm [shape: bf16[6,8,32], index: 7, kind: input, shape index: {}]
  %s8 = inlined_call_operand.hbm [shape: bf16[6,32,32], index: 8, kind: input, shape index: {}]
  %s9 = inlined_call_operand.vmem [shape: f32[1,32], index: 9, kind: input, shape index: {}]
  %s10 = inlined_call_operand.vmem [shape: f32[1,32], index: 10, kind: input, shape index: {}]
  %s11 = inlined_call_operand.vmem [shape: f32[1,32], index: 11, kind: input, shape index: {}]
  %s12 = inlined_call_operand.hbm [shape: bf16[6,32,32], index: 12, kind: input, shape index: {}]
  %s13 = inlined_call_operand.hbm [shape: bf16[6,32,32], index: 13, kind: input, shape index: {}]
  %s14 = inlined_call_operand.hbm [shape: bf16[6,32,32], index: 14, kind: input, shape index: {}]
  %s15 = inlined_call_operand.hbm [shape: bf16[6,32,32], index: 15, kind: input, shape index: {}]
  %s16 = inlined_call_operand.hbm [shape: bf16[6,32,32], index: 16, kind: input, shape index: {}]
  %s17 = inlined_call_operand.hbm [shape: bf16[6,32,32], index: 17, kind: input, shape index: {}]
  %s18 = inlined_call_operand.vmem [shape: f32[1,32], index: 18, kind: input, shape index: {}]
  %s19 = inlined_call_operand.vmem [shape: f32[1,32], index: 19, kind: input, shape index: {}]
  %s20 = inlined_call_operand.vmem [shape: f32[1,32], index: 20, kind: input, shape index: {}]
  %s21 = inlined_call_operand.hbm [shape: f32[2,32,32], index: 21, kind: output, shape index: {}]
  %s22 = sld [smem:[#allocation0]]
  $region165: #{tpu_custom_call.1} parent=0
    _
  %s24 = ssub.s32 1, %s22
  %s25 = scalar_select 0, %s24, %s22
  $region1: #{tpu_custom_call.1} parent=0
    #allocation2 [shape = 'u8[32768]{0}', space=vmem, size = 0x8000, scoped, tag = 'input window, operand 1']
    #allocation3 [shape = 's32[2]{0}', space=sflag, size = 0x8, scoped, tag = 'scoped memory for tpu_custom_call.1']
    #allocation4 [shape = 's32[2]{0}', space=sflag, size = 0x8, scoped, tag = 'scoped memory for tpu_custom_call.1']
    #allocation5 [shape = 'u8[12288]{0}', space=vmem, size = 0x3000, scoped, tag = 'input window, operand 3, single buffered']
    #allocation6 [shape = 's32[1]{0}', space=sflag, size = 0x4, scoped, tag = 'scoped memory for tpu_custom_call.1']
    #allocation7 [shape = 'u8[49152]{0}', space=vmem, size = 0xc000, scoped, tag = 'input window, operand 4, single buffered']
    #allocation8 [shape = 'u8[12288]{0}', space=vmem, size = 0x3000, scoped, tag = 'input window, operand 5, single buffered']
    #allocation9 [shape = 's32[1]{0}', space=sflag, size = 0x4, scoped, tag = 'scoped memory for tpu_custom_call.1']
    #allocation10 [shape = 'u8[12288]{0}', space=vmem, size = 0x3000, scoped, tag = 'input window, operand 7, single buffered']
    #allocation11 [shape = 'u8[49152]{0}', space=vmem, size = 0xc000, scoped, tag = 'input window, operand 8, single buffered']
    #allocation12 [shape = 's32[1]{0}', space=sflag, size = 0x4, scoped, tag = 'scoped memory for tpu_custom_call.1']
    #allocation13 [shape = 'u8[49152]{0}', space=vmem, size = 0xc000, scoped, tag = 'input window, operand 12, single buffered']
    #allocation14 [shape = 'u8[49152]{0}', space=vmem, size = 0xc000, scoped, tag = 'input window, operand 13, single buffered']
    #allocation15 [shape = 's32[1]{0}', space=sflag, size = 0x4, scoped, tag = 'scoped memory for tpu_custom_call.1']
    #allocation16 [shape = 'u8[49152]{0}', space=vmem, size = 0xc000, scoped, tag = 'input window, operand 14, single buffered']
    #allocation17 [shape = 'u8[49152]{0}', space=vmem, size = 0xc000, scoped, tag = 'input window, operand 15, single buffered']
    #allocation18 [shape = 's32[1]{0}', space=sflag, size = 0x4, scoped, tag = 'scoped memory for tpu_custom_call.1']
    #allocation19 [shape = 'u8[49152]{0}', space=vmem, size = 0xc000, scoped, tag = 'input window, operand 16, single buffered']
    #allocation20 [shape = 'u8[49152]{0}', space=vmem, size = 0xc000, scoped, tag = 'input window, operand 17, single buffered']
    #allocation21 [shape = 's32[1]{0}', space=sflag, size = 0x4, scoped, tag = 'scoped memory for tpu_custom_call.1']
    #allocation22 [shape = 'u8[32768]{0}', space=vmem, size = 0x8000, scoped, tag = 'output window, operand 0']
    %26 = vsyncpa [#allocation3], 0
    %s27 = scalar_lea.sflag [#allocation3], 1
    %28 = vsyncpa %s27, 0
    %29 = vsyncpa [#allocation6], 0
    %30 = vsyncpa [#allocation9], 0
    %31 = vsyncpa [#allocation12], 0
    %32 = vsyncpa [#allocation15], 0
    %33 = vsyncpa [#allocation18], 0
    %34 = vsyncpa [#allocation21], 0
    %35 = vsyncpa [#allocation4], 0
    %s36 = scalar_lea.sflag [#allocation4], 1
    %37 = vsyncpa %s36, 0
    loop: start=0, step=1, limit=4
    $region2: #{tpu_custom_call.1} parent=1 // loop_pre_header
      _
    $region3: #{tpu_custom_call.1} parent=1 // loop_header
      %s39 = sphi 0, %s43
      %p40 = scmp.ge.s32.totalorder %s39, 4
      %s49 = sphi 0, %s51
      %s52 = sphi 0, %s49
      %s53 = sphi 0, %s52
      %s69 = sphi 0, %s53
      %s75 = sphi 0, %s77
      %s78 = sphi 0, %s75
      %s79 = sphi 0, %s78
      %s95 = sphi 0, %s79
      %s99 = sphi 0, %s99
      %s101 = sphi 0, %s99
      %s102 = sphi 0, %s101
      %s116 = sphi 0, %s102
      %s120 = sphi 0, %s120
      %s122 = sphi 0, %s120
      %s123 = sphi 0, %s122
      %s137 = sphi 0, %s123
      %s141 = sphi 0, %s141
      %s143 = sphi 0, %s141
      %s144 = sphi 0, %s143
      %s158 = sphi 0, %s144
      %s162 = sphi 0, %s162
      %s164 = sphi 0, %s162
      %s165 = sphi 0, %s164
      %s179 = sphi 0, %s165
      %s183 = sphi 0, %s183
      %s185 = sphi 0, %s183
      %s186 = sphi 0, %s185
      %s200 = sphi 0, %s186
      %s204 = sphi 0, %s204
      %s206 = sphi 0, %s204
      %s207 = sphi 0, %s206
      %s221 = sphi 0, %s207
      %s225 = sphi 0, %s225
      %s227 = sphi 0, %s225
      %s228 = sphi 0, %s227
      %s242 = sphi 0, %s228
      %s246 = sphi 0, %s246
      %s248 = sphi 0, %s246
      %s249 = sphi 0, %s248
      %s263 = sphi 0, %s249
      %s267 = sphi 0, %s267
      %s269 = sphi 0, %s267
      %s270 = sphi 0, %s269
      %s284 = sphi 0, %s270
      %s288 = sphi 0, %s288
      %s290 = sphi 0, %s288
      %s291 = sphi 0, %s290
      %s305 = sphi 0, %s291
      %s309 = sphi 0, %s309
      %s311 = sphi 0, %s309
      %s312 = sphi 0, %s311
      %s326 = sphi 0, %s312
      %s330 = sphi 0, %s330
      %s332 = sphi 0, %s330
      %s333 = sphi 0, %s332
      %s347 = sphi 0, %s333
      %s351 = sphi 0, %s351
      %s353 = sphi 0, %s351
      %s354 = sphi 0, %s353
      %s368 = sphi 0, %s354
      %s372 = sphi 0, %s372
      %s374 = sphi 0, %s372
      %s375 = sphi 0, %s374
      %s389 = sphi 0, %s375
      %s393 = sphi 0, %s393
      %s395 = sphi 0, %s393
      %s396 = sphi 0, %s395
      %s410 = sphi 0, %s396
      %s414 = sphi 0, %s414
      %s416 = sphi 0, %s414
      %s417 = sphi 0, %s416
      %s431 = sphi 0, %s417
      %s435 = sphi 0, %s435
      %s437 = sphi 0, %s435
      %s438 = sphi 0, %s437
      %s452 = sphi 0, %s438
      %s456 = sphi 0, %s456
      %s458 = sphi 0, %s456
      %s459 = sphi 0, %s458
      %s473 = sphi 0, %s459
      %s477 = sphi 0, %s477
      %s479 = sphi 0, %s477
      %s480 = sphi 0, %s479
      %s494 = sphi 0, %s480
      %s500 = sphi 0, %s502
      %s503 = sphi 0, %s500
      %s504 = sphi 0, %s503
      %s520 = sphi 0, %s504
    $region4: #{tpu_custom_call.1} parent=1 // loop_header_branch
      %42 = sbr.rel (%p40) target = $region8
    $region5: #{tpu_custom_call.1} parent=1 // loop_body
      %s44 = ssub.s32 %s39, 1
      %s45 = ssub.s32 %s39, 2
      %s46 = sadd.s32 %s39, 1
      %s47 = ssub.s32 %s39, %s46
      %p48 = scmp.eq.s32.totalorder %s47, 0
      %s50 = sadd.s32 %s49, 1
      %s51 = scalar_select %p48, %s49, %s50
      %p54 = pneg %p48
      %p55 = scmp.eq.s32.totalorder %s39, 1
      %p56 = por %p54, %p55
      %p57 = scmp.ne.s32.totalorder %s49, %s52
      %p58 = scmp.eq.s32.totalorder %s39, 0
      %p59 = por %p57, %p58
      %p60 = scmp.ne.s32.totalorder %s49, %s52
      %p61 = scmp.eq.s32.totalorder %s44, 1
      %p62 = por %p60, %p61
      %p63 = scmp.ne.s32.totalorder %s52, %s53
      %p64 = scmp.eq.s32.totalorder %s44, 0
      %p65 = por %p63, %p64
      %p66 = scmp.ne.s32.totalorder %s52, %s53
      %p67 = scmp.eq.s32.totalorder %s45, 1
      %p68 = por %p66, %p67
      %p70 = scmp.ne.s32.totalorder %s53, %s69
      %p71 = scmp.eq.s32.totalorder %s45, 0
      %p72 = por %p70, %p71
      %s73 = ssub.s32 %s39, %s46
      %p74 = scmp.eq.s32.totalorder %s73, 0
      %s76 = sadd.s32 %s75, 1
      %s77 = scalar_select %p74, %s75, %s76
      %p80 = pneg %p74
      %p81 = scmp.eq.s32.totalorder %s39, 1
      %p82 = por %p80, %p81
      %p83 = scmp.ne.s32.totalorder %s75, %s78
      %p84 = scmp.eq.s32.totalorder %s39, 0
      %p85 = por %p83, %p84
      %p86 = scmp.ne.s32.totalorder %s75, %s78
      %p87 = scmp.eq.s32.totalorder %s44, 1
      %p88 = por %p86, %p87
      %p89 = scmp.ne.s32.totalorder %s78, %s79
      %p90 = scmp.eq.s32.totalorder %s44, 0
      %p91 = por %p89, %p90
      %p92 = scmp.ne.s32.totalorder %s78, %s79
      %p93 = scmp.eq.s32.totalorder %s45, 1
      %p94 = por %p92, %p93
      %p96 = scmp.ne.s32.totalorder %s79, %s95
      %p97 = scmp.eq.s32.totalorder %s45, 0
      %p98 = por %p96, %p97
      %s100 = sadd.s32 %s99, 1
      %p103 = scmp.eq.s32.totalorder %s39, 1
      %p104 = scmp.ne.s32.totalorder %s99, %s101
      %p105 = scmp.eq.s32.totalorder %s39, 0
      %p106 = por %p104, %p105
      %p107 = scmp.ne.s32.totalorder %s99, %s101
      %p108 = scmp.eq.s32.totalorder %s44, 1
      %p109 = por %p107, %p108
      %p110 = scmp.ne.s32.totalorder %s101, %s102
      %p111 = scmp.eq.s32.totalorder %s44, 0
      %p112 = por %p110, %p111
      %p113 = scmp.ne.s32.totalorder %s101, %s102
      %p114 = scmp.eq.s32.totalorder %s45, 1
      %p115 = por %p113, %p114
      %p117 = scmp.ne.s32.totalorder %s102, %s116
      %p118 = scmp.eq.s32.totalorder %s45, 0
      %p119 = por %p117, %p118
      %s121 = sadd.s32 %s120, 1
      %p124 = scmp.eq.s32.totalorder %s39, 1
      %p125 = scmp.ne.s32.totalorder %s120, %s122
      %p126 = scmp.eq.s32.totalorder %s39, 0
      %p127 = por %p125, %p126
      %p128 = scmp.ne.s32.totalorder %s120, %s122
      %p129 = scmp.eq.s32.totalorder %s44, 1
      %p130 = por %p128, %p129
      %p131 = scmp.ne.s32.totalorder %s122, %s123
      %p132 = scmp.eq.s32.totalorder %s44, 0
      %p133 = por %p131, %p132
      %p134 = scmp.ne.s32.totalorder %s122, %s123
      %p135 = scmp.eq.s32.totalorder %s45, 1
      %p136 = por %p134, %p135
      %p138 = scmp.ne.s32.totalorder %s123, %s137
      %p139 = scmp.eq.s32.totalorder %s45, 0
      %p140 = por %p138, %p139
      %s142 = sadd.s32 %s141, 1
      %p145 = scmp.eq.s32.totalorder %s39, 1
      %p146 = scmp.ne.s32.totalorder %s141, %s143
      %p147 = scmp.eq.s32.totalorder %s39, 0
      %p148 = por %p146, %p147
      %p149 = scmp.ne.s32.totalorder %s141, %s143
      %p150 = scmp.eq.s32.totalorder %s44, 1
      %p151 = por %p149, %p150
      %p152 = scmp.ne.s32.totalorder %s143, %s144
      %p153 = scmp.eq.s32.totalorder %s44, 0
      %p154 = por %p152, %p153
      %p155 = scmp.ne.s32.totalorder %s143, %s144
      %p156 = scmp.eq.s32.totalorder %s45, 1
      %p157 = por %p155, %p156
      %p159 = scmp.ne.s32.totalorder %s144, %s158
      %p160 = scmp.eq.s32.totalorder %s45, 0
      %p161 = por %p159, %p160
      %s163 = sadd.s32 %s162, 1
      %p166 = scmp.eq.s32.totalorder %s39, 1
      %p167 = scmp.ne.s32.totalorder %s162, %s164
      %p168 = scmp.eq.s32.totalorder %s39, 0
      %p169 = por %p167, %p168
      %p170 = scmp.ne.s32.totalorder %s162, %s164
      %p171 = scmp.eq.s32.totalorder %s44, 1
      %p172 = por %p170, %p171
      %p173 = scmp.ne.s32.totalorder %s164, %s165
      %p174 = scmp.eq.s32.totalorder %s44, 0
      %p175 = por %p173, %p174
      %p176 = scmp.ne.s32.totalorder %s164, %s165
      %p177 = scmp.eq.s32.totalorder %s45, 1
      %p178 = por %p176, %p177
      %p180 = scmp.ne.s32.totalorder %s165, %s179
      %p181 = scmp.eq.s32.totalorder %s45, 0
      %p182 = por %p180, %p181
      %s184 = sadd.s32 %s183, 1
      %p187 = scmp.eq.s32.totalorder %s39, 1
      %p188 = scmp.ne.s32.totalorder %s183, %s185
      %p189 = scmp.eq.s32.totalorder %s39, 0
      %p190 = por %p188, %p189
      %p191 = scmp.ne.s32.totalorder %s183, %s185
      %p192 = scmp.eq.s32.totalorder %s44, 1
      %p193 = por %p191, %p192
      %p194 = scmp.ne.s32.totalorder %s185, %s186
      %p195 = scmp.eq.s32.totalorder %s44, 0
      %p196 = por %p194, %p195
      %p197 = scmp.ne.s32.totalorder %s185, %s186
      %p198 = scmp.eq.s32.totalorder %s45, 1
      %p199 = por %p197, %p198
      %p201 = scmp.ne.s32.totalorder %s186, %s200
      %p202 = scmp.eq.s32.totalorder %s45, 0
      %p203 = por %p201, %p202
      %s205 = sadd.s32 %s204, 1
      %p208 = scmp.eq.s32.totalorder %s39, 1
      %p209 = scmp.ne.s32.totalorder %s204, %s206
      %p210 = scmp.eq.s32.totalorder %s39, 0
      %p211 = por %p209, %p210
      %p212 = scmp.ne.s32.totalorder %s204, %s206
      %p213 = scmp.eq.s32.totalorder %s44, 1
      %p214 = por %p212, %p213
      %p215 = scmp.ne.s32.totalorder %s206, %s207
      %p216 = scmp.eq.s32.totalorder %s44, 0
      %p217 = por %p215, %p216
      %p218 = scmp.ne.s32.totalorder %s206, %s207
      %p219 = scmp.eq.s32.totalorder %s45, 1
      %p220 = por %p218, %p219
      %p222 = scmp.ne.s32.totalorder %s207, %s221
      %p223 = scmp.eq.s32.totalorder %s45, 0
      %p224 = por %p222, %p223
      %s226 = sadd.s32 %s225, 1
      %p229 = scmp.eq.s32.totalorder %s39, 1
      %p230 = scmp.ne.s32.totalorder %s225, %s227
      %p231 = scmp.eq.s32.totalorder %s39, 0
      %p232 = por %p230, %p231
      %p233 = scmp.ne.s32.totalorder %s225, %s227
      %p234 = scmp.eq.s32.totalorder %s44, 1
      %p235 = por %p233, %p234
      %p236 = scmp.ne.s32.totalorder %s227, %s228
      %p237 = scmp.eq.s32.totalorder %s44, 0
      %p238 = por %p236, %p237
      %p239 = scmp.ne.s32.totalorder %s227, %s228
      %p240 = scmp.eq.s32.totalorder %s45, 1
      %p241 = por %p239, %p240
      %p243 = scmp.ne.s32.totalorder %s228, %s242
      %p244 = scmp.eq.s32.totalorder %s45, 0
      %p245 = por %p243, %p244
      %s247 = sadd.s32 %s246, 1
      %p250 = scmp.eq.s32.totalorder %s39, 1
      %p251 = scmp.ne.s32.totalorder %s246, %s248
      %p252 = scmp.eq.s32.totalorder %s39, 0
      %p253 = por %p251, %p252
      %p254 = scmp.ne.s32.totalorder %s246, %s248
      %p255 = scmp.eq.s32.totalorder %s44, 1
      %p256 = por %p254, %p255
      %p257 = scmp.ne.s32.totalorder %s248, %s249
      %p258 = scmp.eq.s32.totalorder %s44, 0
      %p259 = por %p257, %p258
      %p260 = scmp.ne.s32.totalorder %s248, %s249
      %p261 = scmp.eq.s32.totalorder %s45, 1
      %p262 = por %p260, %p261
      %p264 = scmp.ne.s32.totalorder %s249, %s263
      %p265 = scmp.eq.s32.totalorder %s45, 0
      %p266 = por %p264, %p265
      %s268 = sadd.s32 %s267, 1
      %p271 = scmp.eq.s32.totalorder %s39, 1
      %p272 = scmp.ne.s32.totalorder %s267, %s269
      %p273 = scmp.eq.s32.totalorder %s39, 0
      %p274 = por %p272, %p273
      %p275 = scmp.ne.s32.totalorder %s267, %s269
      %p276 = scmp.eq.s32.totalorder %s44, 1
      %p277 = por %p275, %p276
      %p278 = scmp.ne.s32.totalorder %s269, %s270
      %p279 = scmp.eq.s32.totalorder %s44, 0
      %p280 = por %p278, %p279
      %p281 = scmp.ne.s32.totalorder %s269, %s270
      %p282 = scmp.eq.s32.totalorder %s45, 1
      %p283 = por %p281, %p282
      %p285 = scmp.ne.s32.totalorder %s270, %s284
      %p286 = scmp.eq.s32.totalorder %s45, 0
      %p287 = por %p285, %p286
      %s289 = sadd.s32 %s288, 1
      %p292 = scmp.eq.s32.totalorder %s39, 1
      %p293 = scmp.ne.s32.totalorder %s288, %s290
      %p294 = scmp.eq.s32.totalorder %s39, 0
      %p295 = por %p293, %p294
      %p296 = scmp.ne.s32.totalorder %s288, %s290
      %p297 = scmp.eq.s32.totalorder %s44, 1
      %p298 = por %p296, %p297
      %p299 = scmp.ne.s32.totalorder %s290, %s291
      %p300 = scmp.eq.s32.totalorder %s44, 0
      %p301 = por %p299, %p300
      %p302 = scmp.ne.s32.totalorder %s290, %s291
      %p303 = scmp.eq.s32.totalorder %s45, 1
      %p304 = por %p302, %p303
      %p306 = scmp.ne.s32.totalorder %s291, %s305
      %p307 = scmp.eq.s32.totalorder %s45, 0
      %p308 = por %p306, %p307
      %s310 = sadd.s32 %s309, 1
      %p313 = scmp.eq.s32.totalorder %s39, 1
      %p314 = scmp.ne.s32.totalorder %s309, %s311
      %p315 = scmp.eq.s32.totalorder %s39, 0
      %p316 = por %p314, %p315
      %p317 = scmp.ne.s32.totalorder %s309, %s311
      %p318 = scmp.eq.s32.totalorder %s44, 1
      %p319 = por %p317, %p318
      %p320 = scmp.ne.s32.totalorder %s311, %s312
      %p321 = scmp.eq.s32.totalorder %s44, 0
      %p322 = por %p320, %p321
      %p323 = scmp.ne.s32.totalorder %s311, %s312
      %p324 = scmp.eq.s32.totalorder %s45, 1
      %p325 = por %p323, %p324
      %p327 = scmp.ne.s32.totalorder %s312, %s326
      %p328 = scmp.eq.s32.totalorder %s45, 0
      %p329 = por %p327, %p328
      %s331 = sadd.s32 %s330, 1
      %p334 = scmp.eq.s32.totalorder %s39, 1
      %p335 = scmp.ne.s32.totalorder %s330, %s332
      %p336 = scmp.eq.s32.totalorder %s39, 0
      %p337 = por %p335, %p336
      %p338 = scmp.ne.s32.totalorder %s330, %s332
      %p339 = scmp.eq.s32.totalorder %s44, 1
      %p340 = por %p338, %p339
      %p341 = scmp.ne.s32.totalorder %s332, %s333
      %p342 = scmp.eq.s32.totalorder %s44, 0
      %p343 = por %p341, %p342
      %p344 = scmp.ne.s32.totalorder %s332, %s333
      %p345 = scmp.eq.s32.totalorder %s45, 1
      %p346 = por %p344, %p345
      %p348 = scmp.ne.s32.totalorder %s333, %s347
      %p349 = scmp.eq.s32.totalorder %s45, 0
      %p350 = por %p348, %p349
      %s352 = sadd.s32 %s351, 1
      %p355 = scmp.eq.s32.totalorder %s39, 1
      %p356 = scmp.ne.s32.totalorder %s351, %s353
      %p357 = scmp.eq.s32.totalorder %s39, 0
      %p358 = por %p356, %p357
      %p359 = scmp.ne.s32.totalorder %s351, %s353
      %p360 = scmp.eq.s32.totalorder %s44, 1
      %p361 = por %p359, %p360
      %p362 = scmp.ne.s32.totalorder %s353, %s354
      %p363 = scmp.eq.s32.totalorder %s44, 0
      %p364 = por %p362, %p363
      %p365 = scmp.ne.s32.totalorder %s353, %s354
      %p366 = scmp.eq.s32.totalorder %s45, 1
      %p367 = por %p365, %p366
      %p369 = scmp.ne.s32.totalorder %s354, %s368
      %p370 = scmp.eq.s32.totalorder %s45, 0
      %p371 = por %p369, %p370
      %s373 = sadd.s32 %s372, 1
      %p376 = scmp.eq.s32.totalorder %s39, 1
      %p377 = scmp.ne.s32.totalorder %s372, %s374
      %p378 = scmp.eq.s32.totalorder %s39, 0
      %p379 = por %p377, %p378
      %p380 = scmp.ne.s32.totalorder %s372, %s374
      %p381 = scmp.eq.s32.totalorder %s44, 1
      %p382 = por %p380, %p381
      %p383 = scmp.ne.s32.totalorder %s374, %s375
      %p384 = scmp.eq.s32.totalorder %s44, 0
      %p385 = por %p383, %p384
      %p386 = scmp.ne.s32.totalorder %s374, %s375
      %p387 = scmp.eq.s32.totalorder %s45, 1
      %p388 = por %p386, %p387
      %p390 = scmp.ne.s32.totalorder %s375, %s389
      %p391 = scmp.eq.s32.totalorder %s45, 0
      %p392 = por %p390, %p391
      %s394 = sadd.s32 %s393, 1
      %p397 = scmp.eq.s32.totalorder %s39, 1
      %p398 = scmp.ne.s32.totalorder %s393, %s395
      %p399 = scmp.eq.s32.totalorder %s39, 0
      %p400 = por %p398, %p399
      %p401 = scmp.ne.s32.totalorder %s393, %s395
      %p402 = scmp.eq.s32.totalorder %s44, 1
      %p403 = por %p401, %p402
      %p404 = scmp.ne.s32.totalorder %s395, %s396
      %p405 = scmp.eq.s32.totalorder %s44, 0
      %p406 = por %p404, %p405
      %p407 = scmp.ne.s32.totalorder %s395, %s396
      %p408 = scmp.eq.s32.totalorder %s45, 1
      %p409 = por %p407, %p408
      %p411 = scmp.ne.s32.totalorder %s396, %s410
      %p412 = scmp.eq.s32.totalorder %s45, 0
      %p413 = por %p411, %p412
      %s415 = sadd.s32 %s414, 1
      %p418 = scmp.eq.s32.totalorder %s39, 1
      %p419 = scmp.ne.s32.totalorder %s414, %s416
      %p420 = scmp.eq.s32.totalorder %s39, 0
      %p421 = por %p419, %p420
      %p422 = scmp.ne.s32.totalorder %s414, %s416
      %p423 = scmp.eq.s32.totalorder %s44, 1
      %p424 = por %p422, %p423
      %p425 = scmp.ne.s32.totalorder %s416, %s417
      %p426 = scmp.eq.s32.totalorder %s44, 0
      %p427 = por %p425, %p426
      %p428 = scmp.ne.s32.totalorder %s416, %s417
      %p429 = scmp.eq.s32.totalorder %s45, 1
      %p430 = por %p428, %p429
      %p432 = scmp.ne.s32.totalorder %s417, %s431
      %p433 = scmp.eq.s32.totalorder %s45, 0
      %p434 = por %p432, %p433
      %s436 = sadd.s32 %s435, 1
      %p439 = scmp.eq.s32.totalorder %s39, 1
      %p440 = scmp.ne.s32.totalorder %s435, %s437
      %p441 = scmp.eq.s32.totalorder %s39, 0
      %p442 = por %p440, %p441
      %p443 = scmp.ne.s32.totalorder %s435, %s437
      %p444 = scmp.eq.s32.totalorder %s44, 1
      %p445 = por %p443, %p444
      %p446 = scmp.ne.s32.totalorder %s437, %s438
      %p447 = scmp.eq.s32.totalorder %s44, 0
      %p448 = por %p446, %p447
      %p449 = scmp.ne.s32.totalorder %s437, %s438
      %p450 = scmp.eq.s32.totalorder %s45, 1
      %p451 = por %p449, %p450
      %p453 = scmp.ne.s32.totalorder %s438, %s452
      %p454 = scmp.eq.s32.totalorder %s45, 0
      %p455 = por %p453, %p454
      %s457 = sadd.s32 %s456, 1
      %p460 = scmp.eq.s32.totalorder %s39, 1
      %p461 = scmp.ne.s32.totalorder %s456, %s458
      %p462 = scmp.eq.s32.totalorder %s39, 0
      %p463 = por %p461, %p462
      %p464 = scmp.ne.s32.totalorder %s456, %s458
      %p465 = scmp.eq.s32.totalorder %s44, 1
      %p466 = por %p464, %p465
      %p467 = scmp.ne.s32.totalorder %s458, %s459
      %p468 = scmp.eq.s32.totalorder %s44, 0
      %p469 = por %p467, %p468
      %p470 = scmp.ne.s32.totalorder %s458, %s459
      %p471 = scmp.eq.s32.totalorder %s45, 1
      %p472 = por %p470, %p471
      %p474 = scmp.ne.s32.totalorder %s459, %s473
      %p475 = scmp.eq.s32.totalorder %s45, 0
      %p476 = por %p474, %p475
      %s478 = sadd.s32 %s477, 1
      %p481 = scmp.eq.s32.totalorder %s39, 1
      %p482 = scmp.ne.s32.totalorder %s477, %s479
      %p483 = scmp.eq.s32.totalorder %s39, 0
      %p484 = por %p482, %p483
      %p485 = scmp.ne.s32.totalorder %s477, %s479
      %p486 = scmp.eq.s32.totalorder %s44, 1
      %p487 = por %p485, %p486
      %p488 = scmp.ne.s32.totalorder %s479, %s480
      %p489 = scmp.eq.s32.totalorder %s44, 0
      %p490 = por %p488, %p489
      %p491 = scmp.ne.s32.totalorder %s479, %s480
      %p492 = scmp.eq.s32.totalorder %s45, 1
      %p493 = por %p491, %p492
      %p495 = scmp.ne.s32.totalorder %s480, %s494
      %p496 = scmp.eq.s32.totalorder %s45, 0
      %p497 = por %p495, %p496
      %s498 = ssub.s32 %s39, %s46
      %p499 = scmp.eq.s32.totalorder %s498, 0
      %s501 = sadd.s32 %s500, 1
      %s502 = scalar_select %p499, %s500, %s501
      %p505 = pneg %p499
      %p506 = scmp.eq.s32.totalorder %s39, 1
      %p507 = por %p505, %p506
      %p508 = scmp.ne.s32.totalorder %s500, %s503
      %p509 = scmp.eq.s32.totalorder %s39, 0
      %p510 = por %p508, %p509
      %p511 = scmp.ne.s32.totalorder %s500, %s503
      %p512 = scmp.eq.s32.totalorder %s44, 1
      %p513 = por %p511, %p512
      %p514 = scmp.ne.s32.totalorder %s503, %s504
      %p515 = scmp.eq.s32.totalorder %s44, 0
      %p516 = por %p514, %p515
      %p517 = scmp.ne.s32.totalorder %s503, %s504
      %p518 = scmp.eq.s32.totalorder %s45, 1
      %p519 = por %p517, %p518
      %p521 = scmp.ne.s32.totalorder %s504, %s520
      %p522 = scmp.eq.s32.totalorder %s45, 0
      %p523 = por %p521, %p522
      %p524 = scmp.le.s32.totalorder 1, %s39
      %p525 = scmp.lt.s32.totalorder %s39, 3
      %p526 = pnand %p524, %p525
      %p527 = pneg %p526
      // Predicated region
      $region9: #{tpu_custom_call.1} parent=5 // pred_check
        _
      $region10: #{tpu_custom_call.1} parent=5 // pred_check_branch
        %529 = sbr.rel (%p526) target = $region12
      $region11: #{tpu_custom_call.1} parent=5 // pred_region
        %s530 = ssub.s32 %s39, 1
        // Predicated region
        $region13: #{tpu_custom_call.1} parent=11 // pred_check
          %p531 = pneg %p112
        $region14: #{tpu_custom_call.1} parent=11 // pred_check_branch
          %533 = sbr.rel (%p531) target = $region16
        $region15: #{tpu_custom_call.1} parent=11 // pred_region
          _
        $region16: #{tpu_custom_call.1} parent=11 // pred_fallthru
          _
        // Predicated region
        $region17: #{tpu_custom_call.1} parent=11 // pred_check
          %p534 = pneg %p133
        $region18: #{tpu_custom_call.1} parent=11 // pred_check_branch
          %536 = sbr.rel (%p534) target = $region20
        $region19: #{tpu_custom_call.1} parent=11 // pred_region
          %s538 = ssub.s32 384, 384
          %539 = vsyncadd [#allocation6], %s538
          %s540 = sshll.u32 [#allocation5], 4
          %s541 = int_to_ptr.vmem [resolvable:$true] %s540
          %546 = dma.hbm_to_vmem [thread:$0]  %s3, 384, %s541, [#allocation6], 64, 64, 4
        $region20: #{tpu_custom_call.1} parent=11 // pred_fallthru
          _
        // Predicated region
        $region21: #{tpu_custom_call.1} parent=11 // pred_check
          %p547 = pneg %p154
        $region22: #{tpu_custom_call.1} parent=11 // pred_check_branch
          %549 = sbr.rel (%p547) target = $region24
        $region23: #{tpu_custom_call.1} parent=11 // pred_region
          %s551 = ssub.s32 1536, 1536
          %552 = vsyncadd [#allocation6], %s551
          %s553 = sshll.u32 [#allocation7], 4
          %s554 = int_to_ptr.vmem [resolvable:$true] %s553
          %559 = dma.hbm_to_vmem [thread:$0]  %s4, 1536, %s554, [#allocation6], 64, 64, 4
        $region24: #{tpu_custom_call.1} parent=11 // pred_fallthru
          _
        // Predicated region
        $region25: #{tpu_custom_call.1} parent=11 // pred_check
          %p560 = pneg %p175
        $region26: #{tpu_custom_call.1} parent=11 // pred_check_branch
          %562 = sbr.rel (%p560) target = $region28
        $region27: #{tpu_custom_call.1} parent=11 // pred_region
          %s564 = ssub.s32 384, 384
          %565 = vsyncadd [#allocation9], %s564
          %s566 = sshll.u32 [#allocation8], 4
          %s567 = int_to_ptr.vmem [resolvable:$true] %s566
          %572 = dma.hbm_to_vmem [thread:$0]  %s5, 384, %s567, [#allocation9], 64, 64, 4
        $region28: #{tpu_custom_call.1} parent=11 // pred_fallthru
          _
        // Predicated region
        $region29: #{tpu_custom_call.1} parent=11 // pred_check
          %p573 = pneg %p196
        $region30: #{tpu_custom_call.1} parent=11 // pred_check_branch
          %575 = sbr.rel (%p573) target = $region32
        $region31: #{tpu_custom_call.1} parent=11 // pred_region
          _
        $region32: #{tpu_custom_call.1} parent=11 // pred_fallthru
          _
        // Predicated region
        $region33: #{tpu_custom_call.1} parent=11 // pred_check
          %p576 = pneg %p217
        $region34: #{tpu_custom_call.1} parent=11 // pred_check_branch
          %578 = sbr.rel (%p576) target = $region36
        $region35: #{tpu_custom_call.1} parent=11 // pred_region
          %s580 = ssub.s32 384, 384
          %581 = vsyncadd [#allocation9], %s580
          %s582 = sshll.u32 [#allocation10], 4
          %s583 = int_to_ptr.vmem [resolvable:$true] %s582
          %588 = dma.hbm_to_vmem [thread:$0]  %s7, 384, %s583, [#allocation9], 64, 64, 4
        $region36: #{tpu_custom_call.1} parent=11 // pred_fallthru
          _
        // Predicated region
        $region37: #{tpu_custom_call.1} parent=11 // pred_check
          %p589 = pneg %p238
        $region38: #{tpu_custom_call.1} parent=11 // pred_check_branch
          %591 = sbr.rel (%p589) target = $region40
        $region39: #{tpu_custom_call.1} parent=11 // pred_region
          %s593 = ssub.s32 1536, 1536
          %594 = vsyncadd [#allocation12], %s593
          %s595 = sshll.u32 [#allocation11], 4
          %s596 = int_to_ptr.vmem [resolvable:$true] %s595
          %601 = dma.hbm_to_vmem [thread:$0]  %s8, 1536, %s596, [#allocation12], 64, 64, 4
        $region40: #{tpu_custom_call.1} parent=11 // pred_fallthru
          _
        // Predicated region
        $region41: #{tpu_custom_call.1} parent=11 // pred_check
          %p602 = pneg %p259
        $region42: #{tpu_custom_call.1} parent=11 // pred_check_branch
          %604 = sbr.rel (%p602) target = $region44
        $region43: #{tpu_custom_call.1} parent=11 // pred_region
          _
        $region44: #{tpu_custom_call.1} parent=11 // pred_fallthru
          _
        // Predicated region
        $region45: #{tpu_custom_call.1} parent=11 // pred_check
          %p605 = pneg %p280
        $region46: #{tpu_custom_call.1} parent=11 // pred_check_branch
          %607 = sbr.rel (%p605) target = $region48
        $region47: #{tpu_custom_call.1} parent=11 // pred_region
          _
        $region48: #{tpu_custom_call.1} parent=11 // pred_fallthru
          _
        // Predicated region
        $region49: #{tpu_custom_call.1} parent=11 // pred_check
          %p608 = pneg %p301
        $region50: #{tpu_custom_call.1} parent=11 // pred_check_branch
          %610 = sbr.rel (%p608) target = $region52
        $region51: #{tpu_custom_call.1} parent=11 // pred_region
          _
        $region52: #{tpu_custom_call.1} parent=11 // pred_fallthru
          _
        // Predicated region
        $region53: #{tpu_custom_call.1} parent=11 // pred_check
          %p611 = pneg %p322
        $region54: #{tpu_custom_call.1} parent=11 // pred_check_branch
          %613 = sbr.rel (%p611) target = $region56
        $region55: #{tpu_custom_call.1} parent=11 // pred_region
          %s615 = ssub.s32 1536, 1536
          %616 = vsyncadd [#allocation12], %s615
          %s617 = sshll.u32 [#allocation13], 4
          %s618 = int_to_ptr.vmem [resolvable:$true] %s617
          %623 = dma.hbm_to_vmem [thread:$0]  %s12, 1536, %s618, [#allocation12], 64, 64, 4
        $region56: #{tpu_custom_call.1} parent=11 // pred_fallthru
          _
        // Predicated region
        $region57: #{tpu_custom_call.1} parent=11 // pred_check
          %p624 = pneg %p343
        $region58: #{tpu_custom_call.1} parent=11 // pred_check_branch
          %626 = sbr.rel (%p624) target = $region60
        $region59: #{tpu_custom_call.1} parent=11 // pred_region
          %s628 = ssub.s32 1536, 1536
          %629 = vsyncadd [#allocation15], %s628
          %s630 = sshll.u32 [#allocation14], 4
          %s631 = int_to_ptr.vmem [resolvable:$true] %s630
          %636 = dma.hbm_to_vmem [thread:$0]  %s13, 1536, %s631, [#allocation15], 64, 64, 4
        $region60: #{tpu_custom_call.1} parent=11 // pred_fallthru
          _
        // Predicated region
        $region61: #{tpu_custom_call.1} parent=11 // pred_check
          %p637 = pneg %p364
        $region62: #{tpu_custom_call.1} parent=11 // pred_check_branch
          %639 = sbr.rel (%p637) target = $region64
        $region63: #{tpu_custom_call.1} parent=11 // pred_region
          %s641 = ssub.s32 1536, 1536
          %642 = vsyncadd [#allocation15], %s641
          %s643 = sshll.u32 [#allocation16], 4
          %s644 = int_to_ptr.vmem [resolvable:$true] %s643
          %649 = dma.hbm_to_vmem [thread:$0]  %s14, 1536, %s644, [#allocation15], 64, 64, 4
        $region64: #{tpu_custom_call.1} parent=11 // pred_fallthru
          _
        // Predicated region
        $region65: #{tpu_custom_call.1} parent=11 // pred_check
          %p650 = pneg %p385
        $region66: #{tpu_custom_call.1} parent=11 // pred_check_branch
          %652 = sbr.rel (%p650) target = $region68
        $region67: #{tpu_custom_call.1} parent=11 // pred_region
          %s654 = ssub.s32 1536, 1536
          %655 = vsyncadd [#allocation18], %s654
          %s656 = sshll.u32 [#allocation17], 4
          %s657 = int_to_ptr.vmem [resolvable:$true] %s656
          %662 = dma.hbm_to_vmem [thread:$0]  %s15, 1536, %s657, [#allocation18], 64, 64, 4
        $region68: #{tpu_custom_call.1} parent=11 // pred_fallthru
          _
        // Predicated region
        $region69: #{tpu_custom_call.1} parent=11 // pred_check
          %p663 = pneg %p406
        $region70: #{tpu_custom_call.1} parent=11 // pred_check_branch
          %665 = sbr.rel (%p663) target = $region72
        $region71: #{tpu_custom_call.1} parent=11 // pred_region
          %s667 = ssub.s32 1536, 1536
          %668 = vsyncadd [#allocation18], %s667
          %s669 = sshll.u32 [#allocation19], 4
          %s670 = int_to_ptr.vmem [resolvable:$true] %s669
          %675 = dma.hbm_to_vmem [thread:$0]  %s16, 1536, %s670, [#allocation18], 64, 64, 4
        $region72: #{tpu_custom_call.1} parent=11 // pred_fallthru
          _
        // Predicated region
        $region73: #{tpu_custom_call.1} parent=11 // pred_check
          %p676 = pneg %p427
        $region74: #{tpu_custom_call.1} parent=11 // pred_check_branch
          %678 = sbr.rel (%p676) target = $region76
        $region75: #{tpu_custom_call.1} parent=11 // pred_region
          %s680 = ssub.s32 1536, 1536
          %681 = vsyncadd [#allocation21], %s680
          %s682 = sshll.u32 [#allocation20], 4
          %s683 = int_to_ptr.vmem [resolvable:$true] %s682
          %688 = dma.hbm_to_vmem [thread:$0]  %s17, 1536, %s683, [#allocation21], 64, 64, 4
        $region76: #{tpu_custom_call.1} parent=11 // pred_fallthru
          _
        // Predicated region
        $region77: #{tpu_custom_call.1} parent=11 // pred_check
          %p689 = pneg %p448
        $region78: #{tpu_custom_call.1} parent=11 // pred_check_branch
          %691 = sbr.rel (%p689) target = $region80
        $region79: #{tpu_custom_call.1} parent=11 // pred_region
          _
        $region80: #{tpu_custom_call.1} parent=11 // pred_fallthru
          _
        // Predicated region
        $region81: #{tpu_custom_call.1} parent=11 // pred_check
          %p692 = pneg %p469
        $region82: #{tpu_custom_call.1} parent=11 // pred_check_branch
          %694 = sbr.rel (%p692) target = $region84
        $region83: #{tpu_custom_call.1} parent=11 // pred_region
          _
        $region84: #{tpu_custom_call.1} parent=11 // pred_fallthru
          _
        // Predicated region
        $region85: #{tpu_custom_call.1} parent=11 // pred_check
          %p695 = pneg %p490
        $region86: #{tpu_custom_call.1} parent=11 // pred_check_branch
          %697 = sbr.rel (%p695) target = $region88
        $region87: #{tpu_custom_call.1} parent=11 // pred_region
          _
        $region88: #{tpu_custom_call.1} parent=11 // pred_fallthru
          _
      $region12: #{tpu_custom_call.1} parent=5 // pred_fallthru
        _
      %p698 = scmp.lt.s32.totalorder %s39, 2
      // Predicated region
      $region89: #{tpu_custom_call.1} parent=5 // pred_check
        %p699 = pneg %p698
      $region90: #{tpu_custom_call.1} parent=5 // pred_check_branch
        %701 = sbr.rel (%p699) target = $region92
      $region91: #{tpu_custom_call.1} parent=5 // pred_region
        // Predicated region
        $region93: #{tpu_custom_call.1} parent=91 // pred_check
          %p702 = pneg %p59
        $region94: #{tpu_custom_call.1} parent=91 // pred_check_branch
          %704 = sbr.rel (%p702) target = $region96
        $region95: #{tpu_custom_call.1} parent=91 // pred_region
          %s705 = smul.u32 2, %s39
          %p706 = scmp.lt.s32.totalorder %s705, 3
          %s707 = scalar_select %p706, %s705, 3
          %s708 = smul.addr %s707, 4
          %s709 = scalar_lea.vmem %s0, %s708
          %s710 = smul.u32 2, %s39
        $region96: #{tpu_custom_call.1} parent=91 // pred_fallthru
          _
        // Predicated region
        $region97: #{tpu_custom_call.1} parent=91 // pred_check
          %p711 = pneg %p85
        $region98: #{tpu_custom_call.1} parent=91 // pred_check_branch
          %713 = sbr.rel (%p711) target = $region100
        $region99: #{tpu_custom_call.1} parent=91 // pred_region
          #allocation24 [shape = 'u32[6]{0}', space=smem, size = 0x18, scoped, tag = 'DMA stride descriptor']
          %s714 = sand.u32 %s75, 1
          %s715 = scalar_lea.sflag [#allocation3], %s714
          %s716 = sand.u32 %s75, 1
          %s717 = smul.addr %s716, 32
          %s718 = scalar_lea.vmem [#allocation2], %s717
          %s719 = smul.u32 2, %s39
          %s721 = ssub.s32 512, 512
          %722 = vsyncadd %s715, %s721
          %s723 = smul.addr %s719, 128
          %s724 = scalar_lea.hbm %s1, %s723
          %s726 = sshll.u32 1, 14
          %s727 = sxor.u32 4294967295, %s726
          %s729 = sld [smem:[#allocation0]]
          %s730 = sadd.s32 2, %s729
          %s732 = sshll.u32 7, 26
          %s733 = sxor.u32 4294967295, %s732
          %s734 = sand.u32 0, %s733
          %s735 = sshll.u32 %s730, 26
          %s736 = sor.u32 %s734, %s735
          %s737 = sshll.u32 %s718, 4
          %s738 = int_to_ptr.vmem [resolvable:$true] %s737
          %744 = sst [smem:[#allocation24]] 512
          %s745 = scalar_lea.smem [#allocation24], 1
          %746 = sst [smem:[%s745]] 256
          %s747 = scalar_lea.smem [#allocation24], 2
          %748 = sst [smem:[%s747]] 2
          %s749 = scalar_lea.smem [#allocation24], 3
          %750 = sst [smem:[%s749]] 128
          %s751 = scalar_lea.smem [#allocation24], 4
          %752 = sst [smem:[%s751]] 128
          %s753 = scalar_lea.smem [#allocation24], 5
          %754 = sst [smem:[%s753]] 8
          %756 = dma.general %s724, 512, %s738, %s715, [#allocation23], [#allocation24], %s736, 0
        $region100: #{tpu_custom_call.1} parent=91 // pred_fallthru
          _
      $region92: #{tpu_custom_call.1} parent=5 // pred_fallthru
        _
      %p757 = scmp.le.s32.totalorder 1, %s39
      %p758 = scmp.lt.s32.totalorder %s39, 3
      %p759 = pnand %p757, %p758
      %p760 = pneg %p759
      // Predicated region
      $region101: #{tpu_custom_call.1} parent=5 // pred_check
        _
      $region102: #{tpu_custom_call.1} parent=5 // pred_check_branch
        %762 = sbr.rel (%p759) target = $region104
      $region103: #{tpu_custom_call.1} parent=5 // pred_region
        %s763 = ssub.s32 %s39, 1
        %s764 = sand.u32 %s78, 1
        %s765 = scalar_lea.sflag [#allocation3], %s764
        %s766 = sand.u32 %s78, 1
        %s767 = smul.addr %s766, 32
        %s768 = scalar_lea.vmem [#allocation2], %s767
        // Predicated region
        $region105: #{tpu_custom_call.1} parent=103 // pred_check
          %p769 = pneg %p91
        $region106: #{tpu_custom_call.1} parent=103 // pred_check_branch
          %771 = sbr.rel (%p769) target = $region108
        $region107: #{tpu_custom_call.1} parent=103 // pred_region
          %772 = dma.done %s765, 512
        $region108: #{tpu_custom_call.1} parent=103 // pred_fallthru
          _
        // Predicated region
        $region109: #{tpu_custom_call.1} parent=103 // pred_check
          %p773 = pneg %p133
        $region110: #{tpu_custom_call.1} parent=103 // pred_check_branch
          %775 = sbr.rel (%p773) target = $region112
        $region111: #{tpu_custom_call.1} parent=103 // pred_region
          %776 = dma.done [#allocation6], 384
        $region112: #{tpu_custom_call.1} parent=103 // pred_fallthru
          _
        // Predicated region
        $region113: #{tpu_custom_call.1} parent=103 // pred_check
          %p777 = pneg %p154
        $region114: #{tpu_custom_call.1} parent=103 // pred_check_branch
          %779 = sbr.rel (%p777) target = $region116
        $region115: #{tpu_custom_call.1} parent=103 // pred_region
          %780 = dma.done [#allocation6], 1536
        $region116: #{tpu_custom_call.1} parent=103 // pred_fallthru
          _
        // Predicated region
        $region117: #{tpu_custom_call.1} parent=103 // pred_check
          %p781 = pneg %p175
        $region118: #{tpu_custom_call.1} parent=103 // pred_check_branch
          %783 = sbr.rel (%p781) target = $region120
        $region119: #{tpu_custom_call.1} parent=103 // pred_region
          %784 = dma.done [#allocation9], 384
        $region120: #{tpu_custom_call.1} parent=103 // pred_fallthru
          _
        // Predicated region
        $region121: #{tpu_custom_call.1} parent=103 // pred_check
          %p785 = pneg %p217
        $region122: #{tpu_custom_call.1} parent=103 // pred_check_branch
          %787 = sbr.rel (%p785) target = $region124
        $region123: #{tpu_custom_call.1} parent=103 // pred_region
          %788 = dma.done [#allocation9], 384
        $region124: #{tpu_custom_call.1} parent=103 // pred_fallthru
          _
        // Predicated region
        $region125: #{tpu_custom_call.1} parent=103 // pred_check
          %p789 = pneg %p238
        $region126: #{tpu_custom_call.1} parent=103 // pred_check_branch
          %791 = sbr.rel (%p789) target = $region128
        $region127: #{tpu_custom_call.1} parent=103 // pred_region
          %792 = dma.done [#allocation12], 1536
        $region128: #{tpu_custom_call.1} parent=103 // pred_fallthru
          _
        // Predicated region
        $region129: #{tpu_custom_call.1} parent=103 // pred_check
          %p793 = pneg %p322
        $region130: #{tpu_custom_call.1} parent=103 // pred_check_branch
          %795 = sbr.rel (%p793) target = $region132
        $region131: #{tpu_custom_call.1} parent=103 // pred_region
          %796 = dma.done [#allocation12], 1536
        $region132: #{tpu_custom_call.1} parent=103 // pred_fallthru
          _
        // Predicated region
        $region133: #{tpu_custom_call.1} parent=103 // pred_check
          %p797 = pneg %p343
        $region134: #{tpu_custom_call.1} parent=103 // pred_check_branch
          %799 = sbr.rel (%p797) target = $region136
        $region135: #{tpu_custom_call.1} parent=103 // pred_region
          %800 = dma.done [#allocation15], 1536
        $region136: #{tpu_custom_call.1} parent=103 // pred_fallthru
          _
        // Predicated region
        $region137: #{tpu_custom_call.1} parent=103 // pred_check
          %p801 = pneg %p364
        $region138: #{tpu_custom_call.1} parent=103 // pred_check_branch
          %803 = sbr.rel (%p801) target = $region140
        $region139: #{tpu_custom_call.1} parent=103 // pred_region
          %804 = dma.done [#allocation15], 1536
        $region140: #{tpu_custom_call.1} parent=103 // pred_fallthru
          _
        // Predicated region
        $region141: #{tpu_custom_call.1} parent=103 // pred_check
          %p805 = pneg %p385
        $region142: #{tpu_custom_call.1} parent=103 // pred_check_branch
          %807 = sbr.rel (%p805) target = $region144
        $region143: #{tpu_custom_call.1} parent=103 // pred_region
          %808 = dma.done [#allocation18], 1536
        $region144: #{tpu_custom_call.1} parent=103 // pred_fallthru
          _
        // Predicated region
        $region145: #{tpu_custom_call.1} parent=103 // pred_check
          %p809 = pneg %p406
        $region146: #{tpu_custom_call.1} parent=103 // pred_check_branch
          %811 = sbr.rel (%p809) target = $region148
        $region147: #{tpu_custom_call.1} parent=103 // pred_region
          %812 = dma.done [#allocation18], 1536
        $region148: #{tpu_custom_call.1} parent=103 // pred_fallthru
          _
        // Predicated region
        $region149: #{tpu_custom_call.1} parent=103 // pred_check
          %p813 = pneg %p427
        $region150: #{tpu_custom_call.1} parent=103 // pred_check_branch
          %815 = sbr.rel (%p813) target = $region152
        $region151: #{tpu_custom_call.1} parent=103 // pred_region
          %816 = dma.done [#allocation21], 1536
        $region152: #{tpu_custom_call.1} parent=103 // pred_fallthru
          _
        %s817 = smul.u32 2, %s44
        %p818 = scmp.lt.s32.totalorder %s817, 3
        %s819 = scalar_select %p818, %s817, 3
        %s820 = smul.addr %s819, 4
        %s821 = scalar_lea.vmem %s0, %s820
        %p822 = pneg %p65
        %p823 = pneg %p62
        %s824 = sand.u32 %s78, 1
        %s825 = scalar_lea.sflag [#allocation3], %s824
        %s826 = sand.u32 %s78, 1
        %s827 = smul.addr %s826, 32
        %s828 = scalar_lea.vmem [#allocation2], %s827
        %p829 = pneg %p91
        %p830 = pneg %p88
        %p831 = pneg %p112
        %p832 = pneg %p109
        %p833 = pneg %p133
        %p834 = pneg %p130
        %p835 = pneg %p154
        %p836 = pneg %p151
        %p837 = pneg %p175
        %p838 = pneg %p172
        %p839 = pneg %p196
        %p840 = pneg %p193
        %p841 = pneg %p217
        %p842 = pneg %p214
        %p843 = pneg %p238
        %p844 = pneg %p235
        %p845 = pneg %p259
        %p846 = pneg %p256
        %p847 = pneg %p280
        %p848 = pneg %p277
        %p849 = pneg %p301
        %p850 = pneg %p298
        %p851 = pneg %p322
        %p852 = pneg %p319
        %p853 = pneg %p343
        %p854 = pneg %p340
        %p855 = pneg %p364
        %p856 = pneg %p361
        %p857 = pneg %p385
        %p858 = pneg %p382
        %p859 = pneg %p406
        %p860 = pneg %p403
        %p861 = pneg %p427
        %p862 = pneg %p424
        %p863 = pneg %p448
        %p864 = pneg %p445
        %p865 = pneg %p469
        %p866 = pneg %p466
        %p867 = pneg %p490
        %p868 = pneg %p487
        %p869 = pneg %p516
        %p870 = pneg %p513
        %s871 = sand.u32 %s503, 1
        %s872 = scalar_lea.sflag [#allocation4], %s871
        %s873 = sand.u32 %s503, 1
        %s874 = smul.addr %s873, 32
        %s875 = scalar_lea.vmem [#allocation22], %s874
        %s876 = smul.u32 2, %s44
        %p877 = scmp.lt.s32.totalorder %s876, 3
        %s878 = scalar_select %p877, %s876, 3
        %s879 = smul.addr %s878, 4
        %s880 = scalar_lea.vmem %s0, %s879
        %s881 = smul.u32 2, %s44
        %s882 = smul.u32 2, %s44
        %s883 = smul.u32 2, %s44
        %v885 = vld [vmem:[%s2] sm:$0xf]
        %v886 = vld [vmem:[%s2 + $0x4] sm:$0xf]
        %v887 = vld [vmem:[%s2 + $0x8] sm:$0xf]
        %v888 = vld [vmem:[%s2 + $0xc] sm:$0xf]
        %v889 = vld [vmem:[%s2 + $0x10] sm:$0xf]
        %v890 = vld [vmem:[%s2 + $0x14] sm:$0xf]
        %v891 = vld [vmem:[%s2 + $0x18] sm:$0xf]
        %v892 = vld [vmem:[%s2 + $0x1c] sm:$0xf]
        %v893 = vld [vmem:[%s2 + $0x20] sm:$0xf]
        %v894 = vld [vmem:[%s2 + $0x24] sm:$0xf]
        %v895 = vld [vmem:[%s2 + $0x28] sm:$0xf]
        %v896 = vld [vmem:[%s2 + $0x2c] sm:$0xf]
        %v897 = vld [vmem:[%s880] sm:$0xf]
        %v898 = vld [vmem:[%s880 + $0x4] sm:$0xf]
        %v899 = vld [vmem:[%s768] sm:$0xff]
        %v900 = vld [vmem:[%s768 + $0x8] sm:$0xff]
        %v901 = vpack.c.bf16 %v900, %v899
        %v914 = vunpack.c.l.b16 %v885
        %v915 = vunpack.c.l.b16 %v886
        %v916 = vunpack.c.l.b16 %v887
        %v917 = vunpack.c.l.b16 %v888
        %v918 = vunpack.c.l.b16 %v889
        %v919 = vunpack.c.l.b16 %v890
        %v920 = vunpack.c.l.b16 %v891
        %v921 = vunpack.c.l.b16 %v892
        %v922 = vunpack.c.l.b16 %v893
        %v923 = vunpack.c.l.b16 %v894
        %v924 = vunpack.c.l.b16 %v895
        %v925 = vunpack.c.l.b16 %v896
        %v926 = vpack.c.b16 %v915, %v914
        %v927 = vpack.c.b16 %v917, %v916
        %v928 = vpack.c.b16 %v919, %v918
        %v929 = vpack.c.b16 %v921, %v920
        %v930 = vpack.c.b16 %v923, %v922
        %v931 = vpack.c.b16 %v925, %v924
        %v934 = vunpack.c.l.b16 %v897
        %v935 = vunpack.c.l.b16 %v898
        %v936 = vpack.c.b16 %v935, %v934
        %vm938 = vcmask 130048
        %v940 = vsel %vm938, %v926, 0
        %v943 = vsel %vm938, %v927, 0
        %v946 = vsel %vm938, %v928, 0
        %v949 = vsel %vm938, %v929, 0
        %v952 = vsel %vm938, %v930, 0
        %v955 = vsel %vm938, %v931, 0
        %957 = vmatprep.subr.bf16.mxu0 0
        %958 = vmatpush1.bf16.msra.mxu0 %v936
        %959 = vmatprep.subr.bf16.mxu0 0
        %960 = vmatpush1.bf16.msra.mxu0 0
        %961 = vmatprep.subr.bf16.mxu0 0
        %962 = vmatpush1.bf16.msra.mxu0 0
        %963 = vmatprep.subr.bf16.mxu0 0
        %964 = vmatpush1.bf16.msra.mxu0 0
        %965 = vmatprep.subr.bf16.mxu0 0
        %966 = vmatpush1.bf16.msra.mxu0 0
        %967 = vmatprep.subr.bf16.mxu0 0
        %968 = vmatpush1.bf16.msra.mxu0 0
        %969 = vmatprep.subr.bf16.mxu0 0
        %970 = vmatpush1.bf16.msra.mxu0 0
        %971 = vmatprep.subr.bf16.mxu0 0
        %972 = vmatpush1.bf16.msra.mxu0 0
        %973 = vmatprep.subr.bf16.mxu0 0
        %974 = vmatpush1.bf16.msra.mxu0 0
        %975 = vmatprep.subr.bf16.mxu0 0
        %976 = vmatpush1.bf16.msra.mxu0 0
        %977 = vmatprep.subr.bf16.mxu0 0
        %978 = vmatpush1.bf16.msra.mxu0 0
        %979 = vmatprep.subr.bf16.mxu0 0
        %980 = vmatpush1.bf16.msra.mxu0 0
        %981 = vmatprep.subr.bf16.mxu0 0
        %982 = vmatpush1.bf16.msra.mxu0 0
        %983 = vmatprep.subr.bf16.mxu0 0
        %984 = vmatpush1.bf16.msra.mxu0 0
        %985 = vmatprep.subr.bf16.mxu0 0
        %986 = vmatpush1.bf16.msra.mxu0 0
        %987 = vmatprep.subr.bf16.mxu0 0
        %988 = vmatpush1.bf16.msra.mxu0 0
        %989 = vmatprep.mubr.bf16.mxu0 0
        %990 = vmatmul.mubr.bf16.gmra.mrb[0].mxu0 %v940
        %v991 = vpop.f32.mrb[0].mxu0
        %v992 = vadd.f32 0.0, %v991
        %v993 = vpop.f32.mrb[0].mxu0
        %v994 = vpop.f32.mrb[0].mxu0
        %v995 = vadd.f32 0.0, %v994
        %v996 = vpop.f32.mrb[0].mxu0
        %997 = vmatprep.mubr.bf16.mxu0 0
        %998 = vmatmul.mubr.bf16.gmra.mrb[0].mxu0 %v943
        %v999 = vpop.f32.mrb[0].mxu0
        %v1000 = vadd.f32 0.0, %v999
        %v1001 = vpop.f32.mrb[0].mxu0
        %v1002 = vpop.f32.mrb[0].mxu0
        %v1003 = vadd.f32 0.0, %v1002
        %v1004 = vpop.f32.mrb[0].mxu0
        %1005 = vmatprep.mubr.bf16.mxu0 0
        %1006 = vmatmul.mubr.bf16.gmra.mrb[0].mxu0 %v946
        %v1007 = vpop.f32.mrb[0].mxu0
        %v1008 = vadd.f32 0.0, %v1007
        %v1009 = vpop.f32.mrb[0].mxu0
        %v1010 = vpop.f32.mrb[0].mxu0
        %v1011 = vadd.f32 0.0, %v1010
        %v1012 = vpop.f32.mrb[0].mxu0
        %1013 = vmatprep.mubr.bf16.mxu0 0
        %1014 = vmatmul.mubr.bf16.gmra.mrb[0].mxu0 %v949
        %v1015 = vpop.f32.mrb[0].mxu0
        %v1016 = vadd.f32 0.0, %v1015
        %v1017 = vpop.f32.mrb[0].mxu0
        %v1018 = vpop.f32.mrb[0].mxu0
        %v1019 = vadd.f32 0.0, %v1018
        %v1020 = vpop.f32.mrb[0].mxu0
        %1021 = vmatprep.mubr.bf16.mxu0 0
        %1022 = vmatmul.mubr.bf16.gmra.mrb[0].mxu0 %v952
        %v1023 = vpop.f32.mrb[0].mxu0
        %v1024 = vadd.f32 0.0, %v1023
        %v1025 = vpop.f32.mrb[0].mxu0
        %v1026 = vpop.f32.mrb[0].mxu0
        %v1027 = vadd.f32 0.0, %v1026
        %v1028 = vpop.f32.mrb[0].mxu0
        %1029 = vmatprep.mubr.bf16.mxu0 0
        %1030 = vmatmul.mubr.bf16.gmra.mrb[0].mxu0 %v955
        %v1031 = vpop.f32.mrb[0].mxu0
        %v1032 = vadd.f32 0.0, %v1031
        %v1033 = vpop.f32.mrb[0].mxu0
        %v1034 = vpop.f32.mrb[0].mxu0
        %v1035 = vadd.f32 0.0, %v1034
        %v1036 = vpop.f32.mrb[0].mxu0
        %1037 = vdwg.mxu0
        %v1038 = vpack.c.bf16 %v995, %v992
        %v1039 = vpack.c.bf16 %v1003, %v1000
        %v1040 = vpack.c.bf16 %v1011, %v1008
        %v1041 = vpack.c.bf16 %v1019, %v1016
        %v1042 = vpack.c.bf16 %v1027, %v1024
        %v1043 = vpack.c.bf16 %v1035, %v1032
        %1044 = vmatprep.subr.bf16.mxu0 0
        %1045 = vmatpush1.bf16.msra.mxu0 %v901
        %1046 = vmatprep.subr.bf16.mxu0 0
        %1047 = vmatpush1.bf16.msra.mxu0 0
        %1048 = vmatprep.subr.bf16.mxu0 0
        %1049 = vmatpush1.bf16.msra.mxu0 0
        %1050 = vmatprep.subr.bf16.mxu0 0
        %1051 = vmatpush1.bf16.msra.mxu0 0
        %1052 = vmatprep.subr.bf16.mxu0 0
        %1053 = vmatpush1.bf16.msra.mxu0 0
        %1054 = vmatprep.subr.bf16.mxu0 0
        %1055 = vmatpush1.bf16.msra.mxu0 0
        %1056 = vmatprep.subr.bf16.mxu0 0
        %1057 = vmatpush1.bf16.msra.mxu0 0
        %1058 = vmatprep.subr.bf16.mxu0 0
        %1059 = vmatpush1.bf16.msra.mxu0 0
        %1060 = vmatprep.subr.bf16.mxu0 0
        %1061 = vmatpush1.bf16.msra.mxu0 0
        %1062 = vmatprep.subr.bf16.mxu0 0
        %1063 = vmatpush1.bf16.msra.mxu0 0
        %1064 = vmatprep.subr.bf16.mxu0 0
        %1065 = vmatpush1.bf16.msra.mxu0 0
        %1066 = vmatprep.subr.bf16.mxu0 0
        %1067 = vmatpush1.bf16.msra.mxu0 0
        %1068 = vmatprep.subr.bf16.mxu0 0
        %1069 = vmatpush1.bf16.msra.mxu0 0
        %1070 = vmatprep.subr.bf16.mxu0 0
        %1071 = vmatpush1.bf16.msra.mxu0 0
        %1072 = vmatprep.subr.bf16.mxu0 0
        %1073 = vmatpush1.bf16.msra.mxu0 0
        %1074 = vmatprep.subr.bf16.mxu0 0
        %1075 = vmatpush1.bf16.msra.mxu0 0
        %1076 = vmatprep.mubr.bf16.mxu0 0
        %1077 = vmatmul.mubr.bf16.gmra.mrb[0].mxu0 %v940
        %v1078 = vpop.f32.mrb[0].mxu0
        %v1079 = vadd.f32 0.0, %v1078
        %v1080 = vpop.f32.mrb[0].mxu0
        %v1081 = vpop.f32.mrb[0].mxu0
        %v1082 = vadd.f32 0.0, %v1081
        %v1083 = vpop.f32.mrb[0].mxu0
        %1084 = vmatprep.mubr.bf16.mxu0 0
        %1085 = vmatmul.mubr.bf16.gmra.mrb[0].mxu0 %v943
        %v1086 = vpop.f32.mrb[0].mxu0
        %v1087 = vadd.f32 0.0, %v1086
        %v1088 = vpop.f32.mrb[0].mxu0
        %v1089 = vpop.f32.mrb[0].mxu0
        %v1090 = vadd.f32 0.0, %v1089
        %v1091 = vpop.f32.mrb[0].mxu0
        %1092 = vmatprep.mubr.bf16.mxu0 0
        %1093 = vmatmul.mubr.bf16.gmra.mrb[0].mxu0 %v946
        %v1094 = vpop.f32.mrb[0].mxu0
        %v1095 = vadd.f32 0.0, %v1094
        %v1096 = vpop.f32.mrb[0].mxu0
        %v1097 = vpop.f32.mrb[0].mxu0
        %v1098 = vadd.f32 0.0, %v1097
        %v1099 = vpop.f32.mrb[0].mxu0
        %1100 = vmatprep.mubr.bf16.mxu0 0
        %1101 = vmatmul.mubr.bf16.gmra.mrb[0].mxu0 %v949
        %v1102 = vpop.f32.mrb[0].mxu0
        %v1103 = vadd.f32 0.0, %v1102
        %v1104 = vpop.f32.mrb[0].mxu0
        %v1105 = vpop.f32.mrb[0].mxu0
        %v1106 = vadd.f32 0.0, %v1105
        %v1107 = vpop.f32.mrb[0].mxu0
        %1108 = vmatprep.mubr.bf16.mxu0 0
        %1109 = vmatmul.mubr.bf16.gmra.mrb[0].mxu0 %v952
        %v1110 = vpop.f32.mrb[0].mxu0
        %v1111 = vadd.f32 0.0, %v1110
        %v1112 = vpop.f32.mrb[0].mxu0
        %v1113 = vpop.f32.mrb[0].mxu0
        %v1114 = vadd.f32 0.0, %v1113
        %v1115 = vpop.f32.mrb[0].mxu0
        %1116 = vmatprep.mubr.bf16.mxu0 0
        %1117 = vmatmul.mubr.bf16.gmra.mrb[0].mxu0 %v955
        %v1118 = vpop.f32.mrb[0].mxu0
        %v1119 = vadd.f32 0.0, %v1118
        %v1120 = vpop.f32.mrb[0].mxu0
        %v1121 = vpop.f32.mrb[0].mxu0
        %v1122 = vadd.f32 0.0, %v1121
        %v1123 = vpop.f32.mrb[0].mxu0
        %1124 = vdwg.mxu0
        %v1125 = vpack.c.bf16 %v1082, %v1079
        %v1126 = vpack.c.bf16 %v1090, %v1087
        %v1127 = vpack.c.bf16 %v1098, %v1095
        %v1128 = vpack.c.bf16 %v1106, %v1103
        %v1129 = vpack.c.bf16 %v1114, %v1111
        %v1130 = vpack.c.bf16 %v1122, %v1119
        %v1131 = vld [vmem:[#allocation5] sm:$0xf]
        %v1132 = vld [vmem:[#allocation7] sm:$0xf]
        %v1133 = vld [vmem:[#allocation7 + $0x4] sm:$0xf]
        %v1134 = vld [vmem:[#allocation7 + $0x8] sm:$0xf]
        %v1135 = vld [vmem:[#allocation7 + $0xc] sm:$0xf]
        %v1140 = vunpack.c.l.b16 %v1132
        %v1141 = vunpack.c.l.b16 %v1133
        %v1142 = vunpack.c.l.b16 %v1134
        %v1143 = vunpack.c.l.b16 %v1135
        %v1144 = vpack.c.b16 %v1141, %v1140
        %v1145 = vpack.c.b16 %v1143, %v1142
        %vm1148 = vcmask 261120
        %v1150 = vsel %vm1148, %v1125, 0
        %1152 = vmatprep.subr.bf16.mxu0 0
        %1153 = vmatpush1.bf16.msra.mxu0 %v1144
        %1154 = vmatprep.subr.bf16.mxu0 0
        %1155 = vmatpush1.bf16.msra.mxu0 %v1145
        %1156 = vmatprep.subr.bf16.mxu0 0
        %1157 = vmatpush1.bf16.msra.mxu0 0
        %1158 = vmatprep.subr.bf16.mxu0 0
        %1159 = vmatpush1.bf16.msra.mxu0 0
        %1160 = vmatprep.subr.bf16.mxu0 0
        %1161 = vmatpush1.bf16.msra.mxu0 0
        %1162 = vmatprep.subr.bf16.mxu0 0
        %1163 = vmatpush1.bf16.msra.mxu0 0
        %1164 = vmatprep.subr.bf16.mxu0 0
        %1165 = vmatpush1.bf16.msra.mxu0 0
        %1166 = vmatprep.subr.bf16.mxu0 0
        %1167 = vmatpush1.bf16.msra.mxu0 0
        %1168 = vmatprep.subr.bf16.mxu0 0
        %1169 = vmatpush1.bf16.msra.mxu0 0
        %1170 = vmatprep.subr.bf16.mxu0 0
        %1171 = vmatpush1.bf16.msra.mxu0 0
        %1172 = vmatprep.subr.bf16.mxu0 0
        %1173 = vmatpush1.bf16.msra.mxu0 0
        %1174 = vmatprep.subr.bf16.mxu0 0
        %1175 = vmatpush1.bf16.msra.mxu0 0
        %1176 = vmatprep.subr.bf16.mxu0 0
        %1177 = vmatpush1.bf16.msra.mxu0 0
        %1178 = vmatprep.subr.bf16.mxu0 0
        %1179 = vmatpush1.bf16.msra.mxu0 0
        %1180 = vmatprep.subr.bf16.mxu0 0
        %1181 = vmatpush1.bf16.msra.mxu0 0
        %1182 = vmatprep.subr.bf16.mxu0 0
        %1183 = vmatpush1.bf16.msra.mxu0 0
        %1184 = vmatprep.mubr.bf16.mxu0 0
        %1185 = vmatmul.mubr.bf16.gmra.mrb[0].mxu0 %v1150
        %v1186 = vpop.f32.mrb[0].mxu0
        %v1187 = vadd.f32 0.0, %v1186
        %v1188 = vpop.f32.mrb[0].mxu0
        %v1189 = vpop.f32.mrb[0].mxu0
        %v1190 = vadd.f32 0.0, %v1189
        %v1191 = vpop.f32.mrb[0].mxu0
        %1192 = vdwg.mxu0
        %vm1193 = vcmask 64512
        %v1195 = vsel %vm1193, %v1038, 0
        %vm1197 = vcmask 1043456
        %v1199 = vsel %vm1197, %v1131, 0
        %1201 = vmatprep.subr.bf16.mxu0 0
        %1202 = vmatpush1.bf16.msra.mxu0 %v1199
        %1203 = vmatprep.subr.bf16.mxu0 0
        %1204 = vmatpush1.bf16.msra.mxu0 0
        %1205 = vmatprep.subr.bf16.mxu0 0
        %1206 = vmatpush1.bf16.msra.mxu0 0
        %1207 = vmatprep.subr.bf16.mxu0 0
        %1208 = vmatpush1.bf16.msra.mxu0 0
        %1209 = vmatprep.subr.bf16.mxu0 0
        %1210 = vmatpush1.bf16.msra.mxu0 0
        %1211 = vmatprep.subr.bf16.mxu0 0
        %1212 = vmatpush1.bf16.msra.mxu0 0
        %1213 = vmatprep.subr.bf16.mxu0 0
        %1214 = vmatpush1.bf16.msra.mxu0 0
        %1215 = vmatprep.subr.bf16.mxu0 0
        %1216 = vmatpush1.bf16.msra.mxu0 0
        %1217 = vmatprep.subr.bf16.mxu0 0
        %1218 = vmatpush1.bf16.msra.mxu0 0
        %1219 = vmatprep.subr.bf16.mxu0 0
        %1220 = vmatpush1.bf16.msra.mxu0 0
        %1221 = vmatprep.subr.bf16.mxu0 0
        %1222 = vmatpush1.bf16.msra.mxu0 0
        %1223 = vmatprep.subr.bf16.mxu0 0
        %1224 = vmatpush1.bf16.msra.mxu0 0
        %1225 = vmatprep.subr.bf16.mxu0 0
        %1226 = vmatpush1.bf16.msra.mxu0 0
        %1227 = vmatprep.subr.bf16.mxu0 0
        %1228 = vmatpush1.bf16.msra.mxu0 0
        %1229 = vmatprep.subr.bf16.mxu0 0
        %1230 = vmatpush1.bf16.msra.mxu0 0
        %1231 = vmatprep.subr.bf16.mxu0 0
        %1232 = vmatpush1.bf16.msra.mxu0 0
        %1233 = vmatprep.mubr.bf16.mxu0 0
        %1234 = vmatmul.mubr.bf16.gmra.mrb[0].mxu0 %v1195
        %v1235 = vpop.f32.mrb[0].mxu0
        %v1236 = vadd.f32 %v1187, %v1235
        %v1237 = vpop.f32.mrb[0].mxu0
        %v1238 = vpop.f32.mrb[0].mxu0
        %v1239 = vadd.f32 %v1190, %v1238
        %v1240 = vpop.f32.mrb[0].mxu0
        %1241 = vdwg.mxu0
        %v1242 = vld [vmem:[#allocation8] sm:$0xf]
        %v1243 = vld [vmem:[%s6] sm:$0xf]
        %v1244 = vld [vmem:[%s6 + $0x4] sm:$0xf]
        %v1245 = vld [vmem:[%s6 + $0x8] sm:$0xf]
        %v1246 = vld [vmem:[%s6 + $0xc] sm:$0xf]
        %v1251 = vunpack.c.l.b16 %v1243
        %v1252 = vunpack.c.l.b16 %v1244
        %v1253 = vunpack.c.l.b16 %v1245
        %v1254 = vunpack.c.l.b16 %v1246
        %v1255 = vpack.c.b16 %v1252, %v1251
        %v1256 = vpack.c.b16 %v1254, %v1253
        %1259 = vmatprep.subr.bf16.mxu0 0
        %1260 = vmatpush1.bf16.msra.mxu0 %v1255
        %1261 = vmatprep.subr.bf16.mxu0 0
        %1262 = vmatpush1.bf16.msra.mxu0 %v1256
        %1263 = vmatprep.subr.bf16.mxu0 0
        %1264 = vmatpush1.bf16.msra.mxu0 0
        %1265 = vmatprep.subr.bf16.mxu0 0
        %1266 = vmatpush1.bf16.msra.mxu0 0
        %1267 = vmatprep.subr.bf16.mxu0 0
        %1268 = vmatpush1.bf16.msra.mxu0 0
        %1269 = vmatprep.subr.bf16.mxu0 0
        %1270 = vmatpush1.bf16.msra.mxu0 0
        %1271 = vmatprep.subr.bf16.mxu0 0
        %1272 = vmatpush1.bf16.msra.mxu0 0
        %1273 = vmatprep.subr.bf16.mxu0 0
        %1274 = vmatpush1.bf16.msra.mxu0 0
        %1275 = vmatprep.subr.bf16.mxu0 0
        %1276 = vmatpush1.bf16.msra.mxu0 0
        %1277 = vmatprep.subr.bf16.mxu0 0
        %1278 = vmatpush1.bf16.msra.mxu0 0
        %1279 = vmatprep.subr.bf16.mxu0 0
        %1280 = vmatpush1.bf16.msra.mxu0 0
        %1281 = vmatprep.subr.bf16.mxu0 0
        %1282 = vmatpush1.bf16.msra.mxu0 0
        %1283 = vmatprep.subr.bf16.mxu0 0
        %1284 = vmatpush1.bf16.msra.mxu0 0
        %1285 = vmatprep.subr.bf16.mxu0 0
        %1286 = vmatpush1.bf16.msra.mxu0 0
        %1287 = vmatprep.subr.bf16.mxu0 0
        %1288 = vmatpush1.bf16.msra.mxu0 0
        %1289 = vmatprep.subr.bf16.mxu0 0
        %1290 = vmatpush1.bf16.msra.mxu0 0
        %1291 = vmatprep.mubr.bf16.mxu0 0
        %1292 = vmatmul.mubr.bf16.gmra.mrb[0].mxu0 %v1150
        %v1293 = vpop.f32.mrb[0].mxu0
        %v1294 = vadd.f32 0.0, %v1293
        %v1295 = vpop.f32.mrb[0].mxu0
        %v1296 = vpop.f32.mrb[0].mxu0
        %v1297 = vadd.f32 0.0, %v1296
        %v1298 = vpop.f32.mrb[0].mxu0
        %1299 = vdwg.mxu0
        %v1301 = vsel %vm1197, %v1242, 0
        %1303 = vmatprep.subr.bf16.mxu0 0
        %1304 = vmatpush1.bf16.msra.mxu0 %v1301
        %1305 = vmatprep.subr.bf16.mxu0 0
        %1306 = vmatpush1.bf16.msra.mxu0 0
        %1307 = vmatprep.subr.bf16.mxu0 0
        %1308 = vmatpush1.bf16.msra.mxu0 0
        %1309 = vmatprep.subr.bf16.mxu0 0
        %1310 = vmatpush1.bf16.msra.mxu0 0
        %1311 = vmatprep.subr.bf16.mxu0 0
        %1312 = vmatpush1.bf16.msra.mxu0 0
        %1313 = vmatprep.subr.bf16.mxu0 0
        %1314 = vmatpush1.bf16.msra.mxu0 0
        %1315 = vmatprep.subr.bf16.mxu0 0
        %1316 = vmatpush1.bf16.msra.mxu0 0
        %1317 = vmatprep.subr.bf16.mxu0 0
        %1318 = vmatpush1.bf16.msra.mxu0 0
        %1319 = vmatprep.subr.bf16.mxu0 0
        %1320 = vmatpush1.bf16.msra.mxu0 0
        %1321 = vmatprep.subr.bf16.mxu0 0
        %1322 = vmatpush1.bf16.msra.mxu0 0
        %1323 = vmatprep.subr.bf16.mxu0 0
        %1324 = vmatpush1.bf16.msra.mxu0 0
        %1325 = vmatprep.subr.bf16.mxu0 0
        %1326 = vmatpush1.bf16.msra.mxu0 0
        %1327 = vmatprep.subr.bf16.mxu0 0
        %1328 = vmatpush1.bf16.msra.mxu0 0
        %1329 = vmatprep.subr.bf16.mxu0 0
        %1330 = vmatpush1.bf16.msra.mxu0 0
        %1331 = vmatprep.subr.bf16.mxu0 0
        %1332 = vmatpush1.bf16.msra.mxu0 0
        %1333 = vmatprep.subr.bf16.mxu0 0
        %1334 = vmatpush1.bf16.msra.mxu0 0
        %1335 = vmatprep.mubr.bf16.mxu0 0
        %1336 = vmatmul.mubr.bf16.gmra.mrb[0].mxu0 %v1195
        %v1337 = vpop.f32.mrb[0].mxu0
        %v1338 = vadd.f32 %v1294, %v1337
        %v1339 = vpop.f32.mrb[0].mxu0
        %v1340 = vpop.f32.mrb[0].mxu0
        %v1341 = vadd.f32 %v1297, %v1340
        %v1342 = vpop.f32.mrb[0].mxu0
        %1343 = vdwg.mxu0
        %s1344 = scalar_lea.vmem [#allocation5], 4
        %v1345 = vld [vmem:[%s1344] sm:$0xf]
        %v1347 = vsel %vm1193, %v1039, 0
        %v1350 = vsel %vm1197, %v1345, 0
        %1352 = vmatprep.subr.bf16.mxu0 0
        %1353 = vmatpush1.bf16.msra.mxu0 %v1350
        %1354 = vmatprep.subr.bf16.mxu0 0
        %1355 = vmatpush1.bf16.msra.mxu0 0
        %1356 = vmatprep.subr.bf16.mxu0 0
        %1357 = vmatpush1.bf16.msra.mxu0 0
        %1358 = vmatprep.subr.bf16.mxu0 0
        %1359 = vmatpush1.bf16.msra.mxu0 0
        %1360 = vmatprep.subr.bf16.mxu0 0
        %1361 = vmatpush1.bf16.msra.mxu0 0
        %1362 = vmatprep.subr.bf16.mxu0 0
        %1363 = vmatpush1.bf16.msra.mxu0 0
        %1364 = vmatprep.subr.bf16.mxu0 0
        %1365 = vmatpush1.bf16.msra.mxu0 0
        %1366 = vmatprep.subr.bf16.mxu0 0
        %1367 = vmatpush1.bf16.msra.mxu0 0
        %1368 = vmatprep.subr.bf16.mxu0 0
        %1369 = vmatpush1.bf16.msra.mxu0 0
        %1370 = vmatprep.subr.bf16.mxu0 0
        %1371 = vmatpush1.bf16.msra.mxu0 0
        %1372 = vmatprep.subr.bf16.mxu0 0
        %1373 = vmatpush1.bf16.msra.mxu0 0
        %1374 = vmatprep.subr.bf16.mxu0 0
        %1375 = vmatpush1.bf16.msra.mxu0 0
        %1376 = vmatprep.subr.bf16.mxu0 0
        %1377 = vmatpush1.bf16.msra.mxu0 0
        %1378 = vmatprep.subr.bf16.mxu0 0
        %1379 = vmatpush1.bf16.msra.mxu0 0
        %1380 = vmatprep.subr.bf16.mxu0 0
        %1381 = vmatpush1.bf16.msra.mxu0 0
        %1382 = vmatprep.subr.bf16.mxu0 0
        %1383 = vmatpush1.bf16.msra.mxu0 0
        %1384 = vmatprep.mubr.bf16.mxu0 0
        %1385 = vmatmul.mubr.bf16.gmra.mrb[0].mxu0 %v1347
        %v1386 = vpop.f32.mrb[0].mxu0
        %v1387 = vadd.f32 0.0, %v1386
        %v1388 = vpop.f32.mrb[0].mxu0
        %v1389 = vpop.f32.mrb[0].mxu0
        %v1390 = vadd.f32 0.0, %v1389
        %v1391 = vpop.f32.mrb[0].mxu0
        %1392 = vdwg.mxu0
        %v1393 = vadd.f32 %v1236, %v1387
        %v1394 = vadd.f32 %v1239, %v1390
        %s1395 = scalar_lea.vmem [#allocation7], 16
        %v1396 = vld [vmem:[%s1395] sm:$0xf]
        %v1397 = vld [vmem:[%s1395 + $0x4] sm:$0xf]
        %v1398 = vld [vmem:[%s1395 + $0x8] sm:$0xf]
        %v1399 = vld [vmem:[%s1395 + $0xc] sm:$0xf]
        %v1404 = vunpack.c.l.b16 %v1396
        %v1405 = vunpack.c.l.b16 %v1397
        %v1406 = vunpack.c.l.b16 %v1398
        %v1407 = vunpack.c.l.b16 %v1399
        %v1408 = vpack.c.b16 %v1405, %v1404
        %v1409 = vpack.c.b16 %v1407, %v1406
        %v1413 = vsel %vm1148, %v1126, 0
        %1415 = vmatprep.subr.bf16.mxu0 0
        %1416 = vmatpush1.bf16.msra.mxu0 %v1408
        %1417 = vmatprep.subr.bf16.mxu0 0
        %1418 = vmatpush1.bf16.msra.mxu0 %v1409
        %1419 = vmatprep.subr.bf16.mxu0 0
        %1420 = vmatpush1.bf16.msra.mxu0 0
        %1421 = vmatprep.subr.bf16.mxu0 0
        %1422 = vmatpush1.bf16.msra.mxu0 0
        %1423 = vmatprep.subr.bf16.mxu0 0
        %1424 = vmatpush1.bf16.msra.mxu0 0
        %1425 = vmatprep.subr.bf16.mxu0 0
        %1426 = vmatpush1.bf16.msra.mxu0 0
        %1427 = vmatprep.subr.bf16.mxu0 0
        %1428 = vmatpush1.bf16.msra.mxu0 0
        %1429 = vmatprep.subr.bf16.mxu0 0
        %1430 = vmatpush1.bf16.msra.mxu0 0
        %1431 = vmatprep.subr.bf16.mxu0 0
        %1432 = vmatpush1.bf16.msra.mxu0 0
        %1433 = vmatprep.subr.bf16.mxu0 0
        %1434 = vmatpush1.bf16.msra.mxu0 0
        %1435 = vmatprep.subr.bf16.mxu0 0
        %1436 = vmatpush1.bf16.msra.mxu0 0
        %1437 = vmatprep.subr.bf16.mxu0 0
        %1438 = vmatpush1.bf16.msra.mxu0 0
        %1439 = vmatprep.subr.bf16.mxu0 0
        %1440 = vmatpush1.bf16.msra.mxu0 0
        %1441 = vmatprep.subr.bf16.mxu0 0
        %1442 = vmatpush1.bf16.msra.mxu0 0
        %1443 = vmatprep.subr.bf16.mxu0 0
        %1444 = vmatpush1.bf16.msra.mxu0 0
        %1445 = vmatprep.subr.bf16.mxu0 0
        %1446 = vmatpush1.bf16.msra.mxu0 0
        %1447 = vmatprep.mubr.bf16.mxu0 0
        %1448 = vmatmul.mubr.bf16.gmra.mrb[0].mxu0 %v1413
        %v1449 = vpop.f32.mrb[0].mxu0
        %v1450 = vadd.f32 0.0, %v1449
        %v1451 = vpop.f32.mrb[0].mxu0
        %v1452 = vpop.f32.mrb[0].mxu0
        %v1453 = vadd.f32 0.0, %v1452
        %v1454 = vpop.f32.mrb[0].mxu0
        %1455 = vdwg.mxu0
        %v1456 = vadd.f32 %v1393, %v1450
        %v1457 = vadd.f32 %v1394, %v1453
        %s1458 = scalar_lea.vmem [#allocation8], 4
        %v1459 = vld [vmem:[%s1458] sm:$0xf]
        %v1461 = vsel %vm1197, %v1459, 0
        %1463 = vmatprep.subr.bf16.mxu0 0
        %1464 = vmatpush1.bf16.msra.mxu0 %v1461
        %1465 = vmatprep.subr.bf16.mxu0 0
        %1466 = vmatpush1.bf16.msra.mxu0 0
        %1467 = vmatprep.subr.bf16.mxu0 0
        %1468 = vmatpush1.bf16.msra.mxu0 0
        %1469 = vmatprep.subr.bf16.mxu0 0
        %1470 = vmatpush1.bf16.msra.mxu0 0
        %1471 = vmatprep.subr.bf16.mxu0 0
        %1472 = vmatpush1.bf16.msra.mxu0 0
        %1473 = vmatprep.subr.bf16.mxu0 0
        %1474 = vmatpush1.bf16.msra.mxu0 0
        %1475 = vmatprep.subr.bf16.mxu0 0
        %1476 = vmatpush1.bf16.msra.mxu0 0
        %1477 = vmatprep.subr.bf16.mxu0 0
        %1478 = vmatpush1.bf16.msra.mxu0 0
        %1479 = vmatprep.subr.bf16.mxu0 0
        %1480 = vmatpush1.bf16.msra.mxu0 0
        %1481 = vmatprep.subr.bf16.mxu0 0
        %1482 = vmatpush1.bf16.msra.mxu0 0
        %1483 = vmatprep.subr.bf16.mxu0 0
        %1484 = vmatpush1.bf16.msra.mxu0 0
        %1485 = vmatprep.subr.bf16.mxu0 0
        %1486 = vmatpush1.bf16.msra.mxu0 0
        %1487 = vmatprep.subr.bf16.mxu0 0
        %1488 = vmatpush1.bf16.msra.mxu0 0
        %1489 = vmatprep.subr.bf16.mxu0 0
        %1490 = vmatpush1.bf16.msra.mxu0 0
        %1491 = vmatprep.subr.bf16.mxu0 0
        %1492 = vmatpush1.bf16.msra.mxu0 0
        %1493 = vmatprep.subr.bf16.mxu0 0
        %1494 = vmatpush1.bf16.msra.mxu0 0
        %1495 = vmatprep.mubr.bf16.mxu0 0
        %1496 = vmatmul.mubr.bf16.gmra.mrb[0].mxu0 %v1347
        %v1497 = vpop.f32.mrb[0].mxu0
        %v1498 = vadd.f32 0.0, %v1497
        %v1499 = vpop.f32.mrb[0].mxu0
        %v1500 = vpop.f32.mrb[0].mxu0
        %v1501 = vadd.f32 0.0, %v1500
        %v1502 = vpop.f32.mrb[0].mxu0
        %1503 = vdwg.mxu0
        %v1504 = vadd.f32 %v1338, %v1498
        %v1505 = vadd.f32 %v1341, %v1501
        %s1506 = scalar_lea.vmem %s6, 16
        %v1507 = vld [vmem:[%s1506] sm:$0xf]
        %v1508 = vld [vmem:[%s1506 + $0x4] sm:$0xf]
        %v1509 = vld [vmem:[%s1506 + $0x8] sm:$0xf]
        %v1510 = vld [vmem:[%s1506 + $0xc] sm:$0xf]
        %v1515 = vunpack.c.l.b16 %v1507
        %v1516 = vunpack.c.l.b16 %v1508
        %v1517 = vunpack.c.l.b16 %v1509
        %v1518 = vunpack.c.l.b16 %v1510
        %v1519 = vpack.c.b16 %v1516, %v1515
        %v1520 = vpack.c.b16 %v1518, %v1517
        %1523 = vmatprep.subr.bf16.mxu0 0
        %1524 = vmatpush1.bf16.msra.mxu0 %v1519
        %1525 = vmatprep.subr.bf16.mxu0 0
        %1526 = vmatpush1.bf16.msra.mxu0 %v1520
        %1527 = vmatprep.subr.bf16.mxu0 0
        %1528 = vmatpush1.bf16.msra.mxu0 0
        %1529 = vmatprep.subr.bf16.mxu0 0
        %1530 = vmatpush1.bf16.msra.mxu0 0
        %1531 = vmatprep.subr.bf16.mxu0 0
        %1532 = vmatpush1.bf16.msra.mxu0 0
        %1533 = vmatprep.subr.bf16.mxu0 0
        %1534 = vmatpush1.bf16.msra.mxu0 0
        %1535 = vmatprep.subr.bf16.mxu0 0
        %1536 = vmatpush1.bf16.msra.mxu0 0
        %1537 = vmatprep.subr.bf16.mxu0 0
        %1538 = vmatpush1.bf16.msra.mxu0 0
        %1539 = vmatprep.subr.bf16.mxu0 0
        %1540 = vmatpush1.bf16.msra.mxu0 0
        %1541 = vmatprep.subr.bf16.mxu0 0
        %1542 = vmatpush1.bf16.msra.mxu0 0
        %1543 = vmatprep.subr.bf16.mxu0 0
        %1544 = vmatpush1.bf16.msra.mxu0 0
        %1545 = vmatprep.subr.bf16.mxu0 0
        %1546 = vmatpush1.bf16.msra.mxu0 0
        %1547 = vmatprep.subr.bf16.mxu0 0
        %1548 = vmatpush1.bf16.msra.mxu0 0
        %1549 = vmatprep.subr.bf16.mxu0 0
        %1550 = vmatpush1.bf16.msra.mxu0 0
        %1551 = vmatprep.subr.bf16.mxu0 0
        %1552 = vmatpush1.bf16.msra.mxu0 0
        %1553 = vmatprep.subr.bf16.mxu0 0
        %1554 = vmatpush1.bf16.msra.mxu0 0
        %1555 = vmatprep.mubr.bf16.mxu0 0
        %1556 = vmatmul.mubr.bf16.gmra.mrb[0].mxu0 %v1413
        %v1557 = vpop.f32.mrb[0].mxu0
        %v1558 = vadd.f32 0.0, %v1557
        %v1559 = vpop.f32.mrb[0].mxu0
        %v1560 = vpop.f32.mrb[0].mxu0
        %v1561 = vadd.f32 0.0, %v1560
        %v1562 = vpop.f32.mrb[0].mxu0
        %1563 = vdwg.mxu0
        %v1564 = vadd.f32 %v1504, %v1558
        %v1565 = vadd.f32 %v1505, %v1561
        %s1566 = scalar_lea.vmem [#allocation5], 8
        %v1567 = vld [vmem:[%s1566] sm:$0xf]
        %v1569 = vsel %vm1193, %v1040, 0
        %v1572 = vsel %vm1197, %v1567, 0
        %1574 = vmatprep.subr.bf16.mxu0 0
        %1575 = vmatpush1.bf16.msra.mxu0 %v1572
        %1576 = vmatprep.subr.bf16.mxu0 0
        %1577 = vmatpush1.bf16.msra.mxu0 0
        %1578 = vmatprep.subr.bf16.mxu0 0
        %1579 = vmatpush1.bf16.msra.mxu0 0
        %1580 = vmatprep.subr.bf16.mxu0 0
        %1581 = vmatpush1.bf16.msra.mxu0 0
        %1582 = vmatprep.subr.bf16.mxu0 0
        %1583 = vmatpush1.bf16.msra.mxu0 0
        %1584 = vmatprep.subr.bf16.mxu0 0
        %1585 = vmatpush1.bf16.msra.mxu0 0
        %1586 = vmatprep.subr.bf16.mxu0 0
        %1587 = vmatpush1.bf16.msra.mxu0 0
        %1588 = vmatprep.subr.bf16.mxu0 0
        %1589 = vmatpush1.bf16.msra.mxu0 0
        %1590 = vmatprep.subr.bf16.mxu0 0
        %1591 = vmatpush1.bf16.msra.mxu0 0
        %1592 = vmatprep.subr.bf16.mxu0 0
        %1593 = vmatpush1.bf16.msra.mxu0 0
        %1594 = vmatprep.subr.bf16.mxu0 0
        %1595 = vmatpush1.bf16.msra.mxu0 0
        %1596 = vmatprep.subr.bf16.mxu0 0
        %1597 = vmatpush1.bf16.msra.mxu0 0
        %1598 = vmatprep.subr.bf16.mxu0 0
        %1599 = vmatpush1.bf16.msra.mxu0 0
        %1600 = vmatprep.subr.bf16.mxu0 0
        %1601 = vmatpush1.bf16.msra.mxu0 0
        %1602 = vmatprep.subr.bf16.mxu0 0
        %1603 = vmatpush1.bf16.msra.mxu0 0
        %1604 = vmatprep.subr.bf16.mxu0 0
        %1605 = vmatpush1.bf16.msra.mxu0 0
        %1606 = vmatprep.mubr.bf16.mxu0 0
        %1607 = vmatmul.mubr.bf16.gmra.mrb[0].mxu0 %v1569
        %v1608 = vpop.f32.mrb[0].mxu0
        %v1609 = vadd.f32 0.0, %v1608
        %v1610 = vpop.f32.mrb[0].mxu0
        %v1611 = vpop.f32.mrb[0].mxu0
        %v1612 = vadd.f32 0.0, %v1611
        %v1613 = vpop.f32.mrb[0].mxu0
        %1614 = vdwg.mxu0
        %v1615 = vadd.f32 %v1456, %v1609
        %v1616 = vadd.f32 %v1457, %v1612
        %s1617 = scalar_lea.vmem [#allocation7], 32
        %v1618 = vld [vmem:[%s1617] sm:$0xf]
        %v1619 = vld [vmem:[%s1617 + $0x4] sm:$0xf]
        %v1620 = vld [vmem:[%s1617 + $0x8] sm:$0xf]
        %v1621 = vld [vmem:[%s1617 + $0xc] sm:$0xf]
        %v1626 = vunpack.c.l.b16 %v1618
        %v1627 = vunpack.c.l.b16 %v1619
        %v1628 = vunpack.c.l.b16 %v1620
        %v1629 = vunpack.c.l.b16 %v1621
        %v1630 = vpack.c.b16 %v1627, %v1626
        %v1631 = vpack.c.b16 %v1629, %v1628
        %v1635 = vsel %vm1148, %v1127, 0
        %1637 = vmatprep.subr.bf16.mxu0 0
        %1638 = vmatpush1.bf16.msra.mxu0 %v1630
        %1639 = vmatprep.subr.bf16.mxu0 0
        %1640 = vmatpush1.bf16.msra.mxu0 %v1631
        %1641 = vmatprep.subr.bf16.mxu0 0
        %1642 = vmatpush1.bf16.msra.mxu0 0
        %1643 = vmatprep.subr.bf16.mxu0 0
        %1644 = vmatpush1.bf16.msra.mxu0 0
        %1645 = vmatprep.subr.bf16.mxu0 0
        %1646 = vmatpush1.bf16.msra.mxu0 0
        %1647 = vmatprep.subr.bf16.mxu0 0
        %1648 = vmatpush1.bf16.msra.mxu0 0
        %1649 = vmatprep.subr.bf16.mxu0 0
        %1650 = vmatpush1.bf16.msra.mxu0 0
        %1651 = vmatprep.subr.bf16.mxu0 0
        %1652 = vmatpush1.bf16.msra.mxu0 0
        %1653 = vmatprep.subr.bf16.mxu0 0
        %1654 = vmatpush1.bf16.msra.mxu0 0
        %1655 = vmatprep.subr.bf16.mxu0 0
        %1656 = vmatpush1.bf16.msra.mxu0 0
        %1657 = vmatprep.subr.bf16.mxu0 0
        %1658 = vmatpush1.bf16.msra.mxu0 0
        %1659 = vmatprep.subr.bf16.mxu0 0
        %1660 = vmatpush1.bf16.msra.mxu0 0
        %1661 = vmatprep.subr.bf16.mxu0 0
        %1662 = vmatpush1.bf16.msra.mxu0 0
        %1663 = vmatprep.subr.bf16.mxu0 0
        %1664 = vmatpush1.bf16.msra.mxu0 0
        %1665 = vmatprep.subr.bf16.mxu0 0
        %1666 = vmatpush1.bf16.msra.mxu0 0
        %1667 = vmatprep.subr.bf16.mxu0 0
        %1668 = vmatpush1.bf16.msra.mxu0 0
        %1669 = vmatprep.mubr.bf16.mxu0 0
        %1670 = vmatmul.mubr.bf16.gmra.mrb[0].mxu0 %v1635
        %v1671 = vpop.f32.mrb[0].mxu0
        %v1672 = vadd.f32 0.0, %v1671
        %v1673 = vpop.f32.mrb[0].mxu0
        %v1674 = vpop.f32.mrb[0].mxu0
        %v1675 = vadd.f32 0.0, %v1674
        %v1676 = vpop.f32.mrb[0].mxu0
        %1677 = vdwg.mxu0
        %v1678 = vadd.f32 %v1615, %v1672
        %v1679 = vadd.f32 %v1616, %v1675
        %s1680 = scalar_lea.vmem [#allocation8], 8
        %v1681 = vld [vmem:[%s1680] sm:$0xf]
        %v1683 = vsel %vm1197, %v1681, 0
        %1685 = vmatprep.subr.bf16.mxu0 0
        %1686 = vmatpush1.bf16.msra.mxu0 %v1683
        %1687 = vmatprep.subr.bf16.mxu0 0
        %1688 = vmatpush1.bf16.msra.mxu0 0
        %1689 = vmatprep.subr.bf16.mxu0 0
        %1690 = vmatpush1.bf16.msra.mxu0 0
        %1691 = vmatprep.subr.bf16.mxu0 0
        %1692 = vmatpush1.bf16.msra.mxu0 0
        %1693 = vmatprep.subr.bf16.mxu0 0
        %1694 = vmatpush1.bf16.msra.mxu0 0
        %1695 = vmatprep.subr.bf16.mxu0 0
        %1696 = vmatpush1.bf16.msra.mxu0 0
        %1697 = vmatprep.subr.bf16.mxu0 0
        %1698 = vmatpush1.bf16.msra.mxu0 0
        %1699 = vmatprep.subr.bf16.mxu0 0
        %1700 = vmatpush1.bf16.msra.mxu0 0
        %1701 = vmatprep.subr.bf16.mxu0 0
        %1702 = vmatpush1.bf16.msra.mxu0 0
        %1703 = vmatprep.subr.bf16.mxu0 0
        %1704 = vmatpush1.bf16.msra.mxu0 0
        %1705 = vmatprep.subr.bf16.mxu0 0
        %1706 = vmatpush1.bf16.msra.mxu0 0
        %1707 = vmatprep.subr.bf16.mxu0 0
        %1708 = vmatpush1.bf16.msra.mxu0 0
        %1709 = vmatprep.subr.bf16.mxu0 0
        %1710 = vmatpush1.bf16.msra.mxu0 0
        %1711 = vmatprep.subr.bf16.mxu0 0
        %1712 = vmatpush1.bf16.msra.mxu0 0
        %1713 = vmatprep.subr.bf16.mxu0 0
        %1714 = vmatpush1.bf16.msra.mxu0 0
        %1715 = vmatprep.subr.bf16.mxu0 0
        %1716 = vmatpush1.bf16.msra.mxu0 0
        %1717 = vmatprep.mubr.bf16.mxu0 0
        %1718 = vmatmul.mubr.bf16.gmra.mrb[0].mxu0 %v1569
        %v1719 = vpop.f32.mrb[0].mxu0
        %v1720 = vadd.f32 0.0, %v1719
        %v1721 = vpop.f32.mrb[0].mxu0
        %v1722 = vpop.f32.mrb[0].mxu0
        %v1723 = vadd.f32 0.0, %v1722
        %v1724 = vpop.f32.mrb[0].mxu0
        %1725 = vdwg.mxu0
        %v1726 = vadd.f32 %v1564, %v1720
        %v1727 = vadd.f32 %v1565, %v1723
        %s1728 = scalar_lea.vmem %s6, 32
        %v1729 = vld [vmem:[%s1728] sm:$0xf]
        %v1730 = vld [vmem:[%s1728 + $0x4] sm:$0xf]
        %v1731 = vld [vmem:[%s1728 + $0x8] sm:$0xf]
        %v1732 = vld [vmem:[%s1728 + $0xc] sm:$0xf]
        %v1737 = vunpack.c.l.b16 %v1729
        %v1738 = vunpack.c.l.b16 %v1730
        %v1739 = vunpack.c.l.b16 %v1731
        %v1740 = vunpack.c.l.b16 %v1732
        %v1741 = vpack.c.b16 %v1738, %v1737
        %v1742 = vpack.c.b16 %v1740, %v1739
        %1745 = vmatprep.subr.bf16.mxu0 0
        %1746 = vmatpush1.bf16.msra.mxu0 %v1741
        %1747 = vmatprep.subr.bf16.mxu0 0
        %1748 = vmatpush1.bf16.msra.mxu0 %v1742
        %1749 = vmatprep.subr.bf16.mxu0 0
        %1750 = vmatpush1.bf16.msra.mxu0 0
        %1751 = vmatprep.subr.bf16.mxu0 0
        %1752 = vmatpush1.bf16.msra.mxu0 0
        %1753 = vmatprep.subr.bf16.mxu0 0
        %1754 = vmatpush1.bf16.msra.mxu0 0
        %1755 = vmatprep.subr.bf16.mxu0 0
        %1756 = vmatpush1.bf16.msra.mxu0 0
        %1757 = vmatprep.subr.bf16.mxu0 0
        %1758 = vmatpush1.bf16.msra.mxu0 0
        %1759 = vmatprep.subr.bf16.mxu0 0
        %1760 = vmatpush1.bf16.msra.mxu0 0
        %1761 = vmatprep.subr.bf16.mxu0 0
        %1762 = vmatpush1.bf16.msra.mxu0 0
        %1763 = vmatprep.subr.bf16.mxu0 0
        %1764 = vmatpush1.bf16.msra.mxu0 0
        %1765 = vmatprep.subr.bf16.mxu0 0
        %1766 = vmatpush1.bf16.msra.mxu0 0
        %1767 = vmatprep.subr.bf16.mxu0 0
        %1768 = vmatpush1.bf16.msra.mxu0 0
        %1769 = vmatprep.subr.bf16.mxu0 0
        %1770 = vmatpush1.bf16.msra.mxu0 0
        %1771 = vmatprep.subr.bf16.mxu0 0
        %1772 = vmatpush1.bf16.msra.mxu0 0
        %1773 = vmatprep.subr.bf16.mxu0 0
        %1774 = vmatpush1.bf16.msra.mxu0 0
        %1775 = vmatprep.subr.bf16.mxu0 0
        %1776 = vmatpush1.bf16.msra.mxu0 0
        %1777 = vmatprep.mubr.bf16.mxu0 0
        %1778 = vmatmul.mubr.bf16.gmra.mrb[0].mxu0 %v1635
        %v1779 = vpop.f32.mrb[0].mxu0
        %v1780 = vadd.f32 0.0, %v1779
        %v1781 = vpop.f32.mrb[0].mxu0
        %v1782 = vpop.f32.mrb[0].mxu0
        %v1783 = vadd.f32 0.0, %v1782
        %v1784 = vpop.f32.mrb[0].mxu0
        %1785 = vdwg.mxu0
        %v1786 = vadd.f32 %v1726, %v1780
        %v1787 = vadd.f32 %v1727, %v1783
        %s1788 = scalar_lea.vmem [#allocation5], 12
        %v1789 = vld [vmem:[%s1788] sm:$0xf]
        %v1791 = vsel %vm1193, %v1041, 0
        %v1794 = vsel %vm1197, %v1789, 0
        %1796 = vmatprep.subr.bf16.mxu0 0
        %1797 = vmatpush1.bf16.msra.mxu0 %v1794
        %1798 = vmatprep.subr.bf16.mxu0 0
        %1799 = vmatpush1.bf16.msra.mxu0 0
        %1800 = vmatprep.subr.bf16.mxu0 0
        %1801 = vmatpush1.bf16.msra.mxu0 0
        %1802 = vmatprep.subr.bf16.mxu0 0
        %1803 = vmatpush1.bf16.msra.mxu0 0
        %1804 = vmatprep.subr.bf16.mxu0 0
        %1805 = vmatpush1.bf16.msra.mxu0 0
        %1806 = vmatprep.subr.bf16.mxu0 0
        %1807 = vmatpush1.bf16.msra.mxu0 0
        %1808 = vmatprep.subr.bf16.mxu0 0
        %1809 = vmatpush1.bf16.msra.mxu0 0
        %1810 = vmatprep.subr.bf16.mxu0 0
        %1811 = vmatpush1.bf16.msra.mxu0 0
        %1812 = vmatprep.subr.bf16.mxu0 0
        %1813 = vmatpush1.bf16.msra.mxu0 0
        %1814 = vmatprep.subr.bf16.mxu0 0
        %1815 = vmatpush1.bf16.msra.mxu0 0
        %1816 = vmatprep.subr.bf16.mxu0 0
        %1817 = vmatpush1.bf16.msra.mxu0 0
        %1818 = vmatprep.subr.bf16.mxu0 0
        %1819 = vmatpush1.bf16.msra.mxu0 0
        %1820 = vmatprep.subr.bf16.mxu0 0
        %1821 = vmatpush1.bf16.msra.mxu0 0
        %1822 = vmatprep.subr.bf16.mxu0 0
        %1823 = vmatpush1.bf16.msra.mxu0 0
        %1824 = vmatprep.subr.bf16.mxu0 0
        %1825 = vmatpush1.bf16.msra.mxu0 0
        %1826 = vmatprep.subr.bf16.mxu0 0
        %1827 = vmatpush1.bf16.msra.mxu0 0
        %1828 = vmatprep.mubr.bf16.mxu0 0
        %1829 = vmatmul.mubr.bf16.gmra.mrb[0].mxu0 %v1791
        %v1830 = vpop.f32.mrb[0].mxu0
        %v1831 = vadd.f32 0.0, %v1830
        %v1832 = vpop.f32.mrb[0].mxu0
        %v1833 = vpop.f32.mrb[0].mxu0
        %v1834 = vadd.f32 0.0, %v1833
        %v1835 = vpop.f32.mrb[0].mxu0
        %1836 = vdwg.mxu0
        %v1837 = vadd.f32 %v1678, %v1831
        %v1838 = vadd.f32 %v1679, %v1834
        %s1839 = scalar_lea.vmem [#allocation7], 48
        %v1840 = vld [vmem:[%s1839] sm:$0xf]
        %v1841 = vld [vmem:[%s1839 + $0x4] sm:$0xf]
        %v1842 = vld [vmem:[%s1839 + $0x8] sm:$0xf]
        %v1843 = vld [vmem:[%s1839 + $0xc] sm:$0xf]
        %v1848 = vunpack.c.l.b16 %v1840
        %v1849 = vunpack.c.l.b16 %v1841
        %v1850 = vunpack.c.l.b16 %v1842
        %v1851 = vunpack.c.l.b16 %v1843
        %v1852 = vpack.c.b16 %v1849, %v1848
        %v1853 = vpack.c.b16 %v1851, %v1850
        %v1857 = vsel %vm1148, %v1128, 0
        %1859 = vmatprep.subr.bf16.mxu0 0
        %1860 = vmatpush1.bf16.msra.mxu0 %v1852
        %1861 = vmatprep.subr.bf16.mxu0 0
        %1862 = vmatpush1.bf16.msra.mxu0 %v1853
        %1863 = vmatprep.subr.bf16.mxu0 0
        %1864 = vmatpush1.bf16.msra.mxu0 0
        %1865 = vmatprep.subr.bf16.mxu0 0
        %1866 = vmatpush1.bf16.msra.mxu0 0
        %1867 = vmatprep.subr.bf16.mxu0 0
        %1868 = vmatpush1.bf16.msra.mxu0 0
        %1869 = vmatprep.subr.bf16.mxu0 0
        %1870 = vmatpush1.bf16.msra.mxu0 0
        %1871 = vmatprep.subr.bf16.mxu0 0
        %1872 = vmatpush1.bf16.msra.mxu0 0
        %1873 = vmatprep.subr.bf16.mxu0 0
        %1874 = vmatpush1.bf16.msra.mxu0 0
        %1875 = vmatprep.subr.bf16.mxu0 0
        %1876 = vmatpush1.bf16.msra.mxu0 0
        %1877 = vmatprep.subr.bf16.mxu0 0
        %1878 = vmatpush1.bf16.msra.mxu0 0
        %1879 = vmatprep.subr.bf16.mxu0 0
        %1880 = vmatpush1.bf16.msra.mxu0 0
        %1881 = vmatprep.subr.bf16.mxu0 0
        %1882 = vmatpush1.bf16.msra.mxu0 0
        %1883 = vmatprep.subr.bf16.mxu0 0
        %1884 = vmatpush1.bf16.msra.mxu0 0
        %1885 = vmatprep.subr.bf16.mxu0 0
        %1886 = vmatpush1.bf16.msra.mxu0 0
        %1887 = vmatprep.subr.bf16.mxu0 0
        %1888 = vmatpush1.bf16.msra.mxu0 0
        %1889 = vmatprep.subr.bf16.mxu0 0
        %1890 = vmatpush1.bf16.msra.mxu0 0
        %1891 = vmatprep.mubr.bf16.mxu0 0
        %1892 = vmatmul.mubr.bf16.gmra.mrb[0].mxu0 %v1857
        %v1893 = vpop.f32.mrb[0].mxu0
        %v1894 = vadd.f32 0.0, %v1893
        %v1895 = vpop.f32.mrb[0].mxu0
        %v1896 = vpop.f32.mrb[0].mxu0
        %v1897 = vadd.f32 0.0, %v1896
        %v1898 = vpop.f32.mrb[0].mxu0
        %1899 = vdwg.mxu0
        %v1900 = vadd.f32 %v1837, %v1894
        %v1901 = vadd.f32 %v1838, %v1897
        %s1902 = scalar_lea.vmem [#allocation8], 12
        %v1903 = vld [vmem:[%s1902] sm:$0xf]
        %v1905 = vsel %vm1197, %v1903, 0
        %1907 = vmatprep.subr.bf16.mxu0 0
        %1908 = vmatpush1.bf16.msra.mxu0 %v1905
        %1909 = vmatprep.subr.bf16.mxu0 0
        %1910 = vmatpush1.bf16.msra.mxu0 0
        %1911 = vmatprep.subr.bf16.mxu0 0
        %1912 = vmatpush1.bf16.msra.mxu0 0
        %1913 = vmatprep.subr.bf16.mxu0 0
        %1914 = vmatpush1.bf16.msra.mxu0 0
        %1915 = vmatprep.subr.bf16.mxu0 0
        %1916 = vmatpush1.bf16.msra.mxu0 0
        %1917 = vmatprep.subr.bf16.mxu0 0
        %1918 = vmatpush1.bf16.msra.mxu0 0
        %1919 = vmatprep.subr.bf16.mxu0 0
        %1920 = vmatpush1.bf16.msra.mxu0 0
        %1921 = vmatprep.subr.bf16.mxu0 0
        %1922 = vmatpush1.bf16.msra.mxu0 0
        %1923 = vmatprep.subr.bf16.mxu0 0
        %1924 = vmatpush1.bf16.msra.mxu0 0
        %1925 = vmatprep.subr.bf16.mxu0 0
        %1926 = vmatpush1.bf16.msra.mxu0 0
        %1927 = vmatprep.subr.bf16.mxu0 0
        %1928 = vmatpush1.bf16.msra.mxu0 0
        %1929 = vmatprep.subr.bf16.mxu0 0
        %1930 = vmatpush1.bf16.msra.mxu0 0
        %1931 = vmatprep.subr.bf16.mxu0 0
        %1932 = vmatpush1.bf16.msra.mxu0 0
        %1933 = vmatprep.subr.bf16.mxu0 0
        %1934 = vmatpush1.bf16.msra.mxu0 0
        %1935 = vmatprep.subr.bf16.mxu0 0
        %1936 = vmatpush1.bf16.msra.mxu0 0
        %1937 = vmatprep.subr.bf16.mxu0 0
        %1938 = vmatpush1.bf16.msra.mxu0 0
        %1939 = vmatprep.mubr.bf16.mxu0 0
        %1940 = vmatmul.mubr.bf16.gmra.mrb[0].mxu0 %v1791
        %v1941 = vpop.f32.mrb[0].mxu0
        %v1942 = vadd.f32 0.0, %v1941
        %v1943 = vpop.f32.mrb[0].mxu0
        %v1944 = vpop.f32.mrb[0].mxu0
        %v1945 = vadd.f32 0.0, %v1944
        %v1946 = vpop.f32.mrb[0].mxu0
        %1947 = vdwg.mxu0
        %v1948 = vadd.f32 %v1786, %v1942
        %v1949 = vadd.f32 %v1787, %v1945
        %s1950 = scalar_lea.vmem %s6, 48
        %v1951 = vld [vmem:[%s1950] sm:$0xf]
        %v1952 = vld [vmem:[%s1950 + $0x4] sm:$0xf]
        %v1953 = vld [vmem:[%s1950 + $0x8] sm:$0xf]
        %v1954 = vld [vmem:[%s1950 + $0xc] sm:$0xf]
        %v1959 = vunpack.c.l.b16 %v1951
        %v1960 = vunpack.c.l.b16 %v1952
        %v1961 = vunpack.c.l.b16 %v1953
        %v1962 = vunpack.c.l.b16 %v1954
        %v1963 = vpack.c.b16 %v1960, %v1959
        %v1964 = vpack.c.b16 %v1962, %v1961
        %1967 = vmatprep.subr.bf16.mxu0 0
        %1968 = vmatpush1.bf16.msra.mxu0 %v1963
        %1969 = vmatprep.subr.bf16.mxu0 0
        %1970 = vmatpush1.bf16.msra.mxu0 %v1964
        %1971 = vmatprep.subr.bf16.mxu0 0
        %1972 = vmatpush1.bf16.msra.mxu0 0
        %1973 = vmatprep.subr.bf16.mxu0 0
        %1974 = vmatpush1.bf16.msra.mxu0 0
        %1975 = vmatprep.subr.bf16.mxu0 0
        %1976 = vmatpush1.bf16.msra.mxu0 0
        %1977 = vmatprep.subr.bf16.mxu0 0
        %1978 = vmatpush1.bf16.msra.mxu0 0
        %1979 = vmatprep.subr.bf16.mxu0 0
        %1980 = vmatpush1.bf16.msra.mxu0 0
        %1981 = vmatprep.subr.bf16.mxu0 0
        %1982 = vmatpush1.bf16.msra.mxu0 0
        %1983 = vmatprep.subr.bf16.mxu0 0
        %1984 = vmatpush1.bf16.msra.mxu0 0
        %1985 = vmatprep.subr.bf16.mxu0 0
        %1986 = vmatpush1.bf16.msra.mxu0 0
        %1987 = vmatprep.subr.bf16.mxu0 0
        %1988 = vmatpush1.bf16.msra.mxu0 0
        %1989 = vmatprep.subr.bf16.mxu0 0
        %1990 = vmatpush1.bf16.msra.mxu0 0
        %1991 = vmatprep.subr.bf16.mxu0 0
        %1992 = vmatpush1.bf16.msra.mxu0 0
        %1993 = vmatprep.subr.bf16.mxu0 0
        %1994 = vmatpush1.bf16.msra.mxu0 0
        %1995 = vmatprep.subr.bf16.mxu0 0
        %1996 = vmatpush1.bf16.msra.mxu0 0
        %1997 = vmatprep.subr.bf16.mxu0 0
        %1998 = vmatpush1.bf16.msra.mxu0 0
        %1999 = vmatprep.mubr.bf16.mxu0 0
        %2000 = vmatmul.mubr.bf16.gmra.mrb[0].mxu0 %v1857
        %v2001 = vpop.f32.mrb[0].mxu0
        %v2002 = vadd.f32 0.0, %v2001
        %v2003 = vpop.f32.mrb[0].mxu0
        %v2004 = vpop.f32.mrb[0].mxu0
        %v2005 = vadd.f32 0.0, %v2004
        %v2006 = vpop.f32.mrb[0].mxu0
        %2007 = vdwg.mxu0
        %v2008 = vadd.f32 %v1948, %v2002
        %v2009 = vadd.f32 %v1949, %v2005
        %s2010 = scalar_lea.vmem [#allocation5], 16
        %v2011 = vld [vmem:[%s2010] sm:$0xf]
        %v2013 = vsel %vm1193, %v1042, 0
        %v2016 = vsel %vm1197, %v2011, 0
        %2018 = vmatprep.subr.bf16.mxu0 0
        %2019 = vmatpush1.bf16.msra.mxu0 %v2016
        %2020 = vmatprep.subr.bf16.mxu0 0
        %2021 = vmatpush1.bf16.msra.mxu0 0
        %2022 = vmatprep.subr.bf16.mxu0 0
        %2023 = vmatpush1.bf16.msra.mxu0 0
        %2024 = vmatprep.subr.bf16.mxu0 0
        %2025 = vmatpush1.bf16.msra.mxu0 0
        %2026 = vmatprep.subr.bf16.mxu0 0
        %2027 = vmatpush1.bf16.msra.mxu0 0
        %2028 = vmatprep.subr.bf16.mxu0 0
        %2029 = vmatpush1.bf16.msra.mxu0 0
        %2030 = vmatprep.subr.bf16.mxu0 0
        %2031 = vmatpush1.bf16.msra.mxu0 0
        %2032 = vmatprep.subr.bf16.mxu0 0
        %2033 = vmatpush1.bf16.msra.mxu0 0
        %2034 = vmatprep.subr.bf16.mxu0 0
        %2035 = vmatpush1.bf16.msra.mxu0 0
        %2036 = vmatprep.subr.bf16.mxu0 0
        %2037 = vmatpush1.bf16.msra.mxu0 0
        %2038 = vmatprep.subr.bf16.mxu0 0
        %2039 = vmatpush1.bf16.msra.mxu0 0
        %2040 = vmatprep.subr.bf16.mxu0 0
        %2041 = vmatpush1.bf16.msra.mxu0 0
        %2042 = vmatprep.subr.bf16.mxu0 0
        %2043 = vmatpush1.bf16.msra.mxu0 0
        %2044 = vmatprep.subr.bf16.mxu0 0
        %2045 = vmatpush1.bf16.msra.mxu0 0
        %2046 = vmatprep.subr.bf16.mxu0 0
        %2047 = vmatpush1.bf16.msra.mxu0 0
        %2048 = vmatprep.subr.bf16.mxu0 0
        %2049 = vmatpush1.bf16.msra.mxu0 0
        %2050 = vmatprep.mubr.bf16.mxu0 0
        %2051 = vmatmul.mubr.bf16.gmra.mrb[0].mxu0 %v2013
        %v2052 = vpop.f32.mrb[0].mxu0
        %v2053 = vadd.f32 0.0, %v2052
        %v2054 = vpop.f32.mrb[0].mxu0
        %v2055 = vpop.f32.mrb[0].mxu0
        %v2056 = vadd.f32 0.0, %v2055
        %v2057 = vpop.f32.mrb[0].mxu0
        %2058 = vdwg.mxu0
        %v2059 = vadd.f32 %v1900, %v2053
        %v2060 = vadd.f32 %v1901, %v2056
        %s2061 = scalar_lea.vmem [#allocation7], 64
        %v2062 = vld [vmem:[%s2061] sm:$0xf]
        %v2063 = vld [vmem:[%s2061 + $0x4] sm:$0xf]
        %v2064 = vld [vmem:[%s2061 + $0x8] sm:$0xf]
        %v2065 = vld [vmem:[%s2061 + $0xc] sm:$0xf]
        %v2070 = vunpack.c.l.b16 %v2062
        %v2071 = vunpack.c.l.b16 %v2063
        %v2072 = vunpack.c.l.b16 %v2064
        %v2073 = vunpack.c.l.b16 %v2065
        %v2074 = vpack.c.b16 %v2071, %v2070
        %v2075 = vpack.c.b16 %v2073, %v2072
        %v2079 = vsel %vm1148, %v1129, 0
        %2081 = vmatprep.subr.bf16.mxu0 0
        %2082 = vmatpush1.bf16.msra.mxu0 %v2074
        %2083 = vmatprep.subr.bf16.mxu0 0
        %2084 = vmatpush1.bf16.msra.mxu0 %v2075
        %2085 = vmatprep.subr.bf16.mxu0 0
        %2086 = vmatpush1.bf16.msra.mxu0 0
        %2087 = vmatprep.subr.bf16.mxu0 0
        %2088 = vmatpush1.bf16.msra.mxu0 0
        %2089 = vmatprep.subr.bf16.mxu0 0
        %2090 = vmatpush1.bf16.msra.mxu0 0
        %2091 = vmatprep.subr.bf16.mxu0 0
        %2092 = vmatpush1.bf16.msra.mxu0 0
        %2093 = vmatprep.subr.bf16.mxu0 0
        %2094 = vmatpush1.bf16.msra.mxu0 0
        %2095 = vmatprep.subr.bf16.mxu0 0
        %2096 = vmatpush1.bf16.msra.mxu0 0
        %2097 = vmatprep.subr.bf16.mxu0 0
        %2098 = vmatpush1.bf16.msra.mxu0 0
        %2099 = vmatprep.subr.bf16.mxu0 0
        %2100 = vmatpush1.bf16.msra.mxu0 0
        %2101 = vmatprep.subr.bf16.mxu0 0
        %2102 = vmatpush1.bf16.msra.mxu0 0
        %2103 = vmatprep.subr.bf16.mxu0 0
        %2104 = vmatpush1.bf16.msra.mxu0 0
        %2105 = vmatprep.subr.bf16.mxu0 0
        %2106 = vmatpush1.bf16.msra.mxu0 0
        %2107 = vmatprep.subr.bf16.mxu0 0
        %2108 = vmatpush1.bf16.msra.mxu0 0
        %2109 = vmatprep.subr.bf16.mxu0 0
        %2110 = vmatpush1.bf16.msra.mxu0 0
        %2111 = vmatprep.subr.bf16.mxu0 0
        %2112 = vmatpush1.bf16.msra.mxu0 0
        %2113 = vmatprep.mubr.bf16.mxu0 0
        %2114 = vmatmul.mubr.bf16.gmra.mrb[0].mxu0 %v2079
        %v2115 = vpop.f32.mrb[0].mxu0
        %v2116 = vadd.f32 0.0, %v2115
        %v2117 = vpop.f32.mrb[0].mxu0
        %v2118 = vpop.f32.mrb[0].mxu0
        %v2119 = vadd.f32 0.0, %v2118
        %v2120 = vpop.f32.mrb[0].mxu0
        %2121 = vdwg.mxu0
        %v2122 = vadd.f32 %v2059, %v2116
        %v2123 = vadd.f32 %v2060, %v2119
        %s2124 = scalar_lea.vmem [#allocation8], 16
        %v2125 = vld [vmem:[%s2124] sm:$0xf]
        %v2127 = vsel %vm1197, %v2125, 0
        %2129 = vmatprep.subr.bf16.mxu0 0
        %2130 = vmatpush1.bf16.msra.mxu0 %v2127
        %2131 = vmatprep.subr.bf16.mxu0 0
        %2132 = vmatpush1.bf16.msra.mxu0 0
        %2133 = vmatprep.subr.bf16.mxu0 0
        %2134 = vmatpush1.bf16.msra.mxu0 0
        %2135 = vmatprep.subr.bf16.mxu0 0
        %2136 = vmatpush1.bf16.msra.mxu0 0
        %2137 = vmatprep.subr.bf16.mxu0 0
        %2138 = vmatpush1.bf16.msra.mxu0 0
        %2139 = vmatprep.subr.bf16.mxu0 0
        %2140 = vmatpush1.bf16.msra.mxu0 0
        %2141 = vmatprep.subr.bf16.mxu0 0
        %2142 = vmatpush1.bf16.msra.mxu0 0
        %2143 = vmatprep.subr.bf16.mxu0 0
        %2144 = vmatpush1.bf16.msra.mxu0 0
        %2145 = vmatprep.subr.bf16.mxu0 0
        %2146 = vmatpush1.bf16.msra.mxu0 0
        %2147 = vmatprep.subr.bf16.mxu0 0
        %2148 = vmatpush1.bf16.msra.mxu0 0
        %2149 = vmatprep.subr.bf16.mxu0 0
        %2150 = vmatpush1.bf16.msra.mxu0 0
        %2151 = vmatprep.subr.bf16.mxu0 0
        %2152 = vmatpush1.bf16.msra.mxu0 0
        %2153 = vmatprep.subr.bf16.mxu0 0
        %2154 = vmatpush1.bf16.msra.mxu0 0
        %2155 = vmatprep.subr.bf16.mxu0 0
        %2156 = vmatpush1.bf16.msra.mxu0 0
        %2157 = vmatprep.subr.bf16.mxu0 0
        %2158 = vmatpush1.bf16.msra.mxu0 0
        %2159 = vmatprep.subr.bf16.mxu0 0
        %2160 = vmatpush1.bf16.msra.mxu0 0
        %2161 = vmatprep.mubr.bf16.mxu0 0
        %2162 = vmatmul.mubr.bf16.gmra.mrb[0].mxu0 %v2013
        %v2163 = vpop.f32.mrb[0].mxu0
        %v2164 = vadd.f32 0.0, %v2163
        %v2165 = vpop.f32.mrb[0].mxu0
        %v2166 = vpop.f32.mrb[0].mxu0
        %v2167 = vadd.f32 0.0, %v2166
        %v2168 = vpop.f32.mrb[0].mxu0
        %2169 = vdwg.mxu0
        %v2170 = vadd.f32 %v2008, %v2164
        %v2171 = vadd.f32 %v2009, %v2167
        %s2172 = scalar_lea.vmem %s6, 64
        %v2173 = vld [vmem:[%s2172] sm:$0xf]
        %v2174 = vld [vmem:[%s2172 + $0x4] sm:$0xf]
        %v2175 = vld [vmem:[%s2172 + $0x8] sm:$0xf]
        %v2176 = vld [vmem:[%s2172 + $0xc] sm:$0xf]
        %v2181 = vunpack.c.l.b16 %v2173
        %v2182 = vunpack.c.l.b16 %v2174
        %v2183 = vunpack.c.l.b16 %v2175
        %v2184 = vunpack.c.l.b16 %v2176
        %v2185 = vpack.c.b16 %v2182, %v2181
        %v2186 = vpack.c.b16 %v2184, %v2183
        %2189 = vmatprep.subr.bf16.mxu0 0
        %2190 = vmatpush1.bf16.msra.mxu0 %v2185
        %2191 = vmatprep.subr.bf16.mxu0 0
        %2192 = vmatpush1.bf16.msra.mxu0 %v2186
        %2193 = vmatprep.subr.bf16.mxu0 0
        %2194 = vmatpush1.bf16.msra.mxu0 0
        %2195 = vmatprep.subr.bf16.mxu0 0
        %2196 = vmatpush1.bf16.msra.mxu0 0
        %2197 = vmatprep.subr.bf16.mxu0 0
        %2198 = vmatpush1.bf16.msra.mxu0 0
        %2199 = vmatprep.subr.bf16.mxu0 0
        %2200 = vmatpush1.bf16.msra.mxu0 0
        %2201 = vmatprep.subr.bf16.mxu0 0
        %2202 = vmatpush1.bf16.msra.mxu0 0
        %2203 = vmatprep.subr.bf16.mxu0 0
        %2204 = vmatpush1.bf16.msra.mxu0 0
        %2205 = vmatprep.subr.bf16.mxu0 0
        %2206 = vmatpush1.bf16.msra.mxu0 0
        %2207 = vmatprep.subr.bf16.mxu0 0
        %2208 = vmatpush1.bf16.msra.mxu0 0
        %2209 = vmatprep.subr.bf16.mxu0 0
        %2210 = vmatpush1.bf16.msra.mxu0 0
        %2211 = vmatprep.subr.bf16.mxu0 0
        %2212 = vmatpush1.bf16.msra.mxu0 0
        %2213 = vmatprep.subr.bf16.mxu0 0
        %2214 = vmatpush1.bf16.msra.mxu0 0
        %2215 = vmatprep.subr.bf16.mxu0 0
        %2216 = vmatpush1.bf16.msra.mxu0 0
        %2217 = vmatprep.subr.bf16.mxu0 0
        %2218 = vmatpush1.bf16.msra.mxu0 0
        %2219 = vmatprep.subr.bf16.mxu0 0
        %2220 = vmatpush1.bf16.msra.mxu0 0
        %2221 = vmatprep.mubr.bf16.mxu0 0
        %2222 = vmatmul.mubr.bf16.gmra.mrb[0].mxu0 %v2079
        %v2223 = vpop.f32.mrb[0].mxu0
        %v2224 = vadd.f32 0.0, %v2223
        %v2225 = vpop.f32.mrb[0].mxu0
        %v2226 = vpop.f32.mrb[0].mxu0
        %v2227 = vadd.f32 0.0, %v2226
        %v2228 = vpop.f32.mrb[0].mxu0
        %2229 = vdwg.mxu0
        %v2230 = vadd.f32 %v2170, %v2224
        %v2231 = vadd.f32 %v2171, %v2227
        %s2232 = scalar_lea.vmem [#allocation5], 20
        %v2233 = vld [vmem:[%s2232] sm:$0xf]
        %v2235 = vsel %vm1193, %v1043, 0
        %v2238 = vsel %vm1197, %v2233, 0
        %2240 = vmatprep.subr.bf16.mxu0 0
        %2241 = vmatpush1.bf16.msra.mxu0 %v2238
        %2242 = vmatprep.subr.bf16.mxu0 0
        %2243 = vmatpush1.bf16.msra.mxu0 0
        %2244 = vmatprep.subr.bf16.mxu0 0
        %2245 = vmatpush1.bf16.msra.mxu0 0
        %2246 = vmatprep.subr.bf16.mxu0 0
        %2247 = vmatpush1.bf16.msra.mxu0 0
        %2248 = vmatprep.subr.bf16.mxu0 0
        %2249 = vmatpush1.bf16.msra.mxu0 0
        %2250 = vmatprep.subr.bf16.mxu0 0
        %2251 = vmatpush1.bf16.msra.mxu0 0
        %2252 = vmatprep.subr.bf16.mxu0 0
        %2253 = vmatpush1.bf16.msra.mxu0 0
        %2254 = vmatprep.subr.bf16.mxu0 0
        %2255 = vmatpush1.bf16.msra.mxu0 0
        %2256 = vmatprep.subr.bf16.mxu0 0
        %2257 = vmatpush1.bf16.msra.mxu0 0
        %2258 = vmatprep.subr.bf16.mxu0 0
        %2259 = vmatpush1.bf16.msra.mxu0 0
        %2260 = vmatprep.subr.bf16.mxu0 0
        %2261 = vmatpush1.bf16.msra.mxu0 0
        %2262 = vmatprep.subr.bf16.mxu0 0
        %2263 = vmatpush1.bf16.msra.mxu0 0
        %2264 = vmatprep.subr.bf16.mxu0 0
        %2265 = vmatpush1.bf16.msra.mxu0 0
        %2266 = vmatprep.subr.bf16.mxu0 0
        %2267 = vmatpush1.bf16.msra.mxu0 0
        %2268 = vmatprep.subr.bf16.mxu0 0
        %2269 = vmatpush1.bf16.msra.mxu0 0
        %2270 = vmatprep.subr.bf16.mxu0 0
        %2271 = vmatpush1.bf16.msra.mxu0 0
        %2272 = vmatprep.mubr.bf16.mxu0 0
        %2273 = vmatmul.mubr.bf16.gmra.mrb[0].mxu0 %v2235
        %v2274 = vpop.f32.mrb[0].mxu0
        %v2275 = vadd.f32 0.0, %v2274
        %v2276 = vpop.f32.mrb[0].mxu0
        %v2277 = vpop.f32.mrb[0].mxu0
        %v2278 = vadd.f32 0.0, %v2277
        %v2279 = vpop.f32.mrb[0].mxu0
        %2280 = vdwg.mxu0
        %v2281 = vadd.f32 %v2122, %v2275
        %v2282 = vadd.f32 %v2123, %v2278
        %s2283 = scalar_lea.vmem [#allocation7], 80
        %v2284 = vld [vmem:[%s2283] sm:$0xf]
        %v2285 = vld [vmem:[%s2283 + $0x4] sm:$0xf]
        %v2286 = vld [vmem:[%s2283 + $0x8] sm:$0xf]
        %v2287 = vld [vmem:[%s2283 + $0xc] sm:$0xf]
        %v2292 = vunpack.c.l.b16 %v2284
        %v2293 = vunpack.c.l.b16 %v2285
        %v2294 = vunpack.c.l.b16 %v2286
        %v2295 = vunpack.c.l.b16 %v2287
        %v2296 = vpack.c.b16 %v2293, %v2292
        %v2297 = vpack.c.b16 %v2295, %v2294
        %v2301 = vsel %vm1148, %v1130, 0
        %2303 = vmatprep.subr.bf16.mxu0 0
        %2304 = vmatpush1.bf16.msra.mxu0 %v2296
        %2305 = vmatprep.subr.bf16.mxu0 0
        %2306 = vmatpush1.bf16.msra.mxu0 %v2297
        %2307 = vmatprep.subr.bf16.mxu0 0
        %2308 = vmatpush1.bf16.msra.mxu0 0
        %2309 = vmatprep.subr.bf16.mxu0 0
        %2310 = vmatpush1.bf16.msra.mxu0 0
        %2311 = vmatprep.subr.bf16.mxu0 0
        %2312 = vmatpush1.bf16.msra.mxu0 0
        %2313 = vmatprep.subr.bf16.mxu0 0
        %2314 = vmatpush1.bf16.msra.mxu0 0
        %2315 = vmatprep.subr.bf16.mxu0 0
        %2316 = vmatpush1.bf16.msra.mxu0 0
        %2317 = vmatprep.subr.bf16.mxu0 0
        %2318 = vmatpush1.bf16.msra.mxu0 0
        %2319 = vmatprep.subr.bf16.mxu0 0
        %2320 = vmatpush1.bf16.msra.mxu0 0
        %2321 = vmatprep.subr.bf16.mxu0 0
        %2322 = vmatpush1.bf16.msra.mxu0 0
        %2323 = vmatprep.subr.bf16.mxu0 0
        %2324 = vmatpush1.bf16.msra.mxu0 0
        %2325 = vmatprep.subr.bf16.mxu0 0
        %2326 = vmatpush1.bf16.msra.mxu0 0
        %2327 = vmatprep.subr.bf16.mxu0 0
        %2328 = vmatpush1.bf16.msra.mxu0 0
        %2329 = vmatprep.subr.bf16.mxu0 0
        %2330 = vmatpush1.bf16.msra.mxu0 0
        %2331 = vmatprep.subr.bf16.mxu0 0
        %2332 = vmatpush1.bf16.msra.mxu0 0
        %2333 = vmatprep.subr.bf16.mxu0 0
        %2334 = vmatpush1.bf16.msra.mxu0 0
        %2335 = vmatprep.mubr.bf16.mxu0 0
        %2336 = vmatmul.mubr.bf16.gmra.mrb[0].mxu0 %v2301
        %v2337 = vpop.f32.mrb[0].mxu0
        %v2338 = vadd.f32 0.0, %v2337
        %v2339 = vpop.f32.mrb[0].mxu0
        %v2340 = vpop.f32.mrb[0].mxu0
        %v2341 = vadd.f32 0.0, %v2340
        %v2342 = vpop.f32.mrb[0].mxu0
        %2343 = vdwg.mxu0
        %v2344 = vadd.f32 %v2281, %v2338
        %v2345 = vadd.f32 %v2282, %v2341
        %s2346 = scalar_lea.vmem [#allocation8], 20
        %v2347 = vld [vmem:[%s2346] sm:$0xf]
        %v2349 = vsel %vm1197, %v2347, 0
        %2351 = vmatprep.subr.bf16.mxu0 0
        %2352 = vmatpush1.bf16.msra.mxu0 %v2349
        %2353 = vmatprep.subr.bf16.mxu0 0
        %2354 = vmatpush1.bf16.msra.mxu0 0
        %2355 = vmatprep.subr.bf16.mxu0 0
        %2356 = vmatpush1.bf16.msra.mxu0 0
        %2357 = vmatprep.subr.bf16.mxu0 0
        %2358 = vmatpush1.bf16.msra.mxu0 0
        %2359 = vmatprep.subr.bf16.mxu0 0
        %2360 = vmatpush1.bf16.msra.mxu0 0
        %2361 = vmatprep.subr.bf16.mxu0 0
        %2362 = vmatpush1.bf16.msra.mxu0 0
        %2363 = vmatprep.subr.bf16.mxu0 0
        %2364 = vmatpush1.bf16.msra.mxu0 0
        %2365 = vmatprep.subr.bf16.mxu0 0
        %2366 = vmatpush1.bf16.msra.mxu0 0
        %2367 = vmatprep.subr.bf16.mxu0 0
        %2368 = vmatpush1.bf16.msra.mxu0 0
        %2369 = vmatprep.subr.bf16.mxu0 0
        %2370 = vmatpush1.bf16.msra.mxu0 0
        %2371 = vmatprep.subr.bf16.mxu0 0
        %2372 = vmatpush1.bf16.msra.mxu0 0
        %2373 = vmatprep.subr.bf16.mxu0 0
        %2374 = vmatpush1.bf16.msra.mxu0 0
        %2375 = vmatprep.subr.bf16.mxu0 0
        %2376 = vmatpush1.bf16.msra.mxu0 0
        %2377 = vmatprep.subr.bf16.mxu0 0
        %2378 = vmatpush1.bf16.msra.mxu0 0
        %2379 = vmatprep.subr.bf16.mxu0 0
        %2380 = vmatpush1.bf16.msra.mxu0 0
        %2381 = vmatprep.subr.bf16.mxu0 0
        %2382 = vmatpush1.bf16.msra.mxu0 0
        %2383 = vmatprep.mubr.bf16.mxu0 0
        %2384 = vmatmul.mubr.bf16.gmra.mrb[0].mxu0 %v2235
        %v2385 = vpop.f32.mrb[0].mxu0
        %v2386 = vadd.f32 0.0, %v2385
        %v2387 = vpop.f32.mrb[0].mxu0
        %v2388 = vpop.f32.mrb[0].mxu0
        %v2389 = vadd.f32 0.0, %v2388
        %v2390 = vpop.f32.mrb[0].mxu0
        %2391 = vdwg.mxu0
        %v2392 = vadd.f32 %v2230, %v2386
        %v2393 = vadd.f32 %v2231, %v2389
        %s2394 = scalar_lea.vmem %s6, 80
        %v2395 = vld [vmem:[%s2394] sm:$0xf]
        %v2396 = vld [vmem:[%s2394 + $0x4] sm:$0xf]
        %v2397 = vld [vmem:[%s2394 + $0x8] sm:$0xf]
        %v2398 = vld [vmem:[%s2394 + $0xc] sm:$0xf]
        %v2403 = vunpack.c.l.b16 %v2395
        %v2404 = vunpack.c.l.b16 %v2396
        %v2405 = vunpack.c.l.b16 %v2397
        %v2406 = vunpack.c.l.b16 %v2398
        %v2407 = vpack.c.b16 %v2404, %v2403
        %v2408 = vpack.c.b16 %v2406, %v2405
        %2411 = vmatprep.subr.bf16.mxu0 0
        %2412 = vmatpush1.bf16.msra.mxu0 %v2407
        %2413 = vmatprep.subr.bf16.mxu0 0
        %2414 = vmatpush1.bf16.msra.mxu0 %v2408
        %2415 = vmatprep.subr.bf16.mxu0 0
        %2416 = vmatpush1.bf16.msra.mxu0 0
        %2417 = vmatprep.subr.bf16.mxu0 0
        %2418 = vmatpush1.bf16.msra.mxu0 0
        %2419 = vmatprep.subr.bf16.mxu0 0
        %2420 = vmatpush1.bf16.msra.mxu0 0
        %2421 = vmatprep.subr.bf16.mxu0 0
        %2422 = vmatpush1.bf16.msra.mxu0 0
        %2423 = vmatprep.subr.bf16.mxu0 0
        %2424 = vmatpush1.bf16.msra.mxu0 0
        %2425 = vmatprep.subr.bf16.mxu0 0
        %2426 = vmatpush1.bf16.msra.mxu0 0
        %2427 = vmatprep.subr.bf16.mxu0 0
        %2428 = vmatpush1.bf16.msra.mxu0 0
        %2429 = vmatprep.subr.bf16.mxu0 0
        %2430 = vmatpush1.bf16.msra.mxu0 0
        %2431 = vmatprep.subr.bf16.mxu0 0
        %2432 = vmatpush1.bf16.msra.mxu0 0
        %2433 = vmatprep.subr.bf16.mxu0 0
        %2434 = vmatpush1.bf16.msra.mxu0 0
        %2435 = vmatprep.subr.bf16.mxu0 0
        %2436 = vmatpush1.bf16.msra.mxu0 0
        %2437 = vmatprep.subr.bf16.mxu0 0
        %2438 = vmatpush1.bf16.msra.mxu0 0
        %2439 = vmatprep.subr.bf16.mxu0 0
        %2440 = vmatpush1.bf16.msra.mxu0 0
        %2441 = vmatprep.subr.bf16.mxu0 0
        %2442 = vmatpush1.bf16.msra.mxu0 0
        %2443 = vmatprep.mubr.bf16.mxu0 0
        %2444 = vmatmul.mubr.bf16.gmra.mrb[0].mxu0 %v2301
        %v2445 = vpop.f32.mrb[0].mxu0
        %v2446 = vadd.f32 0.0, %v2445
        %v2447 = vpop.f32.mrb[0].mxu0
        %v2448 = vpop.f32.mrb[0].mxu0
        %v2449 = vadd.f32 0.0, %v2448
        %v2450 = vpop.f32.mrb[0].mxu0
        %2451 = vdwg.mxu0
        %v2452 = vadd.f32 %v2392, %v2446
        %v2453 = vadd.f32 %v2393, %v2449
        %v2454 = vld [vmem:[%s9] sm:$0x1]
        %v2456 = vlaneseq
        %v2457 = vshrl.u32 %v2456, 7
        %v2458 = vsub.s32 0, %v2457
        %v2459 = vrot.slane %v2454, %v2458
        %v2461 = vadd.f32 %v2344, %v2459
        %v2462 = vadd.f32 %v2345, %v2459
        %v2463 = vxor.u32 %v2461, 2147483648
        %v2464 = vxor.u32 %v2462, 2147483648
        %v2465 = vmul.f32 %v2463, 1.442695
        %v2466 = vpow.pop %v2465
        %v2467 = vmul.f32 %v2464, 1.442695
        %v2468 = vpow.pop %v2467
        %v2469 = vadd.f32 %v2466, 1.0
        %v2470 = vadd.f32 %v2468, 1.0
        %v2471 = vrcp.pop %v2469
        %v2472 = vmul.f32 1.0, %v2471
        %v2473 = vrcp.pop %v2470
        %v2474 = vmul.f32 1.0, %v2473
        %v2475 = vld [vmem:[%s10] sm:$0x1]
        %v2477 = vlaneseq
        %v2478 = vshrl.u32 %v2477, 7
        %v2479 = vsub.s32 0, %v2478
        %v2480 = vrot.slane %v2475, %v2479
        %v2482 = vadd.f32 %v2452, %v2480
        %v2483 = vadd.f32 %v2453, %v2480
        %v2484 = vxor.u32 %v2482, 2147483648
        %v2485 = vxor.u32 %v2483, 2147483648
        %v2486 = vmul.f32 %v2484, 1.442695
        %v2487 = vpow.pop %v2486
        %v2488 = vmul.f32 %v2485, 1.442695
        %v2489 = vpow.pop %v2488
        %v2490 = vadd.f32 %v2487, 1.0
        %v2491 = vadd.f32 %v2489, 1.0
        %v2492 = vrcp.pop %v2490
        %v2493 = vmul.f32 1.0, %v2492
        %v2494 = vrcp.pop %v2491
        %v2495 = vmul.f32 1.0, %v2494
        %v2496 = vmul.f32 %v2472, %v899
        %v2497 = vmul.f32 %v2474, %v900
        %v2498 = vpack.c.bf16 %v2497, %v2496
        %2499 = vmatprep.subr.bf16.mxu0 0
        %2500 = vmatpush1.bf16.msra.mxu0 %v2498
        %2501 = vmatprep.subr.bf16.mxu0 0
        %2502 = vmatpush1.bf16.msra.mxu0 0
        %2503 = vmatprep.subr.bf16.mxu0 0
        %2504 = vmatpush1.bf16.msra.mxu0 0
        %2505 = vmatprep.subr.bf16.mxu0 0
        %2506 = vmatpush1.bf16.msra.mxu0 0
        %2507 = vmatprep.subr.bf16.mxu0 0
        %2508 = vmatpush1.bf16.msra.mxu0 0
        %2509 = vmatprep.subr.bf16.mxu0 0
        %2510 = vmatpush1.bf16.msra.mxu0 0
        %2511 = vmatprep.subr.bf16.mxu0 0
        %2512 = vmatpush1.bf16.msra.mxu0 0
        %2513 = vmatprep.subr.bf16.mxu0 0
        %2514 = vmatpush1.bf16.msra.mxu0 0
        %2515 = vmatprep.subr.bf16.mxu0 0
        %2516 = vmatpush1.bf16.msra.mxu0 0
        %2517 = vmatprep.subr.bf16.mxu0 0
        %2518 = vmatpush1.bf16.msra.mxu0 0
        %2519 = vmatprep.subr.bf16.mxu0 0
        %2520 = vmatpush1.bf16.msra.mxu0 0
        %2521 = vmatprep.subr.bf16.mxu0 0
        %2522 = vmatpush1.bf16.msra.mxu0 0
        %2523 = vmatprep.subr.bf16.mxu0 0
        %2524 = vmatpush1.bf16.msra.mxu0 0
        %2525 = vmatprep.subr.bf16.mxu0 0
        %2526 = vmatpush1.bf16.msra.mxu0 0
        %2527 = vmatprep.subr.bf16.mxu0 0
        %2528 = vmatpush1.bf16.msra.mxu0 0
        %2529 = vmatprep.subr.bf16.mxu0 0
        %2530 = vmatpush1.bf16.msra.mxu0 0
        %2531 = vmatprep.mubr.bf16.mxu0 0
        %2532 = vmatmul.mubr.bf16.gmra.mrb[0].mxu0 %v940
        %v2533 = vpop.f32.mrb[0].mxu0
        %v2534 = vadd.f32 0.0, %v2533
        %v2535 = vpop.f32.mrb[0].mxu0
        %v2536 = vpop.f32.mrb[0].mxu0
        %v2537 = vadd.f32 0.0, %v2536
        %v2538 = vpop.f32.mrb[0].mxu0
        %2539 = vmatprep.mubr.bf16.mxu0 0
        %2540 = vmatmul.mubr.bf16.gmra.mrb[0].mxu0 %v943
        %v2541 = vpop.f32.mrb[0].mxu0
        %v2542 = vadd.f32 0.0, %v2541
        %v2543 = vpop.f32.mrb[0].mxu0
        %v2544 = vpop.f32.mrb[0].mxu0
        %v2545 = vadd.f32 0.0, %v2544
        %v2546 = vpop.f32.mrb[0].mxu0
        %2547 = vmatprep.mubr.bf16.mxu0 0
        %2548 = vmatmul.mubr.bf16.gmra.mrb[0].mxu0 %v946
        %v2549 = vpop.f32.mrb[0].mxu0
        %v2550 = vadd.f32 0.0, %v2549
        %v2551 = vpop.f32.mrb[0].mxu0
        %v2552 = vpop.f32.mrb[0].mxu0
        %v2553 = vadd.f32 0.0, %v2552
        %v2554 = vpop.f32.mrb[0].mxu0
        %2555 = vmatprep.mubr.bf16.mxu0 0
        %2556 = vmatmul.mubr.bf16.gmra.mrb[0].mxu0 %v949
        %v2557 = vpop.f32.mrb[0].mxu0
        %v2558 = vadd.f32 0.0, %v2557
        %v2559 = vpop.f32.mrb[0].mxu0
        %v2560 = vpop.f32.mrb[0].mxu0
        %v2561 = vadd.f32 0.0, %v2560
        %v2562 = vpop.f32.mrb[0].mxu0
        %2563 = vmatprep.mubr.bf16.mxu0 0
        %2564 = vmatmul.mubr.bf16.gmra.mrb[0].mxu0 %v952
        %v2565 = vpop.f32.mrb[0].mxu0
        %v2566 = vadd.f32 0.0, %v2565
        %v2567 = vpop.f32.mrb[0].mxu0
        %v2568 = vpop.f32.mrb[0].mxu0
        %v2569 = vadd.f32 0.0, %v2568
        %v2570 = vpop.f32.mrb[0].mxu0
        %2571 = vmatprep.mubr.bf16.mxu0 0
        %2572 = vmatmul.mubr.bf16.gmra.mrb[0].mxu0 %v955
        %v2573 = vpop.f32.mrb[0].mxu0
        %v2574 = vadd.f32 0.0, %v2573
        %v2575 = vpop.f32.mrb[0].mxu0
        %v2576 = vpop.f32.mrb[0].mxu0
        %v2577 = vadd.f32 0.0, %v2576
        %v2578 = vpop.f32.mrb[0].mxu0
        %2579 = vdwg.mxu0
        %v2580 = vpack.c.bf16 %v2537, %v2534
        %v2581 = vpack.c.bf16 %v2545, %v2542
        %v2582 = vpack.c.bf16 %v2553, %v2550
        %v2583 = vpack.c.bf16 %v2561, %v2558
        %v2584 = vpack.c.bf16 %v2569, %v2566
        %v2585 = vpack.c.bf16 %v2577, %v2574
        %v2586 = vld [vmem:[#allocation10] sm:$0xf]
        %v2587 = vld [vmem:[#allocation11] sm:$0xf]
        %v2588 = vld [vmem:[#allocation11 + $0x4] sm:$0xf]
        %v2589 = vld [vmem:[#allocation11 + $0x8] sm:$0xf]
        %v2590 = vld [vmem:[#allocation11 + $0xc] sm:$0xf]
        %v2595 = vunpack.c.l.b16 %v2587
        %v2596 = vunpack.c.l.b16 %v2588
        %v2597 = vunpack.c.l.b16 %v2589
        %v2598 = vunpack.c.l.b16 %v2590
        %v2599 = vpack.c.b16 %v2596, %v2595
        %v2600 = vpack.c.b16 %v2598, %v2597
        %v2604 = vsel %vm1148, %v2580, 0
        %2606 = vmatprep.subr.bf16.mxu0 0
        %2607 = vmatpush1.bf16.msra.mxu0 %v2599
        %2608 = vmatprep.subr.bf16.mxu0 0
        %2609 = vmatpush1.bf16.msra.mxu0 %v2600
        %2610 = vmatprep.subr.bf16.mxu0 0
        %2611 = vmatpush1.bf16.msra.mxu0 0
        %2612 = vmatprep.subr.bf16.mxu0 0
        %2613 = vmatpush1.bf16.msra.mxu0 0
        %2614 = vmatprep.subr.bf16.mxu0 0
        %2615 = vmatpush1.bf16.msra.mxu0 0
        %2616 = vmatprep.subr.bf16.mxu0 0
        %2617 = vmatpush1.bf16.msra.mxu0 0
        %2618 = vmatprep.subr.bf16.mxu0 0
        %2619 = vmatpush1.bf16.msra.mxu0 0
        %2620 = vmatprep.subr.bf16.mxu0 0
        %2621 = vmatpush1.bf16.msra.mxu0 0
        %2622 = vmatprep.subr.bf16.mxu0 0
        %2623 = vmatpush1.bf16.msra.mxu0 0
        %2624 = vmatprep.subr.bf16.mxu0 0
        %2625 = vmatpush1.bf16.msra.mxu0 0
        %2626 = vmatprep.subr.bf16.mxu0 0
        %2627 = vmatpush1.bf16.msra.mxu0 0
        %2628 = vmatprep.subr.bf16.mxu0 0
        %2629 = vmatpush1.bf16.msra.mxu0 0
        %2630 = vmatprep.subr.bf16.mxu0 0
        %2631 = vmatpush1.bf16.msra.mxu0 0
        %2632 = vmatprep.subr.bf16.mxu0 0
        %2633 = vmatpush1.bf16.msra.mxu0 0
        %2634 = vmatprep.subr.bf16.mxu0 0
        %2635 = vmatpush1.bf16.msra.mxu0 0
        %2636 = vmatprep.subr.bf16.mxu0 0
        %2637 = vmatpush1.bf16.msra.mxu0 0
        %2638 = vmatprep.mubr.bf16.mxu0 0
        %2639 = vmatmul.mubr.bf16.gmra.mrb[0].mxu0 %v2604
        %v2640 = vpop.f32.mrb[0].mxu0
        %v2641 = vadd.f32 0.0, %v2640
        %v2642 = vpop.f32.mrb[0].mxu0
        %v2643 = vpop.f32.mrb[0].mxu0
        %v2644 = vadd.f32 0.0, %v2643
        %v2645 = vpop.f32.mrb[0].mxu0
        %2646 = vdwg.mxu0
        %v2648 = vsel %vm1197, %v2586, 0
        %2650 = vmatprep.subr.bf16.mxu0 0
        %2651 = vmatpush1.bf16.msra.mxu0 %v2648
        %2652 = vmatprep.subr.bf16.mxu0 0
        %2653 = vmatpush1.bf16.msra.mxu0 0
        %2654 = vmatprep.subr.bf16.mxu0 0
        %2655 = vmatpush1.bf16.msra.mxu0 0
        %2656 = vmatprep.subr.bf16.mxu0 0
        %2657 = vmatpush1.bf16.msra.mxu0 0
        %2658 = vmatprep.subr.bf16.mxu0 0
        %2659 = vmatpush1.bf16.msra.mxu0 0
        %2660 = vmatprep.subr.bf16.mxu0 0
        %2661 = vmatpush1.bf16.msra.mxu0 0
        %2662 = vmatprep.subr.bf16.mxu0 0
        %2663 = vmatpush1.bf16.msra.mxu0 0
        %2664 = vmatprep.subr.bf16.mxu0 0
        %2665 = vmatpush1.bf16.msra.mxu0 0
        %2666 = vmatprep.subr.bf16.mxu0 0
        %2667 = vmatpush1.bf16.msra.mxu0 0
        %2668 = vmatprep.subr.bf16.mxu0 0
        %2669 = vmatpush1.bf16.msra.mxu0 0
        %2670 = vmatprep.subr.bf16.mxu0 0
        %2671 = vmatpush1.bf16.msra.mxu0 0
        %2672 = vmatprep.subr.bf16.mxu0 0
        %2673 = vmatpush1.bf16.msra.mxu0 0
        %2674 = vmatprep.subr.bf16.mxu0 0
        %2675 = vmatpush1.bf16.msra.mxu0 0
        %2676 = vmatprep.subr.bf16.mxu0 0
        %2677 = vmatpush1.bf16.msra.mxu0 0
        %2678 = vmatprep.subr.bf16.mxu0 0
        %2679 = vmatpush1.bf16.msra.mxu0 0
        %2680 = vmatprep.subr.bf16.mxu0 0
        %2681 = vmatpush1.bf16.msra.mxu0 0
        %2682 = vmatprep.mubr.bf16.mxu0 0
        %2683 = vmatmul.mubr.bf16.gmra.mrb[0].mxu0 %v1195
        %v2684 = vpop.f32.mrb[0].mxu0
        %v2685 = vadd.f32 %v2641, %v2684
        %v2686 = vpop.f32.mrb[0].mxu0
        %v2687 = vpop.f32.mrb[0].mxu0
        %v2688 = vadd.f32 %v2644, %v2687
        %v2689 = vpop.f32.mrb[0].mxu0
        %2690 = vdwg.mxu0
        %s2691 = scalar_lea.vmem [#allocation10], 4
        %v2692 = vld [vmem:[%s2691] sm:$0xf]
        %v2694 = vsel %vm1197, %v2692, 0
        %2696 = vmatprep.subr.bf16.mxu0 0
        %2697 = vmatpush1.bf16.msra.mxu0 %v2694
        %2698 = vmatprep.subr.bf16.mxu0 0
        %2699 = vmatpush1.bf16.msra.mxu0 0
        %2700 = vmatprep.subr.bf16.mxu0 0
        %2701 = vmatpush1.bf16.msra.mxu0 0
        %2702 = vmatprep.subr.bf16.mxu0 0
        %2703 = vmatpush1.bf16.msra.mxu0 0
        %2704 = vmatprep.subr.bf16.mxu0 0
        %2705 = vmatpush1.bf16.msra.mxu0 0
        %2706 = vmatprep.subr.bf16.mxu0 0
        %2707 = vmatpush1.bf16.msra.mxu0 0
        %2708 = vmatprep.subr.bf16.mxu0 0
        %2709 = vmatpush1.bf16.msra.mxu0 0
        %2710 = vmatprep.subr.bf16.mxu0 0
        %2711 = vmatpush1.bf16.msra.mxu0 0
        %2712 = vmatprep.subr.bf16.mxu0 0
        %2713 = vmatpush1.bf16.msra.mxu0 0
        %2714 = vmatprep.subr.bf16.mxu0 0
        %2715 = vmatpush1.bf16.msra.mxu0 0
        %2716 = vmatprep.subr.bf16.mxu0 0
        %2717 = vmatpush1.bf16.msra.mxu0 0
        %2718 = vmatprep.subr.bf16.mxu0 0
        %2719 = vmatpush1.bf16.msra.mxu0 0
        %2720 = vmatprep.subr.bf16.mxu0 0
        %2721 = vmatpush1.bf16.msra.mxu0 0
        %2722 = vmatprep.subr.bf16.mxu0 0
        %2723 = vmatpush1.bf16.msra.mxu0 0
        %2724 = vmatprep.subr.bf16.mxu0 0
        %2725 = vmatpush1.bf16.msra.mxu0 0
        %2726 = vmatprep.subr.bf16.mxu0 0
        %2727 = vmatpush1.bf16.msra.mxu0 0
        %2728 = vmatprep.mubr.bf16.mxu0 0
        %2729 = vmatmul.mubr.bf16.gmra.mrb[0].mxu0 %v1347
        %v2730 = vpop.f32.mrb[0].mxu0
        %v2731 = vadd.f32 0.0, %v2730
        %v2732 = vpop.f32.mrb[0].mxu0
        %v2733 = vpop.f32.mrb[0].mxu0
        %v2734 = vadd.f32 0.0, %v2733
        %v2735 = vpop.f32.mrb[0].mxu0
        %2736 = vdwg.mxu0
        %v2737 = vadd.f32 %v2685, %v2731
        %v2738 = vadd.f32 %v2688, %v2734
        %s2739 = scalar_lea.vmem [#allocation11], 16
        %v2740 = vld [vmem:[%s2739] sm:$0xf]
        %v2741 = vld [vmem:[%s2739 + $0x4] sm:$0xf]
        %v2742 = vld [vmem:[%s2739 + $0x8] sm:$0xf]
        %v2743 = vld [vmem:[%s2739 + $0xc] sm:$0xf]
        %v2748 = vunpack.c.l.b16 %v2740
        %v2749 = vunpack.c.l.b16 %v2741
        %v2750 = vunpack.c.l.b16 %v2742
        %v2751 = vunpack.c.l.b16 %v2743
        %v2752 = vpack.c.b16 %v2749, %v2748
        %v2753 = vpack.c.b16 %v2751, %v2750
        %v2757 = vsel %vm1148, %v2581, 0
        %2759 = vmatprep.subr.bf16.mxu0 0
        %2760 = vmatpush1.bf16.msra.mxu0 %v2752
        %2761 = vmatprep.subr.bf16.mxu0 0
        %2762 = vmatpush1.bf16.msra.mxu0 %v2753
        %2763 = vmatprep.subr.bf16.mxu0 0
        %2764 = vmatpush1.bf16.msra.mxu0 0
        %2765 = vmatprep.subr.bf16.mxu0 0
        %2766 = vmatpush1.bf16.msra.mxu0 0
        %2767 = vmatprep.subr.bf16.mxu0 0
        %2768 = vmatpush1.bf16.msra.mxu0 0
        %2769 = vmatprep.subr.bf16.mxu0 0
        %2770 = vmatpush1.bf16.msra.mxu0 0
        %2771 = vmatprep.subr.bf16.mxu0 0
        %2772 = vmatpush1.bf16.msra.mxu0 0
        %2773 = vmatprep.subr.bf16.mxu0 0
        %2774 = vmatpush1.bf16.msra.mxu0 0
        %2775 = vmatprep.subr.bf16.mxu0 0
        %2776 = vmatpush1.bf16.msra.mxu0 0
        %2777 = vmatprep.subr.bf16.mxu0 0
        %2778 = vmatpush1.bf16.msra.mxu0 0
        %2779 = vmatprep.subr.bf16.mxu0 0
        %2780 = vmatpush1.bf16.msra.mxu0 0
        %2781 = vmatprep.subr.bf16.mxu0 0
        %2782 = vmatpush1.bf16.msra.mxu0 0
        %2783 = vmatprep.subr.bf16.mxu0 0
        %2784 = vmatpush1.bf16.msra.mxu0 0
        %2785 = vmatprep.subr.bf16.mxu0 0
        %2786 = vmatpush1.bf16.msra.mxu0 0
        %2787 = vmatprep.subr.bf16.mxu0 0
        %2788 = vmatpush1.bf16.msra.mxu0 0
        %2789 = vmatprep.subr.bf16.mxu0 0
        %2790 = vmatpush1.bf16.msra.mxu0 0
        %2791 = vmatprep.mubr.bf16.mxu0 0
        %2792 = vmatmul.mubr.bf16.gmra.mrb[0].mxu0 %v2757
        %v2793 = vpop.f32.mrb[0].mxu0
        %v2794 = vadd.f32 0.0, %v2793
        %v2795 = vpop.f32.mrb[0].mxu0
        %v2796 = vpop.f32.mrb[0].mxu0
        %v2797 = vadd.f32 0.0, %v2796
        %v2798 = vpop.f32.mrb[0].mxu0
        %2799 = vdwg.mxu0
        %v2800 = vadd.f32 %v2737, %v2794
        %v2801 = vadd.f32 %v2738, %v2797
        %s2802 = scalar_lea.vmem [#allocation10], 8
        %v2803 = vld [vmem:[%s2802] sm:$0xf]
        %v2805 = vsel %vm1197, %v2803, 0
        %2807 = vmatprep.subr.bf16.mxu0 0
        %2808 = vmatpush1.bf16.msra.mxu0 %v2805
        %2809 = vmatprep.subr.bf16.mxu0 0
        %2810 = vmatpush1.bf16.msra.mxu0 0
        %2811 = vmatprep.subr.bf16.mxu0 0
        %2812 = vmatpush1.bf16.msra.mxu0 0
        %2813 = vmatprep.subr.bf16.mxu0 0
        %2814 = vmatpush1.bf16.msra.mxu0 0
        %2815 = vmatprep.subr.bf16.mxu0 0
        %2816 = vmatpush1.bf16.msra.mxu0 0
        %2817 = vmatprep.subr.bf16.mxu0 0
        %2818 = vmatpush1.bf16.msra.mxu0 0
        %2819 = vmatprep.subr.bf16.mxu0 0
        %2820 = vmatpush1.bf16.msra.mxu0 0
        %2821 = vmatprep.subr.bf16.mxu0 0
        %2822 = vmatpush1.bf16.msra.mxu0 0
        %2823 = vmatprep.subr.bf16.mxu0 0
        %2824 = vmatpush1.bf16.msra.mxu0 0
        %2825 = vmatprep.subr.bf16.mxu0 0
        %2826 = vmatpush1.bf16.msra.mxu0 0
        %2827 = vmatprep.subr.bf16.mxu0 0
        %2828 = vmatpush1.bf16.msra.mxu0 0
        %2829 = vmatprep.subr.bf16.mxu0 0
        %2830 = vmatpush1.bf16.msra.mxu0 0
        %2831 = vmatprep.subr.bf16.mxu0 0
        %2832 = vmatpush1.bf16.msra.mxu0 0
        %2833 = vmatprep.subr.bf16.mxu0 0
        %2834 = vmatpush1.bf16.msra.mxu0 0
        %2835 = vmatprep.subr.bf16.mxu0 0
        %2836 = vmatpush1.bf16.msra.mxu0 0
        %2837 = vmatprep.subr.bf16.mxu0 0
        %2838 = vmatpush1.bf16.msra.mxu0 0
        %2839 = vmatprep.mubr.bf16.mxu0 0
        %2840 = vmatmul.mubr.bf16.gmra.mrb[0].mxu0 %v1569
        %v2841 = vpop.f32.mrb[0].mxu0
        %v2842 = vadd.f32 0.0, %v2841
        %v2843 = vpop.f32.mrb[0].mxu0
        %v2844 = vpop.f32.mrb[0].mxu0
        %v2845 = vadd.f32 0.0, %v2844
        %v2846 = vpop.f32.mrb[0].mxu0
        %2847 = vdwg.mxu0
        %v2848 = vadd.f32 %v2800, %v2842
        %v2849 = vadd.f32 %v2801, %v2845
        %s2850 = scalar_lea.vmem [#allocation11], 32
        %v2851 = vld [vmem:[%s2850] sm:$0xf]
        %v2852 = vld [vmem:[%s2850 + $0x4] sm:$0xf]
        %v2853 = vld [vmem:[%s2850 + $0x8] sm:$0xf]
        %v2854 = vld [vmem:[%s2850 + $0xc] sm:$0xf]
        %v2859 = vunpack.c.l.b16 %v2851
        %v2860 = vunpack.c.l.b16 %v2852
        %v2861 = vunpack.c.l.b16 %v2853
        %v2862 = vunpack.c.l.b16 %v2854
        %v2863 = vpack.c.b16 %v2860, %v2859
        %v2864 = vpack.c.b16 %v2862, %v2861
        %v2868 = vsel %vm1148, %v2582, 0
        %2870 = vmatprep.subr.bf16.mxu0 0
        %2871 = vmatpush1.bf16.msra.mxu0 %v2863
        %2872 = vmatprep.subr.bf16.mxu0 0
        %2873 = vmatpush1.bf16.msra.mxu0 %v2864
        %2874 = vmatprep.subr.bf16.mxu0 0
        %2875 = vmatpush1.bf16.msra.mxu0 0
        %2876 = vmatprep.subr.bf16.mxu0 0
        %2877 = vmatpush1.bf16.msra.mxu0 0
        %2878 = vmatprep.subr.bf16.mxu0 0
        %2879 = vmatpush1.bf16.msra.mxu0 0
        %2880 = vmatprep.subr.bf16.mxu0 0
        %2881 = vmatpush1.bf16.msra.mxu0 0
        %2882 = vmatprep.subr.bf16.mxu0 0
        %2883 = vmatpush1.bf16.msra.mxu0 0
        %2884 = vmatprep.subr.bf16.mxu0 0
        %2885 = vmatpush1.bf16.msra.mxu0 0
        %2886 = vmatprep.subr.bf16.mxu0 0
        %2887 = vmatpush1.bf16.msra.mxu0 0
        %2888 = vmatprep.subr.bf16.mxu0 0
        %2889 = vmatpush1.bf16.msra.mxu0 0
        %2890 = vmatprep.subr.bf16.mxu0 0
        %2891 = vmatpush1.bf16.msra.mxu0 0
        %2892 = vmatprep.subr.bf16.mxu0 0
        %2893 = vmatpush1.bf16.msra.mxu0 0
        %2894 = vmatprep.subr.bf16.mxu0 0
        %2895 = vmatpush1.bf16.msra.mxu0 0
        %2896 = vmatprep.subr.bf16.mxu0 0
        %2897 = vmatpush1.bf16.msra.mxu0 0
        %2898 = vmatprep.subr.bf16.mxu0 0
        %2899 = vmatpush1.bf16.msra.mxu0 0
        %2900 = vmatprep.subr.bf16.mxu0 0
        %2901 = vmatpush1.bf16.msra.mxu0 0
        %2902 = vmatprep.mubr.bf16.mxu0 0
        %2903 = vmatmul.mubr.bf16.gmra.mrb[0].mxu0 %v2868
        %v2904 = vpop.f32.mrb[0].mxu0
        %v2905 = vadd.f32 0.0, %v2904
        %v2906 = vpop.f32.mrb[0].mxu0
        %v2907 = vpop.f32.mrb[0].mxu0
        %v2908 = vadd.f32 0.0, %v2907
        %v2909 = vpop.f32.mrb[0].mxu0
        %2910 = vdwg.mxu0
        %v2911 = vadd.f32 %v2848, %v2905
        %v2912 = vadd.f32 %v2849, %v2908
        %s2913 = scalar_lea.vmem [#allocation10], 12
        %v2914 = vld [vmem:[%s2913] sm:$0xf]
        %v2916 = vsel %vm1197, %v2914, 0
        %2918 = vmatprep.subr.bf16.mxu0 0
        %2919 = vmatpush1.bf16.msra.mxu0 %v2916
        %2920 = vmatprep.subr.bf16.mxu0 0
        %2921 = vmatpush1.bf16.msra.mxu0 0
        %2922 = vmatprep.subr.bf16.mxu0 0
        %2923 = vmatpush1.bf16.msra.mxu0 0
        %2924 = vmatprep.subr.bf16.mxu0 0
        %2925 = vmatpush1.bf16.msra.mxu0 0
        %2926 = vmatprep.subr.bf16.mxu0 0
        %2927 = vmatpush1.bf16.msra.mxu0 0
        %2928 = vmatprep.subr.bf16.mxu0 0
        %2929 = vmatpush1.bf16.msra.mxu0 0
        %2930 = vmatprep.subr.bf16.mxu0 0
        %2931 = vmatpush1.bf16.msra.mxu0 0
        %2932 = vmatprep.subr.bf16.mxu0 0
        %2933 = vmatpush1.bf16.msra.mxu0 0
        %2934 = vmatprep.subr.bf16.mxu0 0
        %2935 = vmatpush1.bf16.msra.mxu0 0
        %2936 = vmatprep.subr.bf16.mxu0 0
        %2937 = vmatpush1.bf16.msra.mxu0 0
        %2938 = vmatprep.subr.bf16.mxu0 0
        %2939 = vmatpush1.bf16.msra.mxu0 0
        %2940 = vmatprep.subr.bf16.mxu0 0
        %2941 = vmatpush1.bf16.msra.mxu0 0
        %2942 = vmatprep.subr.bf16.mxu0 0
        %2943 = vmatpush1.bf16.msra.mxu0 0
        %2944 = vmatprep.subr.bf16.mxu0 0
        %2945 = vmatpush1.bf16.msra.mxu0 0
        %2946 = vmatprep.subr.bf16.mxu0 0
        %2947 = vmatpush1.bf16.msra.mxu0 0
        %2948 = vmatprep.subr.bf16.mxu0 0
        %2949 = vmatpush1.bf16.msra.mxu0 0
        %2950 = vmatprep.mubr.bf16.mxu0 0
        %2951 = vmatmul.mubr.bf16.gmra.mrb[0].mxu0 %v1791
        %v2952 = vpop.f32.mrb[0].mxu0
        %v2953 = vadd.f32 0.0, %v2952
        %v2954 = vpop.f32.mrb[0].mxu0
        %v2955 = vpop.f32.mrb[0].mxu0
        %v2956 = vadd.f32 0.0, %v2955
        %v2957 = vpop.f32.mrb[0].mxu0
        %2958 = vdwg.mxu0
        %v2959 = vadd.f32 %v2911, %v2953
        %v2960 = vadd.f32 %v2912, %v2956
        %s2961 = scalar_lea.vmem [#allocation11], 48
        %v2962 = vld [vmem:[%s2961] sm:$0xf]
        %v2963 = vld [vmem:[%s2961 + $0x4] sm:$0xf]
        %v2964 = vld [vmem:[%s2961 + $0x8] sm:$0xf]
        %v2965 = vld [vmem:[%s2961 + $0xc] sm:$0xf]
        %v2970 = vunpack.c.l.b16 %v2962
        %v2971 = vunpack.c.l.b16 %v2963
        %v2972 = vunpack.c.l.b16 %v2964
        %v2973 = vunpack.c.l.b16 %v2965
        %v2974 = vpack.c.b16 %v2971, %v2970
        %v2975 = vpack.c.b16 %v2973, %v2972
        %v2979 = vsel %vm1148, %v2583, 0
        %2981 = vmatprep.subr.bf16.mxu0 0
        %2982 = vmatpush1.bf16.msra.mxu0 %v2974
        %2983 = vmatprep.subr.bf16.mxu0 0
        %2984 = vmatpush1.bf16.msra.mxu0 %v2975
        %2985 = vmatprep.subr.bf16.mxu0 0
        %2986 = vmatpush1.bf16.msra.mxu0 0
        %2987 = vmatprep.subr.bf16.mxu0 0
        %2988 = vmatpush1.bf16.msra.mxu0 0
        %2989 = vmatprep.subr.bf16.mxu0 0
        %2990 = vmatpush1.bf16.msra.mxu0 0
        %2991 = vmatprep.subr.bf16.mxu0 0
        %2992 = vmatpush1.bf16.msra.mxu0 0
        %2993 = vmatprep.subr.bf16.mxu0 0
        %2994 = vmatpush1.bf16.msra.mxu0 0
        %2995 = vmatprep.subr.bf16.mxu0 0
        %2996 = vmatpush1.bf16.msra.mxu0 0
        %2997 = vmatprep.subr.bf16.mxu0 0
        %2998 = vmatpush1.bf16.msra.mxu0 0
        %2999 = vmatprep.subr.bf16.mxu0 0
        %3000 = vmatpush1.bf16.msra.mxu0 0
        %3001 = vmatprep.subr.bf16.mxu0 0
        %3002 = vmatpush1.bf16.msra.mxu0 0
        %3003 = vmatprep.subr.bf16.mxu0 0
        %3004 = vmatpush1.bf16.msra.mxu0 0
        %3005 = vmatprep.subr.bf16.mxu0 0
        %3006 = vmatpush1.bf16.msra.mxu0 0
        %3007 = vmatprep.subr.bf16.mxu0 0
        %3008 = vmatpush1.bf16.msra.mxu0 0
        %3009 = vmatprep.subr.bf16.mxu0 0
        %3010 = vmatpush1.bf16.msra.mxu0 0
        %3011 = vmatprep.subr.bf16.mxu0 0
        %3012 = vmatpush1.bf16.msra.mxu0 0
        %3013 = vmatprep.mubr.bf16.mxu0 0
        %3014 = vmatmul.mubr.bf16.gmra.mrb[0].mxu0 %v2979
        %v3015 = vpop.f32.mrb[0].mxu0
        %v3016 = vadd.f32 0.0, %v3015
        %v3017 = vpop.f32.mrb[0].mxu0
        %v3018 = vpop.f32.mrb[0].mxu0
        %v3019 = vadd.f32 0.0, %v3018
        %v3020 = vpop.f32.mrb[0].mxu0
        %3021 = vdwg.mxu0
        %v3022 = vadd.f32 %v2959, %v3016
        %v3023 = vadd.f32 %v2960, %v3019
        %s3024 = scalar_lea.vmem [#allocation10], 16
        %v3025 = vld [vmem:[%s3024] sm:$0xf]
        %v3027 = vsel %vm1197, %v3025, 0
        %3029 = vmatprep.subr.bf16.mxu0 0
        %3030 = vmatpush1.bf16.msra.mxu0 %v3027
        %3031 = vmatprep.subr.bf16.mxu0 0
        %3032 = vmatpush1.bf16.msra.mxu0 0
        %3033 = vmatprep.subr.bf16.mxu0 0
        %3034 = vmatpush1.bf16.msra.mxu0 0
        %3035 = vmatprep.subr.bf16.mxu0 0
        %3036 = vmatpush1.bf16.msra.mxu0 0
        %3037 = vmatprep.subr.bf16.mxu0 0
        %3038 = vmatpush1.bf16.msra.mxu0 0
        %3039 = vmatprep.subr.bf16.mxu0 0
        %3040 = vmatpush1.bf16.msra.mxu0 0
        %3041 = vmatprep.subr.bf16.mxu0 0
        %3042 = vmatpush1.bf16.msra.mxu0 0
        %3043 = vmatprep.subr.bf16.mxu0 0
        %3044 = vmatpush1.bf16.msra.mxu0 0
        %3045 = vmatprep.subr.bf16.mxu0 0
        %3046 = vmatpush1.bf16.msra.mxu0 0
        %3047 = vmatprep.subr.bf16.mxu0 0
        %3048 = vmatpush1.bf16.msra.mxu0 0
        %3049 = vmatprep.subr.bf16.mxu0 0
        %3050 = vmatpush1.bf16.msra.mxu0 0
        %3051 = vmatprep.subr.bf16.mxu0 0
        %3052 = vmatpush1.bf16.msra.mxu0 0
        %3053 = vmatprep.subr.bf16.mxu0 0
        %3054 = vmatpush1.bf16.msra.mxu0 0
        %3055 = vmatprep.subr.bf16.mxu0 0
        %3056 = vmatpush1.bf16.msra.mxu0 0
        %3057 = vmatprep.subr.bf16.mxu0 0
        %3058 = vmatpush1.bf16.msra.mxu0 0
        %3059 = vmatprep.subr.bf16.mxu0 0
        %3060 = vmatpush1.bf16.msra.mxu0 0
        %3061 = vmatprep.mubr.bf16.mxu0 0
        %3062 = vmatmul.mubr.bf16.gmra.mrb[0].mxu0 %v2013
        %v3063 = vpop.f32.mrb[0].mxu0
        %v3064 = vadd.f32 0.0, %v3063
        %v3065 = vpop.f32.mrb[0].mxu0
        %v3066 = vpop.f32.mrb[0].mxu0
        %v3067 = vadd.f32 0.0, %v3066
        %v3068 = vpop.f32.mrb[0].mxu0
        %3069 = vdwg.mxu0
        %v3070 = vadd.f32 %v3022, %v3064
        %v3071 = vadd.f32 %v3023, %v3067
        %s3072 = scalar_lea.vmem [#allocation11], 64
        %v3073 = vld [vmem:[%s3072] sm:$0xf]
        %v3074 = vld [vmem:[%s3072 + $0x4] sm:$0xf]
        %v3075 = vld [vmem:[%s3072 + $0x8] sm:$0xf]
        %v3076 = vld [vmem:[%s3072 + $0xc] sm:$0xf]
        %v3081 = vunpack.c.l.b16 %v3073
        %v3082 = vunpack.c.l.b16 %v3074
        %v3083 = vunpack.c.l.b16 %v3075
        %v3084 = vunpack.c.l.b16 %v3076
        %v3085 = vpack.c.b16 %v3082, %v3081
        %v3086 = vpack.c.b16 %v3084, %v3083
        %v3090 = vsel %vm1148, %v2584, 0
        %3092 = vmatprep.subr.bf16.mxu0 0
        %3093 = vmatpush1.bf16.msra.mxu0 %v3085
        %3094 = vmatprep.subr.bf16.mxu0 0
        %3095 = vmatpush1.bf16.msra.mxu0 %v3086
        %3096 = vmatprep.subr.bf16.mxu0 0
        %3097 = vmatpush1.bf16.msra.mxu0 0
        %3098 = vmatprep.subr.bf16.mxu0 0
        %3099 = vmatpush1.bf16.msra.mxu0 0
        %3100 = vmatprep.subr.bf16.mxu0 0
        %3101 = vmatpush1.bf16.msra.mxu0 0
        %3102 = vmatprep.subr.bf16.mxu0 0
        %3103 = vmatpush1.bf16.msra.mxu0 0
        %3104 = vmatprep.subr.bf16.mxu0 0
        %3105 = vmatpush1.bf16.msra.mxu0 0
        %3106 = vmatprep.subr.bf16.mxu0 0
        %3107 = vmatpush1.bf16.msra.mxu0 0
        %3108 = vmatprep.subr.bf16.mxu0 0
        %3109 = vmatpush1.bf16.msra.mxu0 0
        %3110 = vmatprep.subr.bf16.mxu0 0
        %3111 = vmatpush1.bf16.msra.mxu0 0
        %3112 = vmatprep.subr.bf16.mxu0 0
        %3113 = vmatpush1.bf16.msra.mxu0 0
        %3114 = vmatprep.subr.bf16.mxu0 0
        %3115 = vmatpush1.bf16.msra.mxu0 0
        %3116 = vmatprep.subr.bf16.mxu0 0
        %3117 = vmatpush1.bf16.msra.mxu0 0
        %3118 = vmatprep.subr.bf16.mxu0 0
        %3119 = vmatpush1.bf16.msra.mxu0 0
        %3120 = vmatprep.subr.bf16.mxu0 0
        %3121 = vmatpush1.bf16.msra.mxu0 0
        %3122 = vmatprep.subr.bf16.mxu0 0
        %3123 = vmatpush1.bf16.msra.mxu0 0
        %3124 = vmatprep.mubr.bf16.mxu0 0
        %3125 = vmatmul.mubr.bf16.gmra.mrb[0].mxu0 %v3090
        %v3126 = vpop.f32.mrb[0].mxu0
        %v3127 = vadd.f32 0.0, %v3126
        %v3128 = vpop.f32.mrb[0].mxu0
        %v3129 = vpop.f32.mrb[0].mxu0
        %v3130 = vadd.f32 0.0, %v3129
        %v3131 = vpop.f32.mrb[0].mxu0
        %3132 = vdwg.mxu0
        %v3133 = vadd.f32 %v3070, %v3127
        %v3134 = vadd.f32 %v3071, %v3130
        %s3135 = scalar_lea.vmem [#allocation10], 20
        %v3136 = vld [vmem:[%s3135] sm:$0xf]
        %v3138 = vsel %vm1197, %v3136, 0
        %3140 = vmatprep.subr.bf16.mxu0 0
        %3141 = vmatpush1.bf16.msra.mxu0 %v3138
        %3142 = vmatprep.subr.bf16.mxu0 0
        %3143 = vmatpush1.bf16.msra.mxu0 0
        %3144 = vmatprep.subr.bf16.mxu0 0
        %3145 = vmatpush1.bf16.msra.mxu0 0
        %3146 = vmatprep.subr.bf16.mxu0 0
        %3147 = vmatpush1.bf16.msra.mxu0 0
        %3148 = vmatprep.subr.bf16.mxu0 0
        %3149 = vmatpush1.bf16.msra.mxu0 0
        %3150 = vmatprep.subr.bf16.mxu0 0
        %3151 = vmatpush1.bf16.msra.mxu0 0
        %3152 = vmatprep.subr.bf16.mxu0 0
        %3153 = vmatpush1.bf16.msra.mxu0 0
        %3154 = vmatprep.subr.bf16.mxu0 0
        %3155 = vmatpush1.bf16.msra.mxu0 0
        %3156 = vmatprep.subr.bf16.mxu0 0
        %3157 = vmatpush1.bf16.msra.mxu0 0
        %3158 = vmatprep.subr.bf16.mxu0 0
        %3159 = vmatpush1.bf16.msra.mxu0 0
        %3160 = vmatprep.subr.bf16.mxu0 0
        %3161 = vmatpush1.bf16.msra.mxu0 0
        %3162 = vmatprep.subr.bf16.mxu0 0
        %3163 = vmatpush1.bf16.msra.mxu0 0
        %3164 = vmatprep.subr.bf16.mxu0 0
        %3165 = vmatpush1.bf16.msra.mxu0 0
        %3166 = vmatprep.subr.bf16.mxu0 0
        %3167 = vmatpush1.bf16.msra.mxu0 0
        %3168 = vmatprep.subr.bf16.mxu0 0
        %3169 = vmatpush1.bf16.msra.mxu0 0
        %3170 = vmatprep.subr.bf16.mxu0 0
        %3171 = vmatpush1.bf16.msra.mxu0 0
        %3172 = vmatprep.mubr.bf16.mxu0 0
        %3173 = vmatmul.mubr.bf16.gmra.mrb[0].mxu0 %v2235
        %v3174 = vpop.f32.mrb[0].mxu0
        %v3175 = vadd.f32 0.0, %v3174
        %v3176 = vpop.f32.mrb[0].mxu0
        %v3177 = vpop.f32.mrb[0].mxu0
        %v3178 = vadd.f32 0.0, %v3177
        %v3179 = vpop.f32.mrb[0].mxu0
        %3180 = vdwg.mxu0
        %v3181 = vadd.f32 %v3133, %v3175
        %v3182 = vadd.f32 %v3134, %v3178
        %s3183 = scalar_lea.vmem [#allocation11], 80
        %v3184 = vld [vmem:[%s3183] sm:$0xf]
        %v3185 = vld [vmem:[%s3183 + $0x4] sm:$0xf]
        %v3186 = vld [vmem:[%s3183 + $0x8] sm:$0xf]
        %v3187 = vld [vmem:[%s3183 + $0xc] sm:$0xf]
        %v3192 = vunpack.c.l.b16 %v3184
        %v3193 = vunpack.c.l.b16 %v3185
        %v3194 = vunpack.c.l.b16 %v3186
        %v3195 = vunpack.c.l.b16 %v3187
        %v3196 = vpack.c.b16 %v3193, %v3192
        %v3197 = vpack.c.b16 %v3195, %v3194
        %v3201 = vsel %vm1148, %v2585, 0
        %3203 = vmatprep.subr.bf16.mxu0 0
        %3204 = vmatpush1.bf16.msra.mxu0 %v3196
        %3205 = vmatprep.subr.bf16.mxu0 0
        %3206 = vmatpush1.bf16.msra.mxu0 %v3197
        %3207 = vmatprep.subr.bf16.mxu0 0
        %3208 = vmatpush1.bf16.msra.mxu0 0
        %3209 = vmatprep.subr.bf16.mxu0 0
        %3210 = vmatpush1.bf16.msra.mxu0 0
        %3211 = vmatprep.subr.bf16.mxu0 0
        %3212 = vmatpush1.bf16.msra.mxu0 0
        %3213 = vmatprep.subr.bf16.mxu0 0
        %3214 = vmatpush1.bf16.msra.mxu0 0
        %3215 = vmatprep.subr.bf16.mxu0 0
        %3216 = vmatpush1.bf16.msra.mxu0 0
        %3217 = vmatprep.subr.bf16.mxu0 0
        %3218 = vmatpush1.bf16.msra.mxu0 0
        %3219 = vmatprep.subr.bf16.mxu0 0
        %3220 = vmatpush1.bf16.msra.mxu0 0
        %3221 = vmatprep.subr.bf16.mxu0 0
        %3222 = vmatpush1.bf16.msra.mxu0 0
        %3223 = vmatprep.subr.bf16.mxu0 0
        %3224 = vmatpush1.bf16.msra.mxu0 0
        %3225 = vmatprep.subr.bf16.mxu0 0
        %3226 = vmatpush1.bf16.msra.mxu0 0
        %3227 = vmatprep.subr.bf16.mxu0 0
        %3228 = vmatpush1.bf16.msra.mxu0 0
        %3229 = vmatprep.subr.bf16.mxu0 0
        %3230 = vmatpush1.bf16.msra.mxu0 0
        %3231 = vmatprep.subr.bf16.mxu0 0
        %3232 = vmatpush1.bf16.msra.mxu0 0
        %3233 = vmatprep.subr.bf16.mxu0 0
        %3234 = vmatpush1.bf16.msra.mxu0 0
        %3235 = vmatprep.mubr.bf16.mxu0 0
        %3236 = vmatmul.mubr.bf16.gmra.mrb[0].mxu0 %v3201
        %v3237 = vpop.f32.mrb[0].mxu0
        %v3238 = vadd.f32 0.0, %v3237
        %v3239 = vpop.f32.mrb[0].mxu0
        %v3240 = vpop.f32.mrb[0].mxu0
        %v3241 = vadd.f32 0.0, %v3240
        %v3242 = vpop.f32.mrb[0].mxu0
        %3243 = vdwg.mxu0
        %v3244 = vadd.f32 %v3181, %v3238
        %v3245 = vadd.f32 %v3182, %v3241
        %v3246 = vld [vmem:[%s11] sm:$0x1]
        %v3248 = vlaneseq
        %v3249 = vshrl.u32 %v3248, 7
        %v3250 = vsub.s32 0, %v3249
        %v3251 = vrot.slane %v3246, %v3250
        %v3253 = vadd.f32 %v3244, %v3251
        %v3254 = vadd.f32 %v3245, %v3251
        %v3255 = vtanh.pop %v3253
        %v3256 = vtanh.pop %v3254
        %v3257 = vmul.f32 %v2493, %v899
        %v3258 = vmul.f32 %v2495, %v900
        %v3259 = vsub.f32 1.0, %v2493
        %v3260 = vsub.f32 1.0, %v2495
        %v3261 = vmul.f32 %v3259, %v3255
        %v3262 = vmul.f32 %v3260, %v3256
        %v3263 = vadd.f32 %v3257, %v3261
        %v3264 = vadd.f32 %v3258, %v3262
        %3265 = vst.msk [vmem:[%s875] sm:$0xff] %vm1148, %v3263
        %3266 = vst.msk [vmem:[%s875 + $0x8] sm:$0xff] %vm1148, %v3264
        %v3267 = vpack.c.bf16 %v3264, %v3263
        %s3268 = scalar_lea.vmem %s768, 16 [#allocation2]
        %v3269 = vld [vmem:[%s3268] sm:$0xff]
        %v3270 = vld [vmem:[%s3268 + $0x8] sm:$0xff]
        %v3271 = vpack.c.bf16 %v3270, %v3269
        %3272 = vmatprep.subr.bf16.mxu0 0
        %3273 = vmatpush1.bf16.msra.mxu0 %v3267
        %3274 = vmatprep.subr.bf16.mxu0 0
        %3275 = vmatpush1.bf16.msra.mxu0 0
        %3276 = vmatprep.subr.bf16.mxu0 0
        %3277 = vmatpush1.bf16.msra.mxu0 0
        %3278 = vmatprep.subr.bf16.mxu0 0
        %3279 = vmatpush1.bf16.msra.mxu0 0
        %3280 = vmatprep.subr.bf16.mxu0 0
        %3281 = vmatpush1.bf16.msra.mxu0 0
        %3282 = vmatprep.subr.bf16.mxu0 0
        %3283 = vmatpush1.bf16.msra.mxu0 0
        %3284 = vmatprep.subr.bf16.mxu0 0
        %3285 = vmatpush1.bf16.msra.mxu0 0
        %3286 = vmatprep.subr.bf16.mxu0 0
        %3287 = vmatpush1.bf16.msra.mxu0 0
        %3288 = vmatprep.subr.bf16.mxu0 0
        %3289 = vmatpush1.bf16.msra.mxu0 0
        %3290 = vmatprep.subr.bf16.mxu0 0
        %3291 = vmatpush1.bf16.msra.mxu0 0
        %3292 = vmatprep.subr.bf16.mxu0 0
        %3293 = vmatpush1.bf16.msra.mxu0 0
        %3294 = vmatprep.subr.bf16.mxu0 0
        %3295 = vmatpush1.bf16.msra.mxu0 0
        %3296 = vmatprep.subr.bf16.mxu0 0
        %3297 = vmatpush1.bf16.msra.mxu0 0
        %3298 = vmatprep.subr.bf16.mxu0 0
        %3299 = vmatpush1.bf16.msra.mxu0 0
        %3300 = vmatprep.subr.bf16.mxu0 0
        %3301 = vmatpush1.bf16.msra.mxu0 0
        %3302 = vmatprep.subr.bf16.mxu0 0
        %3303 = vmatpush1.bf16.msra.mxu0 0
        %3304 = vmatprep.mubr.bf16.mxu0 0
        %3305 = vmatmul.mubr.bf16.gmra.mrb[0].mxu0 %v940
        %v3306 = vpop.f32.mrb[0].mxu0
        %v3307 = vadd.f32 0.0, %v3306
        %v3308 = vpop.f32.mrb[0].mxu0
        %v3309 = vpop.f32.mrb[0].mxu0
        %v3310 = vadd.f32 0.0, %v3309
        %v3311 = vpop.f32.mrb[0].mxu0
        %3312 = vmatprep.mubr.bf16.mxu0 0
        %3313 = vmatmul.mubr.bf16.gmra.mrb[0].mxu0 %v943
        %v3314 = vpop.f32.mrb[0].mxu0
        %v3315 = vadd.f32 0.0, %v3314
        %v3316 = vpop.f32.mrb[0].mxu0
        %v3317 = vpop.f32.mrb[0].mxu0
        %v3318 = vadd.f32 0.0, %v3317
        %v3319 = vpop.f32.mrb[0].mxu0
        %3320 = vmatprep.mubr.bf16.mxu0 0
        %3321 = vmatmul.mubr.bf16.gmra.mrb[0].mxu0 %v946
        %v3322 = vpop.f32.mrb[0].mxu0
        %v3323 = vadd.f32 0.0, %v3322
        %v3324 = vpop.f32.mrb[0].mxu0
        %v3325 = vpop.f32.mrb[0].mxu0
        %v3326 = vadd.f32 0.0, %v3325
        %v3327 = vpop.f32.mrb[0].mxu0
        %3328 = vmatprep.mubr.bf16.mxu0 0
        %3329 = vmatmul.mubr.bf16.gmra.mrb[0].mxu0 %v949
        %v3330 = vpop.f32.mrb[0].mxu0
        %v3331 = vadd.f32 0.0, %v3330
        %v3332 = vpop.f32.mrb[0].mxu0
        %v3333 = vpop.f32.mrb[0].mxu0
        %v3334 = vadd.f32 0.0, %v3333
        %v3335 = vpop.f32.mrb[0].mxu0
        %3336 = vmatprep.mubr.bf16.mxu0 0
        %3337 = vmatmul.mubr.bf16.gmra.mrb[0].mxu0 %v952
        %v3338 = vpop.f32.mrb[0].mxu0
        %v3339 = vadd.f32 0.0, %v3338
        %v3340 = vpop.f32.mrb[0].mxu0
        %v3341 = vpop.f32.mrb[0].mxu0
        %v3342 = vadd.f32 0.0, %v3341
        %v3343 = vpop.f32.mrb[0].mxu0
        %3344 = vmatprep.mubr.bf16.mxu0 0
        %3345 = vmatmul.mubr.bf16.gmra.mrb[0].mxu0 %v955
        %v3346 = vpop.f32.mrb[0].mxu0
        %v3347 = vadd.f32 0.0, %v3346
        %v3348 = vpop.f32.mrb[0].mxu0
        %v3349 = vpop.f32.mrb[0].mxu0
        %v3350 = vadd.f32 0.0, %v3349
        %v3351 = vpop.f32.mrb[0].mxu0
        %3352 = vdwg.mxu0
        %v3353 = vpack.c.bf16 %v3310, %v3307
        %v3354 = vpack.c.bf16 %v3318, %v3315
        %v3355 = vpack.c.bf16 %v3326, %v3323
        %v3356 = vpack.c.bf16 %v3334, %v3331
        %v3357 = vpack.c.bf16 %v3342, %v3339
        %v3358 = vpack.c.bf16 %v3350, %v3347
        %3359 = vmatprep.subr.bf16.mxu0 0
        %3360 = vmatpush1.bf16.msra.mxu0 %v3271
        %3361 = vmatprep.subr.bf16.mxu0 0
        %3362 = vmatpush1.bf16.msra.mxu0 0
        %3363 = vmatprep.subr.bf16.mxu0 0
        %3364 = vmatpush1.bf16.msra.mxu0 0
        %3365 = vmatprep.subr.bf16.mxu0 0
        %3366 = vmatpush1.bf16.msra.mxu0 0
        %3367 = vmatprep.subr.bf16.mxu0 0
        %3368 = vmatpush1.bf16.msra.mxu0 0
        %3369 = vmatprep.subr.bf16.mxu0 0
        %3370 = vmatpush1.bf16.msra.mxu0 0
        %3371 = vmatprep.subr.bf16.mxu0 0
        %3372 = vmatpush1.bf16.msra.mxu0 0
        %3373 = vmatprep.subr.bf16.mxu0 0
        %3374 = vmatpush1.bf16.msra.mxu0 0
        %3375 = vmatprep.subr.bf16.mxu0 0
        %3376 = vmatpush1.bf16.msra.mxu0 0
        %3377 = vmatprep.subr.bf16.mxu0 0
        %3378 = vmatpush1.bf16.msra.mxu0 0
        %3379 = vmatprep.subr.bf16.mxu0 0
        %3380 = vmatpush1.bf16.msra.mxu0 0
        %3381 = vmatprep.subr.bf16.mxu0 0
        %3382 = vmatpush1.bf16.msra.mxu0 0
        %3383 = vmatprep.subr.bf16.mxu0 0
        %3384 = vmatpush1.bf16.msra.mxu0 0
        %3385 = vmatprep.subr.bf16.mxu0 0
        %3386 = vmatpush1.bf16.msra.mxu0 0
        %3387 = vmatprep.subr.bf16.mxu0 0
        %3388 = vmatpush1.bf16.msra.mxu0 0
        %3389 = vmatprep.subr.bf16.mxu0 0
        %3390 = vmatpush1.bf16.msra.mxu0 0
        %3391 = vmatprep.mubr.bf16.mxu0 0
        %3392 = vmatmul.mubr.bf16.gmra.mrb[0].mxu0 %v940
        %v3393 = vpop.f32.mrb[0].mxu0
        %v3394 = vadd.f32 0.0, %v3393
        %v3395 = vpop.f32.mrb[0].mxu0
        %v3396 = vpop.f32.mrb[0].mxu0
        %v3397 = vadd.f32 0.0, %v3396
        %v3398 = vpop.f32.mrb[0].mxu0
        %3399 = vmatprep.mubr.bf16.mxu0 0
        %3400 = vmatmul.mubr.bf16.gmra.mrb[0].mxu0 %v943
        %v3401 = vpop.f32.mrb[0].mxu0
        %v3402 = vadd.f32 0.0, %v3401
        %v3403 = vpop.f32.mrb[0].mxu0
        %v3404 = vpop.f32.mrb[0].mxu0
        %v3405 = vadd.f32 0.0, %v3404
        %v3406 = vpop.f32.mrb[0].mxu0
        %3407 = vmatprep.mubr.bf16.mxu0 0
        %3408 = vmatmul.mubr.bf16.gmra.mrb[0].mxu0 %v946
        %v3409 = vpop.f32.mrb[0].mxu0
        %v3410 = vadd.f32 0.0, %v3409
        %v3411 = vpop.f32.mrb[0].mxu0
        %v3412 = vpop.f32.mrb[0].mxu0
        %v3413 = vadd.f32 0.0, %v3412
        %v3414 = vpop.f32.mrb[0].mxu0
        %3415 = vmatprep.mubr.bf16.mxu0 0
        %3416 = vmatmul.mubr.bf16.gmra.mrb[0].mxu0 %v949
        %v3417 = vpop.f32.mrb[0].mxu0
        %v3418 = vadd.f32 0.0, %v3417
        %v3419 = vpop.f32.mrb[0].mxu0
        %v3420 = vpop.f32.mrb[0].mxu0
        %v3421 = vadd.f32 0.0, %v3420
        %v3422 = vpop.f32.mrb[0].mxu0
        %3423 = vmatprep.mubr.bf16.mxu0 0
        %3424 = vmatmul.mubr.bf16.gmra.mrb[0].mxu0 %v952
        %v3425 = vpop.f32.mrb[0].mxu0
        %v3426 = vadd.f32 0.0, %v3425
        %v3427 = vpop.f32.mrb[0].mxu0
        %v3428 = vpop.f32.mrb[0].mxu0
        %v3429 = vadd.f32 0.0, %v3428
        %v3430 = vpop.f32.mrb[0].mxu0
        %3431 = vmatprep.mubr.bf16.mxu0 0
        %3432 = vmatmul.mubr.bf16.gmra.mrb[0].mxu0 %v955
        %v3433 = vpop.f32.mrb[0].mxu0
        %v3434 = vadd.f32 0.0, %v3433
        %v3435 = vpop.f32.mrb[0].mxu0
        %v3436 = vpop.f32.mrb[0].mxu0
        %v3437 = vadd.f32 0.0, %v3436
        %v3438 = vpop.f32.mrb[0].mxu0
        %3439 = vdwg.mxu0
        %v3440 = vpack.c.bf16 %v3397, %v3394
        %v3441 = vpack.c.bf16 %v3405, %v3402
        %v3442 = vpack.c.bf16 %v3413, %v3410
        %v3443 = vpack.c.bf16 %v3421, %v3418
        %v3444 = vpack.c.bf16 %v3429, %v3426
        %v3445 = vpack.c.bf16 %v3437, %v3434
        %v3446 = vld [vmem:[#allocation13] sm:$0xf]
        %v3447 = vld [vmem:[#allocation13 + $0x4] sm:$0xf]
        %v3448 = vld [vmem:[#allocation13 + $0x8] sm:$0xf]
        %v3449 = vld [vmem:[#allocation13 + $0xc] sm:$0xf]
        %v3450 = vld [vmem:[#allocation14] sm:$0xf]
        %v3451 = vld [vmem:[#allocation14 + $0x4] sm:$0xf]
        %v3452 = vld [vmem:[#allocation14 + $0x8] sm:$0xf]
        %v3453 = vld [vmem:[#allocation14 + $0xc] sm:$0xf]
        %v3458 = vunpack.c.l.b16 %v3450
        %v3459 = vunpack.c.l.b16 %v3451
        %v3460 = vunpack.c.l.b16 %v3452
        %v3461 = vunpack.c.l.b16 %v3453
        %v3462 = vpack.c.b16 %v3459, %v3458
        %v3463 = vpack.c.b16 %v3461, %v3460
        %v3467 = vsel %vm1148, %v3440, 0
        %3469 = vmatprep.subr.bf16.mxu0 0
        %3470 = vmatpush1.bf16.msra.mxu0 %v3462
        %3471 = vmatprep.subr.bf16.mxu0 0
        %3472 = vmatpush1.bf16.msra.mxu0 %v3463
        %3473 = vmatprep.subr.bf16.mxu0 0
        %3474 = vmatpush1.bf16.msra.mxu0 0
        %3475 = vmatprep.subr.bf16.mxu0 0
        %3476 = vmatpush1.bf16.msra.mxu0 0
        %3477 = vmatprep.subr.bf16.mxu0 0
        %3478 = vmatpush1.bf16.msra.mxu0 0
        %3479 = vmatprep.subr.bf16.mxu0 0
        %3480 = vmatpush1.bf16.msra.mxu0 0
        %3481 = vmatprep.subr.bf16.mxu0 0
        %3482 = vmatpush1.bf16.msra.mxu0 0
        %3483 = vmatprep.subr.bf16.mxu0 0
        %3484 = vmatpush1.bf16.msra.mxu0 0
        %3485 = vmatprep.subr.bf16.mxu0 0
        %3486 = vmatpush1.bf16.msra.mxu0 0
        %3487 = vmatprep.subr.bf16.mxu0 0
        %3488 = vmatpush1.bf16.msra.mxu0 0
        %3489 = vmatprep.subr.bf16.mxu0 0
        %3490 = vmatpush1.bf16.msra.mxu0 0
        %3491 = vmatprep.subr.bf16.mxu0 0
        %3492 = vmatpush1.bf16.msra.mxu0 0
        %3493 = vmatprep.subr.bf16.mxu0 0
        %3494 = vmatpush1.bf16.msra.mxu0 0
        %3495 = vmatprep.subr.bf16.mxu0 0
        %3496 = vmatpush1.bf16.msra.mxu0 0
        %3497 = vmatprep.subr.bf16.mxu0 0
        %3498 = vmatpush1.bf16.msra.mxu0 0
        %3499 = vmatprep.subr.bf16.mxu0 0
        %3500 = vmatpush1.bf16.msra.mxu0 0
        %3501 = vmatprep.mubr.bf16.mxu0 0
        %3502 = vmatmul.mubr.bf16.gmra.mrb[0].mxu0 %v3467
        %v3503 = vpop.f32.mrb[0].mxu0
        %v3504 = vadd.f32 0.0, %v3503
        %v3505 = vpop.f32.mrb[0].mxu0
        %v3506 = vpop.f32.mrb[0].mxu0
        %v3507 = vadd.f32 0.0, %v3506
        %v3508 = vpop.f32.mrb[0].mxu0
        %3509 = vdwg.mxu0
        %v3514 = vunpack.c.l.b16 %v3446
        %v3515 = vunpack.c.l.b16 %v3447
        %v3516 = vunpack.c.l.b16 %v3448
        %v3517 = vunpack.c.l.b16 %v3449
        %v3518 = vpack.c.b16 %v3515, %v3514
        %v3519 = vpack.c.b16 %v3517, %v3516
        %v3523 = vsel %vm1148, %v3353, 0
        %3525 = vmatprep.subr.bf16.mxu0 0
        %3526 = vmatpush1.bf16.msra.mxu0 %v3518
        %3527 = vmatprep.subr.bf16.mxu0 0
        %3528 = vmatpush1.bf16.msra.mxu0 %v3519
        %3529 = vmatprep.subr.bf16.mxu0 0
        %3530 = vmatpush1.bf16.msra.mxu0 0
        %3531 = vmatprep.subr.bf16.mxu0 0
        %3532 = vmatpush1.bf16.msra.mxu0 0
        %3533 = vmatprep.subr.bf16.mxu0 0
        %3534 = vmatpush1.bf16.msra.mxu0 0
        %3535 = vmatprep.subr.bf16.mxu0 0
        %3536 = vmatpush1.bf16.msra.mxu0 0
        %3537 = vmatprep.subr.bf16.mxu0 0
        %3538 = vmatpush1.bf16.msra.mxu0 0
        %3539 = vmatprep.subr.bf16.mxu0 0
        %3540 = vmatpush1.bf16.msra.mxu0 0
        %3541 = vmatprep.subr.bf16.mxu0 0
        %3542 = vmatpush1.bf16.msra.mxu0 0
        %3543 = vmatprep.subr.bf16.mxu0 0
        %3544 = vmatpush1.bf16.msra.mxu0 0
        %3545 = vmatprep.subr.bf16.mxu0 0
        %3546 = vmatpush1.bf16.msra.mxu0 0
        %3547 = vmatprep.subr.bf16.mxu0 0
        %3548 = vmatpush1.bf16.msra.mxu0 0
        %3549 = vmatprep.subr.bf16.mxu0 0
        %3550 = vmatpush1.bf16.msra.mxu0 0
        %3551 = vmatprep.subr.bf16.mxu0 0
        %3552 = vmatpush1.bf16.msra.mxu0 0
        %3553 = vmatprep.subr.bf16.mxu0 0
        %3554 = vmatpush1.bf16.msra.mxu0 0
        %3555 = vmatprep.subr.bf16.mxu0 0
        %3556 = vmatpush1.bf16.msra.mxu0 0
        %3557 = vmatprep.mubr.bf16.mxu0 0
        %3558 = vmatmul.mubr.bf16.gmra.mrb[0].mxu0 %v3523
        %v3559 = vpop.f32.mrb[0].mxu0
        %v3560 = vadd.f32 %v3504, %v3559
        %v3561 = vpop.f32.mrb[0].mxu0
        %v3562 = vpop.f32.mrb[0].mxu0
        %v3563 = vadd.f32 %v3507, %v3562
        %v3564 = vpop.f32.mrb[0].mxu0
        %3565 = vdwg.mxu0
        %v3566 = vld [vmem:[#allocation16] sm:$0xf]
        %v3567 = vld [vmem:[#allocation16 + $0x4] sm:$0xf]
        %v3568 = vld [vmem:[#allocation16 + $0x8] sm:$0xf]
        %v3569 = vld [vmem:[#allocation16 + $0xc] sm:$0xf]
        %v3570 = vld [vmem:[#allocation17] sm:$0xf]
        %v3571 = vld [vmem:[#allocation17 + $0x4] sm:$0xf]
        %v3572 = vld [vmem:[#allocation17 + $0x8] sm:$0xf]
        %v3573 = vld [vmem:[#allocation17 + $0xc] sm:$0xf]
        %v3578 = vunpack.c.l.b16 %v3570
        %v3579 = vunpack.c.l.b16 %v3571
        %v3580 = vunpack.c.l.b16 %v3572
        %v3581 = vunpack.c.l.b16 %v3573
        %v3582 = vpack.c.b16 %v3579, %v3578
        %v3583 = vpack.c.b16 %v3581, %v3580
        %3586 = vmatprep.subr.bf16.mxu0 0
        %3587 = vmatpush1.bf16.msra.mxu0 %v3582
        %3588 = vmatprep.subr.bf16.mxu0 0
        %3589 = vmatpush1.bf16.msra.mxu0 %v3583
        %3590 = vmatprep.subr.bf16.mxu0 0
        %3591 = vmatpush1.bf16.msra.mxu0 0
        %3592 = vmatprep.subr.bf16.mxu0 0
        %3593 = vmatpush1.bf16.msra.mxu0 0
        %3594 = vmatprep.subr.bf16.mxu0 0
        %3595 = vmatpush1.bf16.msra.mxu0 0
        %3596 = vmatprep.subr.bf16.mxu0 0
        %3597 = vmatpush1.bf16.msra.mxu0 0
        %3598 = vmatprep.subr.bf16.mxu0 0
        %3599 = vmatpush1.bf16.msra.mxu0 0
        %3600 = vmatprep.subr.bf16.mxu0 0
        %3601 = vmatpush1.bf16.msra.mxu0 0
        %3602 = vmatprep.subr.bf16.mxu0 0
        %3603 = vmatpush1.bf16.msra.mxu0 0
        %3604 = vmatprep.subr.bf16.mxu0 0
        %3605 = vmatpush1.bf16.msra.mxu0 0
        %3606 = vmatprep.subr.bf16.mxu0 0
        %3607 = vmatpush1.bf16.msra.mxu0 0
        %3608 = vmatprep.subr.bf16.mxu0 0
        %3609 = vmatpush1.bf16.msra.mxu0 0
        %3610 = vmatprep.subr.bf16.mxu0 0
        %3611 = vmatpush1.bf16.msra.mxu0 0
        %3612 = vmatprep.subr.bf16.mxu0 0
        %3613 = vmatpush1.bf16.msra.mxu0 0
        %3614 = vmatprep.subr.bf16.mxu0 0
        %3615 = vmatpush1.bf16.msra.mxu0 0
        %3616 = vmatprep.subr.bf16.mxu0 0
        %3617 = vmatpush1.bf16.msra.mxu0 0
        %3618 = vmatprep.mubr.bf16.mxu0 0
        %3619 = vmatmul.mubr.bf16.gmra.mrb[0].mxu0 %v3467
        %v3620 = vpop.f32.mrb[0].mxu0
        %v3621 = vadd.f32 0.0, %v3620
        %v3622 = vpop.f32.mrb[0].mxu0
        %v3623 = vpop.f32.mrb[0].mxu0
        %v3624 = vadd.f32 0.0, %v3623
        %v3625 = vpop.f32.mrb[0].mxu0
        %3626 = vdwg.mxu0
        %v3631 = vunpack.c.l.b16 %v3566
        %v3632 = vunpack.c.l.b16 %v3567
        %v3633 = vunpack.c.l.b16 %v3568
        %v3634 = vunpack.c.l.b16 %v3569
        %v3635 = vpack.c.b16 %v3632, %v3631
        %v3636 = vpack.c.b16 %v3634, %v3633
        %3639 = vmatprep.subr.bf16.mxu0 0
        %3640 = vmatpush1.bf16.msra.mxu0 %v3635
        %3641 = vmatprep.subr.bf16.mxu0 0
        %3642 = vmatpush1.bf16.msra.mxu0 %v3636
        %3643 = vmatprep.subr.bf16.mxu0 0
        %3644 = vmatpush1.bf16.msra.mxu0 0
        %3645 = vmatprep.subr.bf16.mxu0 0
        %3646 = vmatpush1.bf16.msra.mxu0 0
        %3647 = vmatprep.subr.bf16.mxu0 0
        %3648 = vmatpush1.bf16.msra.mxu0 0
        %3649 = vmatprep.subr.bf16.mxu0 0
        %3650 = vmatpush1.bf16.msra.mxu0 0
        %3651 = vmatprep.subr.bf16.mxu0 0
        %3652 = vmatpush1.bf16.msra.mxu0 0
        %3653 = vmatprep.subr.bf16.mxu0 0
        %3654 = vmatpush1.bf16.msra.mxu0 0
        %3655 = vmatprep.subr.bf16.mxu0 0
        %3656 = vmatpush1.bf16.msra.mxu0 0
        %3657 = vmatprep.subr.bf16.mxu0 0
        %3658 = vmatpush1.bf16.msra.mxu0 0
        %3659 = vmatprep.subr.bf16.mxu0 0
        %3660 = vmatpush1.bf16.msra.mxu0 0
        %3661 = vmatprep.subr.bf16.mxu0 0
        %3662 = vmatpush1.bf16.msra.mxu0 0
        %3663 = vmatprep.subr.bf16.mxu0 0
        %3664 = vmatpush1.bf16.msra.mxu0 0
        %3665 = vmatprep.subr.bf16.mxu0 0
        %3666 = vmatpush1.bf16.msra.mxu0 0
        %3667 = vmatprep.subr.bf16.mxu0 0
        %3668 = vmatpush1.bf16.msra.mxu0 0
        %3669 = vmatprep.subr.bf16.mxu0 0
        %3670 = vmatpush1.bf16.msra.mxu0 0
        %3671 = vmatprep.mubr.bf16.mxu0 0
        %3672 = vmatmul.mubr.bf16.gmra.mrb[0].mxu0 %v3523
        %v3673 = vpop.f32.mrb[0].mxu0
        %v3674 = vadd.f32 %v3621, %v3673
        %v3675 = vpop.f32.mrb[0].mxu0
        %v3676 = vpop.f32.mrb[0].mxu0
        %v3677 = vadd.f32 %v3624, %v3676
        %v3678 = vpop.f32.mrb[0].mxu0
        %3679 = vdwg.mxu0
        %s3680 = scalar_lea.vmem [#allocation13], 16
        %v3681 = vld [vmem:[%s3680] sm:$0xf]
        %v3682 = vld [vmem:[%s3680 + $0x4] sm:$0xf]
        %v3683 = vld [vmem:[%s3680 + $0x8] sm:$0xf]
        %v3684 = vld [vmem:[%s3680 + $0xc] sm:$0xf]
        %v3689 = vunpack.c.l.b16 %v3681
        %v3690 = vunpack.c.l.b16 %v3682
        %v3691 = vunpack.c.l.b16 %v3683
        %v3692 = vunpack.c.l.b16 %v3684
        %v3693 = vpack.c.b16 %v3690, %v3689
        %v3694 = vpack.c.b16 %v3692, %v3691
        %v3698 = vsel %vm1148, %v3354, 0
        %3700 = vmatprep.subr.bf16.mxu0 0
        %3701 = vmatpush1.bf16.msra.mxu0 %v3693
        %3702 = vmatprep.subr.bf16.mxu0 0
        %3703 = vmatpush1.bf16.msra.mxu0 %v3694
        %3704 = vmatprep.subr.bf16.mxu0 0
        %3705 = vmatpush1.bf16.msra.mxu0 0
        %3706 = vmatprep.subr.bf16.mxu0 0
        %3707 = vmatpush1.bf16.msra.mxu0 0
        %3708 = vmatprep.subr.bf16.mxu0 0
        %3709 = vmatpush1.bf16.msra.mxu0 0
        %3710 = vmatprep.subr.bf16.mxu0 0
        %3711 = vmatpush1.bf16.msra.mxu0 0
        %3712 = vmatprep.subr.bf16.mxu0 0
        %3713 = vmatpush1.bf16.msra.mxu0 0
        %3714 = vmatprep.subr.bf16.mxu0 0
        %3715 = vmatpush1.bf16.msra.mxu0 0
        %3716 = vmatprep.subr.bf16.mxu0 0
        %3717 = vmatpush1.bf16.msra.mxu0 0
        %3718 = vmatprep.subr.bf16.mxu0 0
        %3719 = vmatpush1.bf16.msra.mxu0 0
        %3720 = vmatprep.subr.bf16.mxu0 0
        %3721 = vmatpush1.bf16.msra.mxu0 0
        %3722 = vmatprep.subr.bf16.mxu0 0
        %3723 = vmatpush1.bf16.msra.mxu0 0
        %3724 = vmatprep.subr.bf16.mxu0 0
        %3725 = vmatpush1.bf16.msra.mxu0 0
        %3726 = vmatprep.subr.bf16.mxu0 0
        %3727 = vmatpush1.bf16.msra.mxu0 0
        %3728 = vmatprep.subr.bf16.mxu0 0
        %3729 = vmatpush1.bf16.msra.mxu0 0
        %3730 = vmatprep.subr.bf16.mxu0 0
        %3731 = vmatpush1.bf16.msra.mxu0 0
        %3732 = vmatprep.mubr.bf16.mxu0 0
        %3733 = vmatmul.mubr.bf16.gmra.mrb[0].mxu0 %v3698
        %v3734 = vpop.f32.mrb[0].mxu0
        %v3735 = vadd.f32 0.0, %v3734
        %v3736 = vpop.f32.mrb[0].mxu0
        %v3737 = vpop.f32.mrb[0].mxu0
        %v3738 = vadd.f32 0.0, %v3737
        %v3739 = vpop.f32.mrb[0].mxu0
        %3740 = vdwg.mxu0
        %v3741 = vadd.f32 %v3560, %v3735
        %v3742 = vadd.f32 %v3563, %v3738
        %s3743 = scalar_lea.vmem [#allocation14], 16
        %v3744 = vld [vmem:[%s3743] sm:$0xf]
        %v3745 = vld [vmem:[%s3743 + $0x4] sm:$0xf]
        %v3746 = vld [vmem:[%s3743 + $0x8] sm:$0xf]
        %v3747 = vld [vmem:[%s3743 + $0xc] sm:$0xf]
        %v3752 = vunpack.c.l.b16 %v3744
        %v3753 = vunpack.c.l.b16 %v3745
        %v3754 = vunpack.c.l.b16 %v3746
        %v3755 = vunpack.c.l.b16 %v3747
        %v3756 = vpack.c.b16 %v3753, %v3752
        %v3757 = vpack.c.b16 %v3755, %v3754
        %v3761 = vsel %vm1148, %v3441, 0
        %3763 = vmatprep.subr.bf16.mxu0 0
        %3764 = vmatpush1.bf16.msra.mxu0 %v3756
        %3765 = vmatprep.subr.bf16.mxu0 0
        %3766 = vmatpush1.bf16.msra.mxu0 %v3757
        %3767 = vmatprep.subr.bf16.mxu0 0
        %3768 = vmatpush1.bf16.msra.mxu0 0
        %3769 = vmatprep.subr.bf16.mxu0 0
        %3770 = vmatpush1.bf16.msra.mxu0 0
        %3771 = vmatprep.subr.bf16.mxu0 0
        %3772 = vmatpush1.bf16.msra.mxu0 0
        %3773 = vmatprep.subr.bf16.mxu0 0
        %3774 = vmatpush1.bf16.msra.mxu0 0
        %3775 = vmatprep.subr.bf16.mxu0 0
        %3776 = vmatpush1.bf16.msra.mxu0 0
        %3777 = vmatprep.subr.bf16.mxu0 0
        %3778 = vmatpush1.bf16.msra.mxu0 0
        %3779 = vmatprep.subr.bf16.mxu0 0
        %3780 = vmatpush1.bf16.msra.mxu0 0
        %3781 = vmatprep.subr.bf16.mxu0 0
        %3782 = vmatpush1.bf16.msra.mxu0 0
        %3783 = vmatprep.subr.bf16.mxu0 0
        %3784 = vmatpush1.bf16.msra.mxu0 0
        %3785 = vmatprep.subr.bf16.mxu0 0
        %3786 = vmatpush1.bf16.msra.mxu0 0
        %3787 = vmatprep.subr.bf16.mxu0 0
        %3788 = vmatpush1.bf16.msra.mxu0 0
        %3789 = vmatprep.subr.bf16.mxu0 0
        %3790 = vmatpush1.bf16.msra.mxu0 0
        %3791 = vmatprep.subr.bf16.mxu0 0
        %3792 = vmatpush1.bf16.msra.mxu0 0
        %3793 = vmatprep.subr.bf16.mxu0 0
        %3794 = vmatpush1.bf16.msra.mxu0 0
        %3795 = vmatprep.mubr.bf16.mxu0 0
        %3796 = vmatmul.mubr.bf16.gmra.mrb[0].mxu0 %v3761
        %v3797 = vpop.f32.mrb[0].mxu0
        %v3798 = vadd.f32 0.0, %v3797
        %v3799 = vpop.f32.mrb[0].mxu0
        %v3800 = vpop.f32.mrb[0].mxu0
        %v3801 = vadd.f32 0.0, %v3800
        %v3802 = vpop.f32.mrb[0].mxu0
        %3803 = vdwg.mxu0
        %v3804 = vadd.f32 %v3741, %v3798
        %v3805 = vadd.f32 %v3742, %v3801
        %s3806 = scalar_lea.vmem [#allocation16], 16
        %v3807 = vld [vmem:[%s3806] sm:$0xf]
        %v3808 = vld [vmem:[%s3806 + $0x4] sm:$0xf]
        %v3809 = vld [vmem:[%s3806 + $0x8] sm:$0xf]
        %v3810 = vld [vmem:[%s3806 + $0xc] sm:$0xf]
        %v3815 = vunpack.c.l.b16 %v3807
        %v3816 = vunpack.c.l.b16 %v3808
        %v3817 = vunpack.c.l.b16 %v3809
        %v3818 = vunpack.c.l.b16 %v3810
        %v3819 = vpack.c.b16 %v3816, %v3815
        %v3820 = vpack.c.b16 %v3818, %v3817
        %3823 = vmatprep.subr.bf16.mxu0 0
        %3824 = vmatpush1.bf16.msra.mxu0 %v3819
        %3825 = vmatprep.subr.bf16.mxu0 0
        %3826 = vmatpush1.bf16.msra.mxu0 %v3820
        %3827 = vmatprep.subr.bf16.mxu0 0
        %3828 = vmatpush1.bf16.msra.mxu0 0
        %3829 = vmatprep.subr.bf16.mxu0 0
        %3830 = vmatpush1.bf16.msra.mxu0 0
        %3831 = vmatprep.subr.bf16.mxu0 0
        %3832 = vmatpush1.bf16.msra.mxu0 0
        %3833 = vmatprep.subr.bf16.mxu0 0
        %3834 = vmatpush1.bf16.msra.mxu0 0
        %3835 = vmatprep.subr.bf16.mxu0 0
        %3836 = vmatpush1.bf16.msra.mxu0 0
        %3837 = vmatprep.subr.bf16.mxu0 0
        %3838 = vmatpush1.bf16.msra.mxu0 0
        %3839 = vmatprep.subr.bf16.mxu0 0
        %3840 = vmatpush1.bf16.msra.mxu0 0
        %3841 = vmatprep.subr.bf16.mxu0 0
        %3842 = vmatpush1.bf16.msra.mxu0 0
        %3843 = vmatprep.subr.bf16.mxu0 0
        %3844 = vmatpush1.bf16.msra.mxu0 0
        %3845 = vmatprep.subr.bf16.mxu0 0
        %3846 = vmatpush1.bf16.msra.mxu0 0
        %3847 = vmatprep.subr.bf16.mxu0 0
        %3848 = vmatpush1.bf16.msra.mxu0 0
        %3849 = vmatprep.subr.bf16.mxu0 0
        %3850 = vmatpush1.bf16.msra.mxu0 0
        %3851 = vmatprep.subr.bf16.mxu0 0
        %3852 = vmatpush1.bf16.msra.mxu0 0
        %3853 = vmatprep.subr.bf16.mxu0 0
        %3854 = vmatpush1.bf16.msra.mxu0 0
        %3855 = vmatprep.mubr.bf16.mxu0 0
        %3856 = vmatmul.mubr.bf16.gmra.mrb[0].mxu0 %v3698
        %v3857 = vpop.f32.mrb[0].mxu0
        %v3858 = vadd.f32 0.0, %v3857
        %v3859 = vpop.f32.mrb[0].mxu0
        %v3860 = vpop.f32.mrb[0].mxu0
        %v3861 = vadd.f32 0.0, %v3860
        %v3862 = vpop.f32.mrb[0].mxu0
        %3863 = vdwg.mxu0
        %v3864 = vadd.f32 %v3674, %v3858
        %v3865 = vadd.f32 %v3677, %v3861
        %s3866 = scalar_lea.vmem [#allocation17], 16
        %v3867 = vld [vmem:[%s3866] sm:$0xf]
        %v3868 = vld [vmem:[%s3866 + $0x4] sm:$0xf]
        %v3869 = vld [vmem:[%s3866 + $0x8] sm:$0xf]
        %v3870 = vld [vmem:[%s3866 + $0xc] sm:$0xf]
        %v3875 = vunpack.c.l.b16 %v3867
        %v3876 = vunpack.c.l.b16 %v3868
        %v3877 = vunpack.c.l.b16 %v3869
        %v3878 = vunpack.c.l.b16 %v3870
        %v3879 = vpack.c.b16 %v3876, %v3875
        %v3880 = vpack.c.b16 %v3878, %v3877
        %3883 = vmatprep.subr.bf16.mxu0 0
        %3884 = vmatpush1.bf16.msra.mxu0 %v3879
        %3885 = vmatprep.subr.bf16.mxu0 0
        %3886 = vmatpush1.bf16.msra.mxu0 %v3880
        %3887 = vmatprep.subr.bf16.mxu0 0
        %3888 = vmatpush1.bf16.msra.mxu0 0
        %3889 = vmatprep.subr.bf16.mxu0 0
        %3890 = vmatpush1.bf16.msra.mxu0 0
        %3891 = vmatprep.subr.bf16.mxu0 0
        %3892 = vmatpush1.bf16.msra.mxu0 0
        %3893 = vmatprep.subr.bf16.mxu0 0
        %3894 = vmatpush1.bf16.msra.mxu0 0
        %3895 = vmatprep.subr.bf16.mxu0 0
        %3896 = vmatpush1.bf16.msra.mxu0 0
        %3897 = vmatprep.subr.bf16.mxu0 0
        %3898 = vmatpush1.bf16.msra.mxu0 0
        %3899 = vmatprep.subr.bf16.mxu0 0
        %3900 = vmatpush1.bf16.msra.mxu0 0
        %3901 = vmatprep.subr.bf16.mxu0 0
        %3902 = vmatpush1.bf16.msra.mxu0 0
        %3903 = vmatprep.subr.bf16.mxu0 0
        %3904 = vmatpush1.bf16.msra.mxu0 0
        %3905 = vmatprep.subr.bf16.mxu0 0
        %3906 = vmatpush1.bf16.msra.mxu0 0
        %3907 = vmatprep.subr.bf16.mxu0 0
        %3908 = vmatpush1.bf16.msra.mxu0 0
        %3909 = vmatprep.subr.bf16.mxu0 0
        %3910 = vmatpush1.bf16.msra.mxu0 0
        %3911 = vmatprep.subr.bf16.mxu0 0
        %3912 = vmatpush1.bf16.msra.mxu0 0
        %3913 = vmatprep.subr.bf16.mxu0 0
        %3914 = vmatpush1.bf16.msra.mxu0 0
        %3915 = vmatprep.mubr.bf16.mxu0 0
        %3916 = vmatmul.mubr.bf16.gmra.mrb[0].mxu0 %v3761
        %v3917 = vpop.f32.mrb[0].mxu0
        %v3918 = vadd.f32 0.0, %v3917
        %v3919 = vpop.f32.mrb[0].mxu0
        %v3920 = vpop.f32.mrb[0].mxu0
        %v3921 = vadd.f32 0.0, %v3920
        %v3922 = vpop.f32.mrb[0].mxu0
        %3923 = vdwg.mxu0
        %v3924 = vadd.f32 %v3864, %v3918
        %v3925 = vadd.f32 %v3865, %v3921
        %s3926 = scalar_lea.vmem [#allocation13], 32
        %v3927 = vld [vmem:[%s3926] sm:$0xf]
        %v3928 = vld [vmem:[%s3926 + $0x4] sm:$0xf]
        %v3929 = vld [vmem:[%s3926 + $0x8] sm:$0xf]
        %v3930 = vld [vmem:[%s3926 + $0xc] sm:$0xf]
        %v3935 = vunpack.c.l.b16 %v3927
        %v3936 = vunpack.c.l.b16 %v3928
        %v3937 = vunpack.c.l.b16 %v3929
        %v3938 = vunpack.c.l.b16 %v3930
        %v3939 = vpack.c.b16 %v3936, %v3935
        %v3940 = vpack.c.b16 %v3938, %v3937
        %v3944 = vsel %vm1148, %v3355, 0
        %3946 = vmatprep.subr.bf16.mxu0 0
        %3947 = vmatpush1.bf16.msra.mxu0 %v3939
        %3948 = vmatprep.subr.bf16.mxu0 0
        %3949 = vmatpush1.bf16.msra.mxu0 %v3940
        %3950 = vmatprep.subr.bf16.mxu0 0
        %3951 = vmatpush1.bf16.msra.mxu0 0
        %3952 = vmatprep.subr.bf16.mxu0 0
        %3953 = vmatpush1.bf16.msra.mxu0 0
        %3954 = vmatprep.subr.bf16.mxu0 0
        %3955 = vmatpush1.bf16.msra.mxu0 0
        %3956 = vmatprep.subr.bf16.mxu0 0
        %3957 = vmatpush1.bf16.msra.mxu0 0
        %3958 = vmatprep.subr.bf16.mxu0 0
        %3959 = vmatpush1.bf16.msra.mxu0 0
        %3960 = vmatprep.subr.bf16.mxu0 0
        %3961 = vmatpush1.bf16.msra.mxu0 0
        %3962 = vmatprep.subr.bf16.mxu0 0
        %3963 = vmatpush1.bf16.msra.mxu0 0
        %3964 = vmatprep.subr.bf16.mxu0 0
        %3965 = vmatpush1.bf16.msra.mxu0 0
        %3966 = vmatprep.subr.bf16.mxu0 0
        %3967 = vmatpush1.bf16.msra.mxu0 0
        %3968 = vmatprep.subr.bf16.mxu0 0
        %3969 = vmatpush1.bf16.msra.mxu0 0
        %3970 = vmatprep.subr.bf16.mxu0 0
        %3971 = vmatpush1.bf16.msra.mxu0 0
        %3972 = vmatprep.subr.bf16.mxu0 0
        %3973 = vmatpush1.bf16.msra.mxu0 0
        %3974 = vmatprep.subr.bf16.mxu0 0
        %3975 = vmatpush1.bf16.msra.mxu0 0
        %3976 = vmatprep.subr.bf16.mxu0 0
        %3977 = vmatpush1.bf16.msra.mxu0 0
        %3978 = vmatprep.mubr.bf16.mxu0 0
        %3979 = vmatmul.mubr.bf16.gmra.mrb[0].mxu0 %v3944
        %v3980 = vpop.f32.mrb[0].mxu0
        %v3981 = vadd.f32 0.0, %v3980
        %v3982 = vpop.f32.mrb[0].mxu0
        %v3983 = vpop.f32.mrb[0].mxu0
        %v3984 = vadd.f32 0.0, %v3983
        %v3985 = vpop.f32.mrb[0].mxu0
        %3986 = vdwg.mxu0
        %v3987 = vadd.f32 %v3804, %v3981
        %v3988 = vadd.f32 %v3805, %v3984
        %s3989 = scalar_lea.vmem [#allocation14], 32
        %v3990 = vld [vmem:[%s3989] sm:$0xf]
        %v3991 = vld [vmem:[%s3989 + $0x4] sm:$0xf]
        %v3992 = vld [vmem:[%s3989 + $0x8] sm:$0xf]
        %v3993 = vld [vmem:[%s3989 + $0xc] sm:$0xf]
        %v3998 = vunpack.c.l.b16 %v3990
        %v3999 = vunpack.c.l.b16 %v3991
        %v4000 = vunpack.c.l.b16 %v3992
        %v4001 = vunpack.c.l.b16 %v3993
        %v4002 = vpack.c.b16 %v3999, %v3998
        %v4003 = vpack.c.b16 %v4001, %v4000
        %v4007 = vsel %vm1148, %v3442, 0
        %4009 = vmatprep.subr.bf16.mxu0 0
        %4010 = vmatpush1.bf16.msra.mxu0 %v4002
        %4011 = vmatprep.subr.bf16.mxu0 0
        %4012 = vmatpush1.bf16.msra.mxu0 %v4003
        %4013 = vmatprep.subr.bf16.mxu0 0
        %4014 = vmatpush1.bf16.msra.mxu0 0
        %4015 = vmatprep.subr.bf16.mxu0 0
        %4016 = vmatpush1.bf16.msra.mxu0 0
        %4017 = vmatprep.subr.bf16.mxu0 0
        %4018 = vmatpush1.bf16.msra.mxu0 0
        %4019 = vmatprep.subr.bf16.mxu0 0
        %4020 = vmatpush1.bf16.msra.mxu0 0
        %4021 = vmatprep.subr.bf16.mxu0 0
        %4022 = vmatpush1.bf16.msra.mxu0 0
        %4023 = vmatprep.subr.bf16.mxu0 0
        %4024 = vmatpush1.bf16.msra.mxu0 0
        %4025 = vmatprep.subr.bf16.mxu0 0
        %4026 = vmatpush1.bf16.msra.mxu0 0
        %4027 = vmatprep.subr.bf16.mxu0 0
        %4028 = vmatpush1.bf16.msra.mxu0 0
        %4029 = vmatprep.subr.bf16.mxu0 0
        %4030 = vmatpush1.bf16.msra.mxu0 0
        %4031 = vmatprep.subr.bf16.mxu0 0
        %4032 = vmatpush1.bf16.msra.mxu0 0
        %4033 = vmatprep.subr.bf16.mxu0 0
        %4034 = vmatpush1.bf16.msra.mxu0 0
        %4035 = vmatprep.subr.bf16.mxu0 0
        %4036 = vmatpush1.bf16.msra.mxu0 0
        %4037 = vmatprep.subr.bf16.mxu0 0
        %4038 = vmatpush1.bf16.msra.mxu0 0
        %4039 = vmatprep.subr.bf16.mxu0 0
        %4040 = vmatpush1.bf16.msra.mxu0 0
        %4041 = vmatprep.mubr.bf16.mxu0 0
        %4042 = vmatmul.mubr.bf16.gmra.mrb[0].mxu0 %v4007
        %v4043 = vpop.f32.mrb[0].mxu0
        %v4044 = vadd.f32 0.0, %v4043
        %v4045 = vpop.f32.mrb[0].mxu0
        %v4046 = vpop.f32.mrb[0].mxu0
        %v4047 = vadd.f32 0.0, %v4046
        %v4048 = vpop.f32.mrb[0].mxu0
        %4049 = vdwg.mxu0
        %v4050 = vadd.f32 %v3987, %v4044
        %v4051 = vadd.f32 %v3988, %v4047
        %s4052 = scalar_lea.vmem [#allocation16], 32
        %v4053 = vld [vmem:[%s4052] sm:$0xf]
        %v4054 = vld [vmem:[%s4052 + $0x4] sm:$0xf]
        %v4055 = vld [vmem:[%s4052 + $0x8] sm:$0xf]
        %v4056 = vld [vmem:[%s4052 + $0xc] sm:$0xf]
        %v4061 = vunpack.c.l.b16 %v4053
        %v4062 = vunpack.c.l.b16 %v4054
        %v4063 = vunpack.c.l.b16 %v4055
        %v4064 = vunpack.c.l.b16 %v4056
        %v4065 = vpack.c.b16 %v4062, %v4061
        %v4066 = vpack.c.b16 %v4064, %v4063
        %4069 = vmatprep.subr.bf16.mxu0 0
        %4070 = vmatpush1.bf16.msra.mxu0 %v4065
        %4071 = vmatprep.subr.bf16.mxu0 0
        %4072 = vmatpush1.bf16.msra.mxu0 %v4066
        %4073 = vmatprep.subr.bf16.mxu0 0
        %4074 = vmatpush1.bf16.msra.mxu0 0
        %4075 = vmatprep.subr.bf16.mxu0 0
        %4076 = vmatpush1.bf16.msra.mxu0 0
        %4077 = vmatprep.subr.bf16.mxu0 0
        %4078 = vmatpush1.bf16.msra.mxu0 0
        %4079 = vmatprep.subr.bf16.mxu0 0
        %4080 = vmatpush1.bf16.msra.mxu0 0
        %4081 = vmatprep.subr.bf16.mxu0 0
        %4082 = vmatpush1.bf16.msra.mxu0 0
        %4083 = vmatprep.subr.bf16.mxu0 0
        %4084 = vmatpush1.bf16.msra.mxu0 0
        %4085 = vmatprep.subr.bf16.mxu0 0
        %4086 = vmatpush1.bf16.msra.mxu0 0
        %4087 = vmatprep.subr.bf16.mxu0 0
        %4088 = vmatpush1.bf16.msra.mxu0 0
        %4089 = vmatprep.subr.bf16.mxu0 0
        %4090 = vmatpush1.bf16.msra.mxu0 0
        %4091 = vmatprep.subr.bf16.mxu0 0
        %4092 = vmatpush1.bf16.msra.mxu0 0
        %4093 = vmatprep.subr.bf16.mxu0 0
        %4094 = vmatpush1.bf16.msra.mxu0 0
        %4095 = vmatprep.subr.bf16.mxu0 0
        %4096 = vmatpush1.bf16.msra.mxu0 0
        %4097 = vmatprep.subr.bf16.mxu0 0
        %4098 = vmatpush1.bf16.msra.mxu0 0
        %4099 = vmatprep.subr.bf16.mxu0 0
        %4100 = vmatpush1.bf16.msra.mxu0 0
        %4101 = vmatprep.mubr.bf16.mxu0 0
        %4102 = vmatmul.mubr.bf16.gmra.mrb[0].mxu0 %v3944
        %v4103 = vpop.f32.mrb[0].mxu0
        %v4104 = vadd.f32 0.0, %v4103
        %v4105 = vpop.f32.mrb[0].mxu0
        %v4106 = vpop.f32.mrb[0].mxu0
        %v4107 = vadd.f32 0.0, %v4106
        %v4108 = vpop.f32.mrb[0].mxu0
        %4109 = vdwg.mxu0
        %v4110 = vadd.f32 %v3924, %v4104
        %v4111 = vadd.f32 %v3925, %v4107
        %s4112 = scalar_lea.vmem [#allocation17], 32
        %v4113 = vld [vmem:[%s4112] sm:$0xf]
        %v4114 = vld [vmem:[%s4112 + $0x4] sm:$0xf]
        %v4115 = vld [vmem:[%s4112 + $0x8] sm:$0xf]
        %v4116 = vld [vmem:[%s4112 + $0xc] sm:$0xf]
        %v4121 = vunpack.c.l.b16 %v4113
        %v4122 = vunpack.c.l.b16 %v4114
        %v4123 = vunpack.c.l.b16 %v4115
        %v4124 = vunpack.c.l.b16 %v4116
        %v4125 = vpack.c.b16 %v4122, %v4121
        %v4126 = vpack.c.b16 %v4124, %v4123
        %4129 = vmatprep.subr.bf16.mxu0 0
        %4130 = vmatpush1.bf16.msra.mxu0 %v4125
        %4131 = vmatprep.subr.bf16.mxu0 0
        %4132 = vmatpush1.bf16.msra.mxu0 %v4126
        %4133 = vmatprep.subr.bf16.mxu0 0
        %4134 = vmatpush1.bf16.msra.mxu0 0
        %4135 = vmatprep.subr.bf16.mxu0 0
        %4136 = vmatpush1.bf16.msra.mxu0 0
        %4137 = vmatprep.subr.bf16.mxu0 0
        %4138 = vmatpush1.bf16.msra.mxu0 0
        %4139 = vmatprep.subr.bf16.mxu0 0
        %4140 = vmatpush1.bf16.msra.mxu0 0
        %4141 = vmatprep.subr.bf16.mxu0 0
        %4142 = vmatpush1.bf16.msra.mxu0 0
        %4143 = vmatprep.subr.bf16.mxu0 0
        %4144 = vmatpush1.bf16.msra.mxu0 0
        %4145 = vmatprep.subr.bf16.mxu0 0
        %4146 = vmatpush1.bf16.msra.mxu0 0
        %4147 = vmatprep.subr.bf16.mxu0 0
        %4148 = vmatpush1.bf16.msra.mxu0 0
        %4149 = vmatprep.subr.bf16.mxu0 0
        %4150 = vmatpush1.bf16.msra.mxu0 0
        %4151 = vmatprep.subr.bf16.mxu0 0
        %4152 = vmatpush1.bf16.msra.mxu0 0
        %4153 = vmatprep.subr.bf16.mxu0 0
        %4154 = vmatpush1.bf16.msra.mxu0 0
        %4155 = vmatprep.subr.bf16.mxu0 0
        %4156 = vmatpush1.bf16.msra.mxu0 0
        %4157 = vmatprep.subr.bf16.mxu0 0
        %4158 = vmatpush1.bf16.msra.mxu0 0
        %4159 = vmatprep.subr.bf16.mxu0 0
        %4160 = vmatpush1.bf16.msra.mxu0 0
        %4161 = vmatprep.mubr.bf16.mxu0 0
        %4162 = vmatmul.mubr.bf16.gmra.mrb[0].mxu0 %v4007
        %v4163 = vpop.f32.mrb[0].mxu0
        %v4164 = vadd.f32 0.0, %v4163
        %v4165 = vpop.f32.mrb[0].mxu0
        %v4166 = vpop.f32.mrb[0].mxu0
        %v4167 = vadd.f32 0.0, %v4166
        %v4168 = vpop.f32.mrb[0].mxu0
        %4169 = vdwg.mxu0
        %v4170 = vadd.f32 %v4110, %v4164
        %v4171 = vadd.f32 %v4111, %v4167
        %s4172 = scalar_lea.vmem [#allocation13], 48
        %v4173 = vld [vmem:[%s4172] sm:$0xf]
        %v4174 = vld [vmem:[%s4172 + $0x4] sm:$0xf]
        %v4175 = vld [vmem:[%s4172 + $0x8] sm:$0xf]
        %v4176 = vld [vmem:[%s4172 + $0xc] sm:$0xf]
        %v4181 = vunpack.c.l.b16 %v4173
        %v4182 = vunpack.c.l.b16 %v4174
        %v4183 = vunpack.c.l.b16 %v4175
        %v4184 = vunpack.c.l.b16 %v4176
        %v4185 = vpack.c.b16 %v4182, %v4181
        %v4186 = vpack.c.b16 %v4184, %v4183
        %v4190 = vsel %vm1148, %v3356, 0
        %4192 = vmatprep.subr.bf16.mxu0 0
        %4193 = vmatpush1.bf16.msra.mxu0 %v4185
        %4194 = vmatprep.subr.bf16.mxu0 0
        %4195 = vmatpush1.bf16.msra.mxu0 %v4186
        %4196 = vmatprep.subr.bf16.mxu0 0
        %4197 = vmatpush1.bf16.msra.mxu0 0
        %4198 = vmatprep.subr.bf16.mxu0 0
        %4199 = vmatpush1.bf16.msra.mxu0 0
        %4200 = vmatprep.subr.bf16.mxu0 0
        %4201 = vmatpush1.bf16.msra.mxu0 0
        %4202 = vmatprep.subr.bf16.mxu0 0
        %4203 = vmatpush1.bf16.msra.mxu0 0
        %4204 = vmatprep.subr.bf16.mxu0 0
        %4205 = vmatpush1.bf16.msra.mxu0 0
        %4206 = vmatprep.subr.bf16.mxu0 0
        %4207 = vmatpush1.bf16.msra.mxu0 0
        %4208 = vmatprep.subr.bf16.mxu0 0
        %4209 = vmatpush1.bf16.msra.mxu0 0
        %4210 = vmatprep.subr.bf16.mxu0 0
        %4211 = vmatpush1.bf16.msra.mxu0 0
        %4212 = vmatprep.subr.bf16.mxu0 0
        %4213 = vmatpush1.bf16.msra.mxu0 0
        %4214 = vmatprep.subr.bf16.mxu0 0
        %4215 = vmatpush1.bf16.msra.mxu0 0
        %4216 = vmatprep.subr.bf16.mxu0 0
        %4217 = vmatpush1.bf16.msra.mxu0 0
        %4218 = vmatprep.subr.bf16.mxu0 0
        %4219 = vmatpush1.bf16.msra.mxu0 0
        %4220 = vmatprep.subr.bf16.mxu0 0
        %4221 = vmatpush1.bf16.msra.mxu0 0
        %4222 = vmatprep.subr.bf16.mxu0 0
        %4223 = vmatpush1.bf16.msra.mxu0 0
        %4224 = vmatprep.mubr.bf16.mxu0 0
        %4225 = vmatmul.mubr.bf16.gmra.mrb[0].mxu0 %v4190
        %v4226 = vpop.f32.mrb[0].mxu0
        %v4227 = vadd.f32 0.0, %v4226
        %v4228 = vpop.f32.mrb[0].mxu0
        %v4229 = vpop.f32.mrb[0].mxu0
        %v4230 = vadd.f32 0.0, %v4229
        %v4231 = vpop.f32.mrb[0].mxu0
        %4232 = vdwg.mxu0
        %v4233 = vadd.f32 %v4050, %v4227
        %v4234 = vadd.f32 %v4051, %v4230
        %s4235 = scalar_lea.vmem [#allocation14], 48
        %v4236 = vld [vmem:[%s4235] sm:$0xf]
        %v4237 = vld [vmem:[%s4235 + $0x4] sm:$0xf]
        %v4238 = vld [vmem:[%s4235 + $0x8] sm:$0xf]
        %v4239 = vld [vmem:[%s4235 + $0xc] sm:$0xf]
        %v4244 = vunpack.c.l.b16 %v4236
        %v4245 = vunpack.c.l.b16 %v4237
        %v4246 = vunpack.c.l.b16 %v4238
        %v4247 = vunpack.c.l.b16 %v4239
        %v4248 = vpack.c.b16 %v4245, %v4244
        %v4249 = vpack.c.b16 %v4247, %v4246
        %v4253 = vsel %vm1148, %v3443, 0
        %4255 = vmatprep.subr.bf16.mxu0 0
        %4256 = vmatpush1.bf16.msra.mxu0 %v4248
        %4257 = vmatprep.subr.bf16.mxu0 0
        %4258 = vmatpush1.bf16.msra.mxu0 %v4249
        %4259 = vmatprep.subr.bf16.mxu0 0
        %4260 = vmatpush1.bf16.msra.mxu0 0
        %4261 = vmatprep.subr.bf16.mxu0 0
        %4262 = vmatpush1.bf16.msra.mxu0 0
        %4263 = vmatprep.subr.bf16.mxu0 0
        %4264 = vmatpush1.bf16.msra.mxu0 0
        %4265 = vmatprep.subr.bf16.mxu0 0
        %4266 = vmatpush1.bf16.msra.mxu0 0
        %4267 = vmatprep.subr.bf16.mxu0 0
        %4268 = vmatpush1.bf16.msra.mxu0 0
        %4269 = vmatprep.subr.bf16.mxu0 0
        %4270 = vmatpush1.bf16.msra.mxu0 0
        %4271 = vmatprep.subr.bf16.mxu0 0
        %4272 = vmatpush1.bf16.msra.mxu0 0
        %4273 = vmatprep.subr.bf16.mxu0 0
        %4274 = vmatpush1.bf16.msra.mxu0 0
        %4275 = vmatprep.subr.bf16.mxu0 0
        %4276 = vmatpush1.bf16.msra.mxu0 0
        %4277 = vmatprep.subr.bf16.mxu0 0
        %4278 = vmatpush1.bf16.msra.mxu0 0
        %4279 = vmatprep.subr.bf16.mxu0 0
        %4280 = vmatpush1.bf16.msra.mxu0 0
        %4281 = vmatprep.subr.bf16.mxu0 0
        %4282 = vmatpush1.bf16.msra.mxu0 0
        %4283 = vmatprep.subr.bf16.mxu0 0
        %4284 = vmatpush1.bf16.msra.mxu0 0
        %4285 = vmatprep.subr.bf16.mxu0 0
        %4286 = vmatpush1.bf16.msra.mxu0 0
        %4287 = vmatprep.mubr.bf16.mxu0 0
        %4288 = vmatmul.mubr.bf16.gmra.mrb[0].mxu0 %v4253
        %v4289 = vpop.f32.mrb[0].mxu0
        %v4290 = vadd.f32 0.0, %v4289
        %v4291 = vpop.f32.mrb[0].mxu0
        %v4292 = vpop.f32.mrb[0].mxu0
        %v4293 = vadd.f32 0.0, %v4292
        %v4294 = vpop.f32.mrb[0].mxu0
        %4295 = vdwg.mxu0
        %v4296 = vadd.f32 %v4233, %v4290
        %v4297 = vadd.f32 %v4234, %v4293
        %s4298 = scalar_lea.vmem [#allocation16], 48
        %v4299 = vld [vmem:[%s4298] sm:$0xf]
        %v4300 = vld [vmem:[%s4298 + $0x4] sm:$0xf]
        %v4301 = vld [vmem:[%s4298 + $0x8] sm:$0xf]
        %v4302 = vld [vmem:[%s4298 + $0xc] sm:$0xf]
        %v4307 = vunpack.c.l.b16 %v4299
        %v4308 = vunpack.c.l.b16 %v4300
        %v4309 = vunpack.c.l.b16 %v4301
        %v4310 = vunpack.c.l.b16 %v4302
        %v4311 = vpack.c.b16 %v4308, %v4307
        %v4312 = vpack.c.b16 %v4310, %v4309
        %4315 = vmatprep.subr.bf16.mxu0 0
        %4316 = vmatpush1.bf16.msra.mxu0 %v4311
        %4317 = vmatprep.subr.bf16.mxu0 0
        %4318 = vmatpush1.bf16.msra.mxu0 %v4312
        %4319 = vmatprep.subr.bf16.mxu0 0
        %4320 = vmatpush1.bf16.msra.mxu0 0
        %4321 = vmatprep.subr.bf16.mxu0 0
        %4322 = vmatpush1.bf16.msra.mxu0 0
        %4323 = vmatprep.subr.bf16.mxu0 0
        %4324 = vmatpush1.bf16.msra.mxu0 0
        %4325 = vmatprep.subr.bf16.mxu0 0
        %4326 = vmatpush1.bf16.msra.mxu0 0
        %4327 = vmatprep.subr.bf16.mxu0 0
        %4328 = vmatpush1.bf16.msra.mxu0 0
        %4329 = vmatprep.subr.bf16.mxu0 0
        %4330 = vmatpush1.bf16.msra.mxu0 0
        %4331 = vmatprep.subr.bf16.mxu0 0
        %4332 = vmatpush1.bf16.msra.mxu0 0
        %4333 = vmatprep.subr.bf16.mxu0 0
        %4334 = vmatpush1.bf16.msra.mxu0 0
        %4335 = vmatprep.subr.bf16.mxu0 0
        %4336 = vmatpush1.bf16.msra.mxu0 0
        %4337 = vmatprep.subr.bf16.mxu0 0
        %4338 = vmatpush1.bf16.msra.mxu0 0
        %4339 = vmatprep.subr.bf16.mxu0 0
        %4340 = vmatpush1.bf16.msra.mxu0 0
        %4341 = vmatprep.subr.bf16.mxu0 0
        %4342 = vmatpush1.bf16.msra.mxu0 0
        %4343 = vmatprep.subr.bf16.mxu0 0
        %4344 = vmatpush1.bf16.msra.mxu0 0
        %4345 = vmatprep.subr.bf16.mxu0 0
        %4346 = vmatpush1.bf16.msra.mxu0 0
        %4347 = vmatprep.mubr.bf16.mxu0 0
        %4348 = vmatmul.mubr.bf16.gmra.mrb[0].mxu0 %v4190
        %v4349 = vpop.f32.mrb[0].mxu0
        %v4350 = vadd.f32 0.0, %v4349
        %v4351 = vpop.f32.mrb[0].mxu0
        %v4352 = vpop.f32.mrb[0].mxu0
        %v4353 = vadd.f32 0.0, %v4352
        %v4354 = vpop.f32.mrb[0].mxu0
        %4355 = vdwg.mxu0
        %v4356 = vadd.f32 %v4170, %v4350
        %v4357 = vadd.f32 %v4171, %v4353
        %s4358 = scalar_lea.vmem [#allocation17], 48
        %v4359 = vld [vmem:[%s4358] sm:$0xf]
        %v4360 = vld [vmem:[%s4358 + $0x4] sm:$0xf]
        %v4361 = vld [vmem:[%s4358 + $0x8] sm:$0xf]
        %v4362 = vld [vmem:[%s4358 + $0xc] sm:$0xf]
        %v4367 = vunpack.c.l.b16 %v4359
        %v4368 = vunpack.c.l.b16 %v4360
        %v4369 = vunpack.c.l.b16 %v4361
        %v4370 = vunpack.c.l.b16 %v4362
        %v4371 = vpack.c.b16 %v4368, %v4367
        %v4372 = vpack.c.b16 %v4370, %v4369
        %4375 = vmatprep.subr.bf16.mxu0 0
        %4376 = vmatpush1.bf16.msra.mxu0 %v4371
        %4377 = vmatprep.subr.bf16.mxu0 0
        %4378 = vmatpush1.bf16.msra.mxu0 %v4372
        %4379 = vmatprep.subr.bf16.mxu0 0
        %4380 = vmatpush1.bf16.msra.mxu0 0
        %4381 = vmatprep.subr.bf16.mxu0 0
        %4382 = vmatpush1.bf16.msra.mxu0 0
        %4383 = vmatprep.subr.bf16.mxu0 0
        %4384 = vmatpush1.bf16.msra.mxu0 0
        %4385 = vmatprep.subr.bf16.mxu0 0
        %4386 = vmatpush1.bf16.msra.mxu0 0
        %4387 = vmatprep.subr.bf16.mxu0 0
        %4388 = vmatpush1.bf16.msra.mxu0 0
        %4389 = vmatprep.subr.bf16.mxu0 0
        %4390 = vmatpush1.bf16.msra.mxu0 0
        %4391 = vmatprep.subr.bf16.mxu0 0
        %4392 = vmatpush1.bf16.msra.mxu0 0
        %4393 = vmatprep.subr.bf16.mxu0 0
        %4394 = vmatpush1.bf16.msra.mxu0 0
        %4395 = vmatprep.subr.bf16.mxu0 0
        %4396 = vmatpush1.bf16.msra.mxu0 0
        %4397 = vmatprep.subr.bf16.mxu0 0
        %4398 = vmatpush1.bf16.msra.mxu0 0
        %4399 = vmatprep.subr.bf16.mxu0 0
        %4400 = vmatpush1.bf16.msra.mxu0 0
        %4401 = vmatprep.subr.bf16.mxu0 0
        %4402 = vmatpush1.bf16.msra.mxu0 0
        %4403 = vmatprep.subr.bf16.mxu0 0
        %4404 = vmatpush1.bf16.msra.mxu0 0
        %4405 = vmatprep.subr.bf16.mxu0 0
        %4406 = vmatpush1.bf16.msra.mxu0 0
        %4407 = vmatprep.mubr.bf16.mxu0 0
        %4408 = vmatmul.mubr.bf16.gmra.mrb[0].mxu0 %v4253
        %v4409 = vpop.f32.mrb[0].mxu0
        %v4410 = vadd.f32 0.0, %v4409
        %v4411 = vpop.f32.mrb[0].mxu0
        %v4412 = vpop.f32.mrb[0].mxu0
        %v4413 = vadd.f32 0.0, %v4412
        %v4414 = vpop.f32.mrb[0].mxu0
        %4415 = vdwg.mxu0
        %v4416 = vadd.f32 %v4356, %v4410
        %v4417 = vadd.f32 %v4357, %v4413
        %s4418 = scalar_lea.vmem [#allocation13], 64
        %v4419 = vld [vmem:[%s4418] sm:$0xf]
        %v4420 = vld [vmem:[%s4418 + $0x4] sm:$0xf]
        %v4421 = vld [vmem:[%s4418 + $0x8] sm:$0xf]
        %v4422 = vld [vmem:[%s4418 + $0xc] sm:$0xf]
        %v4427 = vunpack.c.l.b16 %v4419
        %v4428 = vunpack.c.l.b16 %v4420
        %v4429 = vunpack.c.l.b16 %v4421
        %v4430 = vunpack.c.l.b16 %v4422
        %v4431 = vpack.c.b16 %v4428, %v4427
        %v4432 = vpack.c.b16 %v4430, %v4429
        %v4436 = vsel %vm1148, %v3357, 0
        %4438 = vmatprep.subr.bf16.mxu0 0
        %4439 = vmatpush1.bf16.msra.mxu0 %v4431
        %4440 = vmatprep.subr.bf16.mxu0 0
        %4441 = vmatpush1.bf16.msra.mxu0 %v4432
        %4442 = vmatprep.subr.bf16.mxu0 0
        %4443 = vmatpush1.bf16.msra.mxu0 0
        %4444 = vmatprep.subr.bf16.mxu0 0
        %4445 = vmatpush1.bf16.msra.mxu0 0
        %4446 = vmatprep.subr.bf16.mxu0 0
        %4447 = vmatpush1.bf16.msra.mxu0 0
        %4448 = vmatprep.subr.bf16.mxu0 0
        %4449 = vmatpush1.bf16.msra.mxu0 0
        %4450 = vmatprep.subr.bf16.mxu0 0
        %4451 = vmatpush1.bf16.msra.mxu0 0
        %4452 = vmatprep.subr.bf16.mxu0 0
        %4453 = vmatpush1.bf16.msra.mxu0 0
        %4454 = vmatprep.subr.bf16.mxu0 0
        %4455 = vmatpush1.bf16.msra.mxu0 0
        %4456 = vmatprep.subr.bf16.mxu0 0
        %4457 = vmatpush1.bf16.msra.mxu0 0
        %4458 = vmatprep.subr.bf16.mxu0 0
        %4459 = vmatpush1.bf16.msra.mxu0 0
        %4460 = vmatprep.subr.bf16.mxu0 0
        %4461 = vmatpush1.bf16.msra.mxu0 0
        %4462 = vmatprep.subr.bf16.mxu0 0
        %4463 = vmatpush1.bf16.msra.mxu0 0
        %4464 = vmatprep.subr.bf16.mxu0 0
        %4465 = vmatpush1.bf16.msra.mxu0 0
        %4466 = vmatprep.subr.bf16.mxu0 0
        %4467 = vmatpush1.bf16.msra.mxu0 0
        %4468 = vmatprep.subr.bf16.mxu0 0
        %4469 = vmatpush1.bf16.msra.mxu0 0
        %4470 = vmatprep.mubr.bf16.mxu0 0
        %4471 = vmatmul.mubr.bf16.gmra.mrb[0].mxu0 %v4436
        %v4472 = vpop.f32.mrb[0].mxu0
        %v4473 = vadd.f32 0.0, %v4472
        %v4474 = vpop.f32.mrb[0].mxu0
        %v4475 = vpop.f32.mrb[0].mxu0
        %v4476 = vadd.f32 0.0, %v4475
        %v4477 = vpop.f32.mrb[0].mxu0
        %4478 = vdwg.mxu0
        %v4479 = vadd.f32 %v4296, %v4473
        %v4480 = vadd.f32 %v4297, %v4476
        %s4481 = scalar_lea.vmem [#allocation14], 64
        %v4482 = vld [vmem:[%s4481] sm:$0xf]
        %v4483 = vld [vmem:[%s4481 + $0x4] sm:$0xf]
        %v4484 = vld [vmem:[%s4481 + $0x8] sm:$0xf]
        %v4485 = vld [vmem:[%s4481 + $0xc] sm:$0xf]
        %v4490 = vunpack.c.l.b16 %v4482
        %v4491 = vunpack.c.l.b16 %v4483
        %v4492 = vunpack.c.l.b16 %v4484
        %v4493 = vunpack.c.l.b16 %v4485
        %v4494 = vpack.c.b16 %v4491, %v4490
        %v4495 = vpack.c.b16 %v4493, %v4492
        %v4499 = vsel %vm1148, %v3444, 0
        %4501 = vmatprep.subr.bf16.mxu0 0
        %4502 = vmatpush1.bf16.msra.mxu0 %v4494
        %4503 = vmatprep.subr.bf16.mxu0 0
        %4504 = vmatpush1.bf16.msra.mxu0 %v4495
        %4505 = vmatprep.subr.bf16.mxu0 0
        %4506 = vmatpush1.bf16.msra.mxu0 0
        %4507 = vmatprep.subr.bf16.mxu0 0
        %4508 = vmatpush1.bf16.msra.mxu0 0
        %4509 = vmatprep.subr.bf16.mxu0 0
        %4510 = vmatpush1.bf16.msra.mxu0 0
        %4511 = vmatprep.subr.bf16.mxu0 0
        %4512 = vmatpush1.bf16.msra.mxu0 0
        %4513 = vmatprep.subr.bf16.mxu0 0
        %4514 = vmatpush1.bf16.msra.mxu0 0
        %4515 = vmatprep.subr.bf16.mxu0 0
        %4516 = vmatpush1.bf16.msra.mxu0 0
        %4517 = vmatprep.subr.bf16.mxu0 0
        %4518 = vmatpush1.bf16.msra.mxu0 0
        %4519 = vmatprep.subr.bf16.mxu0 0
        %4520 = vmatpush1.bf16.msra.mxu0 0
        %4521 = vmatprep.subr.bf16.mxu0 0
        %4522 = vmatpush1.bf16.msra.mxu0 0
        %4523 = vmatprep.subr.bf16.mxu0 0
        %4524 = vmatpush1.bf16.msra.mxu0 0
        %4525 = vmatprep.subr.bf16.mxu0 0
        %4526 = vmatpush1.bf16.msra.mxu0 0
        %4527 = vmatprep.subr.bf16.mxu0 0
        %4528 = vmatpush1.bf16.msra.mxu0 0
        %4529 = vmatprep.subr.bf16.mxu0 0
        %4530 = vmatpush1.bf16.msra.mxu0 0
        %4531 = vmatprep.subr.bf16.mxu0 0
        %4532 = vmatpush1.bf16.msra.mxu0 0
        %4533 = vmatprep.mubr.bf16.mxu0 0
        %4534 = vmatmul.mubr.bf16.gmra.mrb[0].mxu0 %v4499
        %v4535 = vpop.f32.mrb[0].mxu0
        %v4536 = vadd.f32 0.0, %v4535
        %v4537 = vpop.f32.mrb[0].mxu0
        %v4538 = vpop.f32.mrb[0].mxu0
        %v4539 = vadd.f32 0.0, %v4538
        %v4540 = vpop.f32.mrb[0].mxu0
        %4541 = vdwg.mxu0
        %v4542 = vadd.f32 %v4479, %v4536
        %v4543 = vadd.f32 %v4480, %v4539
        %s4544 = scalar_lea.vmem [#allocation16], 64
        %v4545 = vld [vmem:[%s4544] sm:$0xf]
        %v4546 = vld [vmem:[%s4544 + $0x4] sm:$0xf]
        %v4547 = vld [vmem:[%s4544 + $0x8] sm:$0xf]
        %v4548 = vld [vmem:[%s4544 + $0xc] sm:$0xf]
        %v4553 = vunpack.c.l.b16 %v4545
        %v4554 = vunpack.c.l.b16 %v4546
        %v4555 = vunpack.c.l.b16 %v4547
        %v4556 = vunpack.c.l.b16 %v4548
        %v4557 = vpack.c.b16 %v4554, %v4553
        %v4558 = vpack.c.b16 %v4556, %v4555
        %4561 = vmatprep.subr.bf16.mxu0 0
        %4562 = vmatpush1.bf16.msra.mxu0 %v4557
        %4563 = vmatprep.subr.bf16.mxu0 0
        %4564 = vmatpush1.bf16.msra.mxu0 %v4558
        %4565 = vmatprep.subr.bf16.mxu0 0
        %4566 = vmatpush1.bf16.msra.mxu0 0
        %4567 = vmatprep.subr.bf16.mxu0 0
        %4568 = vmatpush1.bf16.msra.mxu0 0
        %4569 = vmatprep.subr.bf16.mxu0 0
        %4570 = vmatpush1.bf16.msra.mxu0 0
        %4571 = vmatprep.subr.bf16.mxu0 0
        %4572 = vmatpush1.bf16.msra.mxu0 0
        %4573 = vmatprep.subr.bf16.mxu0 0
        %4574 = vmatpush1.bf16.msra.mxu0 0
        %4575 = vmatprep.subr.bf16.mxu0 0
        %4576 = vmatpush1.bf16.msra.mxu0 0
        %4577 = vmatprep.subr.bf16.mxu0 0
        %4578 = vmatpush1.bf16.msra.mxu0 0
        %4579 = vmatprep.subr.bf16.mxu0 0
        %4580 = vmatpush1.bf16.msra.mxu0 0
        %4581 = vmatprep.subr.bf16.mxu0 0
        %4582 = vmatpush1.bf16.msra.mxu0 0
        %4583 = vmatprep.subr.bf16.mxu0 0
        %4584 = vmatpush1.bf16.msra.mxu0 0
        %4585 = vmatprep.subr.bf16.mxu0 0
        %4586 = vmatpush1.bf16.msra.mxu0 0
        %4587 = vmatprep.subr.bf16.mxu0 0
        %4588 = vmatpush1.bf16.msra.mxu0 0
        %4589 = vmatprep.subr.bf16.mxu0 0
        %4590 = vmatpush1.bf16.msra.mxu0 0
        %4591 = vmatprep.subr.bf16.mxu0 0
        %4592 = vmatpush1.bf16.msra.mxu0 0
        %4593 = vmatprep.mubr.bf16.mxu0 0
        %4594 = vmatmul.mubr.bf16.gmra.mrb[0].mxu0 %v4436
        %v4595 = vpop.f32.mrb[0].mxu0
        %v4596 = vadd.f32 0.0, %v4595
        %v4597 = vpop.f32.mrb[0].mxu0
        %v4598 = vpop.f32.mrb[0].mxu0
        %v4599 = vadd.f32 0.0, %v4598
        %v4600 = vpop.f32.mrb[0].mxu0
        %4601 = vdwg.mxu0
        %v4602 = vadd.f32 %v4416, %v4596
        %v4603 = vadd.f32 %v4417, %v4599
        %s4604 = scalar_lea.vmem [#allocation17], 64
        %v4605 = vld [vmem:[%s4604] sm:$0xf]
        %v4606 = vld [vmem:[%s4604 + $0x4] sm:$0xf]
        %v4607 = vld [vmem:[%s4604 + $0x8] sm:$0xf]
        %v4608 = vld [vmem:[%s4604 + $0xc] sm:$0xf]
        %v4613 = vunpack.c.l.b16 %v4605
        %v4614 = vunpack.c.l.b16 %v4606
        %v4615 = vunpack.c.l.b16 %v4607
        %v4616 = vunpack.c.l.b16 %v4608
        %v4617 = vpack.c.b16 %v4614, %v4613
        %v4618 = vpack.c.b16 %v4616, %v4615
        %4621 = vmatprep.subr.bf16.mxu0 0
        %4622 = vmatpush1.bf16.msra.mxu0 %v4617
        %4623 = vmatprep.subr.bf16.mxu0 0
        %4624 = vmatpush1.bf16.msra.mxu0 %v4618
        %4625 = vmatprep.subr.bf16.mxu0 0
        %4626 = vmatpush1.bf16.msra.mxu0 0
        %4627 = vmatprep.subr.bf16.mxu0 0
        %4628 = vmatpush1.bf16.msra.mxu0 0
        %4629 = vmatprep.subr.bf16.mxu0 0
        %4630 = vmatpush1.bf16.msra.mxu0 0
        %4631 = vmatprep.subr.bf16.mxu0 0
        %4632 = vmatpush1.bf16.msra.mxu0 0
        %4633 = vmatprep.subr.bf16.mxu0 0
        %4634 = vmatpush1.bf16.msra.mxu0 0
        %4635 = vmatprep.subr.bf16.mxu0 0
        %4636 = vmatpush1.bf16.msra.mxu0 0
        %4637 = vmatprep.subr.bf16.mxu0 0
        %4638 = vmatpush1.bf16.msra.mxu0 0
        %4639 = vmatprep.subr.bf16.mxu0 0
        %4640 = vmatpush1.bf16.msra.mxu0 0
        %4641 = vmatprep.subr.bf16.mxu0 0
        %4642 = vmatpush1.bf16.msra.mxu0 0
        %4643 = vmatprep.subr.bf16.mxu0 0
        %4644 = vmatpush1.bf16.msra.mxu0 0
        %4645 = vmatprep.subr.bf16.mxu0 0
        %4646 = vmatpush1.bf16.msra.mxu0 0
        %4647 = vmatprep.subr.bf16.mxu0 0
        %4648 = vmatpush1.bf16.msra.mxu0 0
        %4649 = vmatprep.subr.bf16.mxu0 0
        %4650 = vmatpush1.bf16.msra.mxu0 0
        %4651 = vmatprep.subr.bf16.mxu0 0
        %4652 = vmatpush1.bf16.msra.mxu0 0
        %4653 = vmatprep.mubr.bf16.mxu0 0
        %4654 = vmatmul.mubr.bf16.gmra.mrb[0].mxu0 %v4499
        %v4655 = vpop.f32.mrb[0].mxu0
        %v4656 = vadd.f32 0.0, %v4655
        %v4657 = vpop.f32.mrb[0].mxu0
        %v4658 = vpop.f32.mrb[0].mxu0
        %v4659 = vadd.f32 0.0, %v4658
        %v4660 = vpop.f32.mrb[0].mxu0
        %4661 = vdwg.mxu0
        %v4662 = vadd.f32 %v4602, %v4656
        %v4663 = vadd.f32 %v4603, %v4659
        %s4664 = scalar_lea.vmem [#allocation13], 80
        %v4665 = vld [vmem:[%s4664] sm:$0xf]
        %v4666 = vld [vmem:[%s4664 + $0x4] sm:$0xf]
        %v4667 = vld [vmem:[%s4664 + $0x8] sm:$0xf]
        %v4668 = vld [vmem:[%s4664 + $0xc] sm:$0xf]
        %v4673 = vunpack.c.l.b16 %v4665
        %v4674 = vunpack.c.l.b16 %v4666
        %v4675 = vunpack.c.l.b16 %v4667
        %v4676 = vunpack.c.l.b16 %v4668
        %v4677 = vpack.c.b16 %v4674, %v4673
        %v4678 = vpack.c.b16 %v4676, %v4675
        %v4682 = vsel %vm1148, %v3358, 0
        %4684 = vmatprep.subr.bf16.mxu0 0
        %4685 = vmatpush1.bf16.msra.mxu0 %v4677
        %4686 = vmatprep.subr.bf16.mxu0 0
        %4687 = vmatpush1.bf16.msra.mxu0 %v4678
        %4688 = vmatprep.subr.bf16.mxu0 0
        %4689 = vmatpush1.bf16.msra.mxu0 0
        %4690 = vmatprep.subr.bf16.mxu0 0
        %4691 = vmatpush1.bf16.msra.mxu0 0
        %4692 = vmatprep.subr.bf16.mxu0 0
        %4693 = vmatpush1.bf16.msra.mxu0 0
        %4694 = vmatprep.subr.bf16.mxu0 0
        %4695 = vmatpush1.bf16.msra.mxu0 0
        %4696 = vmatprep.subr.bf16.mxu0 0
        %4697 = vmatpush1.bf16.msra.mxu0 0
        %4698 = vmatprep.subr.bf16.mxu0 0
        %4699 = vmatpush1.bf16.msra.mxu0 0
        %4700 = vmatprep.subr.bf16.mxu0 0
        %4701 = vmatpush1.bf16.msra.mxu0 0
        %4702 = vmatprep.subr.bf16.mxu0 0
        %4703 = vmatpush1.bf16.msra.mxu0 0
        %4704 = vmatprep.subr.bf16.mxu0 0
        %4705 = vmatpush1.bf16.msra.mxu0 0
        %4706 = vmatprep.subr.bf16.mxu0 0
        %4707 = vmatpush1.bf16.msra.mxu0 0
        %4708 = vmatprep.subr.bf16.mxu0 0
        %4709 = vmatpush1.bf16.msra.mxu0 0
        %4710 = vmatprep.subr.bf16.mxu0 0
        %4711 = vmatpush1.bf16.msra.mxu0 0
        %4712 = vmatprep.subr.bf16.mxu0 0
        %4713 = vmatpush1.bf16.msra.mxu0 0
        %4714 = vmatprep.subr.bf16.mxu0 0
        %4715 = vmatpush1.bf16.msra.mxu0 0
        %4716 = vmatprep.mubr.bf16.mxu0 0
        %4717 = vmatmul.mubr.bf16.gmra.mrb[0].mxu0 %v4682
        %v4718 = vpop.f32.mrb[0].mxu0
        %v4719 = vadd.f32 0.0, %v4718
        %v4720 = vpop.f32.mrb[0].mxu0
        %v4721 = vpop.f32.mrb[0].mxu0
        %v4722 = vadd.f32 0.0, %v4721
        %v4723 = vpop.f32.mrb[0].mxu0
        %4724 = vdwg.mxu0
        %v4725 = vadd.f32 %v4542, %v4719
        %v4726 = vadd.f32 %v4543, %v4722
        %s4727 = scalar_lea.vmem [#allocation14], 80
        %v4728 = vld [vmem:[%s4727] sm:$0xf]
        %v4729 = vld [vmem:[%s4727 + $0x4] sm:$0xf]
        %v4730 = vld [vmem:[%s4727 + $0x8] sm:$0xf]
        %v4731 = vld [vmem:[%s4727 + $0xc] sm:$0xf]
        %v4736 = vunpack.c.l.b16 %v4728
        %v4737 = vunpack.c.l.b16 %v4729
        %v4738 = vunpack.c.l.b16 %v4730
        %v4739 = vunpack.c.l.b16 %v4731
        %v4740 = vpack.c.b16 %v4737, %v4736
        %v4741 = vpack.c.b16 %v4739, %v4738
        %v4745 = vsel %vm1148, %v3445, 0
        %4747 = vmatprep.subr.bf16.mxu0 0
        %4748 = vmatpush1.bf16.msra.mxu0 %v4740
        %4749 = vmatprep.subr.bf16.mxu0 0
        %4750 = vmatpush1.bf16.msra.mxu0 %v4741
        %4751 = vmatprep.subr.bf16.mxu0 0
        %4752 = vmatpush1.bf16.msra.mxu0 0
        %4753 = vmatprep.subr.bf16.mxu0 0
        %4754 = vmatpush1.bf16.msra.mxu0 0
        %4755 = vmatprep.subr.bf16.mxu0 0
        %4756 = vmatpush1.bf16.msra.mxu0 0
        %4757 = vmatprep.subr.bf16.mxu0 0
        %4758 = vmatpush1.bf16.msra.mxu0 0
        %4759 = vmatprep.subr.bf16.mxu0 0
        %4760 = vmatpush1.bf16.msra.mxu0 0
        %4761 = vmatprep.subr.bf16.mxu0 0
        %4762 = vmatpush1.bf16.msra.mxu0 0
        %4763 = vmatprep.subr.bf16.mxu0 0
        %4764 = vmatpush1.bf16.msra.mxu0 0
        %4765 = vmatprep.subr.bf16.mxu0 0
        %4766 = vmatpush1.bf16.msra.mxu0 0
        %4767 = vmatprep.subr.bf16.mxu0 0
        %4768 = vmatpush1.bf16.msra.mxu0 0
        %4769 = vmatprep.subr.bf16.mxu0 0
        %4770 = vmatpush1.bf16.msra.mxu0 0
        %4771 = vmatprep.subr.bf16.mxu0 0
        %4772 = vmatpush1.bf16.msra.mxu0 0
        %4773 = vmatprep.subr.bf16.mxu0 0
        %4774 = vmatpush1.bf16.msra.mxu0 0
        %4775 = vmatprep.subr.bf16.mxu0 0
        %4776 = vmatpush1.bf16.msra.mxu0 0
        %4777 = vmatprep.subr.bf16.mxu0 0
        %4778 = vmatpush1.bf16.msra.mxu0 0
        %4779 = vmatprep.mubr.bf16.mxu0 0
        %4780 = vmatmul.mubr.bf16.gmra.mrb[0].mxu0 %v4745
        %v4781 = vpop.f32.mrb[0].mxu0
        %v4782 = vadd.f32 0.0, %v4781
        %v4783 = vpop.f32.mrb[0].mxu0
        %v4784 = vpop.f32.mrb[0].mxu0
        %v4785 = vadd.f32 0.0, %v4784
        %v4786 = vpop.f32.mrb[0].mxu0
        %4787 = vdwg.mxu0
        %v4788 = vadd.f32 %v4725, %v4782
        %v4789 = vadd.f32 %v4726, %v4785
        %s4790 = scalar_lea.vmem [#allocation16], 80
        %v4791 = vld [vmem:[%s4790] sm:$0xf]
        %v4792 = vld [vmem:[%s4790 + $0x4] sm:$0xf]
        %v4793 = vld [vmem:[%s4790 + $0x8] sm:$0xf]
        %v4794 = vld [vmem:[%s4790 + $0xc] sm:$0xf]
        %v4799 = vunpack.c.l.b16 %v4791
        %v4800 = vunpack.c.l.b16 %v4792
        %v4801 = vunpack.c.l.b16 %v4793
        %v4802 = vunpack.c.l.b16 %v4794
        %v4803 = vpack.c.b16 %v4800, %v4799
        %v4804 = vpack.c.b16 %v4802, %v4801
        %4807 = vmatprep.subr.bf16.mxu0 0
        %4808 = vmatpush1.bf16.msra.mxu0 %v4803
        %4809 = vmatprep.subr.bf16.mxu0 0
        %4810 = vmatpush1.bf16.msra.mxu0 %v4804
        %4811 = vmatprep.subr.bf16.mxu0 0
        %4812 = vmatpush1.bf16.msra.mxu0 0
        %4813 = vmatprep.subr.bf16.mxu0 0
        %4814 = vmatpush1.bf16.msra.mxu0 0
        %4815 = vmatprep.subr.bf16.mxu0 0
        %4816 = vmatpush1.bf16.msra.mxu0 0
        %4817 = vmatprep.subr.bf16.mxu0 0
        %4818 = vmatpush1.bf16.msra.mxu0 0
        %4819 = vmatprep.subr.bf16.mxu0 0
        %4820 = vmatpush1.bf16.msra.mxu0 0
        %4821 = vmatprep.subr.bf16.mxu0 0
        %4822 = vmatpush1.bf16.msra.mxu0 0
        %4823 = vmatprep.subr.bf16.mxu0 0
        %4824 = vmatpush1.bf16.msra.mxu0 0
        %4825 = vmatprep.subr.bf16.mxu0 0
        %4826 = vmatpush1.bf16.msra.mxu0 0
        %4827 = vmatprep.subr.bf16.mxu0 0
        %4828 = vmatpush1.bf16.msra.mxu0 0
        %4829 = vmatprep.subr.bf16.mxu0 0
        %4830 = vmatpush1.bf16.msra.mxu0 0
        %4831 = vmatprep.subr.bf16.mxu0 0
        %4832 = vmatpush1.bf16.msra.mxu0 0
        %4833 = vmatprep.subr.bf16.mxu0 0
        %4834 = vmatpush1.bf16.msra.mxu0 0
        %4835 = vmatprep.subr.bf16.mxu0 0
        %4836 = vmatpush1.bf16.msra.mxu0 0
        %4837 = vmatprep.subr.bf16.mxu0 0
        %4838 = vmatpush1.bf16.msra.mxu0 0
        %4839 = vmatprep.mubr.bf16.mxu0 0
        %4840 = vmatmul.mubr.bf16.gmra.mrb[0].mxu0 %v4682
        %v4841 = vpop.f32.mrb[0].mxu0
        %v4842 = vadd.f32 0.0, %v4841
        %v4843 = vpop.f32.mrb[0].mxu0
        %v4844 = vpop.f32.mrb[0].mxu0
        %v4845 = vadd.f32 0.0, %v4844
        %v4846 = vpop.f32.mrb[0].mxu0
        %4847 = vdwg.mxu0
        %v4848 = vadd.f32 %v4662, %v4842
        %v4849 = vadd.f32 %v4663, %v4845
        %s4850 = scalar_lea.vmem [#allocation17], 80
        %v4851 = vld [vmem:[%s4850] sm:$0xf]
        %v4852 = vld [vmem:[%s4850 + $0x4] sm:$0xf]
        %v4853 = vld [vmem:[%s4850 + $0x8] sm:$0xf]
        %v4854 = vld [vmem:[%s4850 + $0xc] sm:$0xf]
        %v4859 = vunpack.c.l.b16 %v4851
        %v4860 = vunpack.c.l.b16 %v4852
        %v4861 = vunpack.c.l.b16 %v4853
        %v4862 = vunpack.c.l.b16 %v4854
        %v4863 = vpack.c.b16 %v4860, %v4859
        %v4864 = vpack.c.b16 %v4862, %v4861
        %4867 = vmatprep.subr.bf16.mxu0 0
        %4868 = vmatpush1.bf16.msra.mxu0 %v4863
        %4869 = vmatprep.subr.bf16.mxu0 0
        %4870 = vmatpush1.bf16.msra.mxu0 %v4864
        %4871 = vmatprep.subr.bf16.mxu0 0
        %4872 = vmatpush1.bf16.msra.mxu0 0
        %4873 = vmatprep.subr.bf16.mxu0 0
        %4874 = vmatpush1.bf16.msra.mxu0 0
        %4875 = vmatprep.subr.bf16.mxu0 0
        %4876 = vmatpush1.bf16.msra.mxu0 0
        %4877 = vmatprep.subr.bf16.mxu0 0
        %4878 = vmatpush1.bf16.msra.mxu0 0
        %4879 = vmatprep.subr.bf16.mxu0 0
        %4880 = vmatpush1.bf16.msra.mxu0 0
        %4881 = vmatprep.subr.bf16.mxu0 0
        %4882 = vmatpush1.bf16.msra.mxu0 0
        %4883 = vmatprep.subr.bf16.mxu0 0
        %4884 = vmatpush1.bf16.msra.mxu0 0
        %4885 = vmatprep.subr.bf16.mxu0 0
        %4886 = vmatpush1.bf16.msra.mxu0 0
        %4887 = vmatprep.subr.bf16.mxu0 0
        %4888 = vmatpush1.bf16.msra.mxu0 0
        %4889 = vmatprep.subr.bf16.mxu0 0
        %4890 = vmatpush1.bf16.msra.mxu0 0
        %4891 = vmatprep.subr.bf16.mxu0 0
        %4892 = vmatpush1.bf16.msra.mxu0 0
        %4893 = vmatprep.subr.bf16.mxu0 0
        %4894 = vmatpush1.bf16.msra.mxu0 0
        %4895 = vmatprep.subr.bf16.mxu0 0
        %4896 = vmatpush1.bf16.msra.mxu0 0
        %4897 = vmatprep.subr.bf16.mxu0 0
        %4898 = vmatpush1.bf16.msra.mxu0 0
        %4899 = vmatprep.mubr.bf16.mxu0 0
        %4900 = vmatmul.mubr.bf16.gmra.mrb[0].mxu0 %v4745
        %v4901 = vpop.f32.mrb[0].mxu0
        %v4902 = vadd.f32 0.0, %v4901
        %v4903 = vpop.f32.mrb[0].mxu0
        %v4904 = vpop.f32.mrb[0].mxu0
        %v4905 = vadd.f32 0.0, %v4904
        %v4906 = vpop.f32.mrb[0].mxu0
        %4907 = vdwg.mxu0
        %v4908 = vadd.f32 %v4848, %v4902
        %v4909 = vadd.f32 %v4849, %v4905
        %v4910 = vld [vmem:[%s18] sm:$0x1]
        %v4912 = vlaneseq
        %v4913 = vshrl.u32 %v4912, 7
        %v4914 = vsub.s32 0, %v4913
        %v4915 = vrot.slane %v4910, %v4914
        %v4917 = vadd.f32 %v4788, %v4915
        %v4918 = vadd.f32 %v4789, %v4915
        %v4919 = vxor.u32 %v4917, 2147483648
        %v4920 = vxor.u32 %v4918, 2147483648
        %v4921 = vmul.f32 %v4919, 1.442695
        %v4922 = vpow.pop %v4921
        %v4923 = vmul.f32 %v4920, 1.442695
        %v4924 = vpow.pop %v4923
        %v4925 = vadd.f32 %v4922, 1.0
        %v4926 = vadd.f32 %v4924, 1.0
        %v4927 = vrcp.pop %v4925
        %v4928 = vmul.f32 1.0, %v4927
        %v4929 = vrcp.pop %v4926
        %v4930 = vmul.f32 1.0, %v4929
        %v4931 = vld [vmem:[%s19] sm:$0x1]
        %v4933 = vlaneseq
        %v4934 = vshrl.u32 %v4933, 7
        %v4935 = vsub.s32 0, %v4934
        %v4936 = vrot.slane %v4931, %v4935
        %v4938 = vadd.f32 %v4908, %v4936
        %v4939 = vadd.f32 %v4909, %v4936
        %v4940 = vxor.u32 %v4938, 2147483648
        %v4941 = vxor.u32 %v4939, 2147483648
        %v4942 = vmul.f32 %v4940, 1.442695
        %v4943 = vpow.pop %v4942
        %v4944 = vmul.f32 %v4941, 1.442695
        %v4945 = vpow.pop %v4944
        %v4946 = vadd.f32 %v4943, 1.0
        %v4947 = vadd.f32 %v4945, 1.0
        %v4948 = vrcp.pop %v4946
        %v4949 = vmul.f32 1.0, %v4948
        %v4950 = vrcp.pop %v4947
        %v4951 = vmul.f32 1.0, %v4950
        %v4952 = vmul.f32 %v4928, %v3269
        %v4953 = vmul.f32 %v4930, %v3270
        %v4954 = vpack.c.bf16 %v4953, %v4952
        %4955 = vmatprep.subr.bf16.mxu0 0
        %4956 = vmatpush1.bf16.msra.mxu0 %v4954
        %4957 = vmatprep.subr.bf16.mxu0 0
        %4958 = vmatpush1.bf16.msra.mxu0 0
        %4959 = vmatprep.subr.bf16.mxu0 0
        %4960 = vmatpush1.bf16.msra.mxu0 0
        %4961 = vmatprep.subr.bf16.mxu0 0
        %4962 = vmatpush1.bf16.msra.mxu0 0
        %4963 = vmatprep.subr.bf16.mxu0 0
        %4964 = vmatpush1.bf16.msra.mxu0 0
        %4965 = vmatprep.subr.bf16.mxu0 0
        %4966 = vmatpush1.bf16.msra.mxu0 0
        %4967 = vmatprep.subr.bf16.mxu0 0
        %4968 = vmatpush1.bf16.msra.mxu0 0
        %4969 = vmatprep.subr.bf16.mxu0 0
        %4970 = vmatpush1.bf16.msra.mxu0 0
        %4971 = vmatprep.subr.bf16.mxu0 0
        %4972 = vmatpush1.bf16.msra.mxu0 0
        %4973 = vmatprep.subr.bf16.mxu0 0
        %4974 = vmatpush1.bf16.msra.mxu0 0
        %4975 = vmatprep.subr.bf16.mxu0 0
        %4976 = vmatpush1.bf16.msra.mxu0 0
        %4977 = vmatprep.subr.bf16.mxu0 0
        %4978 = vmatpush1.bf16.msra.mxu0 0
        %4979 = vmatprep.subr.bf16.mxu0 0
        %4980 = vmatpush1.bf16.msra.mxu0 0
        %4981 = vmatprep.subr.bf16.mxu0 0
        %4982 = vmatpush1.bf16.msra.mxu0 0
        %4983 = vmatprep.subr.bf16.mxu0 0
        %4984 = vmatpush1.bf16.msra.mxu0 0
        %4985 = vmatprep.subr.bf16.mxu0 0
        %4986 = vmatpush1.bf16.msra.mxu0 0
        %4987 = vmatprep.mubr.bf16.mxu0 0
        %4988 = vmatmul.mubr.bf16.gmra.mrb[0].mxu0 %v940
        %v4989 = vpop.f32.mrb[0].mxu0
        %v4990 = vadd.f32 0.0, %v4989
        %v4991 = vpop.f32.mrb[0].mxu0
        %v4992 = vpop.f32.mrb[0].mxu0
        %v4993 = vadd.f32 0.0, %v4992
        %v4994 = vpop.f32.mrb[0].mxu0
        %4995 = vmatprep.mubr.bf16.mxu0 0
        %4996 = vmatmul.mubr.bf16.gmra.mrb[0].mxu0 %v943
        %v4997 = vpop.f32.mrb[0].mxu0
        %v4998 = vadd.f32 0.0, %v4997
        %v4999 = vpop.f32.mrb[0].mxu0
        %v5000 = vpop.f32.mrb[0].mxu0
        %v5001 = vadd.f32 0.0, %v5000
        %v5002 = vpop.f32.mrb[0].mxu0
        %5003 = vmatprep.mubr.bf16.mxu0 0
        %5004 = vmatmul.mubr.bf16.gmra.mrb[0].mxu0 %v946
        %v5005 = vpop.f32.mrb[0].mxu0
        %v5006 = vadd.f32 0.0, %v5005
        %v5007 = vpop.f32.mrb[0].mxu0
        %v5008 = vpop.f32.mrb[0].mxu0
        %v5009 = vadd.f32 0.0, %v5008
        %v5010 = vpop.f32.mrb[0].mxu0
        %5011 = vmatprep.mubr.bf16.mxu0 0
        %5012 = vmatmul.mubr.bf16.gmra.mrb[0].mxu0 %v949
        %v5013 = vpop.f32.mrb[0].mxu0
        %v5014 = vadd.f32 0.0, %v5013
        %v5015 = vpop.f32.mrb[0].mxu0
        %v5016 = vpop.f32.mrb[0].mxu0
        %v5017 = vadd.f32 0.0, %v5016
        %v5018 = vpop.f32.mrb[0].mxu0
        %5019 = vmatprep.mubr.bf16.mxu0 0
        %5020 = vmatmul.mubr.bf16.gmra.mrb[0].mxu0 %v952
        %v5021 = vpop.f32.mrb[0].mxu0
        %v5022 = vadd.f32 0.0, %v5021
        %v5023 = vpop.f32.mrb[0].mxu0
        %v5024 = vpop.f32.mrb[0].mxu0
        %v5025 = vadd.f32 0.0, %v5024
        %v5026 = vpop.f32.mrb[0].mxu0
        %5027 = vmatprep.mubr.bf16.mxu0 0
        %5028 = vmatmul.mubr.bf16.gmra.mrb[0].mxu0 %v955
        %v5029 = vpop.f32.mrb[0].mxu0
        %v5030 = vadd.f32 0.0, %v5029
        %v5031 = vpop.f32.mrb[0].mxu0
        %v5032 = vpop.f32.mrb[0].mxu0
        %v5033 = vadd.f32 0.0, %v5032
        %v5034 = vpop.f32.mrb[0].mxu0
        %5035 = vdwg.mxu0
        %v5036 = vpack.c.bf16 %v4993, %v4990
        %v5037 = vpack.c.bf16 %v5001, %v4998
        %v5038 = vpack.c.bf16 %v5009, %v5006
        %v5039 = vpack.c.bf16 %v5017, %v5014
        %v5040 = vpack.c.bf16 %v5025, %v5022
        %v5041 = vpack.c.bf16 %v5033, %v5030
        %v5042 = vld [vmem:[#allocation19] sm:$0xf]
        %v5043 = vld [vmem:[#allocation19 + $0x4] sm:$0xf]
        %v5044 = vld [vmem:[#allocation19 + $0x8] sm:$0xf]
        %v5045 = vld [vmem:[#allocation19 + $0xc] sm:$0xf]
        %v5046 = vld [vmem:[#allocation20] sm:$0xf]
        %v5047 = vld [vmem:[#allocation20 + $0x4] sm:$0xf]
        %v5048 = vld [vmem:[#allocation20 + $0x8] sm:$0xf]
        %v5049 = vld [vmem:[#allocation20 + $0xc] sm:$0xf]
        %v5054 = vunpack.c.l.b16 %v5046
        %v5055 = vunpack.c.l.b16 %v5047
        %v5056 = vunpack.c.l.b16 %v5048
        %v5057 = vunpack.c.l.b16 %v5049
        %v5058 = vpack.c.b16 %v5055, %v5054
        %v5059 = vpack.c.b16 %v5057, %v5056
        %v5063 = vsel %vm1148, %v5036, 0
        %5065 = vmatprep.subr.bf16.mxu0 0
        %5066 = vmatpush1.bf16.msra.mxu0 %v5058
        %5067 = vmatprep.subr.bf16.mxu0 0
        %5068 = vmatpush1.bf16.msra.mxu0 %v5059
        %5069 = vmatprep.subr.bf16.mxu0 0
        %5070 = vmatpush1.bf16.msra.mxu0 0
        %5071 = vmatprep.subr.bf16.mxu0 0
        %5072 = vmatpush1.bf16.msra.mxu0 0
        %5073 = vmatprep.subr.bf16.mxu0 0
        %5074 = vmatpush1.bf16.msra.mxu0 0
        %5075 = vmatprep.subr.bf16.mxu0 0
        %5076 = vmatpush1.bf16.msra.mxu0 0
        %5077 = vmatprep.subr.bf16.mxu0 0
        %5078 = vmatpush1.bf16.msra.mxu0 0
        %5079 = vmatprep.subr.bf16.mxu0 0
        %5080 = vmatpush1.bf16.msra.mxu0 0
        %5081 = vmatprep.subr.bf16.mxu0 0
        %5082 = vmatpush1.bf16.msra.mxu0 0
        %5083 = vmatprep.subr.bf16.mxu0 0
        %5084 = vmatpush1.bf16.msra.mxu0 0
        %5085 = vmatprep.subr.bf16.mxu0 0
        %5086 = vmatpush1.bf16.msra.mxu0 0
        %5087 = vmatprep.subr.bf16.mxu0 0
        %5088 = vmatpush1.bf16.msra.mxu0 0
        %5089 = vmatprep.subr.bf16.mxu0 0
        %5090 = vmatpush1.bf16.msra.mxu0 0
        %5091 = vmatprep.subr.bf16.mxu0 0
        %5092 = vmatpush1.bf16.msra.mxu0 0
        %5093 = vmatprep.subr.bf16.mxu0 0
        %5094 = vmatpush1.bf16.msra.mxu0 0
        %5095 = vmatprep.subr.bf16.mxu0 0
        %5096 = vmatpush1.bf16.msra.mxu0 0
        %5097 = vmatprep.mubr.bf16.mxu0 0
        %5098 = vmatmul.mubr.bf16.gmra.mrb[0].mxu0 %v5063
        %v5099 = vpop.f32.mrb[0].mxu0
        %v5100 = vadd.f32 0.0, %v5099
        %v5101 = vpop.f32.mrb[0].mxu0
        %v5102 = vpop.f32.mrb[0].mxu0
        %v5103 = vadd.f32 0.0, %v5102
        %v5104 = vpop.f32.mrb[0].mxu0
        %5105 = vdwg.mxu0
        %v5110 = vunpack.c.l.b16 %v5042
        %v5111 = vunpack.c.l.b16 %v5043
        %v5112 = vunpack.c.l.b16 %v5044
        %v5113 = vunpack.c.l.b16 %v5045
        %v5114 = vpack.c.b16 %v5111, %v5110
        %v5115 = vpack.c.b16 %v5113, %v5112
        %5118 = vmatprep.subr.bf16.mxu0 0
        %5119 = vmatpush1.bf16.msra.mxu0 %v5114
        %5120 = vmatprep.subr.bf16.mxu0 0
        %5121 = vmatpush1.bf16.msra.mxu0 %v5115
        %5122 = vmatprep.subr.bf16.mxu0 0
        %5123 = vmatpush1.bf16.msra.mxu0 0
        %5124 = vmatprep.subr.bf16.mxu0 0
        %5125 = vmatpush1.bf16.msra.mxu0 0
        %5126 = vmatprep.subr.bf16.mxu0 0
        %5127 = vmatpush1.bf16.msra.mxu0 0
        %5128 = vmatprep.subr.bf16.mxu0 0
        %5129 = vmatpush1.bf16.msra.mxu0 0
        %5130 = vmatprep.subr.bf16.mxu0 0
        %5131 = vmatpush1.bf16.msra.mxu0 0
        %5132 = vmatprep.subr.bf16.mxu0 0
        %5133 = vmatpush1.bf16.msra.mxu0 0
        %5134 = vmatprep.subr.bf16.mxu0 0
        %5135 = vmatpush1.bf16.msra.mxu0 0
        %5136 = vmatprep.subr.bf16.mxu0 0
        %5137 = vmatpush1.bf16.msra.mxu0 0
        %5138 = vmatprep.subr.bf16.mxu0 0
        %5139 = vmatpush1.bf16.msra.mxu0 0
        %5140 = vmatprep.subr.bf16.mxu0 0
        %5141 = vmatpush1.bf16.msra.mxu0 0
        %5142 = vmatprep.subr.bf16.mxu0 0
        %5143 = vmatpush1.bf16.msra.mxu0 0
        %5144 = vmatprep.subr.bf16.mxu0 0
        %5145 = vmatpush1.bf16.msra.mxu0 0
        %5146 = vmatprep.subr.bf16.mxu0 0
        %5147 = vmatpush1.bf16.msra.mxu0 0
        %5148 = vmatprep.subr.bf16.mxu0 0
        %5149 = vmatpush1.bf16.msra.mxu0 0
        %5150 = vmatprep.mubr.bf16.mxu0 0
        %5151 = vmatmul.mubr.bf16.gmra.mrb[0].mxu0 %v3523
        %v5152 = vpop.f32.mrb[0].mxu0
        %v5153 = vadd.f32 %v5100, %v5152
        %v5154 = vpop.f32.mrb[0].mxu0
        %v5155 = vpop.f32.mrb[0].mxu0
        %v5156 = vadd.f32 %v5103, %v5155
        %v5157 = vpop.f32.mrb[0].mxu0
        %5158 = vdwg.mxu0
        %s5159 = scalar_lea.vmem [#allocation19], 16
        %v5160 = vld [vmem:[%s5159] sm:$0xf]
        %v5161 = vld [vmem:[%s5159 + $0x4] sm:$0xf]
        %v5162 = vld [vmem:[%s5159 + $0x8] sm:$0xf]
        %v5163 = vld [vmem:[%s5159 + $0xc] sm:$0xf]
        %v5168 = vunpack.c.l.b16 %v5160
        %v5169 = vunpack.c.l.b16 %v5161
        %v5170 = vunpack.c.l.b16 %v5162
        %v5171 = vunpack.c.l.b16 %v5163
        %v5172 = vpack.c.b16 %v5169, %v5168
        %v5173 = vpack.c.b16 %v5171, %v5170
        %5176 = vmatprep.subr.bf16.mxu0 0
        %5177 = vmatpush1.bf16.msra.mxu0 %v5172
        %5178 = vmatprep.subr.bf16.mxu0 0
        %5179 = vmatpush1.bf16.msra.mxu0 %v5173
        %5180 = vmatprep.subr.bf16.mxu0 0
        %5181 = vmatpush1.bf16.msra.mxu0 0
        %5182 = vmatprep.subr.bf16.mxu0 0
        %5183 = vmatpush1.bf16.msra.mxu0 0
        %5184 = vmatprep.subr.bf16.mxu0 0
        %5185 = vmatpush1.bf16.msra.mxu0 0
        %5186 = vmatprep.subr.bf16.mxu0 0
        %5187 = vmatpush1.bf16.msra.mxu0 0
        %5188 = vmatprep.subr.bf16.mxu0 0
        %5189 = vmatpush1.bf16.msra.mxu0 0
        %5190 = vmatprep.subr.bf16.mxu0 0
        %5191 = vmatpush1.bf16.msra.mxu0 0
        %5192 = vmatprep.subr.bf16.mxu0 0
        %5193 = vmatpush1.bf16.msra.mxu0 0
        %5194 = vmatprep.subr.bf16.mxu0 0
        %5195 = vmatpush1.bf16.msra.mxu0 0
        %5196 = vmatprep.subr.bf16.mxu0 0
        %5197 = vmatpush1.bf16.msra.mxu0 0
        %5198 = vmatprep.subr.bf16.mxu0 0
        %5199 = vmatpush1.bf16.msra.mxu0 0
        %5200 = vmatprep.subr.bf16.mxu0 0
        %5201 = vmatpush1.bf16.msra.mxu0 0
        %5202 = vmatprep.subr.bf16.mxu0 0
        %5203 = vmatpush1.bf16.msra.mxu0 0
        %5204 = vmatprep.subr.bf16.mxu0 0
        %5205 = vmatpush1.bf16.msra.mxu0 0
        %5206 = vmatprep.subr.bf16.mxu0 0
        %5207 = vmatpush1.bf16.msra.mxu0 0
        %5208 = vmatprep.mubr.bf16.mxu0 0
        %5209 = vmatmul.mubr.bf16.gmra.mrb[0].mxu0 %v3698
        %v5210 = vpop.f32.mrb[0].mxu0
        %v5211 = vadd.f32 0.0, %v5210
        %v5212 = vpop.f32.mrb[0].mxu0
        %v5213 = vpop.f32.mrb[0].mxu0
        %v5214 = vadd.f32 0.0, %v5213
        %v5215 = vpop.f32.mrb[0].mxu0
        %5216 = vdwg.mxu0
        %v5217 = vadd.f32 %v5153, %v5211
        %v5218 = vadd.f32 %v5156, %v5214
        %s5219 = scalar_lea.vmem [#allocation20], 16
        %v5220 = vld [vmem:[%s5219] sm:$0xf]
        %v5221 = vld [vmem:[%s5219 + $0x4] sm:$0xf]
        %v5222 = vld [vmem:[%s5219 + $0x8] sm:$0xf]
        %v5223 = vld [vmem:[%s5219 + $0xc] sm:$0xf]
        %v5228 = vunpack.c.l.b16 %v5220
        %v5229 = vunpack.c.l.b16 %v5221
        %v5230 = vunpack.c.l.b16 %v5222
        %v5231 = vunpack.c.l.b16 %v5223
        %v5232 = vpack.c.b16 %v5229, %v5228
        %v5233 = vpack.c.b16 %v5231, %v5230
        %v5237 = vsel %vm1148, %v5037, 0
        %5239 = vmatprep.subr.bf16.mxu0 0
        %5240 = vmatpush1.bf16.msra.mxu0 %v5232
        %5241 = vmatprep.subr.bf16.mxu0 0
        %5242 = vmatpush1.bf16.msra.mxu0 %v5233
        %5243 = vmatprep.subr.bf16.mxu0 0
        %5244 = vmatpush1.bf16.msra.mxu0 0
        %5245 = vmatprep.subr.bf16.mxu0 0
        %5246 = vmatpush1.bf16.msra.mxu0 0
        %5247 = vmatprep.subr.bf16.mxu0 0
        %5248 = vmatpush1.bf16.msra.mxu0 0
        %5249 = vmatprep.subr.bf16.mxu0 0
        %5250 = vmatpush1.bf16.msra.mxu0 0
        %5251 = vmatprep.subr.bf16.mxu0 0
        %5252 = vmatpush1.bf16.msra.mxu0 0
        %5253 = vmatprep.subr.bf16.mxu0 0
        %5254 = vmatpush1.bf16.msra.mxu0 0
        %5255 = vmatprep.subr.bf16.mxu0 0
        %5256 = vmatpush1.bf16.msra.mxu0 0
        %5257 = vmatprep.subr.bf16.mxu0 0
        %5258 = vmatpush1.bf16.msra.mxu0 0
        %5259 = vmatprep.subr.bf16.mxu0 0
        %5260 = vmatpush1.bf16.msra.mxu0 0
        %5261 = vmatprep.subr.bf16.mxu0 0
        %5262 = vmatpush1.bf16.msra.mxu0 0
        %5263 = vmatprep.subr.bf16.mxu0 0
        %5264 = vmatpush1.bf16.msra.mxu0 0
        %5265 = vmatprep.subr.bf16.mxu0 0
        %5266 = vmatpush1.bf16.msra.mxu0 0
        %5267 = vmatprep.subr.bf16.mxu0 0
        %5268 = vmatpush1.bf16.msra.mxu0 0
        %5269 = vmatprep.subr.bf16.mxu0 0
        %5270 = vmatpush1.bf16.msra.mxu0 0
        %5271 = vmatprep.mubr.bf16.mxu0 0
        %5272 = vmatmul.mubr.bf16.gmra.mrb[0].mxu0 %v5237
        %v5273 = vpop.f32.mrb[0].mxu0
        %v5274 = vadd.f32 0.0, %v5273
        %v5275 = vpop.f32.mrb[0].mxu0
        %v5276 = vpop.f32.mrb[0].mxu0
        %v5277 = vadd.f32 0.0, %v5276
        %v5278 = vpop.f32.mrb[0].mxu0
        %5279 = vdwg.mxu0
        %v5280 = vadd.f32 %v5217, %v5274
        %v5281 = vadd.f32 %v5218, %v5277
        %s5282 = scalar_lea.vmem [#allocation19], 32
        %v5283 = vld [vmem:[%s5282] sm:$0xf]
        %v5284 = vld [vmem:[%s5282 + $0x4] sm:$0xf]
        %v5285 = vld [vmem:[%s5282 + $0x8] sm:$0xf]
        %v5286 = vld [vmem:[%s5282 + $0xc] sm:$0xf]
        %v5291 = vunpack.c.l.b16 %v5283
        %v5292 = vunpack.c.l.b16 %v5284
        %v5293 = vunpack.c.l.b16 %v5285
        %v5294 = vunpack.c.l.b16 %v5286
        %v5295 = vpack.c.b16 %v5292, %v5291
        %v5296 = vpack.c.b16 %v5294, %v5293
        %5299 = vmatprep.subr.bf16.mxu0 0
        %5300 = vmatpush1.bf16.msra.mxu0 %v5295
        %5301 = vmatprep.subr.bf16.mxu0 0
        %5302 = vmatpush1.bf16.msra.mxu0 %v5296
        %5303 = vmatprep.subr.bf16.mxu0 0
        %5304 = vmatpush1.bf16.msra.mxu0 0
        %5305 = vmatprep.subr.bf16.mxu0 0
        %5306 = vmatpush1.bf16.msra.mxu0 0
        %5307 = vmatprep.subr.bf16.mxu0 0
        %5308 = vmatpush1.bf16.msra.mxu0 0
        %5309 = vmatprep.subr.bf16.mxu0 0
        %5310 = vmatpush1.bf16.msra.mxu0 0
        %5311 = vmatprep.subr.bf16.mxu0 0
        %5312 = vmatpush1.bf16.msra.mxu0 0
        %5313 = vmatprep.subr.bf16.mxu0 0
        %5314 = vmatpush1.bf16.msra.mxu0 0
        %5315 = vmatprep.subr.bf16.mxu0 0
        %5316 = vmatpush1.bf16.msra.mxu0 0
        %5317 = vmatprep.subr.bf16.mxu0 0
        %5318 = vmatpush1.bf16.msra.mxu0 0
        %5319 = vmatprep.subr.bf16.mxu0 0
        %5320 = vmatpush1.bf16.msra.mxu0 0
        %5321 = vmatprep.subr.bf16.mxu0 0
        %5322 = vmatpush1.bf16.msra.mxu0 0
        %5323 = vmatprep.subr.bf16.mxu0 0
        %5324 = vmatpush1.bf16.msra.mxu0 0
        %5325 = vmatprep.subr.bf16.mxu0 0
        %5326 = vmatpush1.bf16.msra.mxu0 0
        %5327 = vmatprep.subr.bf16.mxu0 0
        %5328 = vmatpush1.bf16.msra.mxu0 0
        %5329 = vmatprep.subr.bf16.mxu0 0
        %5330 = vmatpush1.bf16.msra.mxu0 0
        %5331 = vmatprep.mubr.bf16.mxu0 0
        %5332 = vmatmul.mubr.bf16.gmra.mrb[0].mxu0 %v3944
        %v5333 = vpop.f32.mrb[0].mxu0
        %v5334 = vadd.f32 0.0, %v5333
        %v5335 = vpop.f32.mrb[0].mxu0
        %v5336 = vpop.f32.mrb[0].mxu0
        %v5337 = vadd.f32 0.0, %v5336
        %v5338 = vpop.f32.mrb[0].mxu0
        %5339 = vdwg.mxu0
        %v5340 = vadd.f32 %v5280, %v5334
        %v5341 = vadd.f32 %v5281, %v5337
        %s5342 = scalar_lea.vmem [#allocation20], 32
        %v5343 = vld [vmem:[%s5342] sm:$0xf]
        %v5344 = vld [vmem:[%s5342 + $0x4] sm:$0xf]
        %v5345 = vld [vmem:[%s5342 + $0x8] sm:$0xf]
        %v5346 = vld [vmem:[%s5342 + $0xc] sm:$0xf]
        %v5351 = vunpack.c.l.b16 %v5343
        %v5352 = vunpack.c.l.b16 %v5344
        %v5353 = vunpack.c.l.b16 %v5345
        %v5354 = vunpack.c.l.b16 %v5346
        %v5355 = vpack.c.b16 %v5352, %v5351
        %v5356 = vpack.c.b16 %v5354, %v5353
        %v5360 = vsel %vm1148, %v5038, 0
        %5362 = vmatprep.subr.bf16.mxu0 0
        %5363 = vmatpush1.bf16.msra.mxu0 %v5355
        %5364 = vmatprep.subr.bf16.mxu0 0
        %5365 = vmatpush1.bf16.msra.mxu0 %v5356
        %5366 = vmatprep.subr.bf16.mxu0 0
        %5367 = vmatpush1.bf16.msra.mxu0 0
        %5368 = vmatprep.subr.bf16.mxu0 0
        %5369 = vmatpush1.bf16.msra.mxu0 0
        %5370 = vmatprep.subr.bf16.mxu0 0
        %5371 = vmatpush1.bf16.msra.mxu0 0
        %5372 = vmatprep.subr.bf16.mxu0 0
        %5373 = vmatpush1.bf16.msra.mxu0 0
        %5374 = vmatprep.subr.bf16.mxu0 0
        %5375 = vmatpush1.bf16.msra.mxu0 0
        %5376 = vmatprep.subr.bf16.mxu0 0
        %5377 = vmatpush1.bf16.msra.mxu0 0
        %5378 = vmatprep.subr.bf16.mxu0 0
        %5379 = vmatpush1.bf16.msra.mxu0 0
        %5380 = vmatprep.subr.bf16.mxu0 0
        %5381 = vmatpush1.bf16.msra.mxu0 0
        %5382 = vmatprep.subr.bf16.mxu0 0
        %5383 = vmatpush1.bf16.msra.mxu0 0
        %5384 = vmatprep.subr.bf16.mxu0 0
        %5385 = vmatpush1.bf16.msra.mxu0 0
        %5386 = vmatprep.subr.bf16.mxu0 0
        %5387 = vmatpush1.bf16.msra.mxu0 0
        %5388 = vmatprep.subr.bf16.mxu0 0
        %5389 = vmatpush1.bf16.msra.mxu0 0
        %5390 = vmatprep.subr.bf16.mxu0 0
        %5391 = vmatpush1.bf16.msra.mxu0 0
        %5392 = vmatprep.subr.bf16.mxu0 0
        %5393 = vmatpush1.bf16.msra.mxu0 0
        %5394 = vmatprep.mubr.bf16.mxu0 0
        %5395 = vmatmul.mubr.bf16.gmra.mrb[0].mxu0 %v5360
        %v5396 = vpop.f32.mrb[0].mxu0
        %v5397 = vadd.f32 0.0, %v5396
        %v5398 = vpop.f32.mrb[0].mxu0
        %v5399 = vpop.f32.mrb[0].mxu0
        %v5400 = vadd.f32 0.0, %v5399
        %v5401 = vpop.f32.mrb[0].mxu0
        %5402 = vdwg.mxu0
        %v5403 = vadd.f32 %v5340, %v5397
        %v5404 = vadd.f32 %v5341, %v5400
        %s5405 = scalar_lea.vmem [#allocation19], 48
        %v5406 = vld [vmem:[%s5405] sm:$0xf]
        %v5407 = vld [vmem:[%s5405 + $0x4] sm:$0xf]
        %v5408 = vld [vmem:[%s5405 + $0x8] sm:$0xf]
        %v5409 = vld [vmem:[%s5405 + $0xc] sm:$0xf]
        %v5414 = vunpack.c.l.b16 %v5406
        %v5415 = vunpack.c.l.b16 %v5407
        %v5416 = vunpack.c.l.b16 %v5408
        %v5417 = vunpack.c.l.b16 %v5409
        %v5418 = vpack.c.b16 %v5415, %v5414
        %v5419 = vpack.c.b16 %v5417, %v5416
        %5422 = vmatprep.subr.bf16.mxu0 0
        %5423 = vmatpush1.bf16.msra.mxu0 %v5418
        %5424 = vmatprep.subr.bf16.mxu0 0
        %5425 = vmatpush1.bf16.msra.mxu0 %v5419
        %5426 = vmatprep.subr.bf16.mxu0 0
        %5427 = vmatpush1.bf16.msra.mxu0 0
        %5428 = vmatprep.subr.bf16.mxu0 0
        %5429 = vmatpush1.bf16.msra.mxu0 0
        %5430 = vmatprep.subr.bf16.mxu0 0
        %5431 = vmatpush1.bf16.msra.mxu0 0
        %5432 = vmatprep.subr.bf16.mxu0 0
        %5433 = vmatpush1.bf16.msra.mxu0 0
        %5434 = vmatprep.subr.bf16.mxu0 0
        %5435 = vmatpush1.bf16.msra.mxu0 0
        %5436 = vmatprep.subr.bf16.mxu0 0
        %5437 = vmatpush1.bf16.msra.mxu0 0
        %5438 = vmatprep.subr.bf16.mxu0 0
        %5439 = vmatpush1.bf16.msra.mxu0 0
        %5440 = vmatprep.subr.bf16.mxu0 0
        %5441 = vmatpush1.bf16.msra.mxu0 0
        %5442 = vmatprep.subr.bf16.mxu0 0
        %5443 = vmatpush1.bf16.msra.mxu0 0
        %5444 = vmatprep.subr.bf16.mxu0 0
        %5445 = vmatpush1.bf16.msra.mxu0 0
        %5446 = vmatprep.subr.bf16.mxu0 0
        %5447 = vmatpush1.bf16.msra.mxu0 0
        %5448 = vmatprep.subr.bf16.mxu0 0
        %5449 = vmatpush1.bf16.msra.mxu0 0
        %5450 = vmatprep.subr.bf16.mxu0 0
        %5451 = vmatpush1.bf16.msra.mxu0 0
        %5452 = vmatprep.subr.bf16.mxu0 0
        %5453 = vmatpush1.bf16.msra.mxu0 0
        %5454 = vmatprep.mubr.bf16.mxu0 0
        %5455 = vmatmul.mubr.bf16.gmra.mrb[0].mxu0 %v4190
        %v5456 = vpop.f32.mrb[0].mxu0
        %v5457 = vadd.f32 0.0, %v5456
        %v5458 = vpop.f32.mrb[0].mxu0
        %v5459 = vpop.f32.mrb[0].mxu0
        %v5460 = vadd.f32 0.0, %v5459
        %v5461 = vpop.f32.mrb[0].mxu0
        %5462 = vdwg.mxu0
        %v5463 = vadd.f32 %v5403, %v5457
        %v5464 = vadd.f32 %v5404, %v5460
        %s5465 = scalar_lea.vmem [#allocation20], 48
        %v5466 = vld [vmem:[%s5465] sm:$0xf]
        %v5467 = vld [vmem:[%s5465 + $0x4] sm:$0xf]
        %v5468 = vld [vmem:[%s5465 + $0x8] sm:$0xf]
        %v5469 = vld [vmem:[%s5465 + $0xc] sm:$0xf]
        %v5474 = vunpack.c.l.b16 %v5466
        %v5475 = vunpack.c.l.b16 %v5467
        %v5476 = vunpack.c.l.b16 %v5468
        %v5477 = vunpack.c.l.b16 %v5469
        %v5478 = vpack.c.b16 %v5475, %v5474
        %v5479 = vpack.c.b16 %v5477, %v5476
        %v5483 = vsel %vm1148, %v5039, 0
        %5485 = vmatprep.subr.bf16.mxu0 0
        %5486 = vmatpush1.bf16.msra.mxu0 %v5478
        %5487 = vmatprep.subr.bf16.mxu0 0
        %5488 = vmatpush1.bf16.msra.mxu0 %v5479
        %5489 = vmatprep.subr.bf16.mxu0 0
        %5490 = vmatpush1.bf16.msra.mxu0 0
        %5491 = vmatprep.subr.bf16.mxu0 0
        %5492 = vmatpush1.bf16.msra.mxu0 0
        %5493 = vmatprep.subr.bf16.mxu0 0
        %5494 = vmatpush1.bf16.msra.mxu0 0
        %5495 = vmatprep.subr.bf16.mxu0 0
        %5496 = vmatpush1.bf16.msra.mxu0 0
        %5497 = vmatprep.subr.bf16.mxu0 0
        %5498 = vmatpush1.bf16.msra.mxu0 0
        %5499 = vmatprep.subr.bf16.mxu0 0
        %5500 = vmatpush1.bf16.msra.mxu0 0
        %5501 = vmatprep.subr.bf16.mxu0 0
        %5502 = vmatpush1.bf16.msra.mxu0 0
        %5503 = vmatprep.subr.bf16.mxu0 0
        %5504 = vmatpush1.bf16.msra.mxu0 0
        %5505 = vmatprep.subr.bf16.mxu0 0
        %5506 = vmatpush1.bf16.msra.mxu0 0
        %5507 = vmatprep.subr.bf16.mxu0 0
        %5508 = vmatpush1.bf16.msra.mxu0 0
        %5509 = vmatprep.subr.bf16.mxu0 0
        %5510 = vmatpush1.bf16.msra.mxu0 0
        %5511 = vmatprep.subr.bf16.mxu0 0
        %5512 = vmatpush1.bf16.msra.mxu0 0
        %5513 = vmatprep.subr.bf16.mxu0 0
        %5514 = vmatpush1.bf16.msra.mxu0 0
        %5515 = vmatprep.subr.bf16.mxu0 0
        %5516 = vmatpush1.bf16.msra.mxu0 0
        %5517 = vmatprep.mubr.bf16.mxu0 0
        %5518 = vmatmul.mubr.bf16.gmra.mrb[0].mxu0 %v5483
        %v5519 = vpop.f32.mrb[0].mxu0
        %v5520 = vadd.f32 0.0, %v5519
        %v5521 = vpop.f32.mrb[0].mxu0
        %v5522 = vpop.f32.mrb[0].mxu0
        %v5523 = vadd.f32 0.0, %v5522
        %v5524 = vpop.f32.mrb[0].mxu0
        %5525 = vdwg.mxu0
        %v5526 = vadd.f32 %v5463, %v5520
        %v5527 = vadd.f32 %v5464, %v5523
        %s5528 = scalar_lea.vmem [#allocation19], 64
        %v5529 = vld [vmem:[%s5528] sm:$0xf]
        %v5530 = vld [vmem:[%s5528 + $0x4] sm:$0xf]
        %v5531 = vld [vmem:[%s5528 + $0x8] sm:$0xf]
        %v5532 = vld [vmem:[%s5528 + $0xc] sm:$0xf]
        %v5537 = vunpack.c.l.b16 %v5529
        %v5538 = vunpack.c.l.b16 %v5530
        %v5539 = vunpack.c.l.b16 %v5531
        %v5540 = vunpack.c.l.b16 %v5532
        %v5541 = vpack.c.b16 %v5538, %v5537
        %v5542 = vpack.c.b16 %v5540, %v5539
        %5545 = vmatprep.subr.bf16.mxu0 0
        %5546 = vmatpush1.bf16.msra.mxu0 %v5541
        %5547 = vmatprep.subr.bf16.mxu0 0
        %5548 = vmatpush1.bf16.msra.mxu0 %v5542
        %5549 = vmatprep.subr.bf16.mxu0 0
        %5550 = vmatpush1.bf16.msra.mxu0 0
        %5551 = vmatprep.subr.bf16.mxu0 0
        %5552 = vmatpush1.bf16.msra.mxu0 0
        %5553 = vmatprep.subr.bf16.mxu0 0
        %5554 = vmatpush1.bf16.msra.mxu0 0
        %5555 = vmatprep.subr.bf16.mxu0 0
        %5556 = vmatpush1.bf16.msra.mxu0 0
        %5557 = vmatprep.subr.bf16.mxu0 0
        %5558 = vmatpush1.bf16.msra.mxu0 0
        %5559 = vmatprep.subr.bf16.mxu0 0
        %5560 = vmatpush1.bf16.msra.mxu0 0
        %5561 = vmatprep.subr.bf16.mxu0 0
        %5562 = vmatpush1.bf16.msra.mxu0 0
        %5563 = vmatprep.subr.bf16.mxu0 0
        %5564 = vmatpush1.bf16.msra.mxu0 0
        %5565 = vmatprep.subr.bf16.mxu0 0
        %5566 = vmatpush1.bf16.msra.mxu0 0
        %5567 = vmatprep.subr.bf16.mxu0 0
        %5568 = vmatpush1.bf16.msra.mxu0 0
        %5569 = vmatprep.subr.bf16.mxu0 0
        %5570 = vmatpush1.bf16.msra.mxu0 0
        %5571 = vmatprep.subr.bf16.mxu0 0
        %5572 = vmatpush1.bf16.msra.mxu0 0
        %5573 = vmatprep.subr.bf16.mxu0 0
        %5574 = vmatpush1.bf16.msra.mxu0 0
        %5575 = vmatprep.subr.bf16.mxu0 0
        %5576 = vmatpush1.bf16.msra.mxu0 0
        %5577 = vmatprep.mubr.bf16.mxu0 0
        %5578 = vmatmul.mubr.bf16.gmra.mrb[0].mxu0 %v4436
        %v5579 = vpop.f32.mrb[0].mxu0
        %v5580 = vadd.f32 0.0, %v5579
        %v5581 = vpop.f32.mrb[0].mxu0
        %v5582 = vpop.f32.mrb[0].mxu0
        %v5583 = vadd.f32 0.0, %v5582
        %v5584 = vpop.f32.mrb[0].mxu0
        %5585 = vdwg.mxu0
        %v5586 = vadd.f32 %v5526, %v5580
        %v5587 = vadd.f32 %v5527, %v5583
        %s5588 = scalar_lea.vmem [#allocation20], 64
        %v5589 = vld [vmem:[%s5588] sm:$0xf]
        %v5590 = vld [vmem:[%s5588 + $0x4] sm:$0xf]
        %v5591 = vld [vmem:[%s5588 + $0x8] sm:$0xf]
        %v5592 = vld [vmem:[%s5588 + $0xc] sm:$0xf]
        %v5597 = vunpack.c.l.b16 %v5589
        %v5598 = vunpack.c.l.b16 %v5590
        %v5599 = vunpack.c.l.b16 %v5591
        %v5600 = vunpack.c.l.b16 %v5592
        %v5601 = vpack.c.b16 %v5598, %v5597
        %v5602 = vpack.c.b16 %v5600, %v5599
        %v5606 = vsel %vm1148, %v5040, 0
        %5608 = vmatprep.subr.bf16.mxu0 0
        %5609 = vmatpush1.bf16.msra.mxu0 %v5601
        %5610 = vmatprep.subr.bf16.mxu0 0
        %5611 = vmatpush1.bf16.msra.mxu0 %v5602
        %5612 = vmatprep.subr.bf16.mxu0 0
        %5613 = vmatpush1.bf16.msra.mxu0 0
        %5614 = vmatprep.subr.bf16.mxu0 0
        %5615 = vmatpush1.bf16.msra.mxu0 0
        %5616 = vmatprep.subr.bf16.mxu0 0
        %5617 = vmatpush1.bf16.msra.mxu0 0
        %5618 = vmatprep.subr.bf16.mxu0 0
        %5619 = vmatpush1.bf16.msra.mxu0 0
        %5620 = vmatprep.subr.bf16.mxu0 0
        %5621 = vmatpush1.bf16.msra.mxu0 0
        %5622 = vmatprep.subr.bf16.mxu0 0
        %5623 = vmatpush1.bf16.msra.mxu0 0
        %5624 = vmatprep.subr.bf16.mxu0 0
        %5625 = vmatpush1.bf16.msra.mxu0 0
        %5626 = vmatprep.subr.bf16.mxu0 0
        %5627 = vmatpush1.bf16.msra.mxu0 0
        %5628 = vmatprep.subr.bf16.mxu0 0
        %5629 = vmatpush1.bf16.msra.mxu0 0
        %5630 = vmatprep.subr.bf16.mxu0 0
        %5631 = vmatpush1.bf16.msra.mxu0 0
        %5632 = vmatprep.subr.bf16.mxu0 0
        %5633 = vmatpush1.bf16.msra.mxu0 0
        %5634 = vmatprep.subr.bf16.mxu0 0
        %5635 = vmatpush1.bf16.msra.mxu0 0
        %5636 = vmatprep.subr.bf16.mxu0 0
        %5637 = vmatpush1.bf16.msra.mxu0 0
        %5638 = vmatprep.subr.bf16.mxu0 0
        %5639 = vmatpush1.bf16.msra.mxu0 0
        %5640 = vmatprep.mubr.bf16.mxu0 0
        %5641 = vmatmul.mubr.bf16.gmra.mrb[0].mxu0 %v5606
        %v5642 = vpop.f32.mrb[0].mxu0
        %v5643 = vadd.f32 0.0, %v5642
        %v5644 = vpop.f32.mrb[0].mxu0
        %v5645 = vpop.f32.mrb[0].mxu0
        %v5646 = vadd.f32 0.0, %v5645
        %v5647 = vpop.f32.mrb[0].mxu0
        %5648 = vdwg.mxu0
        %v5649 = vadd.f32 %v5586, %v5643
        %v5650 = vadd.f32 %v5587, %v5646
        %s5651 = scalar_lea.vmem [#allocation19], 80
        %v5652 = vld [vmem:[%s5651] sm:$0xf]
        %v5653 = vld [vmem:[%s5651 + $0x4] sm:$0xf]
        %v5654 = vld [vmem:[%s5651 + $0x8] sm:$0xf]
        %v5655 = vld [vmem:[%s5651 + $0xc] sm:$0xf]
        %v5660 = vunpack.c.l.b16 %v5652
        %v5661 = vunpack.c.l.b16 %v5653
        %v5662 = vunpack.c.l.b16 %v5654
        %v5663 = vunpack.c.l.b16 %v5655
        %v5664 = vpack.c.b16 %v5661, %v5660
        %v5665 = vpack.c.b16 %v5663, %v5662
        %5668 = vmatprep.subr.bf16.mxu0 0
        %5669 = vmatpush1.bf16.msra.mxu0 %v5664
        %5670 = vmatprep.subr.bf16.mxu0 0
        %5671 = vmatpush1.bf16.msra.mxu0 %v5665
        %5672 = vmatprep.subr.bf16.mxu0 0
        %5673 = vmatpush1.bf16.msra.mxu0 0
        %5674 = vmatprep.subr.bf16.mxu0 0
        %5675 = vmatpush1.bf16.msra.mxu0 0
        %5676 = vmatprep.subr.bf16.mxu0 0
        %5677 = vmatpush1.bf16.msra.mxu0 0
        %5678 = vmatprep.subr.bf16.mxu0 0
        %5679 = vmatpush1.bf16.msra.mxu0 0
        %5680 = vmatprep.subr.bf16.mxu0 0
        %5681 = vmatpush1.bf16.msra.mxu0 0
        %5682 = vmatprep.subr.bf16.mxu0 0
        %5683 = vmatpush1.bf16.msra.mxu0 0
        %5684 = vmatprep.subr.bf16.mxu0 0
        %5685 = vmatpush1.bf16.msra.mxu0 0
        %5686 = vmatprep.subr.bf16.mxu0 0
        %5687 = vmatpush1.bf16.msra.mxu0 0
        %5688 = vmatprep.subr.bf16.mxu0 0
        %5689 = vmatpush1.bf16.msra.mxu0 0
        %5690 = vmatprep.subr.bf16.mxu0 0
        %5691 = vmatpush1.bf16.msra.mxu0 0
        %5692 = vmatprep.subr.bf16.mxu0 0
        %5693 = vmatpush1.bf16.msra.mxu0 0
        %5694 = vmatprep.subr.bf16.mxu0 0
        %5695 = vmatpush1.bf16.msra.mxu0 0
        %5696 = vmatprep.subr.bf16.mxu0 0
        %5697 = vmatpush1.bf16.msra.mxu0 0
        %5698 = vmatprep.subr.bf16.mxu0 0
        %5699 = vmatpush1.bf16.msra.mxu0 0
        %5700 = vmatprep.mubr.bf16.mxu0 0
        %5701 = vmatmul.mubr.bf16.gmra.mrb[0].mxu0 %v4682
        %v5702 = vpop.f32.mrb[0].mxu0
        %v5703 = vadd.f32 0.0, %v5702
        %v5704 = vpop.f32.mrb[0].mxu0
        %v5705 = vpop.f32.mrb[0].mxu0
        %v5706 = vadd.f32 0.0, %v5705
        %v5707 = vpop.f32.mrb[0].mxu0
        %5708 = vdwg.mxu0
        %v5709 = vadd.f32 %v5649, %v5703
        %v5710 = vadd.f32 %v5650, %v5706
        %s5711 = scalar_lea.vmem [#allocation20], 80
        %v5712 = vld [vmem:[%s5711] sm:$0xf]
        %v5713 = vld [vmem:[%s5711 + $0x4] sm:$0xf]
        %v5714 = vld [vmem:[%s5711 + $0x8] sm:$0xf]
        %v5715 = vld [vmem:[%s5711 + $0xc] sm:$0xf]
        %v5720 = vunpack.c.l.b16 %v5712
        %v5721 = vunpack.c.l.b16 %v5713
        %v5722 = vunpack.c.l.b16 %v5714
        %v5723 = vunpack.c.l.b16 %v5715
        %v5724 = vpack.c.b16 %v5721, %v5720
        %v5725 = vpack.c.b16 %v5723, %v5722
        %v5729 = vsel %vm1148, %v5041, 0
        %5731 = vmatprep.subr.bf16.mxu0 0
        %5732 = vmatpush1.bf16.msra.mxu0 %v5724
        %5733 = vmatprep.subr.bf16.mxu0 0
        %5734 = vmatpush1.bf16.msra.mxu0 %v5725
        %5735 = vmatprep.subr.bf16.mxu0 0
        %5736 = vmatpush1.bf16.msra.mxu0 0
        %5737 = vmatprep.subr.bf16.mxu0 0
        %5738 = vmatpush1.bf16.msra.mxu0 0
        %5739 = vmatprep.subr.bf16.mxu0 0
        %5740 = vmatpush1.bf16.msra.mxu0 0
        %5741 = vmatprep.subr.bf16.mxu0 0
        %5742 = vmatpush1.bf16.msra.mxu0 0
        %5743 = vmatprep.subr.bf16.mxu0 0
        %5744 = vmatpush1.bf16.msra.mxu0 0
        %5745 = vmatprep.subr.bf16.mxu0 0
        %5746 = vmatpush1.bf16.msra.mxu0 0
        %5747 = vmatprep.subr.bf16.mxu0 0
        %5748 = vmatpush1.bf16.msra.mxu0 0
        %5749 = vmatprep.subr.bf16.mxu0 0
        %5750 = vmatpush1.bf16.msra.mxu0 0
        %5751 = vmatprep.subr.bf16.mxu0 0
        %5752 = vmatpush1.bf16.msra.mxu0 0
        %5753 = vmatprep.subr.bf16.mxu0 0
        %5754 = vmatpush1.bf16.msra.mxu0 0
        %5755 = vmatprep.subr.bf16.mxu0 0
        %5756 = vmatpush1.bf16.msra.mxu0 0
        %5757 = vmatprep.subr.bf16.mxu0 0
        %5758 = vmatpush1.bf16.msra.mxu0 0
        %5759 = vmatprep.subr.bf16.mxu0 0
        %5760 = vmatpush1.bf16.msra.mxu0 0
        %5761 = vmatprep.subr.bf16.mxu0 0
        %5762 = vmatpush1.bf16.msra.mxu0 0
        %5763 = vmatprep.mubr.bf16.mxu0 0
        %5764 = vmatmul.mubr.bf16.gmra.mrb[0].mxu0 %v5729
        %v5765 = vpop.f32.mrb[0].mxu0
        %v5766 = vadd.f32 0.0, %v5765
        %v5767 = vpop.f32.mrb[0].mxu0
        %v5768 = vpop.f32.mrb[0].mxu0
        %v5769 = vadd.f32 0.0, %v5768
        %v5770 = vpop.f32.mrb[0].mxu0
        %5771 = vdwg.mxu0
        %v5772 = vadd.f32 %v5709, %v5766
        %v5773 = vadd.f32 %v5710, %v5769
        %v5774 = vld [vmem:[%s20] sm:$0x1]
        %v5776 = vlaneseq
        %v5777 = vshrl.u32 %v5776, 7
        %v5778 = vsub.s32 0, %v5777
        %v5779 = vrot.slane %v5774, %v5778
        %v5781 = vadd.f32 %v5772, %v5779
        %v5782 = vadd.f32 %v5773, %v5779
        %v5783 = vtanh.pop %v5781
        %v5784 = vtanh.pop %v5782
        %v5785 = vmul.f32 %v4949, %v3269
        %v5786 = vmul.f32 %v4951, %v3270
        %v5787 = vsub.f32 1.0, %v4949
        %v5788 = vsub.f32 1.0, %v4951
        %v5789 = vmul.f32 %v5787, %v5783
        %v5790 = vmul.f32 %v5788, %v5784
        %v5791 = vadd.f32 %v5785, %v5789
        %v5792 = vadd.f32 %v5786, %v5790
        %s5793 = scalar_lea.vmem %s875, 16 [#allocation22]
        %5794 = vst.msk [vmem:[%s5793] sm:$0xff] %vm1148, %v5791
        %5795 = vst.msk [vmem:[%s5793 + $0x8] sm:$0xff] %vm1148, %v5792
        %s5796 = sand.u32 %s503, 1
        %s5797 = scalar_lea.sflag [#allocation4], %s5796
        %s5798 = sand.u32 %s503, 1
        %s5799 = smul.addr %s5798, 32
        %s5800 = scalar_lea.vmem [#allocation22], %s5799
        // Predicated region
        $region153: #{tpu_custom_call.1} parent=103 // pred_check
          %p5801 = pneg %p513
        $region154: #{tpu_custom_call.1} parent=103 // pred_check_branch
          %5803 = sbr.rel (%p5801) target = $region156
        $region155: #{tpu_custom_call.1} parent=103 // pred_region
          #allocation26 [shape = 'u32[6]{0}', space=smem, size = 0x18, scoped, tag = 'DMA stride descriptor']
          %s5804 = smul.u32 2, %s44
          %s5806 = ssub.s32 512, 512
          %5807 = vsyncadd %s5797, %s5806
          %s5808 = smul.addr %s5804, 128
          %s5809 = scalar_lea.hbm %s21, %s5808
          %s5811 = sshll.u32 1, 14
          %s5812 = sxor.u32 4294967295, %s5811
          %s5815 = sshll.u32 7, 18
          %s5816 = sxor.u32 4294967295, %s5815
          %s5817 = sand.u32 0, %s5816
          %s5819 = sor.u32 %s5817, 0
          %s5821 = sshll.u32 3, 24
          %s5822 = sxor.u32 4294967295, %s5821
          %s5823 = sand.u32 %s5819, %s5822
          %s5825 = sor.u32 %s5823, 0
          %s5826 = sshll.u32 %s5800, 4
          %s5827 = int_to_ptr.vmem [resolvable:$true] %s5826
          %5833 = sst [smem:[#allocation26]] 256
          %s5834 = scalar_lea.smem [#allocation26], 1
          %5835 = sst [smem:[%s5834]] 512
          %s5836 = scalar_lea.smem [#allocation26], 2
          %5837 = sst [smem:[%s5836]] 2
          %s5838 = scalar_lea.smem [#allocation26], 3
          %5839 = sst [smem:[%s5838]] 128
          %s5840 = scalar_lea.smem [#allocation26], 4
          %5841 = sst [smem:[%s5840]] 128
          %s5842 = scalar_lea.smem [#allocation26], 5
          %5843 = sst [smem:[%s5842]] 8
          %5845 = dma.general %s5827, 512, %s5809, %s5797, [#allocation25], [#allocation26], %s5825, 0
        $region156: #{tpu_custom_call.1} parent=103 // pred_fallthru
          _
      $region104: #{tpu_custom_call.1} parent=5 // pred_fallthru
        _
      %p5846 = scmp.le.s32.totalorder 2, %s39
      // Predicated region
      $region157: #{tpu_custom_call.1} parent=5 // pred_check
        %p5847 = pneg %p5846
      $region158: #{tpu_custom_call.1} parent=5 // pred_check_branch
        %5849 = sbr.rel (%p5847) target = $region160
      $region159: #{tpu_custom_call.1} parent=5 // pred_region
        %s5850 = ssub.s32 %s39, 2
        // Predicated region
        $region161: #{tpu_custom_call.1} parent=159 // pred_check
          %p5851 = pneg %p519
        $region162: #{tpu_custom_call.1} parent=159 // pred_check_branch
          %5853 = sbr.rel (%p5851) target = $region164
        $region163: #{tpu_custom_call.1} parent=159 // pred_region
          %s5854 = sand.u32 %s504, 1
          %s5855 = scalar_lea.sflag [#allocation4], %s5854
          %s5856 = sand.u32 %s504, 1
          %s5857 = smul.addr %s5856, 32
          %s5858 = scalar_lea.vmem [#allocation22], %s5857
          %5859 = dma.done %s5855, 512
        $region164: #{tpu_custom_call.1} parent=159 // pred_fallthru
          _
      $region160: #{tpu_custom_call.1} parent=5 // pred_fallthru
        _
    $region6: #{tpu_custom_call.1} parent=1 // loop_footer
      %s43 = sadd.s32 1, %s39
    $region7: #{tpu_custom_call.1} parent=1 // loop_footer_branch
      %38 = sbr.rel target = $region3
    $region8: #{tpu_custom_call.1} parent=1 // loop_exit
      _
    %5860 = vsyncpa [#allocation3], 1
    %s5861 = scalar_lea.sflag [#allocation3], 1
    %5862 = vsyncpa %s5861, 1
    %5863 = vsyncpa [#allocation6], 1
    %5864 = vsyncpa [#allocation9], 1
    %5865 = vsyncpa [#allocation12], 1
    %5866 = vsyncpa [#allocation15], 1
    %5867 = vsyncpa [#allocation18], 1
    %5868 = vsyncpa [#allocation21], 1
    %5869 = vsyncpa [#allocation4], 1
    %s5870 = scalar_lea.sflag [#allocation4], 1
    %5871 = vsyncpa %s5870, 1

</llo_original>
